<compile_context>
chip_gen: v6e
topology: v6e:2x2x1
jax: 0.10.0
libtpu: 0.0.40
codegen_flags: <defaults>
</compile_context>

<pallas_src>
import math

import numpy as np
import jax
import jax.numpy as jnp
from jax.experimental import pallas as pl
from jax.experimental.pallas import tpu as pltpu

# ---------------------------------------------------------------------------
# Architecture constants (match the PyTorch module).
# ---------------------------------------------------------------------------
_WIDTH = 300            # res_block initial/final/inner widths
_N_INNER = 3            # inner layers per ResBlock MLP (MLP has _N_INNER+1 linears)
_TEMB_DIM = 128
_TEMB_OUT = 2 * _TEMB_DIM   # 256

# Lane-aligned padded widths.
_WIDTH_PAD = 384                           # 300 -> 384
_CAT_PAD = 2 * _WIDTH_PAD                  # 768 : [h | y], each half in its own slot
_HEAD_IN_PAD = 2 * _WIDTH_PAD + _TEMB_OUT  # 1024 : [h3 | y3 | t_emb]


def _round_up(x, m):
    return (x + m - 1) // m * m


def _softplus(v):
    # Numerically-stable softplus (matches torch.nn.Softplus to fp tolerance).
    return jnp.maximum(v, 0.0) + jnp.log1p(jnp.exp(-jnp.abs(v)))


# ---------------------------------------------------------------------------
# Fused forward kernel: one grid point per batch tile, all weights resident.
# Ref order: x, t, temb_consts, Wt, bt, Wf, bf, (3 blocks x 10 refs), out.
# ---------------------------------------------------------------------------
def _fused_kernel(*refs):
    o_ref = refs[-1]
    x_ref, t_ref, tc_ref, wt_ref, bt_ref, wf_ref, bf_ref = refs[:7]
    blk_refs = refs[7:-1]                       # 3 blocks x 10 refs

    f32 = jnp.float32
    bf16 = jnp.bfloat16

    # ---- time branch: sinusoidal embedding + Linear(128, 256) + softplus ----
    # emb = sin(t * freqs + phase); phase = 0 for the sin half, pi/2 for cos.
    args = t_ref[...] * tc_ref[0:1, :] + tc_ref[1:2, :]          # (TB, 128)
    temb = jnp.sin(args).astype(bf16)
    t_act = _softplus(
        jnp.dot(temb, wt_ref[...], preferred_element_type=f32)
        + bt_ref[...]).astype(bf16)                              # (TB, 256) bf16

    def mlp(h_in_bf16, mrefs):
        y = h_in_bf16
        for li in range(_N_INNER + 1):
            w = mrefs[2 * li][...]
            b = mrefs[2 * li + 1][...]
            acc = jnp.dot(y, w, preferred_element_type=f32) + b
            # softplus between layers, none on the last linear
            y = _softplus(acc).astype(bf16) if li < _N_INNER else acc.astype(bf16)
        return y

    # ---- ResBlock 1 (input = x) ----
    r = blk_refs[0:10]
    h = _softplus(jnp.dot(x_ref[...].astype(bf16), r[0][...],
                          preferred_element_type=f32) + r[1][...]).astype(bf16)
    y = mlp(h, r[2:10])

    # ---- ResBlocks 2..3: input = cat([h, y]) realized as split matmuls ----
    for bi in (1, 2):
        r = blk_refs[10 * bi: 10 * (bi + 1)]
        w_first = r[0]                                           # (768, 384)
        acc = (jnp.dot(h, w_first[:_WIDTH_PAD, :], preferred_element_type=f32)
               + jnp.dot(y, w_first[_WIDTH_PAD:, :], preferred_element_type=f32)
               + r[1][...])
        h = _softplus(acc).astype(bf16)
        y = mlp(h, r[2:10])

    # ---- head: cat([h3, y3, t_emb]) @ Wf + bf, again as split matmuls ----
    out = (jnp.dot(h, wf_ref[:_WIDTH_PAD, :], preferred_element_type=f32)
           + jnp.dot(y, wf_ref[_WIDTH_PAD:2 * _WIDTH_PAD, :],
                     preferred_element_type=f32)
           + jnp.dot(t_act, wf_ref[2 * _WIDTH_PAD:, :],
                     preferred_element_type=f32)
           + bf_ref[...])
    o_ref[...] = out.astype(o_ref.dtype)


# ---------------------------------------------------------------------------
# Parameter init (logical PyTorch-like layout: W is (in, out), y = x @ W + b,
# U(-1/sqrt(in), 1/sqrt(in)) like nn.Linear's default, deterministic via key).
# ---------------------------------------------------------------------------
def _init_linear(key, in_dim, out_dim):
    kw, kb = jax.random.split(key)
    bound = 1.0 / math.sqrt(in_dim)
    w = jax.random.uniform(kw, (in_dim, out_dim), jnp.float32, -bound, bound)
    b = jax.random.uniform(kb, (out_dim,), jnp.float32, -bound, bound)
    return w, b


def init_params(key, input_dim):
    res_initial = [_WIDTH, _WIDTH, _WIDTH]
    res_final = [_WIDTH, _WIDTH, _WIDTH]
    res_inner = [_WIDTH, _WIDTH, _WIDTH]

    keys = iter(jax.random.split(key, 32))
    params = {"res": []}
    in_dim = input_dim
    for initial, final in zip(res_initial, res_final):
        blk = {"first": _init_linear(next(keys), in_dim, initial), "mlp": []}
        prev = initial
        for width in res_inner + [final]:
            blk["mlp"].append(_init_linear(next(keys), prev, width))
            prev = width
        params["res"].append(blk)
        in_dim = initial + final
    params["time"] = _init_linear(next(keys), _TEMB_DIM, _TEMB_OUT)
    params["final"] = _init_linear(next(keys), _TEMB_OUT + in_dim, input_dim)
    return params


# ---------------------------------------------------------------------------
# Pack logical params into lane-aligned, zero-padded bf16 weights / fp32 biases.
# ---------------------------------------------------------------------------
def _pad_weight(w, rows, cols):
    wi, wo = w.shape
    wp = jnp.zeros((rows, cols), jnp.float32).at[:wi, :wo].set(w)
    return wp.astype(jnp.bfloat16)


def _pad_bias(b, cols):
    return jnp.zeros((1, cols), jnp.float32).at[0, :b.shape[0]].set(b)


def pack_params(params, input_dim):
    in_pad = _round_up(input_dim, 128)
    out_pad = _round_up(input_dim, 128)

    packed = {}
    wt, bt = params["time"]
    packed["wt"] = wt.astype(jnp.bfloat16)                    # (128, 256), aligned
    packed["bt"] = bt.reshape(1, -1).astype(jnp.float32)

    # Head: logical rows [0:300]=h3, [300:600]=y3, [600:856]=t_emb -> padded slots.
    wf, bf = params["final"]
    wfp = jnp.zeros((_HEAD_IN_PAD, out_pad), jnp.float32)
    wfp = wfp.at[:_WIDTH, :input_dim].set(wf[:_WIDTH])
    wfp = wfp.at[_WIDTH_PAD:_WIDTH_PAD + _WIDTH, :input_dim].set(wf[_WIDTH:2 * _WIDTH])
    wfp = wfp.at[2 * _WIDTH_PAD:2 * _WIDTH_PAD + _TEMB_OUT, :input_dim].set(wf[2 * _WIDTH:])
    packed["wf"] = wfp.astype(jnp.bfloat16)
    packed["bf"] = _pad_bias(bf, out_pad)

    blocks = []
    for bi, blk in enumerate(params["res"]):
        w_first, b_first = blk["first"]
        if bi == 0:
            wp = _pad_weight(w_first, in_pad, _WIDTH_PAD)
        else:
            # logical rows [0:300] <- h_prev, [300:600] <- y_prev -> padded slots.
            wsp = jnp.zeros((_CAT_PAD, _WIDTH_PAD), jnp.float32)
            wsp = wsp.at[:_WIDTH, :_WIDTH].set(w_first[:_WIDTH])
            wsp = wsp.at[_WIDTH_PAD:_WIDTH_PAD + _WIDTH, :_WIDTH].set(w_first[_WIDTH:])
            wp = wsp.astype(jnp.bfloat16)
        entry = [wp, _pad_bias(b_first, _WIDTH_PAD)]
        for wm, bm in blk["mlp"]:
            entry.append(_pad_weight(wm, _WIDTH_PAD, _WIDTH_PAD))
            entry.append(_pad_bias(bm, _WIDTH_PAD))
        blocks.append(entry)
    packed["blocks"] = blocks
    return packed


def _temb_consts():
    half = _TEMB_DIM // 2
    log_scale = math.log(10000.0) / (half - 1)
    freqs = np.exp(np.arange(half, dtype=np.float64) * -log_scale).astype(np.float32)
    tc = np.zeros((2, _TEMB_DIM), np.float32)
    tc[0, :half] = freqs
    tc[0, half:] = freqs
    tc[1, half:] = np.float32(np.pi / 2.0)      # cos(x) = sin(x + pi/2)
    return jnp.asarray(tc)


# ---------------------------------------------------------------------------
# Forward pass: single fused pallas_call.
# ---------------------------------------------------------------------------
def resnet_score_network_large(packed, x, t, input_dim):
    B = x.shape[0]
    in_pad = _round_up(input_dim, 128)
    out_pad = _round_up(input_dim, 128)

    # Batch tiling: single tile for small B, 256-row tiles for large B (keeps
    # per-tile activations tiny next to the ~5 MiB resident weight set).
    if B <= 256:
        tb = _round_up(B, 8)
        b_pad = tb
    else:
        tb = 256
        b_pad = _round_up(B, tb)
    grid = (b_pad // tb,)

    xp = jnp.zeros((b_pad, in_pad), jnp.float32).at[:B, :input_dim].set(x)
    tp = jnp.zeros((b_pad, 1), jnp.float32).at[:B, :].set(t)
    tc = _temb_consts()

    inputs = [xp, tp, tc, packed["wt"], packed["bt"], packed["wf"], packed["bf"]]
    for blk in packed["blocks"]:
        inputs.extend(blk)

    def batch_spec(shape):
        return pl.BlockSpec(shape, lambda i: (i, 0))

    def const_spec(shape):
        return pl.BlockSpec(shape, lambda i: (0, 0))   # resident across batch tiles

    in_specs = [batch_spec((tb, in_pad)),
                batch_spec((tb, 1)),
                const_spec((2, _TEMB_DIM))]
    for a in inputs[3:]:
        in_specs.append(const_spec(a.shape))

    # Advisory cost estimate for XLA scheduling around the custom call.
    macs_per_row = (in_pad * _WIDTH_PAD + 4 * _WIDTH_PAD * _WIDTH_PAD
                    + 2 * (_CAT_PAD * _WIDTH_PAD + 4 * _WIDTH_PAD * _WIDTH_PAD)
                    + _TEMB_DIM * _TEMB_OUT + _HEAD_IN_PAD * out_pad)
    bytes_accessed = sum(int(np.prod(a.shape)) * a.dtype.itemsize for a in inputs)
    bytes_accessed += b_pad * out_pad * 4
    cost = pl.CostEstimate(
        flops=2 * b_pad * macs_per_row,
        transcendentals=b_pad * (_TEMB_DIM + 2 * (_TEMB_OUT + 12 * _WIDTH_PAD)),
        bytes_accessed=bytes_accessed,
    )

    out = pl.pallas_call(
        _fused_kernel,
        out_shape=jax.ShapeDtypeStruct((b_pad, out_pad), jnp.float32),
        grid=grid,
        in_specs=in_specs,
        out_specs=pl.BlockSpec((tb, out_pad), lambda i: (i, 0)),
        compiler_params=pltpu.CompilerParams(
            dimension_semantics=("parallel",),      # megacore sharding on v7x
            vmem_limit_bytes=40 * 1024 * 1024,      # ~5 MiB weights; headroom on all gens
        ),
        cost_estimate=cost,
    )(*inputs)
    return out[:B, :input_dim]


# ---------------------------------------------------------------------------
# Pure-JAX reference using the SAME packed (bf16, padded) weights.
# ---------------------------------------------------------------------------
def _reference_forward(packed, x, t, input_dim):
    B = x.shape[0]
    in_pad = _round_up(input_dim, 128)
    xp = jnp.zeros((B, in_pad), jnp.float32).at[:, :input_dim].set(x)
    tc = _temb_consts()

    def dot(a, w):
        return jnp.dot(a.astype(jnp.bfloat16), w, preferred_element_type=jnp.float32)

    def mlp(h_in, entry):
        y = h_in
        for li in range(_N_INNER + 1):
            acc = dot(y, entry[2 + 2 * li]) + entry[3 + 2 * li]
            y = _softplus(acc) if li < _N_INNER else acc
        return y

    args = t * tc[0:1, :] + tc[1:2, :]
    t_act = _softplus(dot(jnp.sin(args), packed["wt"]) + packed["bt"])

    blk = packed["blocks"][0]
    h = _softplus(dot(xp, blk[0]) + blk[1])
    y = mlp(h, blk)
    for bi in (1, 2):
        blk = packed["blocks"][bi]
        acc = dot(h, blk[0][:_WIDTH_PAD]) + dot(y, blk[0][_WIDTH_PAD:]) + blk[1]
        h = _softplus(acc)
        y = mlp(h, blk)
    wf = packed["wf"]
    out = (dot(h, wf[:_WIDTH_PAD]) + dot(y, wf[_WIDTH_PAD:2 * _WIDTH_PAD])
           + dot(t_act, wf[2 * _WIDTH_PAD:]) + packed["bf"])
    return out[:, :input_dim]


if __name__ == "__main__":
    input_dim = 4
    batch = 8

    root = jax.random.PRNGKey(0)
    k_params, k_x, k_t = jax.random.split(root, 3)

    params = init_params(k_params, input_dim)
    packed = pack_params(params, input_dim)
    x = jax.random.normal(k_x, (batch, input_dim), jnp.float32)
    t = jax.random.uniform(k_t, (batch, 1), jnp.float32)

    out = resnet_score_network_large(packed, x, t, input_dim)
    out = jax.block_until_ready(out)
    assert out.shape == (batch, input_dim), out.shape

    ref = jax.block_until_ready(_reference_forward(packed, x, t, input_dim))
    np.testing.assert_allclose(np.asarray(out), np.asarray(ref), rtol=2e-2, atol=2e-2)

    print("KERNEL_OK")
</pallas_src>

<mosaic_0001>
module attributes {stable_mosaic.version = 11 : i64} {
  func.func @_fused_kernel(%arg0: i32, %arg1: memref<8x128xf32, #tpu.memory_space<vmem>>, %arg2: memref<8x1xf32, #tpu.memory_space<vmem>>, %arg3: memref<2x128xf32, #tpu.memory_space<vmem>>, %arg4: memref<128x256xbf16, #tpu.memory_space<vmem>>, %arg5: memref<1x256xf32, #tpu.memory_space<vmem>>, %arg6: memref<1024x128xbf16, #tpu.memory_space<vmem>>, %arg7: memref<1x128xf32, #tpu.memory_space<vmem>>, %arg8: memref<128x384xbf16, #tpu.memory_space<vmem>>, %arg9: memref<1x384xf32, #tpu.memory_space<vmem>>, %arg10: memref<384x384xbf16, #tpu.memory_space<vmem>>, %arg11: memref<1x384xf32, #tpu.memory_space<vmem>>, %arg12: memref<384x384xbf16, #tpu.memory_space<vmem>>, %arg13: memref<1x384xf32, #tpu.memory_space<vmem>>, %arg14: memref<384x384xbf16, #tpu.memory_space<vmem>>, %arg15: memref<1x384xf32, #tpu.memory_space<vmem>>, %arg16: memref<384x384xbf16, #tpu.memory_space<vmem>>, %arg17: memref<1x384xf32, #tpu.memory_space<vmem>>, %arg18: memref<768x384xbf16, #tpu.memory_space<vmem>>, %arg19: memref<1x384xf32, #tpu.memory_space<vmem>>, %arg20: memref<384x384xbf16, #tpu.memory_space<vmem>>, %arg21: memref<1x384xf32, #tpu.memory_space<vmem>>, %arg22: memref<384x384xbf16, #tpu.memory_space<vmem>>, %arg23: memref<1x384xf32, #tpu.memory_space<vmem>>, %arg24: memref<384x384xbf16, #tpu.memory_space<vmem>>, %arg25: memref<1x384xf32, #tpu.memory_space<vmem>>, %arg26: memref<384x384xbf16, #tpu.memory_space<vmem>>, %arg27: memref<1x384xf32, #tpu.memory_space<vmem>>, %arg28: memref<768x384xbf16, #tpu.memory_space<vmem>>, %arg29: memref<1x384xf32, #tpu.memory_space<vmem>>, %arg30: memref<384x384xbf16, #tpu.memory_space<vmem>>, %arg31: memref<1x384xf32, #tpu.memory_space<vmem>>, %arg32: memref<384x384xbf16, #tpu.memory_space<vmem>>, %arg33: memref<1x384xf32, #tpu.memory_space<vmem>>, %arg34: memref<384x384xbf16, #tpu.memory_space<vmem>>, %arg35: memref<1x384xf32, #tpu.memory_space<vmem>>, %arg36: memref<384x384xbf16, #tpu.memory_space<vmem>>, %arg37: memref<1x384xf32, #tpu.memory_space<vmem>>, %arg38: memref<8x128xf32, #tpu.memory_space<vmem>>) attributes {dimension_semantics = [#tpu.dimension_semantics<parallel>], iteration_bounds = array<i64: 1>, scalar_prefetch = 0 : i64, scratch_operands = 0 : i64, tpu.core_type = #tpu.core_type<tc>, window_params = [{transform_indices = @transform_0, window_bounds = array<i64: 8, 128>}, {transform_indices = @transform_1, window_bounds = array<i64: 8, 1>}, {pipeline_mode = #tpu.pipeline_mode<synchronous>, transform_indices = @transform_2, window_bounds = array<i64: 2, 128>}, {pipeline_mode = #tpu.pipeline_mode<synchronous>, transform_indices = @transform_3, window_bounds = array<i64: 128, 256>}, {pipeline_mode = #tpu.pipeline_mode<synchronous>, transform_indices = @transform_4, window_bounds = array<i64: 1, 256>}, {pipeline_mode = #tpu.pipeline_mode<synchronous>, transform_indices = @transform_5, window_bounds = array<i64: 1024, 128>}, {pipeline_mode = #tpu.pipeline_mode<synchronous>, transform_indices = @transform_6, window_bounds = array<i64: 1, 128>}, {pipeline_mode = #tpu.pipeline_mode<synchronous>, transform_indices = @transform_7, window_bounds = array<i64: 128, 384>}, {pipeline_mode = #tpu.pipeline_mode<synchronous>, transform_indices = @transform_8, window_bounds = array<i64: 1, 384>}, {pipeline_mode = #tpu.pipeline_mode<synchronous>, transform_indices = @transform_9, window_bounds = array<i64: 384, 384>}, {pipeline_mode = #tpu.pipeline_mode<synchronous>, transform_indices = @transform_10, window_bounds = array<i64: 1, 384>}, {pipeline_mode = #tpu.pipeline_mode<synchronous>, transform_indices = @transform_11, window_bounds = array<i64: 384, 384>}, {pipeline_mode = #tpu.pipeline_mode<synchronous>, transform_indices = @transform_12, window_bounds = array<i64: 1, 384>}, {pipeline_mode = #tpu.pipeline_mode<synchronous>, transform_indices = @transform_13, window_bounds = array<i64: 384, 384>}, {pipeline_mode = #tpu.pipeline_mode<synchronous>, transform_indices = @transform_14, window_bounds = array<i64: 1, 384>}, {pipeline_mode = #tpu.pipeline_mode<synchronous>, transform_indices = @transform_15, window_bounds = array<i64: 384, 384>}, {pipeline_mode = #tpu.pipeline_mode<synchronous>, transform_indices = @transform_16, window_bounds = array<i64: 1, 384>}, {pipeline_mode = #tpu.pipeline_mode<synchronous>, transform_indices = @transform_17, window_bounds = array<i64: 768, 384>}, {pipeline_mode = #tpu.pipeline_mode<synchronous>, transform_indices = @transform_18, window_bounds = array<i64: 1, 384>}, {pipeline_mode = #tpu.pipeline_mode<synchronous>, transform_indices = @transform_19, window_bounds = array<i64: 384, 384>}, {pipeline_mode = #tpu.pipeline_mode<synchronous>, transform_indices = @transform_20, window_bounds = array<i64: 1, 384>}, {pipeline_mode = #tpu.pipeline_mode<synchronous>, transform_indices = @transform_21, window_bounds = array<i64: 384, 384>}, {pipeline_mode = #tpu.pipeline_mode<synchronous>, transform_indices = @transform_22, window_bounds = array<i64: 1, 384>}, {pipeline_mode = #tpu.pipeline_mode<synchronous>, transform_indices = @transform_23, window_bounds = array<i64: 384, 384>}, {pipeline_mode = #tpu.pipeline_mode<synchronous>, transform_indices = @transform_24, window_bounds = array<i64: 1, 384>}, {pipeline_mode = #tpu.pipeline_mode<synchronous>, transform_indices = @transform_25, window_bounds = array<i64: 384, 384>}, {pipeline_mode = #tpu.pipeline_mode<synchronous>, transform_indices = @transform_26, window_bounds = array<i64: 1, 384>}, {pipeline_mode = #tpu.pipeline_mode<synchronous>, transform_indices = @transform_27, window_bounds = array<i64: 768, 384>}, {pipeline_mode = #tpu.pipeline_mode<synchronous>, transform_indices = @transform_28, window_bounds = array<i64: 1, 384>}, {pipeline_mode = #tpu.pipeline_mode<synchronous>, transform_indices = @transform_29, window_bounds = array<i64: 384, 384>}, {pipeline_mode = #tpu.pipeline_mode<synchronous>, transform_indices = @transform_30, window_bounds = array<i64: 1, 384>}, {pipeline_mode = #tpu.pipeline_mode<synchronous>, transform_indices = @transform_31, window_bounds = array<i64: 384, 384>}, {pipeline_mode = #tpu.pipeline_mode<synchronous>, transform_indices = @transform_32, window_bounds = array<i64: 1, 384>}, {pipeline_mode = #tpu.pipeline_mode<synchronous>, transform_indices = @transform_33, window_bounds = array<i64: 384, 384>}, {pipeline_mode = #tpu.pipeline_mode<synchronous>, transform_indices = @transform_34, window_bounds = array<i64: 1, 384>}, {pipeline_mode = #tpu.pipeline_mode<synchronous>, transform_indices = @transform_35, window_bounds = array<i64: 384, 384>}, {pipeline_mode = #tpu.pipeline_mode<synchronous>, transform_indices = @transform_36, window_bounds = array<i64: 1, 384>}, {transform_indices = @transform_37, window_bounds = array<i64: 8, 128>}]} {
    %c0 = arith.constant 0 : index
    %c0_0 = arith.constant 0 : index
    %0 = vector.load %arg2[%c0, %c0_0] : memref<8x1xf32, #tpu.memory_space<vmem>>, vector<8x1xf32>
    %c0_1 = arith.constant 0 : index
    %c0_2 = arith.constant 0 : index
    %1 = vector.load %arg3[%c0_1, %c0_2] : memref<2x128xf32, #tpu.memory_space<vmem>>, vector<1x128xf32>
    %2 = vector.broadcast %0 : vector<8x1xf32> to vector<8x128xf32>
    %3 = vector.broadcast %1 : vector<1x128xf32> to vector<8x128xf32>
    %4 = arith.mulf %2, %3 : vector<8x128xf32>
    %c1 = arith.constant 1 : index
    %c0_3 = arith.constant 0 : index
    %5 = vector.load %arg3[%c1, %c0_3] : memref<2x128xf32, #tpu.memory_space<vmem>>, vector<1x128xf32>
    %6 = vector.broadcast %5 : vector<1x128xf32> to vector<8x128xf32>
    %7 = arith.addf %4, %6 : vector<8x128xf32>
    %8 = math.sin %7 : vector<8x128xf32>
    %9 = arith.truncf %8 : vector<8x128xf32> to vector<8x128xbf16>
    %c0_4 = arith.constant 0 : index
    %c0_5 = arith.constant 0 : index
    %10 = vector.load %arg4[%c0_4, %c0_5] : memref<128x256xbf16, #tpu.memory_space<vmem>>, vector<128x256xbf16>
    %cst = arith.constant dense<0.000000e+00> : vector<8x256xf32>
    %11 = tpu.matmul %9, %10, %cst {dimension_numbers = #tpu.dot_dimension_numbers<[1], [0], [0], [1], [0, 0, 1, 1], [], []>} : vector<8x128xbf16>, vector<128x256xbf16>, vector<8x256xf32> -> vector<8x256xf32>
    %c0_6 = arith.constant 0 : index
    %c0_7 = arith.constant 0 : index
    %12 = vector.load %arg5[%c0_6, %c0_7] : memref<1x256xf32, #tpu.memory_space<vmem>>, vector<1x256xf32>
    %13 = vector.broadcast %12 : vector<1x256xf32> to vector<8x256xf32>
    %14 = arith.addf %11, %13 : vector<8x256xf32>
    %cst_8 = arith.constant 0.000000e+00 : f32
    %15 = vector.broadcast %cst_8 : f32 to vector<8x256xf32>
    %16 = arith.maximumf %14, %15 : vector<8x256xf32>
    %17 = math.absf %14 : vector<8x256xf32>
    %cst_9 = arith.constant 0.000000e+00 : f32
    %18 = vector.broadcast %cst_9 : f32 to vector<8x256xf32>
    %19 = arith.subf %18, %17 : vector<8x256xf32>
    %20 = math.exp %19 : vector<8x256xf32>
    %21 = math.log1p %20 : vector<8x256xf32>
    %22 = arith.addf %16, %21 : vector<8x256xf32>
    %23 = arith.truncf %22 : vector<8x256xf32> to vector<8x256xbf16>
    %c0_10 = arith.constant 0 : index
    %c0_11 = arith.constant 0 : index
    %24 = vector.load %arg1[%c0_10, %c0_11] : memref<8x128xf32, #tpu.memory_space<vmem>>, vector<8x128xf32>
    %25 = arith.truncf %24 : vector<8x128xf32> to vector<8x128xbf16>
    %c0_12 = arith.constant 0 : index
    %c0_13 = arith.constant 0 : index
    %26 = vector.load %arg8[%c0_12, %c0_13] : memref<128x384xbf16, #tpu.memory_space<vmem>>, vector<128x384xbf16>
    %cst_14 = arith.constant dense<0.000000e+00> : vector<8x384xf32>
    %27 = tpu.matmul %25, %26, %cst_14 {dimension_numbers = #tpu.dot_dimension_numbers<[1], [0], [0], [1], [0, 0, 1, 1], [], []>} : vector<8x128xbf16>, vector<128x384xbf16>, vector<8x384xf32> -> vector<8x384xf32>
    %c0_15 = arith.constant 0 : index
    %c0_16 = arith.constant 0 : index
    %28 = vector.load %arg9[%c0_15, %c0_16] : memref<1x384xf32, #tpu.memory_space<vmem>>, vector<1x384xf32>
    %29 = vector.broadcast %28 : vector<1x384xf32> to vector<8x384xf32>
    %30 = arith.addf %27, %29 : vector<8x384xf32>
    %cst_17 = arith.constant 0.000000e+00 : f32
    %31 = vector.broadcast %cst_17 : f32 to vector<8x384xf32>
    %32 = arith.maximumf %30, %31 : vector<8x384xf32>
    %33 = math.absf %30 : vector<8x384xf32>
    %cst_18 = arith.constant 0.000000e+00 : f32
    %34 = vector.broadcast %cst_18 : f32 to vector<8x384xf32>
    %35 = arith.subf %34, %33 : vector<8x384xf32>
    %36 = math.exp %35 : vector<8x384xf32>
    %37 = math.log1p %36 : vector<8x384xf32>
    %38 = arith.addf %32, %37 : vector<8x384xf32>
    %39 = arith.truncf %38 : vector<8x384xf32> to vector<8x384xbf16>
    %c0_19 = arith.constant 0 : index
    %c0_20 = arith.constant 0 : index
    %40 = vector.load %arg10[%c0_19, %c0_20] : memref<384x384xbf16, #tpu.memory_space<vmem>>, vector<384x384xbf16>
    %c0_21 = arith.constant 0 : index
    %c0_22 = arith.constant 0 : index
    %41 = vector.load %arg11[%c0_21, %c0_22] : memref<1x384xf32, #tpu.memory_space<vmem>>, vector<1x384xf32>
    %cst_23 = arith.constant dense<0.000000e+00> : vector<8x384xf32>
    %42 = tpu.matmul %39, %40, %cst_23 {dimension_numbers = #tpu.dot_dimension_numbers<[1], [0], [0], [1], [0, 0, 1, 1], [], []>} : vector<8x384xbf16>, vector<384x384xbf16>, vector<8x384xf32> -> vector<8x384xf32>
    %43 = vector.broadcast %41 : vector<1x384xf32> to vector<8x384xf32>
    %44 = arith.addf %42, %43 : vector<8x384xf32>
    %cst_24 = arith.constant 0.000000e+00 : f32
    %45 = vector.broadcast %cst_24 : f32 to vector<8x384xf32>
    %46 = arith.maximumf %44, %45 : vector<8x384xf32>
    %47 = math.absf %44 : vector<8x384xf32>
    %cst_25 = arith.constant 0.000000e+00 : f32
    %48 = vector.broadcast %cst_25 : f32 to vector<8x384xf32>
    %49 = arith.subf %48, %47 : vector<8x384xf32>
    %50 = math.exp %49 : vector<8x384xf32>
    %51 = math.log1p %50 : vector<8x384xf32>
    %52 = arith.addf %46, %51 : vector<8x384xf32>
    %53 = arith.truncf %52 : vector<8x384xf32> to vector<8x384xbf16>
    %c0_26 = arith.constant 0 : index
    %c0_27 = arith.constant 0 : index
    %54 = vector.load %arg12[%c0_26, %c0_27] : memref<384x384xbf16, #tpu.memory_space<vmem>>, vector<384x384xbf16>
    %c0_28 = arith.constant 0 : index
    %c0_29 = arith.constant 0 : index
    %55 = vector.load %arg13[%c0_28, %c0_29] : memref<1x384xf32, #tpu.memory_space<vmem>>, vector<1x384xf32>
    %cst_30 = arith.constant dense<0.000000e+00> : vector<8x384xf32>
    %56 = tpu.matmul %53, %54, %cst_30 {dimension_numbers = #tpu.dot_dimension_numbers<[1], [0], [0], [1], [0, 0, 1, 1], [], []>} : vector<8x384xbf16>, vector<384x384xbf16>, vector<8x384xf32> -> vector<8x384xf32>
    %57 = vector.broadcast %55 : vector<1x384xf32> to vector<8x384xf32>
    %58 = arith.addf %56, %57 : vector<8x384xf32>
    %cst_31 = arith.constant 0.000000e+00 : f32
    %59 = vector.broadcast %cst_31 : f32 to vector<8x384xf32>
    %60 = arith.maximumf %58, %59 : vector<8x384xf32>
    %61 = math.absf %58 : vector<8x384xf32>
    %cst_32 = arith.constant 0.000000e+00 : f32
    %62 = vector.broadcast %cst_32 : f32 to vector<8x384xf32>
    %63 = arith.subf %62, %61 : vector<8x384xf32>
    %64 = math.exp %63 : vector<8x384xf32>
    %65 = math.log1p %64 : vector<8x384xf32>
    %66 = arith.addf %60, %65 : vector<8x384xf32>
    %67 = arith.truncf %66 : vector<8x384xf32> to vector<8x384xbf16>
    %c0_33 = arith.constant 0 : index
    %c0_34 = arith.constant 0 : index
    %68 = vector.load %arg14[%c0_33, %c0_34] : memref<384x384xbf16, #tpu.memory_space<vmem>>, vector<384x384xbf16>
    %c0_35 = arith.constant 0 : index
    %c0_36 = arith.constant 0 : index
    %69 = vector.load %arg15[%c0_35, %c0_36] : memref<1x384xf32, #tpu.memory_space<vmem>>, vector<1x384xf32>
    %cst_37 = arith.constant dense<0.000000e+00> : vector<8x384xf32>
    %70 = tpu.matmul %67, %68, %cst_37 {dimension_numbers = #tpu.dot_dimension_numbers<[1], [0], [0], [1], [0, 0, 1, 1], [], []>} : vector<8x384xbf16>, vector<384x384xbf16>, vector<8x384xf32> -> vector<8x384xf32>
    %71 = vector.broadcast %69 : vector<1x384xf32> to vector<8x384xf32>
    %72 = arith.addf %70, %71 : vector<8x384xf32>
    %cst_38 = arith.constant 0.000000e+00 : f32
    %73 = vector.broadcast %cst_38 : f32 to vector<8x384xf32>
    %74 = arith.maximumf %72, %73 : vector<8x384xf32>
    %75 = math.absf %72 : vector<8x384xf32>
    %cst_39 = arith.constant 0.000000e+00 : f32
    %76 = vector.broadcast %cst_39 : f32 to vector<8x384xf32>
    %77 = arith.subf %76, %75 : vector<8x384xf32>
    %78 = math.exp %77 : vector<8x384xf32>
    %79 = math.log1p %78 : vector<8x384xf32>
    %80 = arith.addf %74, %79 : vector<8x384xf32>
    %81 = arith.truncf %80 : vector<8x384xf32> to vector<8x384xbf16>
    %c0_40 = arith.constant 0 : index
    %c0_41 = arith.constant 0 : index
    %82 = vector.load %arg16[%c0_40, %c0_41] : memref<384x384xbf16, #tpu.memory_space<vmem>>, vector<384x384xbf16>
    %c0_42 = arith.constant 0 : index
    %c0_43 = arith.constant 0 : index
    %83 = vector.load %arg17[%c0_42, %c0_43] : memref<1x384xf32, #tpu.memory_space<vmem>>, vector<1x384xf32>
    %cst_44 = arith.constant dense<0.000000e+00> : vector<8x384xf32>
    %84 = tpu.matmul %81, %82, %cst_44 {dimension_numbers = #tpu.dot_dimension_numbers<[1], [0], [0], [1], [0, 0, 1, 1], [], []>} : vector<8x384xbf16>, vector<384x384xbf16>, vector<8x384xf32> -> vector<8x384xf32>
    %85 = vector.broadcast %83 : vector<1x384xf32> to vector<8x384xf32>
    %86 = arith.addf %84, %85 : vector<8x384xf32>
    %87 = arith.truncf %86 : vector<8x384xf32> to vector<8x384xbf16>
    %c0_45 = arith.constant 0 : index
    %c0_46 = arith.constant 0 : index
    %88 = vector.load %arg18[%c0_45, %c0_46] : memref<768x384xbf16, #tpu.memory_space<vmem>>, vector<384x384xbf16>
    %cst_47 = arith.constant dense<0.000000e+00> : vector<8x384xf32>
    %89 = tpu.matmul %39, %88, %cst_47 {dimension_numbers = #tpu.dot_dimension_numbers<[1], [0], [0], [1], [0, 0, 1, 1], [], []>} : vector<8x384xbf16>, vector<384x384xbf16>, vector<8x384xf32> -> vector<8x384xf32>
    %c384 = arith.constant 384 : index
    %c0_48 = arith.constant 0 : index
    %90 = vector.load %arg18[%c384, %c0_48] : memref<768x384xbf16, #tpu.memory_space<vmem>>, vector<384x384xbf16>
    %cst_49 = arith.constant dense<0.000000e+00> : vector<8x384xf32>
    %91 = tpu.matmul %87, %90, %cst_49 {dimension_numbers = #tpu.dot_dimension_numbers<[1], [0], [0], [1], [0, 0, 1, 1], [], []>} : vector<8x384xbf16>, vector<384x384xbf16>, vector<8x384xf32> -> vector<8x384xf32>
    %92 = arith.addf %89, %91 : vector<8x384xf32>
    %c0_50 = arith.constant 0 : index
    %c0_51 = arith.constant 0 : index
    %93 = vector.load %arg19[%c0_50, %c0_51] : memref<1x384xf32, #tpu.memory_space<vmem>>, vector<1x384xf32>
    %94 = vector.broadcast %93 : vector<1x384xf32> to vector<8x384xf32>
    %95 = arith.addf %92, %94 : vector<8x384xf32>
    %cst_52 = arith.constant 0.000000e+00 : f32
    %96 = vector.broadcast %cst_52 : f32 to vector<8x384xf32>
    %97 = arith.maximumf %95, %96 : vector<8x384xf32>
    %98 = math.absf %95 : vector<8x384xf32>
    %cst_53 = arith.constant 0.000000e+00 : f32
    %99 = vector.broadcast %cst_53 : f32 to vector<8x384xf32>
    %100 = arith.subf %99, %98 : vector<8x384xf32>
    %101 = math.exp %100 : vector<8x384xf32>
    %102 = math.log1p %101 : vector<8x384xf32>
    %103 = arith.addf %97, %102 : vector<8x384xf32>
    %104 = arith.truncf %103 : vector<8x384xf32> to vector<8x384xbf16>
    %c0_54 = arith.constant 0 : index
    %c0_55 = arith.constant 0 : index
    %105 = vector.load %arg20[%c0_54, %c0_55] : memref<384x384xbf16, #tpu.memory_space<vmem>>, vector<384x384xbf16>
    %c0_56 = arith.constant 0 : index
    %c0_57 = arith.constant 0 : index
    %106 = vector.load %arg21[%c0_56, %c0_57] : memref<1x384xf32, #tpu.memory_space<vmem>>, vector<1x384xf32>
    %cst_58 = arith.constant dense<0.000000e+00> : vector<8x384xf32>
    %107 = tpu.matmul %104, %105, %cst_58 {dimension_numbers = #tpu.dot_dimension_numbers<[1], [0], [0], [1], [0, 0, 1, 1], [], []>} : vector<8x384xbf16>, vector<384x384xbf16>, vector<8x384xf32> -> vector<8x384xf32>
    %108 = vector.broadcast %106 : vector<1x384xf32> to vector<8x384xf32>
    %109 = arith.addf %107, %108 : vector<8x384xf32>
    %cst_59 = arith.constant 0.000000e+00 : f32
    %110 = vector.broadcast %cst_59 : f32 to vector<8x384xf32>
    %111 = arith.maximumf %109, %110 : vector<8x384xf32>
    %112 = math.absf %109 : vector<8x384xf32>
    %cst_60 = arith.constant 0.000000e+00 : f32
    %113 = vector.broadcast %cst_60 : f32 to vector<8x384xf32>
    %114 = arith.subf %113, %112 : vector<8x384xf32>
    %115 = math.exp %114 : vector<8x384xf32>
    %116 = math.log1p %115 : vector<8x384xf32>
    %117 = arith.addf %111, %116 : vector<8x384xf32>
    %118 = arith.truncf %117 : vector<8x384xf32> to vector<8x384xbf16>
    %c0_61 = arith.constant 0 : index
    %c0_62 = arith.constant 0 : index
    %119 = vector.load %arg22[%c0_61, %c0_62] : memref<384x384xbf16, #tpu.memory_space<vmem>>, vector<384x384xbf16>
    %c0_63 = arith.constant 0 : index
    %c0_64 = arith.constant 0 : index
    %120 = vector.load %arg23[%c0_63, %c0_64] : memref<1x384xf32, #tpu.memory_space<vmem>>, vector<1x384xf32>
    %cst_65 = arith.constant dense<0.000000e+00> : vector<8x384xf32>
    %121 = tpu.matmul %118, %119, %cst_65 {dimension_numbers = #tpu.dot_dimension_numbers<[1], [0], [0], [1], [0, 0, 1, 1], [], []>} : vector<8x384xbf16>, vector<384x384xbf16>, vector<8x384xf32> -> vector<8x384xf32>
    %122 = vector.broadcast %120 : vector<1x384xf32> to vector<8x384xf32>
    %123 = arith.addf %121, %122 : vector<8x384xf32>
    %cst_66 = arith.constant 0.000000e+00 : f32
    %124 = vector.broadcast %cst_66 : f32 to vector<8x384xf32>
    %125 = arith.maximumf %123, %124 : vector<8x384xf32>
    %126 = math.absf %123 : vector<8x384xf32>
    %cst_67 = arith.constant 0.000000e+00 : f32
    %127 = vector.broadcast %cst_67 : f32 to vector<8x384xf32>
    %128 = arith.subf %127, %126 : vector<8x384xf32>
    %129 = math.exp %128 : vector<8x384xf32>
    %130 = math.log1p %129 : vector<8x384xf32>
    %131 = arith.addf %125, %130 : vector<8x384xf32>
    %132 = arith.truncf %131 : vector<8x384xf32> to vector<8x384xbf16>
    %c0_68 = arith.constant 0 : index
    %c0_69 = arith.constant 0 : index
    %133 = vector.load %arg24[%c0_68, %c0_69] : memref<384x384xbf16, #tpu.memory_space<vmem>>, vector<384x384xbf16>
    %c0_70 = arith.constant 0 : index
    %c0_71 = arith.constant 0 : index
    %134 = vector.load %arg25[%c0_70, %c0_71] : memref<1x384xf32, #tpu.memory_space<vmem>>, vector<1x384xf32>
    %cst_72 = arith.constant dense<0.000000e+00> : vector<8x384xf32>
    %135 = tpu.matmul %132, %133, %cst_72 {dimension_numbers = #tpu.dot_dimension_numbers<[1], [0], [0], [1], [0, 0, 1, 1], [], []>} : vector<8x384xbf16>, vector<384x384xbf16>, vector<8x384xf32> -> vector<8x384xf32>
    %136 = vector.broadcast %134 : vector<1x384xf32> to vector<8x384xf32>
    %137 = arith.addf %135, %136 : vector<8x384xf32>
    %cst_73 = arith.constant 0.000000e+00 : f32
    %138 = vector.broadcast %cst_73 : f32 to vector<8x384xf32>
    %139 = arith.maximumf %137, %138 : vector<8x384xf32>
    %140 = math.absf %137 : vector<8x384xf32>
    %cst_74 = arith.constant 0.000000e+00 : f32
    %141 = vector.broadcast %cst_74 : f32 to vector<8x384xf32>
    %142 = arith.subf %141, %140 : vector<8x384xf32>
    %143 = math.exp %142 : vector<8x384xf32>
    %144 = math.log1p %143 : vector<8x384xf32>
    %145 = arith.addf %139, %144 : vector<8x384xf32>
    %146 = arith.truncf %145 : vector<8x384xf32> to vector<8x384xbf16>
    %c0_75 = arith.constant 0 : index
    %c0_76 = arith.constant 0 : index
    %147 = vector.load %arg26[%c0_75, %c0_76] : memref<384x384xbf16, #tpu.memory_space<vmem>>, vector<384x384xbf16>
    %c0_77 = arith.constant 0 : index
    %c0_78 = arith.constant 0 : index
    %148 = vector.load %arg27[%c0_77, %c0_78] : memref<1x384xf32, #tpu.memory_space<vmem>>, vector<1x384xf32>
    %cst_79 = arith.constant dense<0.000000e+00> : vector<8x384xf32>
    %149 = tpu.matmul %146, %147, %cst_79 {dimension_numbers = #tpu.dot_dimension_numbers<[1], [0], [0], [1], [0, 0, 1, 1], [], []>} : vector<8x384xbf16>, vector<384x384xbf16>, vector<8x384xf32> -> vector<8x384xf32>
    %150 = vector.broadcast %148 : vector<1x384xf32> to vector<8x384xf32>
    %151 = arith.addf %149, %150 : vector<8x384xf32>
    %152 = arith.truncf %151 : vector<8x384xf32> to vector<8x384xbf16>
    %c0_80 = arith.constant 0 : index
    %c0_81 = arith.constant 0 : index
    %153 = vector.load %arg28[%c0_80, %c0_81] : memref<768x384xbf16, #tpu.memory_space<vmem>>, vector<384x384xbf16>
    %cst_82 = arith.constant dense<0.000000e+00> : vector<8x384xf32>
    %154 = tpu.matmul %104, %153, %cst_82 {dimension_numbers = #tpu.dot_dimension_numbers<[1], [0], [0], [1], [0, 0, 1, 1], [], []>} : vector<8x384xbf16>, vector<384x384xbf16>, vector<8x384xf32> -> vector<8x384xf32>
    %c384_83 = arith.constant 384 : index
    %c0_84 = arith.constant 0 : index
    %155 = vector.load %arg28[%c384_83, %c0_84] : memref<768x384xbf16, #tpu.memory_space<vmem>>, vector<384x384xbf16>
    %cst_85 = arith.constant dense<0.000000e+00> : vector<8x384xf32>
    %156 = tpu.matmul %152, %155, %cst_85 {dimension_numbers = #tpu.dot_dimension_numbers<[1], [0], [0], [1], [0, 0, 1, 1], [], []>} : vector<8x384xbf16>, vector<384x384xbf16>, vector<8x384xf32> -> vector<8x384xf32>
    %157 = arith.addf %154, %156 : vector<8x384xf32>
    %c0_86 = arith.constant 0 : index
    %c0_87 = arith.constant 0 : index
    %158 = vector.load %arg29[%c0_86, %c0_87] : memref<1x384xf32, #tpu.memory_space<vmem>>, vector<1x384xf32>
    %159 = vector.broadcast %158 : vector<1x384xf32> to vector<8x384xf32>
    %160 = arith.addf %157, %159 : vector<8x384xf32>
    %cst_88 = arith.constant 0.000000e+00 : f32
    %161 = vector.broadcast %cst_88 : f32 to vector<8x384xf32>
    %162 = arith.maximumf %160, %161 : vector<8x384xf32>
    %163 = math.absf %160 : vector<8x384xf32>
    %cst_89 = arith.constant 0.000000e+00 : f32
    %164 = vector.broadcast %cst_89 : f32 to vector<8x384xf32>
    %165 = arith.subf %164, %163 : vector<8x384xf32>
    %166 = math.exp %165 : vector<8x384xf32>
    %167 = math.log1p %166 : vector<8x384xf32>
    %168 = arith.addf %162, %167 : vector<8x384xf32>
    %169 = arith.truncf %168 : vector<8x384xf32> to vector<8x384xbf16>
    %c0_90 = arith.constant 0 : index
    %c0_91 = arith.constant 0 : index
    %170 = vector.load %arg30[%c0_90, %c0_91] : memref<384x384xbf16, #tpu.memory_space<vmem>>, vector<384x384xbf16>
    %c0_92 = arith.constant 0 : index
    %c0_93 = arith.constant 0 : index
    %171 = vector.load %arg31[%c0_92, %c0_93] : memref<1x384xf32, #tpu.memory_space<vmem>>, vector<1x384xf32>
    %cst_94 = arith.constant dense<0.000000e+00> : vector<8x384xf32>
    %172 = tpu.matmul %169, %170, %cst_94 {dimension_numbers = #tpu.dot_dimension_numbers<[1], [0], [0], [1], [0, 0, 1, 1], [], []>} : vector<8x384xbf16>, vector<384x384xbf16>, vector<8x384xf32> -> vector<8x384xf32>
    %173 = vector.broadcast %171 : vector<1x384xf32> to vector<8x384xf32>
    %174 = arith.addf %172, %173 : vector<8x384xf32>
    %cst_95 = arith.constant 0.000000e+00 : f32
    %175 = vector.broadcast %cst_95 : f32 to vector<8x384xf32>
    %176 = arith.maximumf %174, %175 : vector<8x384xf32>
    %177 = math.absf %174 : vector<8x384xf32>
    %cst_96 = arith.constant 0.000000e+00 : f32
    %178 = vector.broadcast %cst_96 : f32 to vector<8x384xf32>
    %179 = arith.subf %178, %177 : vector<8x384xf32>
    %180 = math.exp %179 : vector<8x384xf32>
    %181 = math.log1p %180 : vector<8x384xf32>
    %182 = arith.addf %176, %181 : vector<8x384xf32>
    %183 = arith.truncf %182 : vector<8x384xf32> to vector<8x384xbf16>
    %c0_97 = arith.constant 0 : index
    %c0_98 = arith.constant 0 : index
    %184 = vector.load %arg32[%c0_97, %c0_98] : memref<384x384xbf16, #tpu.memory_space<vmem>>, vector<384x384xbf16>
    %c0_99 = arith.constant 0 : index
    %c0_100 = arith.constant 0 : index
    %185 = vector.load %arg33[%c0_99, %c0_100] : memref<1x384xf32, #tpu.memory_space<vmem>>, vector<1x384xf32>
    %cst_101 = arith.constant dense<0.000000e+00> : vector<8x384xf32>
    %186 = tpu.matmul %183, %184, %cst_101 {dimension_numbers = #tpu.dot_dimension_numbers<[1], [0], [0], [1], [0, 0, 1, 1], [], []>} : vector<8x384xbf16>, vector<384x384xbf16>, vector<8x384xf32> -> vector<8x384xf32>
    %187 = vector.broadcast %185 : vector<1x384xf32> to vector<8x384xf32>
    %188 = arith.addf %186, %187 : vector<8x384xf32>
    %cst_102 = arith.constant 0.000000e+00 : f32
    %189 = vector.broadcast %cst_102 : f32 to vector<8x384xf32>
    %190 = arith.maximumf %188, %189 : vector<8x384xf32>
    %191 = math.absf %188 : vector<8x384xf32>
    %cst_103 = arith.constant 0.000000e+00 : f32
    %192 = vector.broadcast %cst_103 : f32 to vector<8x384xf32>
    %193 = arith.subf %192, %191 : vector<8x384xf32>
    %194 = math.exp %193 : vector<8x384xf32>
    %195 = math.log1p %194 : vector<8x384xf32>
    %196 = arith.addf %190, %195 : vector<8x384xf32>
    %197 = arith.truncf %196 : vector<8x384xf32> to vector<8x384xbf16>
    %c0_104 = arith.constant 0 : index
    %c0_105 = arith.constant 0 : index
    %198 = vector.load %arg34[%c0_104, %c0_105] : memref<384x384xbf16, #tpu.memory_space<vmem>>, vector<384x384xbf16>
    %c0_106 = arith.constant 0 : index
    %c0_107 = arith.constant 0 : index
    %199 = vector.load %arg35[%c0_106, %c0_107] : memref<1x384xf32, #tpu.memory_space<vmem>>, vector<1x384xf32>
    %cst_108 = arith.constant dense<0.000000e+00> : vector<8x384xf32>
    %200 = tpu.matmul %197, %198, %cst_108 {dimension_numbers = #tpu.dot_dimension_numbers<[1], [0], [0], [1], [0, 0, 1, 1], [], []>} : vector<8x384xbf16>, vector<384x384xbf16>, vector<8x384xf32> -> vector<8x384xf32>
    %201 = vector.broadcast %199 : vector<1x384xf32> to vector<8x384xf32>
    %202 = arith.addf %200, %201 : vector<8x384xf32>
    %cst_109 = arith.constant 0.000000e+00 : f32
    %203 = vector.broadcast %cst_109 : f32 to vector<8x384xf32>
    %204 = arith.maximumf %202, %203 : vector<8x384xf32>
    %205 = math.absf %202 : vector<8x384xf32>
    %cst_110 = arith.constant 0.000000e+00 : f32
    %206 = vector.broadcast %cst_110 : f32 to vector<8x384xf32>
    %207 = arith.subf %206, %205 : vector<8x384xf32>
    %208 = math.exp %207 : vector<8x384xf32>
    %209 = math.log1p %208 : vector<8x384xf32>
    %210 = arith.addf %204, %209 : vector<8x384xf32>
    %211 = arith.truncf %210 : vector<8x384xf32> to vector<8x384xbf16>
    %c0_111 = arith.constant 0 : index
    %c0_112 = arith.constant 0 : index
    %212 = vector.load %arg36[%c0_111, %c0_112] : memref<384x384xbf16, #tpu.memory_space<vmem>>, vector<384x384xbf16>
    %c0_113 = arith.constant 0 : index
    %c0_114 = arith.constant 0 : index
    %213 = vector.load %arg37[%c0_113, %c0_114] : memref<1x384xf32, #tpu.memory_space<vmem>>, vector<1x384xf32>
    %cst_115 = arith.constant dense<0.000000e+00> : vector<8x384xf32>
    %214 = tpu.matmul %211, %212, %cst_115 {dimension_numbers = #tpu.dot_dimension_numbers<[1], [0], [0], [1], [0, 0, 1, 1], [], []>} : vector<8x384xbf16>, vector<384x384xbf16>, vector<8x384xf32> -> vector<8x384xf32>
    %215 = vector.broadcast %213 : vector<1x384xf32> to vector<8x384xf32>
    %216 = arith.addf %214, %215 : vector<8x384xf32>
    %217 = arith.truncf %216 : vector<8x384xf32> to vector<8x384xbf16>
    %c0_116 = arith.constant 0 : index
    %c0_117 = arith.constant 0 : index
    %218 = vector.load %arg6[%c0_116, %c0_117] : memref<1024x128xbf16, #tpu.memory_space<vmem>>, vector<384x128xbf16>
    %cst_118 = arith.constant dense<0.000000e+00> : vector<8x128xf32>
    %219 = tpu.matmul %169, %218, %cst_118 {dimension_numbers = #tpu.dot_dimension_numbers<[1], [0], [0], [1], [0, 0, 1, 1], [], []>} : vector<8x384xbf16>, vector<384x128xbf16>, vector<8x128xf32> -> vector<8x128xf32>
    %c384_119 = arith.constant 384 : index
    %c0_120 = arith.constant 0 : index
    %220 = vector.load %arg6[%c384_119, %c0_120] : memref<1024x128xbf16, #tpu.memory_space<vmem>>, vector<384x128xbf16>
    %cst_121 = arith.constant dense<0.000000e+00> : vector<8x128xf32>
    %221 = tpu.matmul %217, %220, %cst_121 {dimension_numbers = #tpu.dot_dimension_numbers<[1], [0], [0], [1], [0, 0, 1, 1], [], []>} : vector<8x384xbf16>, vector<384x128xbf16>, vector<8x128xf32> -> vector<8x128xf32>
    %222 = arith.addf %219, %221 : vector<8x128xf32>
    %c768 = arith.constant 768 : index
    %c0_122 = arith.constant 0 : index
    %223 = vector.load %arg6[%c768, %c0_122] : memref<1024x128xbf16, #tpu.memory_space<vmem>>, vector<256x128xbf16>
    %cst_123 = arith.constant dense<0.000000e+00> : vector<8x128xf32>
    %224 = tpu.matmul %23, %223, %cst_123 {dimension_numbers = #tpu.dot_dimension_numbers<[1], [0], [0], [1], [0, 0, 1, 1], [], []>} : vector<8x256xbf16>, vector<256x128xbf16>, vector<8x128xf32> -> vector<8x128xf32>
    %225 = arith.addf %222, %224 : vector<8x128xf32>
    %c0_124 = arith.constant 0 : index
    %c0_125 = arith.constant 0 : index
    %226 = vector.load %arg7[%c0_124, %c0_125] : memref<1x128xf32, #tpu.memory_space<vmem>>, vector<1x128xf32>
    %227 = vector.broadcast %226 : vector<1x128xf32> to vector<8x128xf32>
    %228 = arith.addf %225, %227 : vector<8x128xf32>
    %c0_126 = arith.constant 0 : index
    %c0_127 = arith.constant 0 : index
    %229 = vector.load %arg38[%c0_126, %c0_127] : memref<8x128xf32, #tpu.memory_space<vmem>>, vector<8x128xf32>
    tpu.vector_store %arg38[%c0_126, %c0_127], %228 {strides = array<i32>} : memref<8x128xf32, #tpu.memory_space<vmem>>, vector<8x128xf32>,
    return
  }
  func.func @transform_0(%arg0: i32) -> (i32, i32) {
    %c0_i32 = arith.constant 0 : i32
    %c0_i32_0 = arith.constant 0 : i32
    return %arg0, %c0_i32 : i32, i32
  }
  func.func @transform_1(%arg0: i32) -> (i32, i32) {
    %c0_i32 = arith.constant 0 : i32
    %c0_i32_0 = arith.constant 0 : i32
    return %arg0, %c0_i32 : i32, i32
  }
  func.func @transform_2(%arg0: i32) -> (i32, i32) {
    %c0_i32 = arith.constant 0 : i32
    %c0_i32_0 = arith.constant 0 : i32
    %c0_i32_1 = arith.constant 0 : i32
    return %c0_i32, %c0_i32_0 : i32, i32
  }
  func.func @transform_3(%arg0: i32) -> (i32, i32) {
    %c0_i32 = arith.constant 0 : i32
    %c0_i32_0 = arith.constant 0 : i32
    %c0_i32_1 = arith.constant 0 : i32
    return %c0_i32, %c0_i32_0 : i32, i32
  }
  func.func @transform_4(%arg0: i32) -> (i32, i32) {
    %c0_i32 = arith.constant 0 : i32
    %c0_i32_0 = arith.constant 0 : i32
    %c0_i32_1 = arith.constant 0 : i32
    return %c0_i32, %c0_i32_0 : i32, i32
  }
  func.func @transform_5(%arg0: i32) -> (i32, i32) {
    %c0_i32 = arith.constant 0 : i32
    %c0_i32_0 = arith.constant 0 : i32
    %c0_i32_1 = arith.constant 0 : i32
    return %c0_i32, %c0_i32_0 : i32, i32
  }
  func.func @transform_6(%arg0: i32) -> (i32, i32) {
    %c0_i32 = arith.constant 0 : i32
    %c0_i32_0 = arith.constant 0 : i32
    %c0_i32_1 = arith.constant 0 : i32
    return %c0_i32, %c0_i32_0 : i32, i32
  }
  func.func @transform_7(%arg0: i32) -> (i32, i32) {
    %c0_i32 = arith.constant 0 : i32
    %c0_i32_0 = arith.constant 0 : i32
    %c0_i32_1 = arith.constant 0 : i32
    return %c0_i32, %c0_i32_0 : i32, i32
  }
  func.func @transform_8(%arg0: i32) -> (i32, i32) {
    %c0_i32 = arith.constant 0 : i32
    %c0_i32_0 = arith.constant 0 : i32
    %c0_i32_1 = arith.constant 0 : i32
    return %c0_i32, %c0_i32_0 : i32, i32
  }
  func.func @transform_9(%arg0: i32) -> (i32, i32) {
    %c0_i32 = arith.constant 0 : i32
    %c0_i32_0 = arith.constant 0 : i32
    %c0_i32_1 = arith.constant 0 : i32
    return %c0_i32, %c0_i32_0 : i32, i32
  }
  func.func @transform_10(%arg0: i32) -> (i32, i32) {
    %c0_i32 = arith.constant 0 : i32
    %c0_i32_0 = arith.constant 0 : i32
    %c0_i32_1 = arith.constant 0 : i32
    return %c0_i32, %c0_i32_0 : i32, i32
  }
  func.func @transform_11(%arg0: i32) -> (i32, i32) {
    %c0_i32 = arith.constant 0 : i32
    %c0_i32_0 = arith.constant 0 : i32
    %c0_i32_1 = arith.constant 0 : i32
    return %c0_i32, %c0_i32_0 : i32, i32
  }
  func.func @transform_12(%arg0: i32) -> (i32, i32) {
    %c0_i32 = arith.constant 0 : i32
    %c0_i32_0 = arith.constant 0 : i32
    %c0_i32_1 = arith.constant 0 : i32
    return %c0_i32, %c0_i32_0 : i32, i32
  }
  func.func @transform_13(%arg0: i32) -> (i32, i32) {
    %c0_i32 = arith.constant 0 : i32
    %c0_i32_0 = arith.constant 0 : i32
    %c0_i32_1 = arith.constant 0 : i32
    return %c0_i32, %c0_i32_0 : i32, i32
  }
  func.func @transform_14(%arg0: i32) -> (i32, i32) {
    %c0_i32 = arith.constant 0 : i32
    %c0_i32_0 = arith.constant 0 : i32
    %c0_i32_1 = arith.constant 0 : i32
    return %c0_i32, %c0_i32_0 : i32, i32
  }
  func.func @transform_15(%arg0: i32) -> (i32, i32) {
    %c0_i32 = arith.constant 0 : i32
    %c0_i32_0 = arith.constant 0 : i32
    %c0_i32_1 = arith.constant 0 : i32
    return %c0_i32, %c0_i32_0 : i32, i32
  }
  func.func @transform_16(%arg0: i32) -> (i32, i32) {
    %c0_i32 = arith.constant 0 : i32
    %c0_i32_0 = arith.constant 0 : i32
    %c0_i32_1 = arith.constant 0 : i32
    return %c0_i32, %c0_i32_0 : i32, i32
  }
  func.func @transform_17(%arg0: i32) -> (i32, i32) {
    %c0_i32 = arith.constant 0 : i32
    %c0_i32_0 = arith.constant 0 : i32
    %c0_i32_1 = arith.constant 0 : i32
    return %c0_i32, %c0_i32_0 : i32, i32
  }
  func.func @transform_18(%arg0: i32) -> (i32, i32) {
    %c0_i32 = arith.constant 0 : i32
    %c0_i32_0 = arith.constant 0 : i32
    %c0_i32_1 = arith.constant 0 : i32
    return %c0_i32, %c0_i32_0 : i32, i32
  }
  func.func @transform_19(%arg0: i32) -> (i32, i32) {
    %c0_i32 = arith.constant 0 : i32
    %c0_i32_0 = arith.constant 0 : i32
    %c0_i32_1 = arith.constant 0 : i32
    return %c0_i32, %c0_i32_0 : i32, i32
  }
  func.func @transform_20(%arg0: i32) -> (i32, i32) {
    %c0_i32 = arith.constant 0 : i32
    %c0_i32_0 = arith.constant 0 : i32
    %c0_i32_1 = arith.constant 0 : i32
    return %c0_i32, %c0_i32_0 : i32, i32
  }
  func.func @transform_21(%arg0: i32) -> (i32, i32) {
    %c0_i32 = arith.constant 0 : i32
    %c0_i32_0 = arith.constant 0 : i32
    %c0_i32_1 = arith.constant 0 : i32
    return %c0_i32, %c0_i32_0 : i32, i32
  }
  func.func @transform_22(%arg0: i32) -> (i32, i32) {
    %c0_i32 = arith.constant 0 : i32
    %c0_i32_0 = arith.constant 0 : i32
    %c0_i32_1 = arith.constant 0 : i32
    return %c0_i32, %c0_i32_0 : i32, i32
  }
  func.func @transform_23(%arg0: i32) -> (i32, i32) {
    %c0_i32 = arith.constant 0 : i32
    %c0_i32_0 = arith.constant 0 : i32
    %c0_i32_1 = arith.constant 0 : i32
    return %c0_i32, %c0_i32_0 : i32, i32
  }
  func.func @transform_24(%arg0: i32) -> (i32, i32) {
    %c0_i32 = arith.constant 0 : i32
    %c0_i32_0 = arith.constant 0 : i32
    %c0_i32_1 = arith.constant 0 : i32
    return %c0_i32, %c0_i32_0 : i32, i32
  }
  func.func @transform_25(%arg0: i32) -> (i32, i32) {
    %c0_i32 = arith.constant 0 : i32
    %c0_i32_0 = arith.constant 0 : i32
    %c0_i32_1 = arith.constant 0 : i32
    return %c0_i32, %c0_i32_0 : i32, i32
  }
  func.func @transform_26(%arg0: i32) -> (i32, i32) {
    %c0_i32 = arith.constant 0 : i32
    %c0_i32_0 = arith.constant 0 : i32
    %c0_i32_1 = arith.constant 0 : i32
    return %c0_i32, %c0_i32_0 : i32, i32
  }
  func.func @transform_27(%arg0: i32) -> (i32, i32) {
    %c0_i32 = arith.constant 0 : i32
    %c0_i32_0 = arith.constant 0 : i32
    %c0_i32_1 = arith.constant 0 : i32
    return %c0_i32, %c0_i32_0 : i32, i32
  }
  func.func @transform_28(%arg0: i32) -> (i32, i32) {
    %c0_i32 = arith.constant 0 : i32
    %c0_i32_0 = arith.constant 0 : i32
    %c0_i32_1 = arith.constant 0 : i32
    return %c0_i32, %c0_i32_0 : i32, i32
  }
  func.func @transform_29(%arg0: i32) -> (i32, i32) {
    %c0_i32 = arith.constant 0 : i32
    %c0_i32_0 = arith.constant 0 : i32
    %c0_i32_1 = arith.constant 0 : i32
    return %c0_i32, %c0_i32_0 : i32, i32
  }
  func.func @transform_30(%arg0: i32) -> (i32, i32) {
    %c0_i32 = arith.constant 0 : i32
    %c0_i32_0 = arith.constant 0 : i32
    %c0_i32_1 = arith.constant 0 : i32
    return %c0_i32, %c0_i32_0 : i32, i32
  }
  func.func @transform_31(%arg0: i32) -> (i32, i32) {
    %c0_i32 = arith.constant 0 : i32
    %c0_i32_0 = arith.constant 0 : i32
    %c0_i32_1 = arith.constant 0 : i32
    return %c0_i32, %c0_i32_0 : i32, i32
  }
  func.func @transform_32(%arg0: i32) -> (i32, i32) {
    %c0_i32 = arith.constant 0 : i32
    %c0_i32_0 = arith.constant 0 : i32
    %c0_i32_1 = arith.constant 0 : i32
    return %c0_i32, %c0_i32_0 : i32, i32
  }
  func.func @transform_33(%arg0: i32) -> (i32, i32) {
    %c0_i32 = arith.constant 0 : i32
    %c0_i32_0 = arith.constant 0 : i32
    %c0_i32_1 = arith.constant 0 : i32
    return %c0_i32, %c0_i32_0 : i32, i32
  }
  func.func @transform_34(%arg0: i32) -> (i32, i32) {
    %c0_i32 = arith.constant 0 : i32
    %c0_i32_0 = arith.constant 0 : i32
    %c0_i32_1 = arith.constant 0 : i32
    return %c0_i32, %c0_i32_0 : i32, i32
  }
  func.func @transform_35(%arg0: i32) -> (i32, i32) {
    %c0_i32 = arith.constant 0 : i32
    %c0_i32_0 = arith.constant 0 : i32
    %c0_i32_1 = arith.constant 0 : i32
    return %c0_i32, %c0_i32_0 : i32, i32
  }
  func.func @transform_36(%arg0: i32) -> (i32, i32) {
    %c0_i32 = arith.constant 0 : i32
    %c0_i32_0 = arith.constant 0 : i32
    %c0_i32_1 = arith.constant 0 : i32
    return %c0_i32, %c0_i32_0 : i32, i32
  }
  func.func @transform_37(%arg0: i32) -> (i32, i32) {
    %c0_i32 = arith.constant 0 : i32
    %c0_i32_0 = arith.constant 0 : i32
    return %arg0, %c0_i32 : i32, i32
  }
}

</mosaic_0001>

<llo_original>
// kernel: tpu_custom_call.1
$region0: #{tpu_custom_call.1}
  #allocation0 [shape = 'u32[]', space=smem, size = 0x4, offset = 0x4, fixed_abs, tag = 'smem constant byte address 0x4 - core index']
  #allocation1 [shape = 'u32[144,128]{1,0:T(1,128)}', space=vmem, size = 0x12000, scoped, tag = 'internal scratch']
  %s0 = inlined_call_operand.smem [shape: u32[38], index: -1, kind: input, shape index: {}]
  %s1 = sld [smem:[%s0]]
  %s2 = scalar_lea.smem %s0, 1
  %s3 = sld [smem:[%s2]]
  %s4 = scalar_lea.smem %s0, 2
  %s5 = sld [smem:[%s4]]
  %s6 = scalar_lea.smem %s0, 3
  %s7 = sld [smem:[%s6]]
  %s8 = scalar_lea.smem %s0, 4
  %s9 = sld [smem:[%s8]]
  %s10 = scalar_lea.smem %s0, 5
  %s11 = sld [smem:[%s10]]
  %s12 = scalar_lea.smem %s0, 6
  %s13 = sld [smem:[%s12]]
  %s14 = scalar_lea.smem %s0, 7
  %s15 = sld [smem:[%s14]]
  %s16 = scalar_lea.smem %s0, 8
  %s17 = sld [smem:[%s16]]
  %s18 = scalar_lea.smem %s0, 9
  %s19 = sld [smem:[%s18]]
  %s20 = scalar_lea.smem %s0, 10
  %s21 = sld [smem:[%s20]]
  %s22 = scalar_lea.smem %s0, 11
  %s23 = sld [smem:[%s22]]
  %s24 = scalar_lea.smem %s0, 12
  %s25 = sld [smem:[%s24]]
  %s26 = scalar_lea.smem %s0, 13
  %s27 = sld [smem:[%s26]]
  %s28 = scalar_lea.smem %s0, 14
  %s29 = sld [smem:[%s28]]
  %s30 = scalar_lea.smem %s0, 15
  %s31 = sld [smem:[%s30]]
  %s32 = scalar_lea.smem %s0, 16
  %s33 = sld [smem:[%s32]]
  %s34 = scalar_lea.smem %s0, 17
  %s35 = sld [smem:[%s34]]
  %s36 = scalar_lea.smem %s0, 18
  %s37 = sld [smem:[%s36]]
  %s38 = scalar_lea.smem %s0, 19
  %s39 = sld [smem:[%s38]]
  %s40 = scalar_lea.smem %s0, 20
  %s41 = sld [smem:[%s40]]
  %s42 = scalar_lea.smem %s0, 21
  %s43 = sld [smem:[%s42]]
  %s44 = scalar_lea.smem %s0, 22
  %s45 = sld [smem:[%s44]]
  %s46 = scalar_lea.smem %s0, 23
  %s47 = sld [smem:[%s46]]
  %s48 = scalar_lea.smem %s0, 24
  %s49 = sld [smem:[%s48]]
  %s50 = scalar_lea.smem %s0, 25
  %s51 = sld [smem:[%s50]]
  %s52 = scalar_lea.smem %s0, 26
  %s53 = sld [smem:[%s52]]
  %s54 = scalar_lea.smem %s0, 27
  %s55 = sld [smem:[%s54]]
  %s56 = scalar_lea.smem %s0, 28
  %s57 = sld [smem:[%s56]]
  %s58 = scalar_lea.smem %s0, 29
  %s59 = sld [smem:[%s58]]
  %s60 = scalar_lea.smem %s0, 30
  %s61 = sld [smem:[%s60]]
  %s62 = scalar_lea.smem %s0, 31
  %s63 = sld [smem:[%s62]]
  %s64 = scalar_lea.smem %s0, 32
  %s65 = sld [smem:[%s64]]
  %s66 = scalar_lea.smem %s0, 33
  %s67 = sld [smem:[%s66]]
  %s68 = scalar_lea.smem %s0, 34
  %s69 = sld [smem:[%s68]]
  %s70 = scalar_lea.smem %s0, 35
  %s71 = sld [smem:[%s70]]
  %s72 = scalar_lea.smem %s0, 36
  %s73 = sld [smem:[%s72]]
  %s74 = scalar_lea.smem %s0, 37
  %s75 = sld [smem:[%s74]]
  %s76 = sld [smem:[#allocation0]]
  $region238: #{tpu_custom_call.1} parent=0
    _
  %s78 = ssub.s32 1, %s76
  %s79 = scalar_select 0, %s78, %s76
  $region1: #{tpu_custom_call.1} parent=0
    #allocation2 [shape = 'u8[1024]{0}', space=vmem, size = 0x400, scoped, tag = 'input window, operand 2, single buffered']
    #allocation3 [shape = 's32[1]{0}', space=sflag, size = 0x4, scoped, tag = 'scoped memory for tpu_custom_call.1']
    #allocation4 [shape = 's32[1]{0}', space=sflag, size = 0x4, scoped, tag = 'scoped memory for tpu_custom_call.1']
    #allocation5 [shape = 'u8[65536]{0}', space=vmem, size = 0x10000, scoped, tag = 'input window, operand 3, single buffered']
    #allocation6 [shape = 's32[1]{0}', space=sflag, size = 0x4, scoped, tag = 'scoped memory for tpu_custom_call.1']
    #allocation7 [shape = 'u8[1024]{0}', space=vmem, size = 0x400, scoped, tag = 'input window, operand 4, single buffered']
    #allocation8 [shape = 'u8[262144]{0}', space=vmem, size = 0x40000, scoped, tag = 'input window, operand 5, single buffered']
    #allocation9 [shape = 's32[1]{0}', space=sflag, size = 0x4, scoped, tag = 'scoped memory for tpu_custom_call.1']
    #allocation10 [shape = 'u8[512]{0}', space=vmem, size = 0x400, scoped, tag = 'input window, operand 6, single buffered']
    #allocation11 [shape = 'u8[98304]{0}', space=vmem, size = 0x18000, scoped, tag = 'input window, operand 7, single buffered']
    #allocation12 [shape = 's32[1]{0}', space=sflag, size = 0x4, scoped, tag = 'scoped memory for tpu_custom_call.1']
    #allocation13 [shape = 'u8[294912]{0}', space=vmem, size = 0x48000, scoped, tag = 'input window, operand 9, single buffered']
    #allocation14 [shape = 'u8[294912]{0}', space=vmem, size = 0x48000, scoped, tag = 'input window, operand 11, single buffered']
    #allocation15 [shape = 's32[1]{0}', space=sflag, size = 0x4, scoped, tag = 'scoped memory for tpu_custom_call.1']
    #allocation16 [shape = 'u8[294912]{0}', space=vmem, size = 0x48000, scoped, tag = 'input window, operand 13, single buffered']
    #allocation17 [shape = 'u8[294912]{0}', space=vmem, size = 0x48000, scoped, tag = 'input window, operand 15, single buffered']
    #allocation18 [shape = 's32[1]{0}', space=sflag, size = 0x4, scoped, tag = 'scoped memory for tpu_custom_call.1']
    #allocation19 [shape = 'u8[589824]{0}', space=vmem, size = 0x90000, scoped, tag = 'input window, operand 17, single buffered']
    #allocation20 [shape = 'u8[294912]{0}', space=vmem, size = 0x48000, scoped, tag = 'input window, operand 19, single buffered']
    #allocation21 [shape = 's32[1]{0}', space=sflag, size = 0x4, scoped, tag = 'scoped memory for tpu_custom_call.1']
    #allocation22 [shape = 'u8[294912]{0}', space=vmem, size = 0x48000, scoped, tag = 'input window, operand 21, single buffered']
    #allocation23 [shape = 'u8[294912]{0}', space=vmem, size = 0x48000, scoped, tag = 'input window, operand 23, single buffered']
    #allocation24 [shape = 's32[1]{0}', space=sflag, size = 0x4, scoped, tag = 'scoped memory for tpu_custom_call.1']
    #allocation25 [shape = 'u8[294912]{0}', space=vmem, size = 0x48000, scoped, tag = 'input window, operand 25, single buffered']
    #allocation26 [shape = 'u8[589824]{0}', space=vmem, size = 0x90000, scoped, tag = 'input window, operand 27, single buffered']
    #allocation27 [shape = 's32[1]{0}', space=sflag, size = 0x4, scoped, tag = 'scoped memory for tpu_custom_call.1']
    #allocation28 [shape = 'u8[294912]{0}', space=vmem, size = 0x48000, scoped, tag = 'input window, operand 29, single buffered']
    #allocation29 [shape = 'u8[294912]{0}', space=vmem, size = 0x48000, scoped, tag = 'input window, operand 31, single buffered']
    #allocation30 [shape = 's32[1]{0}', space=sflag, size = 0x4, scoped, tag = 'scoped memory for tpu_custom_call.1']
    #allocation31 [shape = 'u8[294912]{0}', space=vmem, size = 0x48000, scoped, tag = 'input window, operand 33, single buffered']
    #allocation32 [shape = 'u8[294912]{0}', space=vmem, size = 0x48000, scoped, tag = 'input window, operand 35, single buffered']
    #allocation33 [shape = 's32[1]{0}', space=sflag, size = 0x4, scoped, tag = 'scoped memory for tpu_custom_call.1']
    #allocation34 [shape = 'u8[4096]{0}', space=vmem, size = 0x1000, scoped, tag = 'output window, operand 0, single buffered']
    %80 = vsyncpa [#allocation3], 0
    %81 = vsyncpa [#allocation6], 0
    %82 = vsyncpa [#allocation9], 0
    %83 = vsyncpa [#allocation12], 0
    %84 = vsyncpa [#allocation15], 0
    %85 = vsyncpa [#allocation18], 0
    %86 = vsyncpa [#allocation21], 0
    %87 = vsyncpa [#allocation24], 0
    %88 = vsyncpa [#allocation27], 0
    %89 = vsyncpa [#allocation30], 0
    %90 = vsyncpa [#allocation33], 0
    %91 = vsyncpa [#allocation4], 0
    // Predicated region
    $region2: #{tpu_custom_call.1} parent=1 // pred_check
      _
    $region3: #{tpu_custom_call.1} parent=1 // pred_check_branch
      %93 = sbr.rel (0) target = $region5
    $region4: #{tpu_custom_call.1} parent=1 // pred_region
      _
    $region5: #{tpu_custom_call.1} parent=1 // pred_fallthru
      _
    // Predicated region
    $region6: #{tpu_custom_call.1} parent=1 // pred_check
      _
    $region7: #{tpu_custom_call.1} parent=1 // pred_check_branch
      %95 = sbr.rel (0) target = $region9
    $region8: #{tpu_custom_call.1} parent=1 // pred_region
      _
    $region9: #{tpu_custom_call.1} parent=1 // pred_fallthru
      _
    // Predicated region
    $region10: #{tpu_custom_call.1} parent=1 // pred_check
      _
    $region11: #{tpu_custom_call.1} parent=1 // pred_check_branch
      %97 = sbr.rel (0) target = $region13
    $region12: #{tpu_custom_call.1} parent=1 // pred_region
      %s99 = ssub.s32 32, 32
      %100 = vsyncadd [#allocation3], %s99
      %s102 = sshll.u32 [#allocation2], 4
      %s103 = int_to_ptr.vmem [resolvable:$true] %s102
      %105 = dma.hbm_to_vmem [thread:$0]  %s5, 32, %s103, [#allocation3]
    $region13: #{tpu_custom_call.1} parent=1 // pred_fallthru
      _
    // Predicated region
    $region14: #{tpu_custom_call.1} parent=1 // pred_check
      _
    $region15: #{tpu_custom_call.1} parent=1 // pred_check_branch
      %107 = sbr.rel (0) target = $region17
    $region16: #{tpu_custom_call.1} parent=1 // pred_region
      %s109 = ssub.s32 2048, 2048
      %110 = vsyncadd [#allocation6], %s109
      %s111 = sshll.u32 [#allocation5], 4
      %s112 = int_to_ptr.vmem [resolvable:$true] %s111
      %117 = dma.hbm_to_vmem [thread:$0]  %s7, 2048, %s112, [#allocation6], 128, 128, 8
    $region17: #{tpu_custom_call.1} parent=1 // pred_fallthru
      _
    // Predicated region
    $region18: #{tpu_custom_call.1} parent=1 // pred_check
      _
    $region19: #{tpu_custom_call.1} parent=1 // pred_check_branch
      %119 = sbr.rel (0) target = $region21
    $region20: #{tpu_custom_call.1} parent=1 // pred_region
      %s121 = ssub.s32 32, 32
      %122 = vsyncadd [#allocation6], %s121
      %s124 = sshll.u32 [#allocation7], 4
      %s125 = int_to_ptr.vmem [resolvable:$true] %s124
      %127 = dma.hbm_to_vmem [thread:$0]  %s9, 32, %s125, [#allocation6]
    $region21: #{tpu_custom_call.1} parent=1 // pred_fallthru
      _
    // Predicated region
    $region22: #{tpu_custom_call.1} parent=1 // pred_check
      _
    $region23: #{tpu_custom_call.1} parent=1 // pred_check_branch
      %129 = sbr.rel (0) target = $region25
    $region24: #{tpu_custom_call.1} parent=1 // pred_region
      %s131 = ssub.s32 8192, 8192
      %132 = vsyncadd [#allocation9], %s131
      %s133 = sshll.u32 [#allocation8], 4
      %s134 = int_to_ptr.vmem [resolvable:$true] %s133
      %139 = dma.hbm_to_vmem [thread:$0]  %s11, 8192, %s134, [#allocation9], 64, 64, 4
    $region25: #{tpu_custom_call.1} parent=1 // pred_fallthru
      _
    // Predicated region
    $region26: #{tpu_custom_call.1} parent=1 // pred_check
      _
    $region27: #{tpu_custom_call.1} parent=1 // pred_check_branch
      %141 = sbr.rel (0) target = $region29
    $region28: #{tpu_custom_call.1} parent=1 // pred_region
      %s143 = ssub.s32 16, 16
      %144 = vsyncadd [#allocation9], %s143
      %s146 = sshll.u32 [#allocation10], 4
      %s147 = int_to_ptr.vmem [resolvable:$true] %s146
      %149 = dma.hbm_to_vmem [thread:$0]  %s13, 16, %s147, [#allocation9]
    $region29: #{tpu_custom_call.1} parent=1 // pred_fallthru
      _
    // Predicated region
    $region30: #{tpu_custom_call.1} parent=1 // pred_check
      _
    $region31: #{tpu_custom_call.1} parent=1 // pred_check_branch
      %151 = sbr.rel (0) target = $region33
    $region32: #{tpu_custom_call.1} parent=1 // pred_region
      %s153 = ssub.s32 3072, 3072
      %154 = vsyncadd [#allocation12], %s153
      %s155 = sshll.u32 [#allocation11], 4
      %s156 = int_to_ptr.vmem [resolvable:$true] %s155
      %161 = dma.hbm_to_vmem [thread:$0]  %s15, 3072, %s156, [#allocation12], 192, 192, 12
    $region33: #{tpu_custom_call.1} parent=1 // pred_fallthru
      _
    // Predicated region
    $region34: #{tpu_custom_call.1} parent=1 // pred_check
      _
    $region35: #{tpu_custom_call.1} parent=1 // pred_check_branch
      %163 = sbr.rel (0) target = $region37
    $region36: #{tpu_custom_call.1} parent=1 // pred_region
      _
    $region37: #{tpu_custom_call.1} parent=1 // pred_fallthru
      _
    // Predicated region
    $region38: #{tpu_custom_call.1} parent=1 // pred_check
      _
    $region39: #{tpu_custom_call.1} parent=1 // pred_check_branch
      %165 = sbr.rel (0) target = $region41
    $region40: #{tpu_custom_call.1} parent=1 // pred_region
      %s167 = ssub.s32 9216, 9216
      %168 = vsyncadd [#allocation12], %s167
      %s169 = sshll.u32 [#allocation13], 4
      %s170 = int_to_ptr.vmem [resolvable:$true] %s169
      %175 = dma.hbm_to_vmem [thread:$0]  %s19, 9216, %s170, [#allocation12], 192, 192, 12
    $region41: #{tpu_custom_call.1} parent=1 // pred_fallthru
      _
    // Predicated region
    $region42: #{tpu_custom_call.1} parent=1 // pred_check
      _
    $region43: #{tpu_custom_call.1} parent=1 // pred_check_branch
      %177 = sbr.rel (0) target = $region45
    $region44: #{tpu_custom_call.1} parent=1 // pred_region
      _
    $region45: #{tpu_custom_call.1} parent=1 // pred_fallthru
      _
    // Predicated region
    $region46: #{tpu_custom_call.1} parent=1 // pred_check
      _
    $region47: #{tpu_custom_call.1} parent=1 // pred_check_branch
      %179 = sbr.rel (0) target = $region49
    $region48: #{tpu_custom_call.1} parent=1 // pred_region
      %s181 = ssub.s32 9216, 9216
      %182 = vsyncadd [#allocation15], %s181
      %s183 = sshll.u32 [#allocation14], 4
      %s184 = int_to_ptr.vmem [resolvable:$true] %s183
      %189 = dma.hbm_to_vmem [thread:$0]  %s23, 9216, %s184, [#allocation15], 192, 192, 12
    $region49: #{tpu_custom_call.1} parent=1 // pred_fallthru
      _
    // Predicated region
    $region50: #{tpu_custom_call.1} parent=1 // pred_check
      _
    $region51: #{tpu_custom_call.1} parent=1 // pred_check_branch
      %191 = sbr.rel (0) target = $region53
    $region52: #{tpu_custom_call.1} parent=1 // pred_region
      _
    $region53: #{tpu_custom_call.1} parent=1 // pred_fallthru
      _
    // Predicated region
    $region54: #{tpu_custom_call.1} parent=1 // pred_check
      _
    $region55: #{tpu_custom_call.1} parent=1 // pred_check_branch
      %193 = sbr.rel (0) target = $region57
    $region56: #{tpu_custom_call.1} parent=1 // pred_region
      %s195 = ssub.s32 9216, 9216
      %196 = vsyncadd [#allocation15], %s195
      %s197 = sshll.u32 [#allocation16], 4
      %s198 = int_to_ptr.vmem [resolvable:$true] %s197
      %203 = dma.hbm_to_vmem [thread:$0]  %s27, 9216, %s198, [#allocation15], 192, 192, 12
    $region57: #{tpu_custom_call.1} parent=1 // pred_fallthru
      _
    // Predicated region
    $region58: #{tpu_custom_call.1} parent=1 // pred_check
      _
    $region59: #{tpu_custom_call.1} parent=1 // pred_check_branch
      %205 = sbr.rel (0) target = $region61
    $region60: #{tpu_custom_call.1} parent=1 // pred_region
      _
    $region61: #{tpu_custom_call.1} parent=1 // pred_fallthru
      _
    // Predicated region
    $region62: #{tpu_custom_call.1} parent=1 // pred_check
      _
    $region63: #{tpu_custom_call.1} parent=1 // pred_check_branch
      %207 = sbr.rel (0) target = $region65
    $region64: #{tpu_custom_call.1} parent=1 // pred_region
      %s209 = ssub.s32 9216, 9216
      %210 = vsyncadd [#allocation18], %s209
      %s211 = sshll.u32 [#allocation17], 4
      %s212 = int_to_ptr.vmem [resolvable:$true] %s211
      %217 = dma.hbm_to_vmem [thread:$0]  %s31, 9216, %s212, [#allocation18], 192, 192, 12
    $region65: #{tpu_custom_call.1} parent=1 // pred_fallthru
      _
    // Predicated region
    $region66: #{tpu_custom_call.1} parent=1 // pred_check
      _
    $region67: #{tpu_custom_call.1} parent=1 // pred_check_branch
      %219 = sbr.rel (0) target = $region69
    $region68: #{tpu_custom_call.1} parent=1 // pred_region
      _
    $region69: #{tpu_custom_call.1} parent=1 // pred_fallthru
      _
    // Predicated region
    $region70: #{tpu_custom_call.1} parent=1 // pred_check
      _
    $region71: #{tpu_custom_call.1} parent=1 // pred_check_branch
      %221 = sbr.rel (0) target = $region73
    $region72: #{tpu_custom_call.1} parent=1 // pred_region
      %s223 = ssub.s32 18432, 18432
      %224 = vsyncadd [#allocation18], %s223
      %s225 = sshll.u32 [#allocation19], 4
      %s226 = int_to_ptr.vmem [resolvable:$true] %s225
      %231 = dma.hbm_to_vmem [thread:$0]  %s35, 18432, %s226, [#allocation18], 192, 192, 12
    $region73: #{tpu_custom_call.1} parent=1 // pred_fallthru
      _
    // Predicated region
    $region74: #{tpu_custom_call.1} parent=1 // pred_check
      _
    $region75: #{tpu_custom_call.1} parent=1 // pred_check_branch
      %233 = sbr.rel (0) target = $region77
    $region76: #{tpu_custom_call.1} parent=1 // pred_region
      _
    $region77: #{tpu_custom_call.1} parent=1 // pred_fallthru
      _
    // Predicated region
    $region78: #{tpu_custom_call.1} parent=1 // pred_check
      _
    $region79: #{tpu_custom_call.1} parent=1 // pred_check_branch
      %235 = sbr.rel (0) target = $region81
    $region80: #{tpu_custom_call.1} parent=1 // pred_region
      %s237 = ssub.s32 9216, 9216
      %238 = vsyncadd [#allocation21], %s237
      %s239 = sshll.u32 [#allocation20], 4
      %s240 = int_to_ptr.vmem [resolvable:$true] %s239
      %245 = dma.hbm_to_vmem [thread:$0]  %s39, 9216, %s240, [#allocation21], 192, 192, 12
    $region81: #{tpu_custom_call.1} parent=1 // pred_fallthru
      _
    // Predicated region
    $region82: #{tpu_custom_call.1} parent=1 // pred_check
      _
    $region83: #{tpu_custom_call.1} parent=1 // pred_check_branch
      %247 = sbr.rel (0) target = $region85
    $region84: #{tpu_custom_call.1} parent=1 // pred_region
      _
    $region85: #{tpu_custom_call.1} parent=1 // pred_fallthru
      _
    // Predicated region
    $region86: #{tpu_custom_call.1} parent=1 // pred_check
      _
    $region87: #{tpu_custom_call.1} parent=1 // pred_check_branch
      %249 = sbr.rel (0) target = $region89
    $region88: #{tpu_custom_call.1} parent=1 // pred_region
      %s251 = ssub.s32 9216, 9216
      %252 = vsyncadd [#allocation21], %s251
      %s253 = sshll.u32 [#allocation22], 4
      %s254 = int_to_ptr.vmem [resolvable:$true] %s253
      %259 = dma.hbm_to_vmem [thread:$0]  %s43, 9216, %s254, [#allocation21], 192, 192, 12
    $region89: #{tpu_custom_call.1} parent=1 // pred_fallthru
      _
    // Predicated region
    $region90: #{tpu_custom_call.1} parent=1 // pred_check
      _
    $region91: #{tpu_custom_call.1} parent=1 // pred_check_branch
      %261 = sbr.rel (0) target = $region93
    $region92: #{tpu_custom_call.1} parent=1 // pred_region
      _
    $region93: #{tpu_custom_call.1} parent=1 // pred_fallthru
      _
    // Predicated region
    $region94: #{tpu_custom_call.1} parent=1 // pred_check
      _
    $region95: #{tpu_custom_call.1} parent=1 // pred_check_branch
      %263 = sbr.rel (0) target = $region97
    $region96: #{tpu_custom_call.1} parent=1 // pred_region
      %s265 = ssub.s32 9216, 9216
      %266 = vsyncadd [#allocation24], %s265
      %s267 = sshll.u32 [#allocation23], 4
      %s268 = int_to_ptr.vmem [resolvable:$true] %s267
      %273 = dma.hbm_to_vmem [thread:$0]  %s47, 9216, %s268, [#allocation24], 192, 192, 12
    $region97: #{tpu_custom_call.1} parent=1 // pred_fallthru
      _
    // Predicated region
    $region98: #{tpu_custom_call.1} parent=1 // pred_check
      _
    $region99: #{tpu_custom_call.1} parent=1 // pred_check_branch
      %275 = sbr.rel (0) target = $region101
    $region100: #{tpu_custom_call.1} parent=1 // pred_region
      _
    $region101: #{tpu_custom_call.1} parent=1 // pred_fallthru
      _
    // Predicated region
    $region102: #{tpu_custom_call.1} parent=1 // pred_check
      _
    $region103: #{tpu_custom_call.1} parent=1 // pred_check_branch
      %277 = sbr.rel (0) target = $region105
    $region104: #{tpu_custom_call.1} parent=1 // pred_region
      %s279 = ssub.s32 9216, 9216
      %280 = vsyncadd [#allocation24], %s279
      %s281 = sshll.u32 [#allocation25], 4
      %s282 = int_to_ptr.vmem [resolvable:$true] %s281
      %287 = dma.hbm_to_vmem [thread:$0]  %s51, 9216, %s282, [#allocation24], 192, 192, 12
    $region105: #{tpu_custom_call.1} parent=1 // pred_fallthru
      _
    // Predicated region
    $region106: #{tpu_custom_call.1} parent=1 // pred_check
      _
    $region107: #{tpu_custom_call.1} parent=1 // pred_check_branch
      %289 = sbr.rel (0) target = $region109
    $region108: #{tpu_custom_call.1} parent=1 // pred_region
      _
    $region109: #{tpu_custom_call.1} parent=1 // pred_fallthru
      _
    // Predicated region
    $region110: #{tpu_custom_call.1} parent=1 // pred_check
      _
    $region111: #{tpu_custom_call.1} parent=1 // pred_check_branch
      %291 = sbr.rel (0) target = $region113
    $region112: #{tpu_custom_call.1} parent=1 // pred_region
      %s293 = ssub.s32 18432, 18432
      %294 = vsyncadd [#allocation27], %s293
      %s295 = sshll.u32 [#allocation26], 4
      %s296 = int_to_ptr.vmem [resolvable:$true] %s295
      %301 = dma.hbm_to_vmem [thread:$0]  %s55, 18432, %s296, [#allocation27], 192, 192, 12
    $region113: #{tpu_custom_call.1} parent=1 // pred_fallthru
      _
    // Predicated region
    $region114: #{tpu_custom_call.1} parent=1 // pred_check
      _
    $region115: #{tpu_custom_call.1} parent=1 // pred_check_branch
      %303 = sbr.rel (0) target = $region117
    $region116: #{tpu_custom_call.1} parent=1 // pred_region
      _
    $region117: #{tpu_custom_call.1} parent=1 // pred_fallthru
      _
    // Predicated region
    $region118: #{tpu_custom_call.1} parent=1 // pred_check
      _
    $region119: #{tpu_custom_call.1} parent=1 // pred_check_branch
      %305 = sbr.rel (0) target = $region121
    $region120: #{tpu_custom_call.1} parent=1 // pred_region
      %s307 = ssub.s32 9216, 9216
      %308 = vsyncadd [#allocation27], %s307
      %s309 = sshll.u32 [#allocation28], 4
      %s310 = int_to_ptr.vmem [resolvable:$true] %s309
      %315 = dma.hbm_to_vmem [thread:$0]  %s59, 9216, %s310, [#allocation27], 192, 192, 12
    $region121: #{tpu_custom_call.1} parent=1 // pred_fallthru
      _
    // Predicated region
    $region122: #{tpu_custom_call.1} parent=1 // pred_check
      _
    $region123: #{tpu_custom_call.1} parent=1 // pred_check_branch
      %317 = sbr.rel (0) target = $region125
    $region124: #{tpu_custom_call.1} parent=1 // pred_region
      _
    $region125: #{tpu_custom_call.1} parent=1 // pred_fallthru
      _
    // Predicated region
    $region126: #{tpu_custom_call.1} parent=1 // pred_check
      _
    $region127: #{tpu_custom_call.1} parent=1 // pred_check_branch
      %319 = sbr.rel (0) target = $region129
    $region128: #{tpu_custom_call.1} parent=1 // pred_region
      %s321 = ssub.s32 9216, 9216
      %322 = vsyncadd [#allocation30], %s321
      %s323 = sshll.u32 [#allocation29], 4
      %s324 = int_to_ptr.vmem [resolvable:$true] %s323
      %329 = dma.hbm_to_vmem [thread:$0]  %s63, 9216, %s324, [#allocation30], 192, 192, 12
    $region129: #{tpu_custom_call.1} parent=1 // pred_fallthru
      _
    // Predicated region
    $region130: #{tpu_custom_call.1} parent=1 // pred_check
      _
    $region131: #{tpu_custom_call.1} parent=1 // pred_check_branch
      %331 = sbr.rel (0) target = $region133
    $region132: #{tpu_custom_call.1} parent=1 // pred_region
      _
    $region133: #{tpu_custom_call.1} parent=1 // pred_fallthru
      _
    // Predicated region
    $region134: #{tpu_custom_call.1} parent=1 // pred_check
      _
    $region135: #{tpu_custom_call.1} parent=1 // pred_check_branch
      %333 = sbr.rel (0) target = $region137
    $region136: #{tpu_custom_call.1} parent=1 // pred_region
      %s335 = ssub.s32 9216, 9216
      %336 = vsyncadd [#allocation30], %s335
      %s337 = sshll.u32 [#allocation31], 4
      %s338 = int_to_ptr.vmem [resolvable:$true] %s337
      %343 = dma.hbm_to_vmem [thread:$0]  %s67, 9216, %s338, [#allocation30], 192, 192, 12
    $region137: #{tpu_custom_call.1} parent=1 // pred_fallthru
      _
    // Predicated region
    $region138: #{tpu_custom_call.1} parent=1 // pred_check
      _
    $region139: #{tpu_custom_call.1} parent=1 // pred_check_branch
      %345 = sbr.rel (0) target = $region141
    $region140: #{tpu_custom_call.1} parent=1 // pred_region
      _
    $region141: #{tpu_custom_call.1} parent=1 // pred_fallthru
      _
    // Predicated region
    $region142: #{tpu_custom_call.1} parent=1 // pred_check
      _
    $region143: #{tpu_custom_call.1} parent=1 // pred_check_branch
      %347 = sbr.rel (0) target = $region145
    $region144: #{tpu_custom_call.1} parent=1 // pred_region
      %s349 = ssub.s32 9216, 9216
      %350 = vsyncadd [#allocation33], %s349
      %s351 = sshll.u32 [#allocation32], 4
      %s352 = int_to_ptr.vmem [resolvable:$true] %s351
      %357 = dma.hbm_to_vmem [thread:$0]  %s71, 9216, %s352, [#allocation33], 192, 192, 12
    $region145: #{tpu_custom_call.1} parent=1 // pred_fallthru
      _
    // Predicated region
    $region146: #{tpu_custom_call.1} parent=1 // pred_check
      _
    $region147: #{tpu_custom_call.1} parent=1 // pred_check_branch
      %359 = sbr.rel (0) target = $region149
    $region148: #{tpu_custom_call.1} parent=1 // pred_region
      _
    $region149: #{tpu_custom_call.1} parent=1 // pred_fallthru
      _
    // Predicated region
    $region150: #{tpu_custom_call.1} parent=1 // pred_check
      _
    $region151: #{tpu_custom_call.1} parent=1 // pred_check_branch
      %361 = sbr.rel (0) target = $region153
    $region152: #{tpu_custom_call.1} parent=1 // pred_region
      %362 = dma.done [#allocation3], 32
    $region153: #{tpu_custom_call.1} parent=1 // pred_fallthru
      _
    // Predicated region
    $region154: #{tpu_custom_call.1} parent=1 // pred_check
      _
    $region155: #{tpu_custom_call.1} parent=1 // pred_check_branch
      %364 = sbr.rel (0) target = $region157
    $region156: #{tpu_custom_call.1} parent=1 // pred_region
      %365 = dma.done [#allocation6], 2048
    $region157: #{tpu_custom_call.1} parent=1 // pred_fallthru
      _
    // Predicated region
    $region158: #{tpu_custom_call.1} parent=1 // pred_check
      _
    $region159: #{tpu_custom_call.1} parent=1 // pred_check_branch
      %367 = sbr.rel (0) target = $region161
    $region160: #{tpu_custom_call.1} parent=1 // pred_region
      %368 = dma.done [#allocation6], 32
    $region161: #{tpu_custom_call.1} parent=1 // pred_fallthru
      _
    // Predicated region
    $region162: #{tpu_custom_call.1} parent=1 // pred_check
      _
    $region163: #{tpu_custom_call.1} parent=1 // pred_check_branch
      %370 = sbr.rel (0) target = $region165
    $region164: #{tpu_custom_call.1} parent=1 // pred_region
      %371 = dma.done [#allocation9], 8192
    $region165: #{tpu_custom_call.1} parent=1 // pred_fallthru
      _
    // Predicated region
    $region166: #{tpu_custom_call.1} parent=1 // pred_check
      _
    $region167: #{tpu_custom_call.1} parent=1 // pred_check_branch
      %373 = sbr.rel (0) target = $region169
    $region168: #{tpu_custom_call.1} parent=1 // pred_region
      %374 = dma.done [#allocation9], 16
    $region169: #{tpu_custom_call.1} parent=1 // pred_fallthru
      _
    // Predicated region
    $region170: #{tpu_custom_call.1} parent=1 // pred_check
      _
    $region171: #{tpu_custom_call.1} parent=1 // pred_check_branch
      %376 = sbr.rel (0) target = $region173
    $region172: #{tpu_custom_call.1} parent=1 // pred_region
      %377 = dma.done [#allocation12], 3072
    $region173: #{tpu_custom_call.1} parent=1 // pred_fallthru
      _
    // Predicated region
    $region174: #{tpu_custom_call.1} parent=1 // pred_check
      _
    $region175: #{tpu_custom_call.1} parent=1 // pred_check_branch
      %379 = sbr.rel (0) target = $region177
    $region176: #{tpu_custom_call.1} parent=1 // pred_region
      %380 = dma.done [#allocation12], 9216
    $region177: #{tpu_custom_call.1} parent=1 // pred_fallthru
      _
    // Predicated region
    $region178: #{tpu_custom_call.1} parent=1 // pred_check
      _
    $region179: #{tpu_custom_call.1} parent=1 // pred_check_branch
      %382 = sbr.rel (0) target = $region181
    $region180: #{tpu_custom_call.1} parent=1 // pred_region
      %383 = dma.done [#allocation15], 9216
    $region181: #{tpu_custom_call.1} parent=1 // pred_fallthru
      _
    // Predicated region
    $region182: #{tpu_custom_call.1} parent=1 // pred_check
      _
    $region183: #{tpu_custom_call.1} parent=1 // pred_check_branch
      %385 = sbr.rel (0) target = $region185
    $region184: #{tpu_custom_call.1} parent=1 // pred_region
      %386 = dma.done [#allocation15], 9216
    $region185: #{tpu_custom_call.1} parent=1 // pred_fallthru
      _
    // Predicated region
    $region186: #{tpu_custom_call.1} parent=1 // pred_check
      _
    $region187: #{tpu_custom_call.1} parent=1 // pred_check_branch
      %388 = sbr.rel (0) target = $region189
    $region188: #{tpu_custom_call.1} parent=1 // pred_region
      %389 = dma.done [#allocation18], 9216
    $region189: #{tpu_custom_call.1} parent=1 // pred_fallthru
      _
    // Predicated region
    $region190: #{tpu_custom_call.1} parent=1 // pred_check
      _
    $region191: #{tpu_custom_call.1} parent=1 // pred_check_branch
      %391 = sbr.rel (0) target = $region193
    $region192: #{tpu_custom_call.1} parent=1 // pred_region
      %392 = dma.done [#allocation18], 18432
    $region193: #{tpu_custom_call.1} parent=1 // pred_fallthru
      _
    // Predicated region
    $region194: #{tpu_custom_call.1} parent=1 // pred_check
      _
    $region195: #{tpu_custom_call.1} parent=1 // pred_check_branch
      %394 = sbr.rel (0) target = $region197
    $region196: #{tpu_custom_call.1} parent=1 // pred_region
      %395 = dma.done [#allocation21], 9216
    $region197: #{tpu_custom_call.1} parent=1 // pred_fallthru
      _
    // Predicated region
    $region198: #{tpu_custom_call.1} parent=1 // pred_check
      _
    $region199: #{tpu_custom_call.1} parent=1 // pred_check_branch
      %397 = sbr.rel (0) target = $region201
    $region200: #{tpu_custom_call.1} parent=1 // pred_region
      %398 = dma.done [#allocation21], 9216
    $region201: #{tpu_custom_call.1} parent=1 // pred_fallthru
      _
    // Predicated region
    $region202: #{tpu_custom_call.1} parent=1 // pred_check
      _
    $region203: #{tpu_custom_call.1} parent=1 // pred_check_branch
      %400 = sbr.rel (0) target = $region205
    $region204: #{tpu_custom_call.1} parent=1 // pred_region
      %401 = dma.done [#allocation24], 9216
    $region205: #{tpu_custom_call.1} parent=1 // pred_fallthru
      _
    // Predicated region
    $region206: #{tpu_custom_call.1} parent=1 // pred_check
      _
    $region207: #{tpu_custom_call.1} parent=1 // pred_check_branch
      %403 = sbr.rel (0) target = $region209
    $region208: #{tpu_custom_call.1} parent=1 // pred_region
      %404 = dma.done [#allocation24], 9216
    $region209: #{tpu_custom_call.1} parent=1 // pred_fallthru
      _
    // Predicated region
    $region210: #{tpu_custom_call.1} parent=1 // pred_check
      _
    $region211: #{tpu_custom_call.1} parent=1 // pred_check_branch
      %406 = sbr.rel (0) target = $region213
    $region212: #{tpu_custom_call.1} parent=1 // pred_region
      %407 = dma.done [#allocation27], 18432
    $region213: #{tpu_custom_call.1} parent=1 // pred_fallthru
      _
    // Predicated region
    $region214: #{tpu_custom_call.1} parent=1 // pred_check
      _
    $region215: #{tpu_custom_call.1} parent=1 // pred_check_branch
      %409 = sbr.rel (0) target = $region217
    $region216: #{tpu_custom_call.1} parent=1 // pred_region
      %410 = dma.done [#allocation27], 9216
    $region217: #{tpu_custom_call.1} parent=1 // pred_fallthru
      _
    // Predicated region
    $region218: #{tpu_custom_call.1} parent=1 // pred_check
      _
    $region219: #{tpu_custom_call.1} parent=1 // pred_check_branch
      %412 = sbr.rel (0) target = $region221
    $region220: #{tpu_custom_call.1} parent=1 // pred_region
      %413 = dma.done [#allocation30], 9216
    $region221: #{tpu_custom_call.1} parent=1 // pred_fallthru
      _
    // Predicated region
    $region222: #{tpu_custom_call.1} parent=1 // pred_check
      _
    $region223: #{tpu_custom_call.1} parent=1 // pred_check_branch
      %415 = sbr.rel (0) target = $region225
    $region224: #{tpu_custom_call.1} parent=1 // pred_region
      %416 = dma.done [#allocation30], 9216
    $region225: #{tpu_custom_call.1} parent=1 // pred_fallthru
      _
    // Predicated region
    $region226: #{tpu_custom_call.1} parent=1 // pred_check
      _
    $region227: #{tpu_custom_call.1} parent=1 // pred_check_branch
      %418 = sbr.rel (0) target = $region229
    $region228: #{tpu_custom_call.1} parent=1 // pred_region
      %419 = dma.done [#allocation33], 9216
    $region229: #{tpu_custom_call.1} parent=1 // pred_fallthru
      _
    %v421 = vld [vmem:[%s3] sm:$0xff]
    %v422 = vld [vmem:[#allocation2] sm:$0x1]
    %424 = vset.pattern.permute.xlu0 0
    %425 = vperm.xlu0 %424, %v421
    %v426 = vpop.permute.xlu0 %425
    %v428 = vlaneseq
    %v429 = vshrl.u32 %v428, 7
    %v430 = vsub.s32 0, %v429
    %v431 = vrot.slane %v422, %v430
    %v432 = vmul.f32 %v426, %v431
    %v433 = vld [vmem:[#allocation2 + $0x1] sm:$0x1]
    %v434 = vlaneseq
    %v435 = vshrl.u32 %v434, 7
    %v436 = vsub.s32 0, %v435
    %v437 = vrot.slane %v433, %v436
    %v438 = vadd.f32 %v432, %v437
    %v439 = vand.u32 2147483647, %v438
    %vm440 = vcmp.le.f32.partialorder %v439, 0.7853982
    %vm441 = vcmp.lt.s32.totalorder %v438, 0
    %v442 = vand.u32 %v438, 2139095040
    %v443 = vshrl.u32 %v442, 23
    %v444 = vsub.s32 %v443, 127
    %v445 = vand.u32 2147483647, %v438
    %v446 = vand.u32 %v445, 8388607
    %v447 = vor.u32 %v446, 8388608
    %v448 = vsub.s32 0, %v447
    %v449 = vadd.s32 %v444, 1
    %vm450 = vcmp.gt.s32.totalorder %v449, 0
    %v451 = vsel %vm450, %v449, 0
    %v452 = vshrl.u32 %v451, 5
    %v453 = vand.u32 %v451, 31
    %v454 = vsub.s32 32, %v453
    %v455 = vshrl.u32 683565275, %v454
    %v456 = vshll.u32 683565275, %v453
    %v457 = vshrl.u32 2475754826, %v454
    %v458 = vor.u32 %v456, %v457
    %v459 = vshll.u32 2475754826, %v453
    %v460 = vshrl.u32 2131351028, %v454
    %v461 = vor.u32 %v459, %v460
    %v462 = vshll.u32 2131351028, %v453
    %v463 = vshrl.u32 2102212464, %v454
    %v464 = vor.u32 %v462, %v463
    %v465 = vshll.u32 2102212464, %v453
    %v466 = vshrl.u32 920167782, %v454
    %v467 = vor.u32 %v465, %v466
    %v468 = vshll.u32 920167782, %v453
    %v469 = vshrl.u32 1326507024, %v454
    %v470 = vor.u32 %v468, %v469
    %vm471 = vcmp.lt.s32.totalorder %v452, 1
    %vm472 = vcmp.lt.s32.totalorder %v452, 2
    %vm473 = vcmp.lt.s32.totalorder %v452, 3
    %vm474 = vcmp.lt.s32.totalorder %v452, 4
    %v475 = vsel %vm471, %v455, %v458
    %v476 = vsel %vm474, %v464, 2102212464
    %v477 = vsel %vm473, %v461, %v476
    %v478 = vsel %vm472, %v475, %v477
    %v479 = vsel %vm471, %v458, %v461
    %v480 = vsel %vm474, %v467, 920167782
    %v481 = vsel %vm473, %v464, %v480
    %v482 = vsel %vm472, %v479, %v481
    %v483 = vsel %vm471, %v461, %v464
    %v484 = vsel %vm474, %v470, 1326507024
    %v485 = vsel %vm473, %v467, %v484
    %v486 = vsel %vm472, %v483, %v485
    %v487 = vshll.u32 %v447, 8
    %v488 = vmul.u32.u64.compose %v487, %v486
    %v489 = vextract.low.u32 %v488
    %v490 = vextract.high.u32 %v488
    %v491 = vmul.u32.u64.compose %v487, %v482
    %v492 = vextract.low.u32 %v491
    %v493 = vextract.high.u32 %v491
    %v494 = vmul.u32 %v487, %v478
    %v495 = vadd.s32 %v490, %v492
    %vm496 = vc.u32 %v490, %v492
    %v497 = vadd.s32 %v493, 1
    %v498 = vsel %vm496, %v497, %v493
    %v499 = vadd.s32 %v494, %v498
    %v500 = vadd.s32 %v499, 536870912
    %v501 = vshrl.u32 %v500, 30
    %v502 = vshll.u32 %v501, 30
    %v503 = vsub.s32 %v499, %v502
    %vm504 = vcmp.lt.s32.totalorder %v503, 0
    %v505 = vsub.s32 0, %v503
    %v506 = vsel %vm504, %v505, %v503
    %v507 = vclz %v506
    %v508 = vsub.s32 %v507, 2
    %vm509 = vcmp.gt.s32.totalorder 0, %v508
    %v510 = vsel %vm509, 0, %v508
    %v511 = vsub.s32 32, %v510
    %v512 = vshll.u32 %v503, %v510
    %v513 = vshrl.u32 %v495, %v511
    %v514 = vor.u32 %v512, %v513
    %v515 = vsub.s32 4294967266, %v510
    %v516 = vadd.s32 %v515, 127
    %v517 = vshll.u32 %v516, 23
    %v518 = vor.u32 4788187, %v517
    %v519 = vand.u32 2147483647, %v518
    %v521 = vcvt.s32.f32 %v514
    %v522 = vmul.f32 %v521, %v519
    %v523 = vxor.u32 %v522, 2147483648
    %v524 = vsel %vm441, %v523, %v522
    %v525 = vsub.s32 4, %v501
    %v526 = vsel %vm441, %v525, %v501
    %v527 = vsel %vm440, %v438, %v524
    %v528 = vsel %vm440, 0, %v526
    %v529 = vcosq.f32.pop %v527
    %v530 = vsinq.f32.pop %v527
    %vm531 = vweird.f32 %v438
    %v532 = vadd.s32 %v528, 3
    %v533 = vand.u32 %v532, 3
    %vm534 = vcmp.lt.s32.totalorder %v533, 2
    %vm535 = vcmp.eq.s32.totalorder %v533, 0
    %v536 = vxor.u32 %v530, 2147483648
    %v537 = vsel %vm535, %v529, %v536
    %vm538 = vcmp.eq.s32.totalorder %v533, 2
    %v539 = vxor.u32 %v529, 2147483648
    %v540 = vsel %vm538, %v539, %v530
    %v541 = vsel %vm534, %v537, %v540
    %v542 = vsel %vm531, nan, %v541
    %v543 = vpack.c.bf16 %v542, %v542
    %v544 = vld [vmem:[#allocation5] sm:$0xff]
    %v545 = vld [vmem:[#allocation5 + $0x8] sm:$0xff]
    %v546 = vld [vmem:[#allocation5 + $0x10] sm:$0xff]
    %v547 = vld [vmem:[#allocation5 + $0x18] sm:$0xff]
    %v548 = vld [vmem:[#allocation5 + $0x20] sm:$0xff]
    %v549 = vld [vmem:[#allocation5 + $0x28] sm:$0xff]
    %v550 = vld [vmem:[#allocation5 + $0x30] sm:$0xff]
    %v551 = vld [vmem:[#allocation5 + $0x38] sm:$0xff]
    %v552 = vld [vmem:[#allocation5 + $0x40] sm:$0xff]
    %v553 = vld [vmem:[#allocation5 + $0x48] sm:$0xff]
    %v554 = vld [vmem:[#allocation5 + $0x50] sm:$0xff]
    %v555 = vld [vmem:[#allocation5 + $0x58] sm:$0xff]
    %v556 = vld [vmem:[#allocation5 + $0x60] sm:$0xff]
    %v557 = vld [vmem:[#allocation5 + $0x68] sm:$0xff]
    %v558 = vld [vmem:[#allocation5 + $0x70] sm:$0xff]
    %v559 = vld [vmem:[#allocation5 + $0x78] sm:$0xff]
    %v560 = vld [vmem:[#allocation7] sm:$0x3]
    %v562 = vlaneseq
    %v563 = vshrl.u32 %v562, 7
    %v564 = vsub.s32 0, %v563
    %v565 = vrot.slane %v560, %v564
    %v566 = vlaneseq
    %v567 = vshrl.u32 %v566, 7
    %v568 = vsub.s32 1, %v567
    %v569 = vrot.slane %v560, %v568
    %v588 = vunpack.c.l.b16 %v544
    %v589 = vunpack.c.h.b16 %v544
    %v590 = vunpack.c.l.b16 %v545
    %v591 = vunpack.c.h.b16 %v545
    %v592 = vunpack.c.l.b16 %v546
    %v593 = vunpack.c.h.b16 %v546
    %v594 = vunpack.c.l.b16 %v547
    %v595 = vunpack.c.h.b16 %v547
    %v596 = vunpack.c.l.b16 %v548
    %v597 = vunpack.c.h.b16 %v548
    %v598 = vunpack.c.l.b16 %v549
    %v599 = vunpack.c.h.b16 %v549
    %v600 = vunpack.c.l.b16 %v550
    %v601 = vunpack.c.h.b16 %v550
    %v602 = vunpack.c.l.b16 %v551
    %v603 = vunpack.c.h.b16 %v551
    %v604 = vunpack.c.l.b16 %v552
    %v605 = vunpack.c.h.b16 %v552
    %v606 = vunpack.c.l.b16 %v553
    %v607 = vunpack.c.h.b16 %v553
    %v608 = vunpack.c.l.b16 %v554
    %v609 = vunpack.c.h.b16 %v554
    %v610 = vunpack.c.l.b16 %v555
    %v611 = vunpack.c.h.b16 %v555
    %v612 = vunpack.c.l.b16 %v556
    %v613 = vunpack.c.h.b16 %v556
    %v614 = vunpack.c.l.b16 %v557
    %v615 = vunpack.c.h.b16 %v557
    %v616 = vunpack.c.l.b16 %v558
    %v617 = vunpack.c.h.b16 %v558
    %v618 = vunpack.c.l.b16 %v559
    %v619 = vunpack.c.h.b16 %v559
    %v620 = vpack.c.b16 %v590, %v588
    %v621 = vpack.c.b16 %v591, %v589
    %v622 = vpack.c.b16 %v594, %v592
    %v623 = vpack.c.b16 %v595, %v593
    %v624 = vpack.c.b16 %v598, %v596
    %v625 = vpack.c.b16 %v599, %v597
    %v626 = vpack.c.b16 %v602, %v600
    %v627 = vpack.c.b16 %v603, %v601
    %v628 = vpack.c.b16 %v606, %v604
    %v629 = vpack.c.b16 %v607, %v605
    %v630 = vpack.c.b16 %v610, %v608
    %v631 = vpack.c.b16 %v611, %v609
    %v632 = vpack.c.b16 %v614, %v612
    %v633 = vpack.c.b16 %v615, %v613
    %v634 = vpack.c.b16 %v618, %v616
    %v635 = vpack.c.b16 %v619, %v617
    %652 = vmatprep.subr.bf16.mxu0 %v635
    %653 = vmatpush1.bf16.msra.mxu0 %v634
    %654 = vmatprep.subr.bf16.mxu0 %v633
    %655 = vmatpush1.bf16.msra.mxu0 %v632
    %656 = vmatprep.subr.bf16.mxu0 %v631
    %657 = vmatpush1.bf16.msra.mxu0 %v630
    %658 = vmatprep.subr.bf16.mxu0 %v629
    %659 = vmatpush1.bf16.msra.mxu0 %v628
    %660 = vmatprep.subr.bf16.mxu0 %v627
    %661 = vmatpush1.bf16.msra.mxu0 %v626
    %662 = vmatprep.subr.bf16.mxu0 %v625
    %663 = vmatpush1.bf16.msra.mxu0 %v624
    %664 = vmatprep.subr.bf16.mxu0 %v623
    %665 = vmatpush1.bf16.msra.mxu0 %v622
    %666 = vmatprep.subr.bf16.mxu0 %v621
    %667 = vmatpush1.bf16.msra.mxu0 %v620
    %668 = vmatprep.subr.bf16.mxu0 0
    %669 = vmatpush2.bf16.msra.mxu0 0
    %670 = vmatprep.subr.bf16.mxu0 0
    %671 = vmatpush2.bf16.msra.mxu0 0
    %672 = vmatprep.subr.bf16.mxu0 0
    %673 = vmatpush2.bf16.msra.mxu0 0
    %674 = vmatprep.subr.bf16.mxu0 0
    %675 = vmatpush2.bf16.msra.mxu0 0
    %676 = vmatprep.subr.bf16.mxu0 0
    %677 = vmatpush2.bf16.msra.mxu0 0
    %678 = vmatprep.subr.bf16.mxu0 0
    %679 = vmatpush2.bf16.msra.mxu0 0
    %680 = vmatprep.subr.bf16.mxu0 0
    %681 = vmatpush2.bf16.msra.mxu0 0
    %682 = vmatprep.subr.bf16.mxu0 0
    %683 = vmatpush2.bf16.msra.mxu0 0
    %684 = vmatprep.mubr.bf16.mxu0 0
    %685 = vmatmul.mubr.bf16.gmra.mxu0 %v543
    %v686 = vpop.f32.mrf.mxu0
    %v687 = vadd.f32 %v565, %v686
    %v688 = vpop.f32.mrf.mxu0
    %v689 = vadd.f32 %v569, %v688
    %v690 = vpop.f32.mrf.mxu0
    %v691 = vpop.f32.mrf.mxu0
    %692 = vdwg.mxu0
    %v693 = vmax.f32 %v687, 0.0
    %v694 = vmax.f32 %v689, 0.0
    %v695 = vand.u32 2147483647, %v687
    %v696 = vand.u32 2147483647, %v689
    %v697 = vsub.f32 0.0, %v695
    %v698 = vsub.f32 0.0, %v696
    %v699 = vmul.f32 %v697, 1.442695
    %v700 = vpow.pop %v699
    %v701 = vmul.f32 %v698, 1.442695
    %v702 = vpow.pop %v701
    %v703 = vadd.f32 %v700, 1.0
    %v704 = vlog2.pop %v703
    %v705 = vmul.f32 %v704, 0.6931472
    %v706 = vmul.f32 -0.5, %v700
    %v707 = vadd.f32 %v706, 1.0
    %v708 = vmul.f32 %v707, %v700
    %v709 = vand.u32 2147483647, %v700
    %vm710 = vcmp.lt.f32.partialorder %v709, 0.0004427343
    %v711 = vsel %vm710, %v708, %v705
    %v712 = vadd.f32 %v702, 1.0
    %v713 = vlog2.pop %v712
    %v714 = vmul.f32 %v713, 0.6931472
    %v715 = vmul.f32 -0.5, %v702
    %v716 = vadd.f32 %v715, 1.0
    %v717 = vmul.f32 %v716, %v702
    %v718 = vand.u32 2147483647, %v702
    %vm719 = vcmp.lt.f32.partialorder %v718, 0.0004427343
    %v720 = vsel %vm719, %v717, %v714
    %v721 = vadd.f32 %v693, %v711
    %v722 = vadd.f32 %v694, %v720
    %v723 = vpack.c.bf16 %v721, %v721
    %v724 = vpack.c.bf16 %v722, %v722
    %v725 = vld [vmem:[%s1] sm:$0xff]
    %v726 = vpack.c.bf16 %v725, %v725
    %v727 = vld [vmem:[#allocation11] sm:$0xff]
    %v728 = vld [vmem:[#allocation11 + $0x8] sm:$0xf]
    %v729 = vld [vmem:[#allocation11 + $0xc] sm:$0xff]
    %v730 = vld [vmem:[#allocation11 + $0x14] sm:$0xf]
    %v731 = vld [vmem:[#allocation11 + $0x18] sm:$0xff]
    %v732 = vld [vmem:[#allocation11 + $0x20] sm:$0xf]
    %v733 = vld [vmem:[#allocation11 + $0x24] sm:$0xff]
    %v734 = vld [vmem:[#allocation11 + $0x2c] sm:$0xf]
    %v735 = vld [vmem:[#allocation11 + $0x30] sm:$0xff]
    %v736 = vld [vmem:[#allocation11 + $0x38] sm:$0xf]
    %v737 = vld [vmem:[#allocation11 + $0x3c] sm:$0xff]
    %v738 = vld [vmem:[#allocation11 + $0x44] sm:$0xf]
    %v739 = vld [vmem:[#allocation11 + $0x48] sm:$0xff]
    %v740 = vld [vmem:[#allocation11 + $0x50] sm:$0xf]
    %v741 = vld [vmem:[#allocation11 + $0x54] sm:$0xff]
    %v742 = vld [vmem:[#allocation11 + $0x5c] sm:$0xf]
    %v743 = vld [vmem:[#allocation11 + $0x60] sm:$0xff]
    %v744 = vld [vmem:[#allocation11 + $0x68] sm:$0xf]
    %v745 = vld [vmem:[#allocation11 + $0x6c] sm:$0xff]
    %v746 = vld [vmem:[#allocation11 + $0x74] sm:$0xf]
    %v747 = vld [vmem:[#allocation11 + $0x78] sm:$0xff]
    %v748 = vld [vmem:[#allocation11 + $0x80] sm:$0xf]
    %v749 = vld [vmem:[#allocation11 + $0x84] sm:$0xff]
    %v750 = vld [vmem:[#allocation11 + $0x8c] sm:$0xf]
    %v751 = vld [vmem:[#allocation11 + $0x90] sm:$0xff]
    %v752 = vld [vmem:[#allocation11 + $0x98] sm:$0xf]
    %v753 = vld [vmem:[#allocation11 + $0x9c] sm:$0xff]
    %v754 = vld [vmem:[#allocation11 + $0xa4] sm:$0xf]
    %v755 = vld [vmem:[#allocation11 + $0xa8] sm:$0xff]
    %v756 = vld [vmem:[#allocation11 + $0xb0] sm:$0xf]
    %v757 = vld [vmem:[#allocation11 + $0xb4] sm:$0xff]
    %v758 = vld [vmem:[#allocation11 + $0xbc] sm:$0xf]
    %v759 = vld [vmem:[%s17] sm:$0x7]
    %v761 = vlaneseq
    %v762 = vshrl.u32 %v761, 7
    %v763 = vsub.s32 0, %v762
    %v764 = vrot.slane %v759, %v763
    %v765 = vlaneseq
    %v766 = vshrl.u32 %v765, 7
    %v767 = vsub.s32 1, %v766
    %v768 = vrot.slane %v759, %v767
    %v769 = vlaneseq
    %v770 = vshrl.u32 %v769, 7
    %v771 = vsub.s32 2, %v770
    %v772 = vrot.slane %v759, %v771
    %v808 = vunpack.c.l.b16 %v727
    %v809 = vunpack.c.h.b16 %v727
    %v810 = vunpack.c.l.b16 %v728
    %v811 = vunpack.c.l.b16 %v729
    %v812 = vunpack.c.h.b16 %v729
    %v813 = vunpack.c.l.b16 %v730
    %v814 = vunpack.c.l.b16 %v731
    %v815 = vunpack.c.h.b16 %v731
    %v816 = vunpack.c.l.b16 %v732
    %v817 = vunpack.c.l.b16 %v733
    %v818 = vunpack.c.h.b16 %v733
    %v819 = vunpack.c.l.b16 %v734
    %v820 = vunpack.c.l.b16 %v735
    %v821 = vunpack.c.h.b16 %v735
    %v822 = vunpack.c.l.b16 %v736
    %v823 = vunpack.c.l.b16 %v737
    %v824 = vunpack.c.h.b16 %v737
    %v825 = vunpack.c.l.b16 %v738
    %v826 = vunpack.c.l.b16 %v739
    %v827 = vunpack.c.h.b16 %v739
    %v828 = vunpack.c.l.b16 %v740
    %v829 = vunpack.c.l.b16 %v741
    %v830 = vunpack.c.h.b16 %v741
    %v831 = vunpack.c.l.b16 %v742
    %v832 = vunpack.c.l.b16 %v743
    %v833 = vunpack.c.h.b16 %v743
    %v834 = vunpack.c.l.b16 %v744
    %v835 = vunpack.c.l.b16 %v745
    %v836 = vunpack.c.h.b16 %v745
    %v837 = vunpack.c.l.b16 %v746
    %v838 = vunpack.c.l.b16 %v747
    %v839 = vunpack.c.h.b16 %v747
    %v840 = vunpack.c.l.b16 %v748
    %v841 = vunpack.c.l.b16 %v749
    %v842 = vunpack.c.h.b16 %v749
    %v843 = vunpack.c.l.b16 %v750
    %v844 = vunpack.c.l.b16 %v751
    %v845 = vunpack.c.h.b16 %v751
    %v846 = vunpack.c.l.b16 %v752
    %v847 = vunpack.c.l.b16 %v753
    %v848 = vunpack.c.h.b16 %v753
    %v849 = vunpack.c.l.b16 %v754
    %v850 = vunpack.c.l.b16 %v755
    %v851 = vunpack.c.h.b16 %v755
    %v852 = vunpack.c.l.b16 %v756
    %v853 = vunpack.c.l.b16 %v757
    %v854 = vunpack.c.h.b16 %v757
    %v855 = vunpack.c.l.b16 %v758
    %v856 = vpack.c.b16 %v811, %v808
    %v857 = vpack.c.b16 %v812, %v809
    %v858 = vpack.c.b16 %v813, %v810
    %v859 = vpack.c.b16 %v817, %v814
    %v860 = vpack.c.b16 %v818, %v815
    %v861 = vpack.c.b16 %v819, %v816
    %v862 = vpack.c.b16 %v823, %v820
    %v863 = vpack.c.b16 %v824, %v821
    %v864 = vpack.c.b16 %v825, %v822
    %v865 = vpack.c.b16 %v829, %v826
    %v866 = vpack.c.b16 %v830, %v827
    %v867 = vpack.c.b16 %v831, %v828
    %v868 = vpack.c.b16 %v835, %v832
    %v869 = vpack.c.b16 %v836, %v833
    %v870 = vpack.c.b16 %v837, %v834
    %v871 = vpack.c.b16 %v841, %v838
    %v872 = vpack.c.b16 %v842, %v839
    %v873 = vpack.c.b16 %v843, %v840
    %v874 = vpack.c.b16 %v847, %v844
    %v875 = vpack.c.b16 %v848, %v845
    %v876 = vpack.c.b16 %v849, %v846
    %v877 = vpack.c.b16 %v853, %v850
    %v878 = vpack.c.b16 %v854, %v851
    %v879 = vpack.c.b16 %v855, %v852
    %904 = vmatprep.subr.bf16.mxu0 %v878
    %905 = vmatpush1.bf16.msra.mxu0 %v877
    %906 = vmatprep.subr.bf16.mxu0 %v875
    %907 = vmatpush1.bf16.msra.mxu0 %v874
    %908 = vmatprep.subr.bf16.mxu0 %v872
    %909 = vmatpush1.bf16.msra.mxu0 %v871
    %910 = vmatprep.subr.bf16.mxu0 %v869
    %911 = vmatpush1.bf16.msra.mxu0 %v868
    %912 = vmatprep.subr.bf16.mxu0 %v866
    %913 = vmatpush1.bf16.msra.mxu0 %v865
    %914 = vmatprep.subr.bf16.mxu0 %v863
    %915 = vmatpush1.bf16.msra.mxu0 %v862
    %916 = vmatprep.subr.bf16.mxu0 %v860
    %917 = vmatpush1.bf16.msra.mxu0 %v859
    %918 = vmatprep.subr.bf16.mxu0 %v857
    %919 = vmatpush1.bf16.msra.mxu0 %v856
    %920 = vmatprep.subr.bf16.mxu0 0
    %921 = vmatpush2.bf16.msra.mxu0 0
    %922 = vmatprep.subr.bf16.mxu0 0
    %923 = vmatpush2.bf16.msra.mxu0 0
    %924 = vmatprep.subr.bf16.mxu0 0
    %925 = vmatpush2.bf16.msra.mxu0 0
    %926 = vmatprep.subr.bf16.mxu0 0
    %927 = vmatpush2.bf16.msra.mxu0 0
    %928 = vmatprep.subr.bf16.mxu0 0
    %929 = vmatpush2.bf16.msra.mxu0 0
    %930 = vmatprep.subr.bf16.mxu0 0
    %931 = vmatpush2.bf16.msra.mxu0 0
    %932 = vmatprep.subr.bf16.mxu0 0
    %933 = vmatpush2.bf16.msra.mxu0 0
    %934 = vmatprep.subr.bf16.mxu0 0
    %935 = vmatpush2.bf16.msra.mxu0 0
    %936 = vmatprep.mubr.bf16.mxu0 0
    %937 = vmatmul.mubr.bf16.gmra.mxu0 %v726
    %v938 = vpop.f32.mrf.mxu0
    %v939 = vadd.f32 %v764, %v938
    %v940 = vpop.f32.mrf.mxu0
    %v941 = vadd.f32 %v768, %v940
    %v942 = vpop.f32.mrf.mxu0
    %v943 = vpop.f32.mrf.mxu0
    %944 = vdwg.mxu0
    %945 = vmatprep.subr.bf16.mxu0 0
    %946 = vmatpush1.bf16.msra.mxu0 %v879
    %947 = vmatprep.subr.bf16.mxu0 0
    %948 = vmatpush1.bf16.msra.mxu0 %v876
    %949 = vmatprep.subr.bf16.mxu0 0
    %950 = vmatpush1.bf16.msra.mxu0 %v873
    %951 = vmatprep.subr.bf16.mxu0 0
    %952 = vmatpush1.bf16.msra.mxu0 %v870
    %953 = vmatprep.subr.bf16.mxu0 0
    %954 = vmatpush1.bf16.msra.mxu0 %v867
    %955 = vmatprep.subr.bf16.mxu0 0
    %956 = vmatpush1.bf16.msra.mxu0 %v864
    %957 = vmatprep.subr.bf16.mxu0 0
    %958 = vmatpush1.bf16.msra.mxu0 %v861
    %959 = vmatprep.subr.bf16.mxu0 0
    %960 = vmatpush1.bf16.msra.mxu0 %v858
    %961 = vmatprep.subr.bf16.mxu0 0
    %962 = vmatpush2.bf16.msra.mxu0 0
    %963 = vmatprep.subr.bf16.mxu0 0
    %964 = vmatpush2.bf16.msra.mxu0 0
    %965 = vmatprep.subr.bf16.mxu0 0
    %966 = vmatpush2.bf16.msra.mxu0 0
    %967 = vmatprep.subr.bf16.mxu0 0
    %968 = vmatpush2.bf16.msra.mxu0 0
    %969 = vmatprep.subr.bf16.mxu0 0
    %970 = vmatpush2.bf16.msra.mxu0 0
    %971 = vmatprep.subr.bf16.mxu0 0
    %972 = vmatpush2.bf16.msra.mxu0 0
    %973 = vmatprep.subr.bf16.mxu0 0
    %974 = vmatpush2.bf16.msra.mxu0 0
    %975 = vmatprep.subr.bf16.mxu0 0
    %976 = vmatpush2.bf16.msra.mxu0 0
    %977 = vmatprep.mubr.bf16.mxu0 0
    %978 = vmatmul.mubr.bf16.gmra.mxu0 %v726
    %v979 = vpop.f32.mrf.mxu0
    %v980 = vadd.f32 %v772, %v979
    %v981 = vpop.f32.mrf.mxu0
    %v982 = vpop.f32.mrf.mxu0
    %v983 = vpop.f32.mrf.mxu0
    %984 = vdwg.mxu0
    %v985 = vmax.f32 %v939, 0.0
    %v986 = vmax.f32 %v941, 0.0
    %v987 = vmax.f32 %v980, 0.0
    %v988 = vand.u32 2147483647, %v939
    %v989 = vand.u32 2147483647, %v941
    %v990 = vand.u32 2147483647, %v980
    %v991 = vsub.f32 0.0, %v988
    %v992 = vsub.f32 0.0, %v989
    %v993 = vsub.f32 0.0, %v990
    %v994 = vmul.f32 %v991, 1.442695
    %v995 = vpow.pop %v994
    %v996 = vmul.f32 %v992, 1.442695
    %v997 = vpow.pop %v996
    %v998 = vmul.f32 %v993, 1.442695
    %v999 = vpow.pop %v998
    %v1000 = vadd.f32 %v995, 1.0
    %v1001 = vlog2.pop %v1000
    %v1002 = vmul.f32 %v1001, 0.6931472
    %v1003 = vmul.f32 -0.5, %v995
    %v1004 = vadd.f32 %v1003, 1.0
    %v1005 = vmul.f32 %v1004, %v995
    %v1006 = vand.u32 2147483647, %v995
    %vm1007 = vcmp.lt.f32.partialorder %v1006, 0.0004427343
    %v1008 = vsel %vm1007, %v1005, %v1002
    %v1009 = vadd.f32 %v997, 1.0
    %v1010 = vlog2.pop %v1009
    %v1011 = vmul.f32 %v1010, 0.6931472
    %v1012 = vmul.f32 -0.5, %v997
    %v1013 = vadd.f32 %v1012, 1.0
    %v1014 = vmul.f32 %v1013, %v997
    %v1015 = vand.u32 2147483647, %v997
    %vm1016 = vcmp.lt.f32.partialorder %v1015, 0.0004427343
    %v1017 = vsel %vm1016, %v1014, %v1011
    %v1018 = vadd.f32 %v999, 1.0
    %v1019 = vlog2.pop %v1018
    %v1020 = vmul.f32 %v1019, 0.6931472
    %v1021 = vmul.f32 -0.5, %v999
    %v1022 = vadd.f32 %v1021, 1.0
    %v1023 = vmul.f32 %v1022, %v999
    %v1024 = vand.u32 2147483647, %v999
    %vm1025 = vcmp.lt.f32.partialorder %v1024, 0.0004427343
    %v1026 = vsel %vm1025, %v1023, %v1020
    %v1027 = vadd.f32 %v985, %v1008
    %v1028 = vadd.f32 %v986, %v1017
    %v1029 = vadd.f32 %v987, %v1026
    %v1030 = vpack.c.bf16 %v1027, %v1027
    %v1031 = vpack.c.bf16 %v1028, %v1028
    %v1032 = vpack.c.bf16 %v1029, %v1029
    %v1033 = vld [vmem:[#allocation13] sm:$0xff]
    %v1034 = vld [vmem:[#allocation13 + $0x8] sm:$0xf]
    %v1035 = vld [vmem:[#allocation13 + $0xc] sm:$0xff]
    %v1036 = vld [vmem:[#allocation13 + $0x14] sm:$0xf]
    %v1037 = vld [vmem:[#allocation13 + $0x18] sm:$0xff]
    %v1038 = vld [vmem:[#allocation13 + $0x20] sm:$0xf]
    %v1039 = vld [vmem:[#allocation13 + $0x24] sm:$0xff]
    %v1040 = vld [vmem:[#allocation13 + $0x2c] sm:$0xf]
    %v1041 = vld [vmem:[#allocation13 + $0x30] sm:$0xff]
    %v1042 = vld [vmem:[#allocation13 + $0x38] sm:$0xf]
    %v1043 = vld [vmem:[#allocation13 + $0x3c] sm:$0xff]
    %v1044 = vld [vmem:[#allocation13 + $0x44] sm:$0xf]
    %v1045 = vld [vmem:[#allocation13 + $0x48] sm:$0xff]
    %v1046 = vld [vmem:[#allocation13 + $0x50] sm:$0xf]
    %v1047 = vld [vmem:[#allocation13 + $0x54] sm:$0xff]
    %v1048 = vld [vmem:[#allocation13 + $0x5c] sm:$0xf]
    %v1049 = vld [vmem:[#allocation13 + $0x60] sm:$0xff]
    %v1050 = vld [vmem:[#allocation13 + $0x68] sm:$0xf]
    %v1051 = vld [vmem:[#allocation13 + $0x6c] sm:$0xff]
    %v1052 = vld [vmem:[#allocation13 + $0x74] sm:$0xf]
    %v1053 = vld [vmem:[#allocation13 + $0x78] sm:$0xff]
    %v1054 = vld [vmem:[#allocation13 + $0x80] sm:$0xf]
    %v1055 = vld [vmem:[#allocation13 + $0x84] sm:$0xff]
    %v1056 = vld [vmem:[#allocation13 + $0x8c] sm:$0xf]
    %v1057 = vld [vmem:[#allocation13 + $0x90] sm:$0xff]
    %v1058 = vld [vmem:[#allocation13 + $0x98] sm:$0xf]
    %v1059 = vld [vmem:[#allocation13 + $0x9c] sm:$0xff]
    %v1060 = vld [vmem:[#allocation13 + $0xa4] sm:$0xf]
    %v1061 = vld [vmem:[#allocation13 + $0xa8] sm:$0xff]
    %v1062 = vld [vmem:[#allocation13 + $0xb0] sm:$0xf]
    %v1063 = vld [vmem:[#allocation13 + $0xb4] sm:$0xff]
    %v1064 = vld [vmem:[#allocation13 + $0xbc] sm:$0xf]
    %v1065 = vld [vmem:[#allocation13 + $0xc0] sm:$0xff]
    %v1066 = vld [vmem:[#allocation13 + $0xc8] sm:$0xf]
    %v1067 = vld [vmem:[#allocation13 + $0xcc] sm:$0xff]
    %v1068 = vld [vmem:[#allocation13 + $0xd4] sm:$0xf]
    %v1069 = vld [vmem:[#allocation13 + $0xd8] sm:$0xff]
    %v1070 = vld [vmem:[#allocation13 + $0xe0] sm:$0xf]
    %v1071 = vld [vmem:[#allocation13 + $0xe4] sm:$0xff]
    %v1072 = vld [vmem:[#allocation13 + $0xec] sm:$0xf]
    %v1073 = vld [vmem:[#allocation13 + $0xf0] sm:$0xff]
    %v1074 = vld [vmem:[#allocation13 + $0xf8] sm:$0xf]
    %v1075 = vld [vmem:[#allocation13 + $0xfc] sm:$0xff]
    %v1076 = vld [vmem:[#allocation13 + $0x104] sm:$0xf]
    %v1077 = vld [vmem:[#allocation13 + $0x108] sm:$0xff]
    %v1078 = vld [vmem:[#allocation13 + $0x110] sm:$0xf]
    %v1079 = vld [vmem:[#allocation13 + $0x114] sm:$0xff]
    %v1080 = vld [vmem:[#allocation13 + $0x11c] sm:$0xf]
    %v1081 = vld [vmem:[#allocation13 + $0x120] sm:$0xff]
    %v1082 = vld [vmem:[#allocation13 + $0x128] sm:$0xf]
    %v1083 = vld [vmem:[#allocation13 + $0x12c] sm:$0xff]
    %v1084 = vld [vmem:[#allocation13 + $0x134] sm:$0xf]
    %v1085 = vld [vmem:[#allocation13 + $0x138] sm:$0xff]
    %v1086 = vld [vmem:[#allocation13 + $0x140] sm:$0xf]
    %v1087 = vld [vmem:[#allocation13 + $0x144] sm:$0xff]
    %v1088 = vld [vmem:[#allocation13 + $0x14c] sm:$0xf]
    %v1089 = vld [vmem:[#allocation13 + $0x150] sm:$0xff]
    %v1090 = vld [vmem:[#allocation13 + $0x158] sm:$0xf]
    %v1091 = vld [vmem:[#allocation13 + $0x15c] sm:$0xff]
    %v1092 = vld [vmem:[#allocation13 + $0x164] sm:$0xf]
    %v1093 = vld [vmem:[#allocation13 + $0x168] sm:$0xff]
    %v1094 = vld [vmem:[#allocation13 + $0x170] sm:$0xf]
    %v1095 = vld [vmem:[#allocation13 + $0x174] sm:$0xff]
    %v1096 = vld [vmem:[#allocation13 + $0x17c] sm:$0xf]
    %v1097 = vld [vmem:[#allocation13 + $0x180] sm:$0xff]
    %v1098 = vld [vmem:[#allocation13 + $0x188] sm:$0xf]
    %v1099 = vld [vmem:[#allocation13 + $0x18c] sm:$0xff]
    %v1100 = vld [vmem:[#allocation13 + $0x194] sm:$0xf]
    %v1101 = vld [vmem:[#allocation13 + $0x198] sm:$0xff]
    %v1102 = vld [vmem:[#allocation13 + $0x1a0] sm:$0xf]
    %v1103 = vld [vmem:[#allocation13 + $0x1a4] sm:$0xff]
    %v1104 = vld [vmem:[#allocation13 + $0x1ac] sm:$0xf]
    %v1105 = vld [vmem:[#allocation13 + $0x1b0] sm:$0xff]
    %v1106 = vld [vmem:[#allocation13 + $0x1b8] sm:$0xf]
    %v1107 = vld [vmem:[#allocation13 + $0x1bc] sm:$0xff]
    %v1108 = vld [vmem:[#allocation13 + $0x1c4] sm:$0xf]
    %v1109 = vld [vmem:[#allocation13 + $0x1c8] sm:$0xff]
    %v1110 = vld [vmem:[#allocation13 + $0x1d0] sm:$0xf]
    %v1111 = vld [vmem:[#allocation13 + $0x1d4] sm:$0xff]
    %v1112 = vld [vmem:[#allocation13 + $0x1dc] sm:$0xf]
    %v1113 = vld [vmem:[#allocation13 + $0x1e0] sm:$0xff]
    %v1114 = vld [vmem:[#allocation13 + $0x1e8] sm:$0xf]
    %v1115 = vld [vmem:[#allocation13 + $0x1ec] sm:$0xff]
    %v1116 = vld [vmem:[#allocation13 + $0x1f4] sm:$0xf]
    %v1117 = vld [vmem:[#allocation13 + $0x1f8] sm:$0xff]
    %v1118 = vld [vmem:[#allocation13 + $0x200] sm:$0xf]
    %v1119 = vld [vmem:[#allocation13 + $0x204] sm:$0xff]
    %v1120 = vld [vmem:[#allocation13 + $0x20c] sm:$0xf]
    %v1121 = vld [vmem:[#allocation13 + $0x210] sm:$0xff]
    %v1122 = vld [vmem:[#allocation13 + $0x218] sm:$0xf]
    %v1123 = vld [vmem:[#allocation13 + $0x21c] sm:$0xff]
    %v1124 = vld [vmem:[#allocation13 + $0x224] sm:$0xf]
    %v1125 = vld [vmem:[#allocation13 + $0x228] sm:$0xff]
    %v1126 = vld [vmem:[#allocation13 + $0x230] sm:$0xf]
    %v1127 = vld [vmem:[#allocation13 + $0x234] sm:$0xff]
    %v1128 = vld [vmem:[#allocation13 + $0x23c] sm:$0xf]
    %v1129 = vld [vmem:[%s21] sm:$0x7]
    %v1131 = vlaneseq
    %v1132 = vshrl.u32 %v1131, 7
    %v1133 = vsub.s32 0, %v1132
    %v1134 = vrot.slane %v1129, %v1133
    %v1135 = vlaneseq
    %v1136 = vshrl.u32 %v1135, 7
    %v1137 = vsub.s32 1, %v1136
    %v1138 = vrot.slane %v1129, %v1137
    %v1139 = vlaneseq
    %v1140 = vshrl.u32 %v1139, 7
    %v1141 = vsub.s32 2, %v1140
    %v1142 = vrot.slane %v1129, %v1141
    %v1242 = vunpack.c.l.b16 %v1033
    %v1243 = vunpack.c.h.b16 %v1033
    %v1244 = vunpack.c.l.b16 %v1034
    %v1245 = vunpack.c.l.b16 %v1035
    %v1246 = vunpack.c.h.b16 %v1035
    %v1247 = vunpack.c.l.b16 %v1036
    %v1248 = vunpack.c.l.b16 %v1037
    %v1249 = vunpack.c.h.b16 %v1037
    %v1250 = vunpack.c.l.b16 %v1038
    %v1251 = vunpack.c.l.b16 %v1039
    %v1252 = vunpack.c.h.b16 %v1039
    %v1253 = vunpack.c.l.b16 %v1040
    %v1254 = vunpack.c.l.b16 %v1041
    %v1255 = vunpack.c.h.b16 %v1041
    %v1256 = vunpack.c.l.b16 %v1042
    %v1257 = vunpack.c.l.b16 %v1043
    %v1258 = vunpack.c.h.b16 %v1043
    %v1259 = vunpack.c.l.b16 %v1044
    %v1260 = vunpack.c.l.b16 %v1045
    %v1261 = vunpack.c.h.b16 %v1045
    %v1262 = vunpack.c.l.b16 %v1046
    %v1263 = vunpack.c.l.b16 %v1047
    %v1264 = vunpack.c.h.b16 %v1047
    %v1265 = vunpack.c.l.b16 %v1048
    %v1266 = vunpack.c.l.b16 %v1049
    %v1267 = vunpack.c.h.b16 %v1049
    %v1268 = vunpack.c.l.b16 %v1050
    %v1269 = vunpack.c.l.b16 %v1051
    %v1270 = vunpack.c.h.b16 %v1051
    %v1271 = vunpack.c.l.b16 %v1052
    %v1272 = vunpack.c.l.b16 %v1053
    %v1273 = vunpack.c.h.b16 %v1053
    %v1274 = vunpack.c.l.b16 %v1054
    %v1275 = vunpack.c.l.b16 %v1055
    %v1276 = vunpack.c.h.b16 %v1055
    %v1277 = vunpack.c.l.b16 %v1056
    %v1278 = vunpack.c.l.b16 %v1057
    %v1279 = vunpack.c.h.b16 %v1057
    %v1280 = vunpack.c.l.b16 %v1058
    %v1281 = vunpack.c.l.b16 %v1059
    %v1282 = vunpack.c.h.b16 %v1059
    %v1283 = vunpack.c.l.b16 %v1060
    %v1284 = vunpack.c.l.b16 %v1061
    %v1285 = vunpack.c.h.b16 %v1061
    %v1286 = vunpack.c.l.b16 %v1062
    %v1287 = vunpack.c.l.b16 %v1063
    %v1288 = vunpack.c.h.b16 %v1063
    %v1289 = vunpack.c.l.b16 %v1064
    %v1290 = vunpack.c.l.b16 %v1065
    %v1291 = vunpack.c.h.b16 %v1065
    %v1292 = vunpack.c.l.b16 %v1066
    %v1293 = vunpack.c.l.b16 %v1067
    %v1294 = vunpack.c.h.b16 %v1067
    %v1295 = vunpack.c.l.b16 %v1068
    %v1296 = vunpack.c.l.b16 %v1069
    %v1297 = vunpack.c.h.b16 %v1069
    %v1298 = vunpack.c.l.b16 %v1070
    %v1299 = vunpack.c.l.b16 %v1071
    %v1300 = vunpack.c.h.b16 %v1071
    %v1301 = vunpack.c.l.b16 %v1072
    %v1302 = vunpack.c.l.b16 %v1073
    %v1303 = vunpack.c.h.b16 %v1073
    %v1304 = vunpack.c.l.b16 %v1074
    %v1305 = vunpack.c.l.b16 %v1075
    %v1306 = vunpack.c.h.b16 %v1075
    %v1307 = vunpack.c.l.b16 %v1076
    %v1308 = vunpack.c.l.b16 %v1077
    %v1309 = vunpack.c.h.b16 %v1077
    %v1310 = vunpack.c.l.b16 %v1078
    %v1311 = vunpack.c.l.b16 %v1079
    %v1312 = vunpack.c.h.b16 %v1079
    %v1313 = vunpack.c.l.b16 %v1080
    %v1314 = vunpack.c.l.b16 %v1081
    %v1315 = vunpack.c.h.b16 %v1081
    %v1316 = vunpack.c.l.b16 %v1082
    %v1317 = vunpack.c.l.b16 %v1083
    %v1318 = vunpack.c.h.b16 %v1083
    %v1319 = vunpack.c.l.b16 %v1084
    %v1320 = vunpack.c.l.b16 %v1085
    %v1321 = vunpack.c.h.b16 %v1085
    %v1322 = vunpack.c.l.b16 %v1086
    %v1323 = vunpack.c.l.b16 %v1087
    %v1324 = vunpack.c.h.b16 %v1087
    %v1325 = vunpack.c.l.b16 %v1088
    %v1326 = vunpack.c.l.b16 %v1089
    %v1327 = vunpack.c.h.b16 %v1089
    %v1328 = vunpack.c.l.b16 %v1090
    %v1329 = vunpack.c.l.b16 %v1091
    %v1330 = vunpack.c.h.b16 %v1091
    %v1331 = vunpack.c.l.b16 %v1092
    %v1332 = vunpack.c.l.b16 %v1093
    %v1333 = vunpack.c.h.b16 %v1093
    %v1334 = vunpack.c.l.b16 %v1094
    %v1335 = vunpack.c.l.b16 %v1095
    %v1336 = vunpack.c.h.b16 %v1095
    %v1337 = vunpack.c.l.b16 %v1096
    %v1338 = vunpack.c.l.b16 %v1097
    %v1339 = vunpack.c.h.b16 %v1097
    %v1340 = vunpack.c.l.b16 %v1098
    %v1341 = vunpack.c.l.b16 %v1099
    %v1342 = vunpack.c.h.b16 %v1099
    %v1343 = vunpack.c.l.b16 %v1100
    %v1344 = vunpack.c.l.b16 %v1101
    %v1345 = vunpack.c.h.b16 %v1101
    %v1346 = vunpack.c.l.b16 %v1102
    %v1347 = vunpack.c.l.b16 %v1103
    %v1348 = vunpack.c.h.b16 %v1103
    %v1349 = vunpack.c.l.b16 %v1104
    %v1350 = vunpack.c.l.b16 %v1105
    %v1351 = vunpack.c.h.b16 %v1105
    %v1352 = vunpack.c.l.b16 %v1106
    %v1353 = vunpack.c.l.b16 %v1107
    %v1354 = vunpack.c.h.b16 %v1107
    %v1355 = vunpack.c.l.b16 %v1108
    %v1356 = vunpack.c.l.b16 %v1109
    %v1357 = vunpack.c.h.b16 %v1109
    %v1358 = vunpack.c.l.b16 %v1110
    %v1359 = vunpack.c.l.b16 %v1111
    %v1360 = vunpack.c.h.b16 %v1111
    %v1361 = vunpack.c.l.b16 %v1112
    %v1362 = vunpack.c.l.b16 %v1113
    %v1363 = vunpack.c.h.b16 %v1113
    %v1364 = vunpack.c.l.b16 %v1114
    %v1365 = vunpack.c.l.b16 %v1115
    %v1366 = vunpack.c.h.b16 %v1115
    %v1367 = vunpack.c.l.b16 %v1116
    %v1368 = vunpack.c.l.b16 %v1117
    %v1369 = vunpack.c.h.b16 %v1117
    %v1370 = vunpack.c.l.b16 %v1118
    %v1371 = vunpack.c.l.b16 %v1119
    %v1372 = vunpack.c.h.b16 %v1119
    %v1373 = vunpack.c.l.b16 %v1120
    %v1374 = vunpack.c.l.b16 %v1121
    %v1375 = vunpack.c.h.b16 %v1121
    %v1376 = vunpack.c.l.b16 %v1122
    %v1377 = vunpack.c.l.b16 %v1123
    %v1378 = vunpack.c.h.b16 %v1123
    %v1379 = vunpack.c.l.b16 %v1124
    %v1380 = vunpack.c.l.b16 %v1125
    %v1381 = vunpack.c.h.b16 %v1125
    %v1382 = vunpack.c.l.b16 %v1126
    %v1383 = vunpack.c.l.b16 %v1127
    %v1384 = vunpack.c.h.b16 %v1127
    %v1385 = vunpack.c.l.b16 %v1128
    %v1386 = vpack.c.b16 %v1245, %v1242
    %v1387 = vpack.c.b16 %v1246, %v1243
    %v1388 = vpack.c.b16 %v1247, %v1244
    %v1389 = vpack.c.b16 %v1251, %v1248
    %v1390 = vpack.c.b16 %v1252, %v1249
    %v1391 = vpack.c.b16 %v1253, %v1250
    %v1392 = vpack.c.b16 %v1257, %v1254
    %v1393 = vpack.c.b16 %v1258, %v1255
    %v1394 = vpack.c.b16 %v1259, %v1256
    %v1395 = vpack.c.b16 %v1263, %v1260
    %v1396 = vpack.c.b16 %v1264, %v1261
    %v1397 = vpack.c.b16 %v1265, %v1262
    %v1398 = vpack.c.b16 %v1269, %v1266
    %v1399 = vpack.c.b16 %v1270, %v1267
    %v1400 = vpack.c.b16 %v1271, %v1268
    %v1401 = vpack.c.b16 %v1275, %v1272
    %v1402 = vpack.c.b16 %v1276, %v1273
    %v1403 = vpack.c.b16 %v1277, %v1274
    %v1404 = vpack.c.b16 %v1281, %v1278
    %v1405 = vpack.c.b16 %v1282, %v1279
    %v1406 = vpack.c.b16 %v1283, %v1280
    %v1407 = vpack.c.b16 %v1287, %v1284
    %v1408 = vpack.c.b16 %v1288, %v1285
    %v1409 = vpack.c.b16 %v1289, %v1286
    %v1410 = vpack.c.b16 %v1293, %v1290
    %v1411 = vpack.c.b16 %v1294, %v1291
    %v1412 = vpack.c.b16 %v1295, %v1292
    %v1413 = vpack.c.b16 %v1299, %v1296
    %v1414 = vpack.c.b16 %v1300, %v1297
    %v1415 = vpack.c.b16 %v1301, %v1298
    %v1416 = vpack.c.b16 %v1305, %v1302
    %v1417 = vpack.c.b16 %v1306, %v1303
    %v1418 = vpack.c.b16 %v1307, %v1304
    %v1419 = vpack.c.b16 %v1311, %v1308
    %v1420 = vpack.c.b16 %v1312, %v1309
    %v1421 = vpack.c.b16 %v1313, %v1310
    %v1422 = vpack.c.b16 %v1317, %v1314
    %v1423 = vpack.c.b16 %v1318, %v1315
    %v1424 = vpack.c.b16 %v1319, %v1316
    %v1425 = vpack.c.b16 %v1323, %v1320
    %v1426 = vpack.c.b16 %v1324, %v1321
    %v1427 = vpack.c.b16 %v1325, %v1322
    %v1428 = vpack.c.b16 %v1329, %v1326
    %v1429 = vpack.c.b16 %v1330, %v1327
    %v1430 = vpack.c.b16 %v1331, %v1328
    %v1431 = vpack.c.b16 %v1335, %v1332
    %v1432 = vpack.c.b16 %v1336, %v1333
    %v1433 = vpack.c.b16 %v1337, %v1334
    %v1434 = vpack.c.b16 %v1341, %v1338
    %v1435 = vpack.c.b16 %v1342, %v1339
    %v1436 = vpack.c.b16 %v1343, %v1340
    %v1437 = vpack.c.b16 %v1347, %v1344
    %v1438 = vpack.c.b16 %v1348, %v1345
    %v1439 = vpack.c.b16 %v1349, %v1346
    %v1440 = vpack.c.b16 %v1353, %v1350
    %v1441 = vpack.c.b16 %v1354, %v1351
    %v1442 = vpack.c.b16 %v1355, %v1352
    %v1443 = vpack.c.b16 %v1359, %v1356
    %v1444 = vpack.c.b16 %v1360, %v1357
    %v1445 = vpack.c.b16 %v1361, %v1358
    %v1446 = vpack.c.b16 %v1365, %v1362
    %v1447 = vpack.c.b16 %v1366, %v1363
    %v1448 = vpack.c.b16 %v1367, %v1364
    %v1449 = vpack.c.b16 %v1371, %v1368
    %v1450 = vpack.c.b16 %v1372, %v1369
    %v1451 = vpack.c.b16 %v1373, %v1370
    %v1452 = vpack.c.b16 %v1377, %v1374
    %v1453 = vpack.c.b16 %v1378, %v1375
    %v1454 = vpack.c.b16 %v1379, %v1376
    %v1455 = vpack.c.b16 %v1383, %v1380
    %v1456 = vpack.c.b16 %v1384, %v1381
    %v1457 = vpack.c.b16 %v1385, %v1382
    %1530 = vmatprep.subr.bf16.mxu0 %v1408
    %1531 = vmatpush1.bf16.msra.mxu0 %v1407
    %1532 = vmatprep.subr.bf16.mxu0 %v1405
    %1533 = vmatpush1.bf16.msra.mxu0 %v1404
    %1534 = vmatprep.subr.bf16.mxu0 %v1402
    %1535 = vmatpush1.bf16.msra.mxu0 %v1401
    %1536 = vmatprep.subr.bf16.mxu0 %v1399
    %1537 = vmatpush1.bf16.msra.mxu0 %v1398
    %1538 = vmatprep.subr.bf16.mxu0 %v1396
    %1539 = vmatpush1.bf16.msra.mxu0 %v1395
    %1540 = vmatprep.subr.bf16.mxu0 %v1393
    %1541 = vmatpush1.bf16.msra.mxu0 %v1392
    %1542 = vmatprep.subr.bf16.mxu0 %v1390
    %1543 = vmatpush1.bf16.msra.mxu0 %v1389
    %1544 = vmatprep.subr.bf16.mxu0 %v1387
    %1545 = vmatpush1.bf16.msra.mxu0 %v1386
    %1546 = vmatprep.subr.bf16.mxu0 %v1432
    %1547 = vmatpush2.bf16.msra.mxu0 %v1431
    %1548 = vmatprep.subr.bf16.mxu0 %v1429
    %1549 = vmatpush2.bf16.msra.mxu0 %v1428
    %1550 = vmatprep.subr.bf16.mxu0 %v1426
    %1551 = vmatpush2.bf16.msra.mxu0 %v1425
    %1552 = vmatprep.subr.bf16.mxu0 %v1423
    %1553 = vmatpush2.bf16.msra.mxu0 %v1422
    %1554 = vmatprep.subr.bf16.mxu0 %v1420
    %1555 = vmatpush2.bf16.msra.mxu0 %v1419
    %1556 = vmatprep.subr.bf16.mxu0 %v1417
    %1557 = vmatpush2.bf16.msra.mxu0 %v1416
    %1558 = vmatprep.subr.bf16.mxu0 %v1414
    %1559 = vmatpush2.bf16.msra.mxu0 %v1413
    %1560 = vmatprep.subr.bf16.mxu0 %v1411
    %1561 = vmatpush2.bf16.msra.mxu0 %v1410
    %1562 = vmatprep.mubr.bf16.mxu0 %v1031
    %1563 = vmatmul.mubr.bf16.gmra.mxu0 %v1030
    %v1564 = vpop.f32.mrf.mxu0
    %v1565 = vadd.f32 %v1134, %v1564
    %v1566 = vpop.f32.mrf.mxu0
    %v1567 = vadd.f32 %v1138, %v1566
    %v1568 = vpop.f32.mrf.mxu0
    %v1569 = vpop.f32.mrf.mxu0
    %1570 = vdwg.mxu0
    %1571 = vmatprep.subr.bf16.mxu0 %v1456
    %1572 = vmatpush1.bf16.msra.mxu0 %v1455
    %1573 = vmatprep.subr.bf16.mxu0 %v1453
    %1574 = vmatpush1.bf16.msra.mxu0 %v1452
    %1575 = vmatprep.subr.bf16.mxu0 %v1450
    %1576 = vmatpush1.bf16.msra.mxu0 %v1449
    %1577 = vmatprep.subr.bf16.mxu0 %v1447
    %1578 = vmatpush1.bf16.msra.mxu0 %v1446
    %1579 = vmatprep.subr.bf16.mxu0 %v1444
    %1580 = vmatpush1.bf16.msra.mxu0 %v1443
    %1581 = vmatprep.subr.bf16.mxu0 %v1441
    %1582 = vmatpush1.bf16.msra.mxu0 %v1440
    %1583 = vmatprep.subr.bf16.mxu0 %v1438
    %1584 = vmatpush1.bf16.msra.mxu0 %v1437
    %1585 = vmatprep.subr.bf16.mxu0 %v1435
    %1586 = vmatpush1.bf16.msra.mxu0 %v1434
    %1587 = vmatprep.subr.bf16.mxu0 0
    %1588 = vmatpush2.bf16.msra.mxu0 0
    %1589 = vmatprep.subr.bf16.mxu0 0
    %1590 = vmatpush2.bf16.msra.mxu0 0
    %1591 = vmatprep.subr.bf16.mxu0 0
    %1592 = vmatpush2.bf16.msra.mxu0 0
    %1593 = vmatprep.subr.bf16.mxu0 0
    %1594 = vmatpush2.bf16.msra.mxu0 0
    %1595 = vmatprep.subr.bf16.mxu0 0
    %1596 = vmatpush2.bf16.msra.mxu0 0
    %1597 = vmatprep.subr.bf16.mxu0 0
    %1598 = vmatpush2.bf16.msra.mxu0 0
    %1599 = vmatprep.subr.bf16.mxu0 0
    %1600 = vmatpush2.bf16.msra.mxu0 0
    %1601 = vmatprep.subr.bf16.mxu0 0
    %1602 = vmatpush2.bf16.msra.mxu0 0
    %1603 = vmatprep.mubr.bf16.mxu0 0
    %1604 = vmatmul.mubr.bf16.gmra.mxu0 %v1032
    %v1605 = vpop.f32.mrf.mxu0
    %v1606 = vadd.f32 %v1565, %v1605
    %v1607 = vpop.f32.mrf.mxu0
    %v1608 = vadd.f32 %v1567, %v1607
    %v1609 = vpop.f32.mrf.mxu0
    %v1610 = vpop.f32.mrf.mxu0
    %1611 = vdwg.mxu0
    %1612 = vmatprep.subr.bf16.mxu0 0
    %1613 = vmatpush1.bf16.msra.mxu0 %v1409
    %1614 = vmatprep.subr.bf16.mxu0 0
    %1615 = vmatpush1.bf16.msra.mxu0 %v1406
    %1616 = vmatprep.subr.bf16.mxu0 0
    %1617 = vmatpush1.bf16.msra.mxu0 %v1403
    %1618 = vmatprep.subr.bf16.mxu0 0
    %1619 = vmatpush1.bf16.msra.mxu0 %v1400
    %1620 = vmatprep.subr.bf16.mxu0 0
    %1621 = vmatpush1.bf16.msra.mxu0 %v1397
    %1622 = vmatprep.subr.bf16.mxu0 0
    %1623 = vmatpush1.bf16.msra.mxu0 %v1394
    %1624 = vmatprep.subr.bf16.mxu0 0
    %1625 = vmatpush1.bf16.msra.mxu0 %v1391
    %1626 = vmatprep.subr.bf16.mxu0 0
    %1627 = vmatpush1.bf16.msra.mxu0 %v1388
    %1628 = vmatprep.subr.bf16.mxu0 0
    %1629 = vmatpush2.bf16.msra.mxu0 %v1433
    %1630 = vmatprep.subr.bf16.mxu0 0
    %1631 = vmatpush2.bf16.msra.mxu0 %v1430
    %1632 = vmatprep.subr.bf16.mxu0 0
    %1633 = vmatpush2.bf16.msra.mxu0 %v1427
    %1634 = vmatprep.subr.bf16.mxu0 0
    %1635 = vmatpush2.bf16.msra.mxu0 %v1424
    %1636 = vmatprep.subr.bf16.mxu0 0
    %1637 = vmatpush2.bf16.msra.mxu0 %v1421
    %1638 = vmatprep.subr.bf16.mxu0 0
    %1639 = vmatpush2.bf16.msra.mxu0 %v1418
    %1640 = vmatprep.subr.bf16.mxu0 0
    %1641 = vmatpush2.bf16.msra.mxu0 %v1415
    %1642 = vmatprep.subr.bf16.mxu0 0
    %1643 = vmatpush2.bf16.msra.mxu0 %v1412
    %1644 = vmatprep.mubr.bf16.mxu0 %v1031
    %1645 = vmatmul.mubr.bf16.gmra.mxu0 %v1030
    %v1646 = vpop.f32.mrf.mxu0
    %v1647 = vadd.f32 %v1142, %v1646
    %v1648 = vpop.f32.mrf.mxu0
    %v1649 = vpop.f32.mrf.mxu0
    %v1650 = vpop.f32.mrf.mxu0
    %1651 = vdwg.mxu0
    %1652 = vmatprep.subr.bf16.mxu0 0
    %1653 = vmatpush1.bf16.msra.mxu0 %v1457
    %1654 = vmatprep.subr.bf16.mxu0 0
    %1655 = vmatpush1.bf16.msra.mxu0 %v1454
    %1656 = vmatprep.subr.bf16.mxu0 0
    %1657 = vmatpush1.bf16.msra.mxu0 %v1451
    %1658 = vmatprep.subr.bf16.mxu0 0
    %1659 = vmatpush1.bf16.msra.mxu0 %v1448
    %1660 = vmatprep.subr.bf16.mxu0 0
    %1661 = vmatpush1.bf16.msra.mxu0 %v1445
    %1662 = vmatprep.subr.bf16.mxu0 0
    %1663 = vmatpush1.bf16.msra.mxu0 %v1442
    %1664 = vmatprep.subr.bf16.mxu0 0
    %1665 = vmatpush1.bf16.msra.mxu0 %v1439
    %1666 = vmatprep.subr.bf16.mxu0 0
    %1667 = vmatpush1.bf16.msra.mxu0 %v1436
    %1668 = vmatprep.subr.bf16.mxu0 0
    %1669 = vmatpush2.bf16.msra.mxu0 0
    %1670 = vmatprep.subr.bf16.mxu0 0
    %1671 = vmatpush2.bf16.msra.mxu0 0
    %1672 = vmatprep.subr.bf16.mxu0 0
    %1673 = vmatpush2.bf16.msra.mxu0 0
    %1674 = vmatprep.subr.bf16.mxu0 0
    %1675 = vmatpush2.bf16.msra.mxu0 0
    %1676 = vmatprep.subr.bf16.mxu0 0
    %1677 = vmatpush2.bf16.msra.mxu0 0
    %1678 = vmatprep.subr.bf16.mxu0 0
    %1679 = vmatpush2.bf16.msra.mxu0 0
    %1680 = vmatprep.subr.bf16.mxu0 0
    %1681 = vmatpush2.bf16.msra.mxu0 0
    %1682 = vmatprep.subr.bf16.mxu0 0
    %1683 = vmatpush2.bf16.msra.mxu0 0
    %1684 = vmatprep.mubr.bf16.mxu0 0
    %1685 = vmatmul.mubr.bf16.gmra.mxu0 %v1032
    %v1686 = vpop.f32.mrf.mxu0
    %v1687 = vadd.f32 %v1647, %v1686
    %v1688 = vpop.f32.mrf.mxu0
    %v1689 = vpop.f32.mrf.mxu0
    %v1690 = vpop.f32.mrf.mxu0
    %1691 = vdwg.mxu0
    %v1692 = vmax.f32 %v1606, 0.0
    %v1693 = vmax.f32 %v1608, 0.0
    %v1694 = vmax.f32 %v1687, 0.0
    %v1695 = vand.u32 2147483647, %v1606
    %v1696 = vand.u32 2147483647, %v1608
    %v1697 = vand.u32 2147483647, %v1687
    %v1698 = vsub.f32 0.0, %v1695
    %v1699 = vsub.f32 0.0, %v1696
    %v1700 = vsub.f32 0.0, %v1697
    %v1701 = vmul.f32 %v1698, 1.442695
    %v1702 = vpow.pop %v1701
    %v1703 = vmul.f32 %v1699, 1.442695
    %v1704 = vpow.pop %v1703
    %v1705 = vmul.f32 %v1700, 1.442695
    %v1706 = vpow.pop %v1705
    %v1707 = vadd.f32 %v1702, 1.0
    %v1708 = vlog2.pop %v1707
    %v1709 = vmul.f32 %v1708, 0.6931472
    %v1710 = vmul.f32 -0.5, %v1702
    %v1711 = vadd.f32 %v1710, 1.0
    %v1712 = vmul.f32 %v1711, %v1702
    %v1713 = vand.u32 2147483647, %v1702
    %vm1714 = vcmp.lt.f32.partialorder %v1713, 0.0004427343
    %v1715 = vsel %vm1714, %v1712, %v1709
    %v1716 = vadd.f32 %v1704, 1.0
    %v1717 = vlog2.pop %v1716
    %v1718 = vmul.f32 %v1717, 0.6931472
    %v1719 = vmul.f32 -0.5, %v1704
    %v1720 = vadd.f32 %v1719, 1.0
    %v1721 = vmul.f32 %v1720, %v1704
    %v1722 = vand.u32 2147483647, %v1704
    %vm1723 = vcmp.lt.f32.partialorder %v1722, 0.0004427343
    %v1724 = vsel %vm1723, %v1721, %v1718
    %v1725 = vadd.f32 %v1706, 1.0
    %v1726 = vlog2.pop %v1725
    %v1727 = vmul.f32 %v1726, 0.6931472
    %v1728 = vmul.f32 -0.5, %v1706
    %v1729 = vadd.f32 %v1728, 1.0
    %v1730 = vmul.f32 %v1729, %v1706
    %v1731 = vand.u32 2147483647, %v1706
    %vm1732 = vcmp.lt.f32.partialorder %v1731, 0.0004427343
    %v1733 = vsel %vm1732, %v1730, %v1727
    %v1734 = vadd.f32 %v1692, %v1715
    %v1735 = vadd.f32 %v1693, %v1724
    %v1736 = vadd.f32 %v1694, %v1733
    %v1737 = vpack.c.bf16 %v1734, %v1734
    %v1738 = vpack.c.bf16 %v1735, %v1735
    %v1739 = vpack.c.bf16 %v1736, %v1736
    %v1740 = vld [vmem:[#allocation14] sm:$0xff]
    %v1741 = vld [vmem:[#allocation14 + $0x8] sm:$0xf]
    %v1742 = vld [vmem:[#allocation14 + $0xc] sm:$0xff]
    %v1743 = vld [vmem:[#allocation14 + $0x14] sm:$0xf]
    %v1744 = vld [vmem:[#allocation14 + $0x18] sm:$0xff]
    %v1745 = vld [vmem:[#allocation14 + $0x20] sm:$0xf]
    %v1746 = vld [vmem:[#allocation14 + $0x24] sm:$0xff]
    %v1747 = vld [vmem:[#allocation14 + $0x2c] sm:$0xf]
    %v1748 = vld [vmem:[#allocation14 + $0x30] sm:$0xff]
    %v1749 = vld [vmem:[#allocation14 + $0x38] sm:$0xf]
    %v1750 = vld [vmem:[#allocation14 + $0x3c] sm:$0xff]
    %v1751 = vld [vmem:[#allocation14 + $0x44] sm:$0xf]
    %v1752 = vld [vmem:[#allocation14 + $0x48] sm:$0xff]
    %v1753 = vld [vmem:[#allocation14 + $0x50] sm:$0xf]
    %v1754 = vld [vmem:[#allocation14 + $0x54] sm:$0xff]
    %v1755 = vld [vmem:[#allocation14 + $0x5c] sm:$0xf]
    %v1756 = vld [vmem:[#allocation14 + $0x60] sm:$0xff]
    %v1757 = vld [vmem:[#allocation14 + $0x68] sm:$0xf]
    %v1758 = vld [vmem:[#allocation14 + $0x6c] sm:$0xff]
    %v1759 = vld [vmem:[#allocation14 + $0x74] sm:$0xf]
    %v1760 = vld [vmem:[#allocation14 + $0x78] sm:$0xff]
    %v1761 = vld [vmem:[#allocation14 + $0x80] sm:$0xf]
    %v1762 = vld [vmem:[#allocation14 + $0x84] sm:$0xff]
    %v1763 = vld [vmem:[#allocation14 + $0x8c] sm:$0xf]
    %v1764 = vld [vmem:[#allocation14 + $0x90] sm:$0xff]
    %v1765 = vld [vmem:[#allocation14 + $0x98] sm:$0xf]
    %v1766 = vld [vmem:[#allocation14 + $0x9c] sm:$0xff]
    %v1767 = vld [vmem:[#allocation14 + $0xa4] sm:$0xf]
    %v1768 = vld [vmem:[#allocation14 + $0xa8] sm:$0xff]
    %v1769 = vld [vmem:[#allocation14 + $0xb0] sm:$0xf]
    %v1770 = vld [vmem:[#allocation14 + $0xb4] sm:$0xff]
    %v1771 = vld [vmem:[#allocation14 + $0xbc] sm:$0xf]
    %v1772 = vld [vmem:[#allocation14 + $0xc0] sm:$0xff]
    %v1773 = vld [vmem:[#allocation14 + $0xc8] sm:$0xf]
    %v1774 = vld [vmem:[#allocation14 + $0xcc] sm:$0xff]
    %v1775 = vld [vmem:[#allocation14 + $0xd4] sm:$0xf]
    %v1776 = vld [vmem:[#allocation14 + $0xd8] sm:$0xff]
    %v1777 = vld [vmem:[#allocation14 + $0xe0] sm:$0xf]
    %v1778 = vld [vmem:[#allocation14 + $0xe4] sm:$0xff]
    %v1779 = vld [vmem:[#allocation14 + $0xec] sm:$0xf]
    %v1780 = vld [vmem:[#allocation14 + $0xf0] sm:$0xff]
    %v1781 = vld [vmem:[#allocation14 + $0xf8] sm:$0xf]
    %v1782 = vld [vmem:[#allocation14 + $0xfc] sm:$0xff]
    %v1783 = vld [vmem:[#allocation14 + $0x104] sm:$0xf]
    %v1784 = vld [vmem:[#allocation14 + $0x108] sm:$0xff]
    %v1785 = vld [vmem:[#allocation14 + $0x110] sm:$0xf]
    %v1786 = vld [vmem:[#allocation14 + $0x114] sm:$0xff]
    %v1787 = vld [vmem:[#allocation14 + $0x11c] sm:$0xf]
    %v1788 = vld [vmem:[#allocation14 + $0x120] sm:$0xff]
    %v1789 = vld [vmem:[#allocation14 + $0x128] sm:$0xf]
    %v1790 = vld [vmem:[#allocation14 + $0x12c] sm:$0xff]
    %v1791 = vld [vmem:[#allocation14 + $0x134] sm:$0xf]
    %v1792 = vld [vmem:[#allocation14 + $0x138] sm:$0xff]
    %v1793 = vld [vmem:[#allocation14 + $0x140] sm:$0xf]
    %v1794 = vld [vmem:[#allocation14 + $0x144] sm:$0xff]
    %v1795 = vld [vmem:[#allocation14 + $0x14c] sm:$0xf]
    %v1796 = vld [vmem:[#allocation14 + $0x150] sm:$0xff]
    %v1797 = vld [vmem:[#allocation14 + $0x158] sm:$0xf]
    %v1798 = vld [vmem:[#allocation14 + $0x15c] sm:$0xff]
    %v1799 = vld [vmem:[#allocation14 + $0x164] sm:$0xf]
    %v1800 = vld [vmem:[#allocation14 + $0x168] sm:$0xff]
    %v1801 = vld [vmem:[#allocation14 + $0x170] sm:$0xf]
    %v1802 = vld [vmem:[#allocation14 + $0x174] sm:$0xff]
    %v1803 = vld [vmem:[#allocation14 + $0x17c] sm:$0xf]
    %v1804 = vld [vmem:[#allocation14 + $0x180] sm:$0xff]
    %v1805 = vld [vmem:[#allocation14 + $0x188] sm:$0xf]
    %v1806 = vld [vmem:[#allocation14 + $0x18c] sm:$0xff]
    %v1807 = vld [vmem:[#allocation14 + $0x194] sm:$0xf]
    %v1808 = vld [vmem:[#allocation14 + $0x198] sm:$0xff]
    %v1809 = vld [vmem:[#allocation14 + $0x1a0] sm:$0xf]
    %v1810 = vld [vmem:[#allocation14 + $0x1a4] sm:$0xff]
    %v1811 = vld [vmem:[#allocation14 + $0x1ac] sm:$0xf]
    %v1812 = vld [vmem:[#allocation14 + $0x1b0] sm:$0xff]
    %v1813 = vld [vmem:[#allocation14 + $0x1b8] sm:$0xf]
    %v1814 = vld [vmem:[#allocation14 + $0x1bc] sm:$0xff]
    %v1815 = vld [vmem:[#allocation14 + $0x1c4] sm:$0xf]
    %v1816 = vld [vmem:[#allocation14 + $0x1c8] sm:$0xff]
    %v1817 = vld [vmem:[#allocation14 + $0x1d0] sm:$0xf]
    %v1818 = vld [vmem:[#allocation14 + $0x1d4] sm:$0xff]
    %v1819 = vld [vmem:[#allocation14 + $0x1dc] sm:$0xf]
    %v1820 = vld [vmem:[#allocation14 + $0x1e0] sm:$0xff]
    %v1821 = vld [vmem:[#allocation14 + $0x1e8] sm:$0xf]
    %v1822 = vld [vmem:[#allocation14 + $0x1ec] sm:$0xff]
    %v1823 = vld [vmem:[#allocation14 + $0x1f4] sm:$0xf]
    %v1824 = vld [vmem:[#allocation14 + $0x1f8] sm:$0xff]
    %v1825 = vld [vmem:[#allocation14 + $0x200] sm:$0xf]
    %v1826 = vld [vmem:[#allocation14 + $0x204] sm:$0xff]
    %v1827 = vld [vmem:[#allocation14 + $0x20c] sm:$0xf]
    %v1828 = vld [vmem:[#allocation14 + $0x210] sm:$0xff]
    %v1829 = vld [vmem:[#allocation14 + $0x218] sm:$0xf]
    %v1830 = vld [vmem:[#allocation14 + $0x21c] sm:$0xff]
    %v1831 = vld [vmem:[#allocation14 + $0x224] sm:$0xf]
    %v1832 = vld [vmem:[#allocation14 + $0x228] sm:$0xff]
    %v1833 = vld [vmem:[#allocation14 + $0x230] sm:$0xf]
    %v1834 = vld [vmem:[#allocation14 + $0x234] sm:$0xff]
    %v1835 = vld [vmem:[#allocation14 + $0x23c] sm:$0xf]
    %v1836 = vld [vmem:[%s25] sm:$0x7]
    %v1838 = vlaneseq
    %v1839 = vshrl.u32 %v1838, 7
    %v1840 = vsub.s32 0, %v1839
    %v1841 = vrot.slane %v1836, %v1840
    %v1842 = vlaneseq
    %v1843 = vshrl.u32 %v1842, 7
    %v1844 = vsub.s32 1, %v1843
    %v1845 = vrot.slane %v1836, %v1844
    %v1846 = vlaneseq
    %v1847 = vshrl.u32 %v1846, 7
    %v1848 = vsub.s32 2, %v1847
    %v1849 = vrot.slane %v1836, %v1848
    %v1949 = vunpack.c.l.b16 %v1740
    %v1950 = vunpack.c.h.b16 %v1740
    %v1951 = vunpack.c.l.b16 %v1741
    %v1952 = vunpack.c.l.b16 %v1742
    %v1953 = vunpack.c.h.b16 %v1742
    %v1954 = vunpack.c.l.b16 %v1743
    %v1955 = vunpack.c.l.b16 %v1744
    %v1956 = vunpack.c.h.b16 %v1744
    %v1957 = vunpack.c.l.b16 %v1745
    %v1958 = vunpack.c.l.b16 %v1746
    %v1959 = vunpack.c.h.b16 %v1746
    %v1960 = vunpack.c.l.b16 %v1747
    %v1961 = vunpack.c.l.b16 %v1748
    %v1962 = vunpack.c.h.b16 %v1748
    %v1963 = vunpack.c.l.b16 %v1749
    %v1964 = vunpack.c.l.b16 %v1750
    %v1965 = vunpack.c.h.b16 %v1750
    %v1966 = vunpack.c.l.b16 %v1751
    %v1967 = vunpack.c.l.b16 %v1752
    %v1968 = vunpack.c.h.b16 %v1752
    %v1969 = vunpack.c.l.b16 %v1753
    %v1970 = vunpack.c.l.b16 %v1754
    %v1971 = vunpack.c.h.b16 %v1754
    %v1972 = vunpack.c.l.b16 %v1755
    %v1973 = vunpack.c.l.b16 %v1756
    %v1974 = vunpack.c.h.b16 %v1756
    %v1975 = vunpack.c.l.b16 %v1757
    %v1976 = vunpack.c.l.b16 %v1758
    %v1977 = vunpack.c.h.b16 %v1758
    %v1978 = vunpack.c.l.b16 %v1759
    %v1979 = vunpack.c.l.b16 %v1760
    %v1980 = vunpack.c.h.b16 %v1760
    %v1981 = vunpack.c.l.b16 %v1761
    %v1982 = vunpack.c.l.b16 %v1762
    %v1983 = vunpack.c.h.b16 %v1762
    %v1984 = vunpack.c.l.b16 %v1763
    %v1985 = vunpack.c.l.b16 %v1764
    %v1986 = vunpack.c.h.b16 %v1764
    %v1987 = vunpack.c.l.b16 %v1765
    %v1988 = vunpack.c.l.b16 %v1766
    %v1989 = vunpack.c.h.b16 %v1766
    %v1990 = vunpack.c.l.b16 %v1767
    %v1991 = vunpack.c.l.b16 %v1768
    %v1992 = vunpack.c.h.b16 %v1768
    %v1993 = vunpack.c.l.b16 %v1769
    %v1994 = vunpack.c.l.b16 %v1770
    %v1995 = vunpack.c.h.b16 %v1770
    %v1996 = vunpack.c.l.b16 %v1771
    %v1997 = vunpack.c.l.b16 %v1772
    %v1998 = vunpack.c.h.b16 %v1772
    %v1999 = vunpack.c.l.b16 %v1773
    %v2000 = vunpack.c.l.b16 %v1774
    %v2001 = vunpack.c.h.b16 %v1774
    %v2002 = vunpack.c.l.b16 %v1775
    %v2003 = vunpack.c.l.b16 %v1776
    %v2004 = vunpack.c.h.b16 %v1776
    %v2005 = vunpack.c.l.b16 %v1777
    %v2006 = vunpack.c.l.b16 %v1778
    %v2007 = vunpack.c.h.b16 %v1778
    %v2008 = vunpack.c.l.b16 %v1779
    %v2009 = vunpack.c.l.b16 %v1780
    %v2010 = vunpack.c.h.b16 %v1780
    %v2011 = vunpack.c.l.b16 %v1781
    %v2012 = vunpack.c.l.b16 %v1782
    %v2013 = vunpack.c.h.b16 %v1782
    %v2014 = vunpack.c.l.b16 %v1783
    %v2015 = vunpack.c.l.b16 %v1784
    %v2016 = vunpack.c.h.b16 %v1784
    %v2017 = vunpack.c.l.b16 %v1785
    %v2018 = vunpack.c.l.b16 %v1786
    %v2019 = vunpack.c.h.b16 %v1786
    %v2020 = vunpack.c.l.b16 %v1787
    %v2021 = vunpack.c.l.b16 %v1788
    %v2022 = vunpack.c.h.b16 %v1788
    %v2023 = vunpack.c.l.b16 %v1789
    %v2024 = vunpack.c.l.b16 %v1790
    %v2025 = vunpack.c.h.b16 %v1790
    %v2026 = vunpack.c.l.b16 %v1791
    %v2027 = vunpack.c.l.b16 %v1792
    %v2028 = vunpack.c.h.b16 %v1792
    %v2029 = vunpack.c.l.b16 %v1793
    %v2030 = vunpack.c.l.b16 %v1794
    %v2031 = vunpack.c.h.b16 %v1794
    %v2032 = vunpack.c.l.b16 %v1795
    %v2033 = vunpack.c.l.b16 %v1796
    %v2034 = vunpack.c.h.b16 %v1796
    %v2035 = vunpack.c.l.b16 %v1797
    %v2036 = vunpack.c.l.b16 %v1798
    %v2037 = vunpack.c.h.b16 %v1798
    %v2038 = vunpack.c.l.b16 %v1799
    %v2039 = vunpack.c.l.b16 %v1800
    %v2040 = vunpack.c.h.b16 %v1800
    %v2041 = vunpack.c.l.b16 %v1801
    %v2042 = vunpack.c.l.b16 %v1802
    %v2043 = vunpack.c.h.b16 %v1802
    %v2044 = vunpack.c.l.b16 %v1803
    %v2045 = vunpack.c.l.b16 %v1804
    %v2046 = vunpack.c.h.b16 %v1804
    %v2047 = vunpack.c.l.b16 %v1805
    %v2048 = vunpack.c.l.b16 %v1806
    %v2049 = vunpack.c.h.b16 %v1806
    %v2050 = vunpack.c.l.b16 %v1807
    %v2051 = vunpack.c.l.b16 %v1808
    %v2052 = vunpack.c.h.b16 %v1808
    %v2053 = vunpack.c.l.b16 %v1809
    %v2054 = vunpack.c.l.b16 %v1810
    %v2055 = vunpack.c.h.b16 %v1810
    %v2056 = vunpack.c.l.b16 %v1811
    %v2057 = vunpack.c.l.b16 %v1812
    %v2058 = vunpack.c.h.b16 %v1812
    %v2059 = vunpack.c.l.b16 %v1813
    %v2060 = vunpack.c.l.b16 %v1814
    %v2061 = vunpack.c.h.b16 %v1814
    %v2062 = vunpack.c.l.b16 %v1815
    %v2063 = vunpack.c.l.b16 %v1816
    %v2064 = vunpack.c.h.b16 %v1816
    %v2065 = vunpack.c.l.b16 %v1817
    %v2066 = vunpack.c.l.b16 %v1818
    %v2067 = vunpack.c.h.b16 %v1818
    %v2068 = vunpack.c.l.b16 %v1819
    %v2069 = vunpack.c.l.b16 %v1820
    %v2070 = vunpack.c.h.b16 %v1820
    %v2071 = vunpack.c.l.b16 %v1821
    %v2072 = vunpack.c.l.b16 %v1822
    %v2073 = vunpack.c.h.b16 %v1822
    %v2074 = vunpack.c.l.b16 %v1823
    %v2075 = vunpack.c.l.b16 %v1824
    %v2076 = vunpack.c.h.b16 %v1824
    %v2077 = vunpack.c.l.b16 %v1825
    %v2078 = vunpack.c.l.b16 %v1826
    %v2079 = vunpack.c.h.b16 %v1826
    %v2080 = vunpack.c.l.b16 %v1827
    %v2081 = vunpack.c.l.b16 %v1828
    %v2082 = vunpack.c.h.b16 %v1828
    %v2083 = vunpack.c.l.b16 %v1829
    %v2084 = vunpack.c.l.b16 %v1830
    %v2085 = vunpack.c.h.b16 %v1830
    %v2086 = vunpack.c.l.b16 %v1831
    %v2087 = vunpack.c.l.b16 %v1832
    %v2088 = vunpack.c.h.b16 %v1832
    %v2089 = vunpack.c.l.b16 %v1833
    %v2090 = vunpack.c.l.b16 %v1834
    %v2091 = vunpack.c.h.b16 %v1834
    %v2092 = vunpack.c.l.b16 %v1835
    %v2093 = vpack.c.b16 %v1952, %v1949
    %v2094 = vpack.c.b16 %v1953, %v1950
    %v2095 = vpack.c.b16 %v1954, %v1951
    %v2096 = vpack.c.b16 %v1958, %v1955
    %v2097 = vpack.c.b16 %v1959, %v1956
    %v2098 = vpack.c.b16 %v1960, %v1957
    %v2099 = vpack.c.b16 %v1964, %v1961
    %v2100 = vpack.c.b16 %v1965, %v1962
    %v2101 = vpack.c.b16 %v1966, %v1963
    %v2102 = vpack.c.b16 %v1970, %v1967
    %v2103 = vpack.c.b16 %v1971, %v1968
    %v2104 = vpack.c.b16 %v1972, %v1969
    %v2105 = vpack.c.b16 %v1976, %v1973
    %v2106 = vpack.c.b16 %v1977, %v1974
    %v2107 = vpack.c.b16 %v1978, %v1975
    %v2108 = vpack.c.b16 %v1982, %v1979
    %v2109 = vpack.c.b16 %v1983, %v1980
    %v2110 = vpack.c.b16 %v1984, %v1981
    %v2111 = vpack.c.b16 %v1988, %v1985
    %v2112 = vpack.c.b16 %v1989, %v1986
    %v2113 = vpack.c.b16 %v1990, %v1987
    %v2114 = vpack.c.b16 %v1994, %v1991
    %v2115 = vpack.c.b16 %v1995, %v1992
    %v2116 = vpack.c.b16 %v1996, %v1993
    %v2117 = vpack.c.b16 %v2000, %v1997
    %v2118 = vpack.c.b16 %v2001, %v1998
    %v2119 = vpack.c.b16 %v2002, %v1999
    %v2120 = vpack.c.b16 %v2006, %v2003
    %v2121 = vpack.c.b16 %v2007, %v2004
    %v2122 = vpack.c.b16 %v2008, %v2005
    %v2123 = vpack.c.b16 %v2012, %v2009
    %v2124 = vpack.c.b16 %v2013, %v2010
    %v2125 = vpack.c.b16 %v2014, %v2011
    %v2126 = vpack.c.b16 %v2018, %v2015
    %v2127 = vpack.c.b16 %v2019, %v2016
    %v2128 = vpack.c.b16 %v2020, %v2017
    %v2129 = vpack.c.b16 %v2024, %v2021
    %v2130 = vpack.c.b16 %v2025, %v2022
    %v2131 = vpack.c.b16 %v2026, %v2023
    %v2132 = vpack.c.b16 %v2030, %v2027
    %v2133 = vpack.c.b16 %v2031, %v2028
    %v2134 = vpack.c.b16 %v2032, %v2029
    %v2135 = vpack.c.b16 %v2036, %v2033
    %v2136 = vpack.c.b16 %v2037, %v2034
    %v2137 = vpack.c.b16 %v2038, %v2035
    %v2138 = vpack.c.b16 %v2042, %v2039
    %v2139 = vpack.c.b16 %v2043, %v2040
    %v2140 = vpack.c.b16 %v2044, %v2041
    %v2141 = vpack.c.b16 %v2048, %v2045
    %v2142 = vpack.c.b16 %v2049, %v2046
    %v2143 = vpack.c.b16 %v2050, %v2047
    %v2144 = vpack.c.b16 %v2054, %v2051
    %v2145 = vpack.c.b16 %v2055, %v2052
    %v2146 = vpack.c.b16 %v2056, %v2053
    %v2147 = vpack.c.b16 %v2060, %v2057
    %v2148 = vpack.c.b16 %v2061, %v2058
    %v2149 = vpack.c.b16 %v2062, %v2059
    %v2150 = vpack.c.b16 %v2066, %v2063
    %v2151 = vpack.c.b16 %v2067, %v2064
    %v2152 = vpack.c.b16 %v2068, %v2065
    %v2153 = vpack.c.b16 %v2072, %v2069
    %v2154 = vpack.c.b16 %v2073, %v2070
    %v2155 = vpack.c.b16 %v2074, %v2071
    %v2156 = vpack.c.b16 %v2078, %v2075
    %v2157 = vpack.c.b16 %v2079, %v2076
    %v2158 = vpack.c.b16 %v2080, %v2077
    %v2159 = vpack.c.b16 %v2084, %v2081
    %v2160 = vpack.c.b16 %v2085, %v2082
    %v2161 = vpack.c.b16 %v2086, %v2083
    %v2162 = vpack.c.b16 %v2090, %v2087
    %v2163 = vpack.c.b16 %v2091, %v2088
    %v2164 = vpack.c.b16 %v2092, %v2089
    %2237 = vmatprep.subr.bf16.mxu0 %v2115
    %2238 = vmatpush1.bf16.msra.mxu0 %v2114
    %2239 = vmatprep.subr.bf16.mxu0 %v2112
    %2240 = vmatpush1.bf16.msra.mxu0 %v2111
    %2241 = vmatprep.subr.bf16.mxu0 %v2109
    %2242 = vmatpush1.bf16.msra.mxu0 %v2108
    %2243 = vmatprep.subr.bf16.mxu0 %v2106
    %2244 = vmatpush1.bf16.msra.mxu0 %v2105
    %2245 = vmatprep.subr.bf16.mxu0 %v2103
    %2246 = vmatpush1.bf16.msra.mxu0 %v2102
    %2247 = vmatprep.subr.bf16.mxu0 %v2100
    %2248 = vmatpush1.bf16.msra.mxu0 %v2099
    %2249 = vmatprep.subr.bf16.mxu0 %v2097
    %2250 = vmatpush1.bf16.msra.mxu0 %v2096
    %2251 = vmatprep.subr.bf16.mxu0 %v2094
    %2252 = vmatpush1.bf16.msra.mxu0 %v2093
    %2253 = vmatprep.subr.bf16.mxu0 %v2139
    %2254 = vmatpush2.bf16.msra.mxu0 %v2138
    %2255 = vmatprep.subr.bf16.mxu0 %v2136
    %2256 = vmatpush2.bf16.msra.mxu0 %v2135
    %2257 = vmatprep.subr.bf16.mxu0 %v2133
    %2258 = vmatpush2.bf16.msra.mxu0 %v2132
    %2259 = vmatprep.subr.bf16.mxu0 %v2130
    %2260 = vmatpush2.bf16.msra.mxu0 %v2129
    %2261 = vmatprep.subr.bf16.mxu0 %v2127
    %2262 = vmatpush2.bf16.msra.mxu0 %v2126
    %2263 = vmatprep.subr.bf16.mxu0 %v2124
    %2264 = vmatpush2.bf16.msra.mxu0 %v2123
    %2265 = vmatprep.subr.bf16.mxu0 %v2121
    %2266 = vmatpush2.bf16.msra.mxu0 %v2120
    %2267 = vmatprep.subr.bf16.mxu0 %v2118
    %2268 = vmatpush2.bf16.msra.mxu0 %v2117
    %2269 = vmatprep.mubr.bf16.mxu0 %v1738
    %2270 = vmatmul.mubr.bf16.gmra.mxu0 %v1737
    %v2271 = vpop.f32.mrf.mxu0
    %v2272 = vadd.f32 %v1841, %v2271
    %v2273 = vpop.f32.mrf.mxu0
    %v2274 = vadd.f32 %v1845, %v2273
    %v2275 = vpop.f32.mrf.mxu0
    %v2276 = vpop.f32.mrf.mxu0
    %2277 = vdwg.mxu0
    %2278 = vmatprep.subr.bf16.mxu0 %v2163
    %2279 = vmatpush1.bf16.msra.mxu0 %v2162
    %2280 = vmatprep.subr.bf16.mxu0 %v2160
    %2281 = vmatpush1.bf16.msra.mxu0 %v2159
    %2282 = vmatprep.subr.bf16.mxu0 %v2157
    %2283 = vmatpush1.bf16.msra.mxu0 %v2156
    %2284 = vmatprep.subr.bf16.mxu0 %v2154
    %2285 = vmatpush1.bf16.msra.mxu0 %v2153
    %2286 = vmatprep.subr.bf16.mxu0 %v2151
    %2287 = vmatpush1.bf16.msra.mxu0 %v2150
    %2288 = vmatprep.subr.bf16.mxu0 %v2148
    %2289 = vmatpush1.bf16.msra.mxu0 %v2147
    %2290 = vmatprep.subr.bf16.mxu0 %v2145
    %2291 = vmatpush1.bf16.msra.mxu0 %v2144
    %2292 = vmatprep.subr.bf16.mxu0 %v2142
    %2293 = vmatpush1.bf16.msra.mxu0 %v2141
    %2294 = vmatprep.subr.bf16.mxu0 0
    %2295 = vmatpush2.bf16.msra.mxu0 0
    %2296 = vmatprep.subr.bf16.mxu0 0
    %2297 = vmatpush2.bf16.msra.mxu0 0
    %2298 = vmatprep.subr.bf16.mxu0 0
    %2299 = vmatpush2.bf16.msra.mxu0 0
    %2300 = vmatprep.subr.bf16.mxu0 0
    %2301 = vmatpush2.bf16.msra.mxu0 0
    %2302 = vmatprep.subr.bf16.mxu0 0
    %2303 = vmatpush2.bf16.msra.mxu0 0
    %2304 = vmatprep.subr.bf16.mxu0 0
    %2305 = vmatpush2.bf16.msra.mxu0 0
    %2306 = vmatprep.subr.bf16.mxu0 0
    %2307 = vmatpush2.bf16.msra.mxu0 0
    %2308 = vmatprep.subr.bf16.mxu0 0
    %2309 = vmatpush2.bf16.msra.mxu0 0
    %2310 = vmatprep.mubr.bf16.mxu0 0
    %2311 = vmatmul.mubr.bf16.gmra.mxu0 %v1739
    %v2312 = vpop.f32.mrf.mxu0
    %v2313 = vadd.f32 %v2272, %v2312
    %v2314 = vpop.f32.mrf.mxu0
    %v2315 = vadd.f32 %v2274, %v2314
    %v2316 = vpop.f32.mrf.mxu0
    %v2317 = vpop.f32.mrf.mxu0
    %2318 = vdwg.mxu0
    %2319 = vmatprep.subr.bf16.mxu0 0
    %2320 = vmatpush1.bf16.msra.mxu0 %v2116
    %2321 = vmatprep.subr.bf16.mxu0 0
    %2322 = vmatpush1.bf16.msra.mxu0 %v2113
    %2323 = vmatprep.subr.bf16.mxu0 0
    %2324 = vmatpush1.bf16.msra.mxu0 %v2110
    %2325 = vmatprep.subr.bf16.mxu0 0
    %2326 = vmatpush1.bf16.msra.mxu0 %v2107
    %2327 = vmatprep.subr.bf16.mxu0 0
    %2328 = vmatpush1.bf16.msra.mxu0 %v2104
    %2329 = vmatprep.subr.bf16.mxu0 0
    %2330 = vmatpush1.bf16.msra.mxu0 %v2101
    %2331 = vmatprep.subr.bf16.mxu0 0
    %2332 = vmatpush1.bf16.msra.mxu0 %v2098
    %2333 = vmatprep.subr.bf16.mxu0 0
    %2334 = vmatpush1.bf16.msra.mxu0 %v2095
    %2335 = vmatprep.subr.bf16.mxu0 0
    %2336 = vmatpush2.bf16.msra.mxu0 %v2140
    %2337 = vmatprep.subr.bf16.mxu0 0
    %2338 = vmatpush2.bf16.msra.mxu0 %v2137
    %2339 = vmatprep.subr.bf16.mxu0 0
    %2340 = vmatpush2.bf16.msra.mxu0 %v2134
    %2341 = vmatprep.subr.bf16.mxu0 0
    %2342 = vmatpush2.bf16.msra.mxu0 %v2131
    %2343 = vmatprep.subr.bf16.mxu0 0
    %2344 = vmatpush2.bf16.msra.mxu0 %v2128
    %2345 = vmatprep.subr.bf16.mxu0 0
    %2346 = vmatpush2.bf16.msra.mxu0 %v2125
    %2347 = vmatprep.subr.bf16.mxu0 0
    %2348 = vmatpush2.bf16.msra.mxu0 %v2122
    %2349 = vmatprep.subr.bf16.mxu0 0
    %2350 = vmatpush2.bf16.msra.mxu0 %v2119
    %2351 = vmatprep.mubr.bf16.mxu0 %v1738
    %2352 = vmatmul.mubr.bf16.gmra.mxu0 %v1737
    %v2353 = vpop.f32.mrf.mxu0
    %v2354 = vadd.f32 %v1849, %v2353
    %v2355 = vpop.f32.mrf.mxu0
    %v2356 = vpop.f32.mrf.mxu0
    %v2357 = vpop.f32.mrf.mxu0
    %2358 = vdwg.mxu0
    %2359 = vmatprep.subr.bf16.mxu0 0
    %2360 = vmatpush1.bf16.msra.mxu0 %v2164
    %2361 = vmatprep.subr.bf16.mxu0 0
    %2362 = vmatpush1.bf16.msra.mxu0 %v2161
    %2363 = vmatprep.subr.bf16.mxu0 0
    %2364 = vmatpush1.bf16.msra.mxu0 %v2158
    %2365 = vmatprep.subr.bf16.mxu0 0
    %2366 = vmatpush1.bf16.msra.mxu0 %v2155
    %2367 = vmatprep.subr.bf16.mxu0 0
    %2368 = vmatpush1.bf16.msra.mxu0 %v2152
    %2369 = vmatprep.subr.bf16.mxu0 0
    %2370 = vmatpush1.bf16.msra.mxu0 %v2149
    %2371 = vmatprep.subr.bf16.mxu0 0
    %2372 = vmatpush1.bf16.msra.mxu0 %v2146
    %2373 = vmatprep.subr.bf16.mxu0 0
    %2374 = vmatpush1.bf16.msra.mxu0 %v2143
    %2375 = vmatprep.subr.bf16.mxu0 0
    %2376 = vmatpush2.bf16.msra.mxu0 0
    %2377 = vmatprep.subr.bf16.mxu0 0
    %2378 = vmatpush2.bf16.msra.mxu0 0
    %2379 = vmatprep.subr.bf16.mxu0 0
    %2380 = vmatpush2.bf16.msra.mxu0 0
    %2381 = vmatprep.subr.bf16.mxu0 0
    %2382 = vmatpush2.bf16.msra.mxu0 0
    %2383 = vmatprep.subr.bf16.mxu0 0
    %2384 = vmatpush2.bf16.msra.mxu0 0
    %2385 = vmatprep.subr.bf16.mxu0 0
    %2386 = vmatpush2.bf16.msra.mxu0 0
    %2387 = vmatprep.subr.bf16.mxu0 0
    %2388 = vmatpush2.bf16.msra.mxu0 0
    %2389 = vmatprep.subr.bf16.mxu0 0
    %2390 = vmatpush2.bf16.msra.mxu0 0
    %2391 = vmatprep.mubr.bf16.mxu0 0
    %2392 = vmatmul.mubr.bf16.gmra.mxu0 %v1739
    %v2393 = vpop.f32.mrf.mxu0
    %v2394 = vadd.f32 %v2354, %v2393
    %v2395 = vpop.f32.mrf.mxu0
    %v2396 = vpop.f32.mrf.mxu0
    %v2397 = vpop.f32.mrf.mxu0
    %2398 = vdwg.mxu0
    %v2399 = vmax.f32 %v2313, 0.0
    %v2400 = vmax.f32 %v2315, 0.0
    %v2401 = vmax.f32 %v2394, 0.0
    %v2402 = vand.u32 2147483647, %v2313
    %v2403 = vand.u32 2147483647, %v2315
    %v2404 = vand.u32 2147483647, %v2394
    %v2405 = vsub.f32 0.0, %v2402
    %v2406 = vsub.f32 0.0, %v2403
    %v2407 = vsub.f32 0.0, %v2404
    %v2408 = vmul.f32 %v2405, 1.442695
    %v2409 = vpow.pop %v2408
    %v2410 = vmul.f32 %v2406, 1.442695
    %v2411 = vpow.pop %v2410
    %v2412 = vmul.f32 %v2407, 1.442695
    %v2413 = vpow.pop %v2412
    %v2414 = vadd.f32 %v2409, 1.0
    %v2415 = vlog2.pop %v2414
    %v2416 = vmul.f32 %v2415, 0.6931472
    %v2417 = vmul.f32 -0.5, %v2409
    %v2418 = vadd.f32 %v2417, 1.0
    %v2419 = vmul.f32 %v2418, %v2409
    %v2420 = vand.u32 2147483647, %v2409
    %vm2421 = vcmp.lt.f32.partialorder %v2420, 0.0004427343
    %v2422 = vsel %vm2421, %v2419, %v2416
    %v2423 = vadd.f32 %v2411, 1.0
    %v2424 = vlog2.pop %v2423
    %v2425 = vmul.f32 %v2424, 0.6931472
    %v2426 = vmul.f32 -0.5, %v2411
    %v2427 = vadd.f32 %v2426, 1.0
    %v2428 = vmul.f32 %v2427, %v2411
    %v2429 = vand.u32 2147483647, %v2411
    %vm2430 = vcmp.lt.f32.partialorder %v2429, 0.0004427343
    %v2431 = vsel %vm2430, %v2428, %v2425
    %v2432 = vadd.f32 %v2413, 1.0
    %v2433 = vlog2.pop %v2432
    %v2434 = vmul.f32 %v2433, 0.6931472
    %v2435 = vmul.f32 -0.5, %v2413
    %v2436 = vadd.f32 %v2435, 1.0
    %v2437 = vmul.f32 %v2436, %v2413
    %v2438 = vand.u32 2147483647, %v2413
    %vm2439 = vcmp.lt.f32.partialorder %v2438, 0.0004427343
    %v2440 = vsel %vm2439, %v2437, %v2434
    %v2441 = vadd.f32 %v2399, %v2422
    %v2442 = vadd.f32 %v2400, %v2431
    %v2443 = vadd.f32 %v2401, %v2440
    %v2444 = vpack.c.bf16 %v2441, %v2441
    %v2445 = vpack.c.bf16 %v2442, %v2442
    %v2446 = vpack.c.bf16 %v2443, %v2443
    %v2447 = vld [vmem:[#allocation16] sm:$0xff]
    %v2448 = vld [vmem:[#allocation16 + $0x8] sm:$0xf]
    %v2449 = vld [vmem:[#allocation16 + $0xc] sm:$0xff]
    %v2450 = vld [vmem:[#allocation16 + $0x14] sm:$0xf]
    %v2451 = vld [vmem:[#allocation16 + $0x18] sm:$0xff]
    %v2452 = vld [vmem:[#allocation16 + $0x20] sm:$0xf]
    %v2453 = vld [vmem:[#allocation16 + $0x24] sm:$0xff]
    %v2454 = vld [vmem:[#allocation16 + $0x2c] sm:$0xf]
    %v2455 = vld [vmem:[#allocation16 + $0x30] sm:$0xff]
    %v2456 = vld [vmem:[#allocation16 + $0x38] sm:$0xf]
    %v2457 = vld [vmem:[#allocation16 + $0x3c] sm:$0xff]
    %v2458 = vld [vmem:[#allocation16 + $0x44] sm:$0xf]
    %v2459 = vld [vmem:[#allocation16 + $0x48] sm:$0xff]
    %v2460 = vld [vmem:[#allocation16 + $0x50] sm:$0xf]
    %v2461 = vld [vmem:[#allocation16 + $0x54] sm:$0xff]
    %v2462 = vld [vmem:[#allocation16 + $0x5c] sm:$0xf]
    %v2463 = vld [vmem:[#allocation16 + $0x60] sm:$0xff]
    %v2464 = vld [vmem:[#allocation16 + $0x68] sm:$0xf]
    %v2465 = vld [vmem:[#allocation16 + $0x6c] sm:$0xff]
    %v2466 = vld [vmem:[#allocation16 + $0x74] sm:$0xf]
    %v2467 = vld [vmem:[#allocation16 + $0x78] sm:$0xff]
    %v2468 = vld [vmem:[#allocation16 + $0x80] sm:$0xf]
    %v2469 = vld [vmem:[#allocation16 + $0x84] sm:$0xff]
    %v2470 = vld [vmem:[#allocation16 + $0x8c] sm:$0xf]
    %v2471 = vld [vmem:[#allocation16 + $0x90] sm:$0xff]
    %v2472 = vld [vmem:[#allocation16 + $0x98] sm:$0xf]
    %v2473 = vld [vmem:[#allocation16 + $0x9c] sm:$0xff]
    %v2474 = vld [vmem:[#allocation16 + $0xa4] sm:$0xf]
    %v2475 = vld [vmem:[#allocation16 + $0xa8] sm:$0xff]
    %v2476 = vld [vmem:[#allocation16 + $0xb0] sm:$0xf]
    %v2477 = vld [vmem:[#allocation16 + $0xb4] sm:$0xff]
    %v2478 = vld [vmem:[#allocation16 + $0xbc] sm:$0xf]
    %v2479 = vld [vmem:[#allocation16 + $0xc0] sm:$0xff]
    %v2480 = vld [vmem:[#allocation16 + $0xc8] sm:$0xf]
    %v2481 = vld [vmem:[#allocation16 + $0xcc] sm:$0xff]
    %v2482 = vld [vmem:[#allocation16 + $0xd4] sm:$0xf]
    %v2483 = vld [vmem:[#allocation16 + $0xd8] sm:$0xff]
    %v2484 = vld [vmem:[#allocation16 + $0xe0] sm:$0xf]
    %v2485 = vld [vmem:[#allocation16 + $0xe4] sm:$0xff]
    %v2486 = vld [vmem:[#allocation16 + $0xec] sm:$0xf]
    %v2487 = vld [vmem:[#allocation16 + $0xf0] sm:$0xff]
    %v2488 = vld [vmem:[#allocation16 + $0xf8] sm:$0xf]
    %v2489 = vld [vmem:[#allocation16 + $0xfc] sm:$0xff]
    %v2490 = vld [vmem:[#allocation16 + $0x104] sm:$0xf]
    %v2491 = vld [vmem:[#allocation16 + $0x108] sm:$0xff]
    %v2492 = vld [vmem:[#allocation16 + $0x110] sm:$0xf]
    %v2493 = vld [vmem:[#allocation16 + $0x114] sm:$0xff]
    %v2494 = vld [vmem:[#allocation16 + $0x11c] sm:$0xf]
    %v2495 = vld [vmem:[#allocation16 + $0x120] sm:$0xff]
    %v2496 = vld [vmem:[#allocation16 + $0x128] sm:$0xf]
    %v2497 = vld [vmem:[#allocation16 + $0x12c] sm:$0xff]
    %v2498 = vld [vmem:[#allocation16 + $0x134] sm:$0xf]
    %v2499 = vld [vmem:[#allocation16 + $0x138] sm:$0xff]
    %v2500 = vld [vmem:[#allocation16 + $0x140] sm:$0xf]
    %v2501 = vld [vmem:[#allocation16 + $0x144] sm:$0xff]
    %v2502 = vld [vmem:[#allocation16 + $0x14c] sm:$0xf]
    %v2503 = vld [vmem:[#allocation16 + $0x150] sm:$0xff]
    %v2504 = vld [vmem:[#allocation16 + $0x158] sm:$0xf]
    %v2505 = vld [vmem:[#allocation16 + $0x15c] sm:$0xff]
    %v2506 = vld [vmem:[#allocation16 + $0x164] sm:$0xf]
    %v2507 = vld [vmem:[#allocation16 + $0x168] sm:$0xff]
    %v2508 = vld [vmem:[#allocation16 + $0x170] sm:$0xf]
    %v2509 = vld [vmem:[#allocation16 + $0x174] sm:$0xff]
    %v2510 = vld [vmem:[#allocation16 + $0x17c] sm:$0xf]
    %v2511 = vld [vmem:[#allocation16 + $0x180] sm:$0xff]
    %v2512 = vld [vmem:[#allocation16 + $0x188] sm:$0xf]
    %v2513 = vld [vmem:[#allocation16 + $0x18c] sm:$0xff]
    %v2514 = vld [vmem:[#allocation16 + $0x194] sm:$0xf]
    %v2515 = vld [vmem:[#allocation16 + $0x198] sm:$0xff]
    %v2516 = vld [vmem:[#allocation16 + $0x1a0] sm:$0xf]
    %v2517 = vld [vmem:[#allocation16 + $0x1a4] sm:$0xff]
    %v2518 = vld [vmem:[#allocation16 + $0x1ac] sm:$0xf]
    %v2519 = vld [vmem:[#allocation16 + $0x1b0] sm:$0xff]
    %v2520 = vld [vmem:[#allocation16 + $0x1b8] sm:$0xf]
    %v2521 = vld [vmem:[#allocation16 + $0x1bc] sm:$0xff]
    %v2522 = vld [vmem:[#allocation16 + $0x1c4] sm:$0xf]
    %v2523 = vld [vmem:[#allocation16 + $0x1c8] sm:$0xff]
    %v2524 = vld [vmem:[#allocation16 + $0x1d0] sm:$0xf]
    %v2525 = vld [vmem:[#allocation16 + $0x1d4] sm:$0xff]
    %v2526 = vld [vmem:[#allocation16 + $0x1dc] sm:$0xf]
    %v2527 = vld [vmem:[#allocation16 + $0x1e0] sm:$0xff]
    %v2528 = vld [vmem:[#allocation16 + $0x1e8] sm:$0xf]
    %v2529 = vld [vmem:[#allocation16 + $0x1ec] sm:$0xff]
    %v2530 = vld [vmem:[#allocation16 + $0x1f4] sm:$0xf]
    %v2531 = vld [vmem:[#allocation16 + $0x1f8] sm:$0xff]
    %v2532 = vld [vmem:[#allocation16 + $0x200] sm:$0xf]
    %v2533 = vld [vmem:[#allocation16 + $0x204] sm:$0xff]
    %v2534 = vld [vmem:[#allocation16 + $0x20c] sm:$0xf]
    %v2535 = vld [vmem:[#allocation16 + $0x210] sm:$0xff]
    %v2536 = vld [vmem:[#allocation16 + $0x218] sm:$0xf]
    %v2537 = vld [vmem:[#allocation16 + $0x21c] sm:$0xff]
    %v2538 = vld [vmem:[#allocation16 + $0x224] sm:$0xf]
    %v2539 = vld [vmem:[#allocation16 + $0x228] sm:$0xff]
    %v2540 = vld [vmem:[#allocation16 + $0x230] sm:$0xf]
    %v2541 = vld [vmem:[#allocation16 + $0x234] sm:$0xff]
    %v2542 = vld [vmem:[#allocation16 + $0x23c] sm:$0xf]
    %v2543 = vld [vmem:[%s29] sm:$0x7]
    %v2545 = vlaneseq
    %v2546 = vshrl.u32 %v2545, 7
    %v2547 = vsub.s32 0, %v2546
    %v2548 = vrot.slane %v2543, %v2547
    %v2549 = vlaneseq
    %v2550 = vshrl.u32 %v2549, 7
    %v2551 = vsub.s32 1, %v2550
    %v2552 = vrot.slane %v2543, %v2551
    %v2553 = vlaneseq
    %v2554 = vshrl.u32 %v2553, 7
    %v2555 = vsub.s32 2, %v2554
    %v2556 = vrot.slane %v2543, %v2555
    %v2656 = vunpack.c.l.b16 %v2447
    %v2657 = vunpack.c.h.b16 %v2447
    %v2658 = vunpack.c.l.b16 %v2448
    %v2659 = vunpack.c.l.b16 %v2449
    %v2660 = vunpack.c.h.b16 %v2449
    %v2661 = vunpack.c.l.b16 %v2450
    %v2662 = vunpack.c.l.b16 %v2451
    %v2663 = vunpack.c.h.b16 %v2451
    %v2664 = vunpack.c.l.b16 %v2452
    %v2665 = vunpack.c.l.b16 %v2453
    %v2666 = vunpack.c.h.b16 %v2453
    %v2667 = vunpack.c.l.b16 %v2454
    %v2668 = vunpack.c.l.b16 %v2455
    %v2669 = vunpack.c.h.b16 %v2455
    %v2670 = vunpack.c.l.b16 %v2456
    %v2671 = vunpack.c.l.b16 %v2457
    %v2672 = vunpack.c.h.b16 %v2457
    %v2673 = vunpack.c.l.b16 %v2458
    %v2674 = vunpack.c.l.b16 %v2459
    %v2675 = vunpack.c.h.b16 %v2459
    %v2676 = vunpack.c.l.b16 %v2460
    %v2677 = vunpack.c.l.b16 %v2461
    %v2678 = vunpack.c.h.b16 %v2461
    %v2679 = vunpack.c.l.b16 %v2462
    %v2680 = vunpack.c.l.b16 %v2463
    %v2681 = vunpack.c.h.b16 %v2463
    %v2682 = vunpack.c.l.b16 %v2464
    %v2683 = vunpack.c.l.b16 %v2465
    %v2684 = vunpack.c.h.b16 %v2465
    %v2685 = vunpack.c.l.b16 %v2466
    %v2686 = vunpack.c.l.b16 %v2467
    %v2687 = vunpack.c.h.b16 %v2467
    %v2688 = vunpack.c.l.b16 %v2468
    %v2689 = vunpack.c.l.b16 %v2469
    %v2690 = vunpack.c.h.b16 %v2469
    %v2691 = vunpack.c.l.b16 %v2470
    %v2692 = vunpack.c.l.b16 %v2471
    %v2693 = vunpack.c.h.b16 %v2471
    %v2694 = vunpack.c.l.b16 %v2472
    %v2695 = vunpack.c.l.b16 %v2473
    %v2696 = vunpack.c.h.b16 %v2473
    %v2697 = vunpack.c.l.b16 %v2474
    %v2698 = vunpack.c.l.b16 %v2475
    %v2699 = vunpack.c.h.b16 %v2475
    %v2700 = vunpack.c.l.b16 %v2476
    %v2701 = vunpack.c.l.b16 %v2477
    %v2702 = vunpack.c.h.b16 %v2477
    %v2703 = vunpack.c.l.b16 %v2478
    %v2704 = vunpack.c.l.b16 %v2479
    %v2705 = vunpack.c.h.b16 %v2479
    %v2706 = vunpack.c.l.b16 %v2480
    %v2707 = vunpack.c.l.b16 %v2481
    %v2708 = vunpack.c.h.b16 %v2481
    %v2709 = vunpack.c.l.b16 %v2482
    %v2710 = vunpack.c.l.b16 %v2483
    %v2711 = vunpack.c.h.b16 %v2483
    %v2712 = vunpack.c.l.b16 %v2484
    %v2713 = vunpack.c.l.b16 %v2485
    %v2714 = vunpack.c.h.b16 %v2485
    %v2715 = vunpack.c.l.b16 %v2486
    %v2716 = vunpack.c.l.b16 %v2487
    %v2717 = vunpack.c.h.b16 %v2487
    %v2718 = vunpack.c.l.b16 %v2488
    %v2719 = vunpack.c.l.b16 %v2489
    %v2720 = vunpack.c.h.b16 %v2489
    %v2721 = vunpack.c.l.b16 %v2490
    %v2722 = vunpack.c.l.b16 %v2491
    %v2723 = vunpack.c.h.b16 %v2491
    %v2724 = vunpack.c.l.b16 %v2492
    %v2725 = vunpack.c.l.b16 %v2493
    %v2726 = vunpack.c.h.b16 %v2493
    %v2727 = vunpack.c.l.b16 %v2494
    %v2728 = vunpack.c.l.b16 %v2495
    %v2729 = vunpack.c.h.b16 %v2495
    %v2730 = vunpack.c.l.b16 %v2496
    %v2731 = vunpack.c.l.b16 %v2497
    %v2732 = vunpack.c.h.b16 %v2497
    %v2733 = vunpack.c.l.b16 %v2498
    %v2734 = vunpack.c.l.b16 %v2499
    %v2735 = vunpack.c.h.b16 %v2499
    %v2736 = vunpack.c.l.b16 %v2500
    %v2737 = vunpack.c.l.b16 %v2501
    %v2738 = vunpack.c.h.b16 %v2501
    %v2739 = vunpack.c.l.b16 %v2502
    %v2740 = vunpack.c.l.b16 %v2503
    %v2741 = vunpack.c.h.b16 %v2503
    %v2742 = vunpack.c.l.b16 %v2504
    %v2743 = vunpack.c.l.b16 %v2505
    %v2744 = vunpack.c.h.b16 %v2505
    %v2745 = vunpack.c.l.b16 %v2506
    %v2746 = vunpack.c.l.b16 %v2507
    %v2747 = vunpack.c.h.b16 %v2507
    %v2748 = vunpack.c.l.b16 %v2508
    %v2749 = vunpack.c.l.b16 %v2509
    %v2750 = vunpack.c.h.b16 %v2509
    %v2751 = vunpack.c.l.b16 %v2510
    %v2752 = vunpack.c.l.b16 %v2511
    %v2753 = vunpack.c.h.b16 %v2511
    %v2754 = vunpack.c.l.b16 %v2512
    %v2755 = vunpack.c.l.b16 %v2513
    %v2756 = vunpack.c.h.b16 %v2513
    %v2757 = vunpack.c.l.b16 %v2514
    %v2758 = vunpack.c.l.b16 %v2515
    %v2759 = vunpack.c.h.b16 %v2515
    %v2760 = vunpack.c.l.b16 %v2516
    %v2761 = vunpack.c.l.b16 %v2517
    %v2762 = vunpack.c.h.b16 %v2517
    %v2763 = vunpack.c.l.b16 %v2518
    %v2764 = vunpack.c.l.b16 %v2519
    %v2765 = vunpack.c.h.b16 %v2519
    %v2766 = vunpack.c.l.b16 %v2520
    %v2767 = vunpack.c.l.b16 %v2521
    %v2768 = vunpack.c.h.b16 %v2521
    %v2769 = vunpack.c.l.b16 %v2522
    %v2770 = vunpack.c.l.b16 %v2523
    %v2771 = vunpack.c.h.b16 %v2523
    %v2772 = vunpack.c.l.b16 %v2524
    %v2773 = vunpack.c.l.b16 %v2525
    %v2774 = vunpack.c.h.b16 %v2525
    %v2775 = vunpack.c.l.b16 %v2526
    %v2776 = vunpack.c.l.b16 %v2527
    %v2777 = vunpack.c.h.b16 %v2527
    %v2778 = vunpack.c.l.b16 %v2528
    %v2779 = vunpack.c.l.b16 %v2529
    %v2780 = vunpack.c.h.b16 %v2529
    %v2781 = vunpack.c.l.b16 %v2530
    %v2782 = vunpack.c.l.b16 %v2531
    %v2783 = vunpack.c.h.b16 %v2531
    %v2784 = vunpack.c.l.b16 %v2532
    %v2785 = vunpack.c.l.b16 %v2533
    %v2786 = vunpack.c.h.b16 %v2533
    %v2787 = vunpack.c.l.b16 %v2534
    %v2788 = vunpack.c.l.b16 %v2535
    %v2789 = vunpack.c.h.b16 %v2535
    %v2790 = vunpack.c.l.b16 %v2536
    %v2791 = vunpack.c.l.b16 %v2537
    %v2792 = vunpack.c.h.b16 %v2537
    %v2793 = vunpack.c.l.b16 %v2538
    %v2794 = vunpack.c.l.b16 %v2539
    %v2795 = vunpack.c.h.b16 %v2539
    %v2796 = vunpack.c.l.b16 %v2540
    %v2797 = vunpack.c.l.b16 %v2541
    %v2798 = vunpack.c.h.b16 %v2541
    %v2799 = vunpack.c.l.b16 %v2542
    %v2800 = vpack.c.b16 %v2659, %v2656
    %v2801 = vpack.c.b16 %v2660, %v2657
    %v2802 = vpack.c.b16 %v2661, %v2658
    %v2803 = vpack.c.b16 %v2665, %v2662
    %v2804 = vpack.c.b16 %v2666, %v2663
    %v2805 = vpack.c.b16 %v2667, %v2664
    %v2806 = vpack.c.b16 %v2671, %v2668
    %v2807 = vpack.c.b16 %v2672, %v2669
    %v2808 = vpack.c.b16 %v2673, %v2670
    %v2809 = vpack.c.b16 %v2677, %v2674
    %v2810 = vpack.c.b16 %v2678, %v2675
    %v2811 = vpack.c.b16 %v2679, %v2676
    %v2812 = vpack.c.b16 %v2683, %v2680
    %v2813 = vpack.c.b16 %v2684, %v2681
    %v2814 = vpack.c.b16 %v2685, %v2682
    %v2815 = vpack.c.b16 %v2689, %v2686
    %v2816 = vpack.c.b16 %v2690, %v2687
    %v2817 = vpack.c.b16 %v2691, %v2688
    %v2818 = vpack.c.b16 %v2695, %v2692
    %v2819 = vpack.c.b16 %v2696, %v2693
    %v2820 = vpack.c.b16 %v2697, %v2694
    %v2821 = vpack.c.b16 %v2701, %v2698
    %v2822 = vpack.c.b16 %v2702, %v2699
    %v2823 = vpack.c.b16 %v2703, %v2700
    %v2824 = vpack.c.b16 %v2707, %v2704
    %v2825 = vpack.c.b16 %v2708, %v2705
    %v2826 = vpack.c.b16 %v2709, %v2706
    %v2827 = vpack.c.b16 %v2713, %v2710
    %v2828 = vpack.c.b16 %v2714, %v2711
    %v2829 = vpack.c.b16 %v2715, %v2712
    %v2830 = vpack.c.b16 %v2719, %v2716
    %v2831 = vpack.c.b16 %v2720, %v2717
    %v2832 = vpack.c.b16 %v2721, %v2718
    %v2833 = vpack.c.b16 %v2725, %v2722
    %v2834 = vpack.c.b16 %v2726, %v2723
    %v2835 = vpack.c.b16 %v2727, %v2724
    %v2836 = vpack.c.b16 %v2731, %v2728
    %v2837 = vpack.c.b16 %v2732, %v2729
    %v2838 = vpack.c.b16 %v2733, %v2730
    %v2839 = vpack.c.b16 %v2737, %v2734
    %v2840 = vpack.c.b16 %v2738, %v2735
    %v2841 = vpack.c.b16 %v2739, %v2736
    %v2842 = vpack.c.b16 %v2743, %v2740
    %v2843 = vpack.c.b16 %v2744, %v2741
    %v2844 = vpack.c.b16 %v2745, %v2742
    %v2845 = vpack.c.b16 %v2749, %v2746
    %v2846 = vpack.c.b16 %v2750, %v2747
    %v2847 = vpack.c.b16 %v2751, %v2748
    %v2848 = vpack.c.b16 %v2755, %v2752
    %v2849 = vpack.c.b16 %v2756, %v2753
    %v2850 = vpack.c.b16 %v2757, %v2754
    %v2851 = vpack.c.b16 %v2761, %v2758
    %v2852 = vpack.c.b16 %v2762, %v2759
    %v2853 = vpack.c.b16 %v2763, %v2760
    %v2854 = vpack.c.b16 %v2767, %v2764
    %v2855 = vpack.c.b16 %v2768, %v2765
    %v2856 = vpack.c.b16 %v2769, %v2766
    %v2857 = vpack.c.b16 %v2773, %v2770
    %v2858 = vpack.c.b16 %v2774, %v2771
    %v2859 = vpack.c.b16 %v2775, %v2772
    %v2860 = vpack.c.b16 %v2779, %v2776
    %v2861 = vpack.c.b16 %v2780, %v2777
    %v2862 = vpack.c.b16 %v2781, %v2778
    %v2863 = vpack.c.b16 %v2785, %v2782
    %v2864 = vpack.c.b16 %v2786, %v2783
    %v2865 = vpack.c.b16 %v2787, %v2784
    %v2866 = vpack.c.b16 %v2791, %v2788
    %v2867 = vpack.c.b16 %v2792, %v2789
    %v2868 = vpack.c.b16 %v2793, %v2790
    %v2869 = vpack.c.b16 %v2797, %v2794
    %v2870 = vpack.c.b16 %v2798, %v2795
    %v2871 = vpack.c.b16 %v2799, %v2796
    %2944 = vmatprep.subr.bf16.mxu0 %v2822
    %2945 = vmatpush1.bf16.msra.mxu0 %v2821
    %2946 = vmatprep.subr.bf16.mxu0 %v2819
    %2947 = vmatpush1.bf16.msra.mxu0 %v2818
    %2948 = vmatprep.subr.bf16.mxu0 %v2816
    %2949 = vmatpush1.bf16.msra.mxu0 %v2815
    %2950 = vmatprep.subr.bf16.mxu0 %v2813
    %2951 = vmatpush1.bf16.msra.mxu0 %v2812
    %2952 = vmatprep.subr.bf16.mxu0 %v2810
    %2953 = vmatpush1.bf16.msra.mxu0 %v2809
    %2954 = vmatprep.subr.bf16.mxu0 %v2807
    %2955 = vmatpush1.bf16.msra.mxu0 %v2806
    %2956 = vmatprep.subr.bf16.mxu0 %v2804
    %2957 = vmatpush1.bf16.msra.mxu0 %v2803
    %2958 = vmatprep.subr.bf16.mxu0 %v2801
    %2959 = vmatpush1.bf16.msra.mxu0 %v2800
    %2960 = vmatprep.subr.bf16.mxu0 %v2846
    %2961 = vmatpush2.bf16.msra.mxu0 %v2845
    %2962 = vmatprep.subr.bf16.mxu0 %v2843
    %2963 = vmatpush2.bf16.msra.mxu0 %v2842
    %2964 = vmatprep.subr.bf16.mxu0 %v2840
    %2965 = vmatpush2.bf16.msra.mxu0 %v2839
    %2966 = vmatprep.subr.bf16.mxu0 %v2837
    %2967 = vmatpush2.bf16.msra.mxu0 %v2836
    %2968 = vmatprep.subr.bf16.mxu0 %v2834
    %2969 = vmatpush2.bf16.msra.mxu0 %v2833
    %2970 = vmatprep.subr.bf16.mxu0 %v2831
    %2971 = vmatpush2.bf16.msra.mxu0 %v2830
    %2972 = vmatprep.subr.bf16.mxu0 %v2828
    %2973 = vmatpush2.bf16.msra.mxu0 %v2827
    %2974 = vmatprep.subr.bf16.mxu0 %v2825
    %2975 = vmatpush2.bf16.msra.mxu0 %v2824
    %2976 = vmatprep.mubr.bf16.mxu0 %v2445
    %2977 = vmatmul.mubr.bf16.gmra.mxu0 %v2444
    %v2978 = vpop.f32.mrf.mxu0
    %v2979 = vadd.f32 %v2548, %v2978
    %v2980 = vpop.f32.mrf.mxu0
    %v2981 = vadd.f32 %v2552, %v2980
    %v2982 = vpop.f32.mrf.mxu0
    %v2983 = vpop.f32.mrf.mxu0
    %2984 = vdwg.mxu0
    %2985 = vmatprep.subr.bf16.mxu0 %v2870
    %2986 = vmatpush1.bf16.msra.mxu0 %v2869
    %2987 = vmatprep.subr.bf16.mxu0 %v2867
    %2988 = vmatpush1.bf16.msra.mxu0 %v2866
    %2989 = vmatprep.subr.bf16.mxu0 %v2864
    %2990 = vmatpush1.bf16.msra.mxu0 %v2863
    %2991 = vmatprep.subr.bf16.mxu0 %v2861
    %2992 = vmatpush1.bf16.msra.mxu0 %v2860
    %2993 = vmatprep.subr.bf16.mxu0 %v2858
    %2994 = vmatpush1.bf16.msra.mxu0 %v2857
    %2995 = vmatprep.subr.bf16.mxu0 %v2855
    %2996 = vmatpush1.bf16.msra.mxu0 %v2854
    %2997 = vmatprep.subr.bf16.mxu0 %v2852
    %2998 = vmatpush1.bf16.msra.mxu0 %v2851
    %2999 = vmatprep.subr.bf16.mxu0 %v2849
    %3000 = vmatpush1.bf16.msra.mxu0 %v2848
    %3001 = vmatprep.subr.bf16.mxu0 0
    %3002 = vmatpush2.bf16.msra.mxu0 0
    %3003 = vmatprep.subr.bf16.mxu0 0
    %3004 = vmatpush2.bf16.msra.mxu0 0
    %3005 = vmatprep.subr.bf16.mxu0 0
    %3006 = vmatpush2.bf16.msra.mxu0 0
    %3007 = vmatprep.subr.bf16.mxu0 0
    %3008 = vmatpush2.bf16.msra.mxu0 0
    %3009 = vmatprep.subr.bf16.mxu0 0
    %3010 = vmatpush2.bf16.msra.mxu0 0
    %3011 = vmatprep.subr.bf16.mxu0 0
    %3012 = vmatpush2.bf16.msra.mxu0 0
    %3013 = vmatprep.subr.bf16.mxu0 0
    %3014 = vmatpush2.bf16.msra.mxu0 0
    %3015 = vmatprep.subr.bf16.mxu0 0
    %3016 = vmatpush2.bf16.msra.mxu0 0
    %3017 = vmatprep.mubr.bf16.mxu0 0
    %3018 = vmatmul.mubr.bf16.gmra.mxu0 %v2446
    %v3019 = vpop.f32.mrf.mxu0
    %v3020 = vadd.f32 %v2979, %v3019
    %v3021 = vpop.f32.mrf.mxu0
    %v3022 = vadd.f32 %v2981, %v3021
    %v3023 = vpop.f32.mrf.mxu0
    %v3024 = vpop.f32.mrf.mxu0
    %3025 = vdwg.mxu0
    %3026 = vmatprep.subr.bf16.mxu0 0
    %3027 = vmatpush1.bf16.msra.mxu0 %v2823
    %3028 = vmatprep.subr.bf16.mxu0 0
    %3029 = vmatpush1.bf16.msra.mxu0 %v2820
    %3030 = vmatprep.subr.bf16.mxu0 0
    %3031 = vmatpush1.bf16.msra.mxu0 %v2817
    %3032 = vmatprep.subr.bf16.mxu0 0
    %3033 = vmatpush1.bf16.msra.mxu0 %v2814
    %3034 = vmatprep.subr.bf16.mxu0 0
    %3035 = vmatpush1.bf16.msra.mxu0 %v2811
    %3036 = vmatprep.subr.bf16.mxu0 0
    %3037 = vmatpush1.bf16.msra.mxu0 %v2808
    %3038 = vmatprep.subr.bf16.mxu0 0
    %3039 = vmatpush1.bf16.msra.mxu0 %v2805
    %3040 = vmatprep.subr.bf16.mxu0 0
    %3041 = vmatpush1.bf16.msra.mxu0 %v2802
    %3042 = vmatprep.subr.bf16.mxu0 0
    %3043 = vmatpush2.bf16.msra.mxu0 %v2847
    %3044 = vmatprep.subr.bf16.mxu0 0
    %3045 = vmatpush2.bf16.msra.mxu0 %v2844
    %3046 = vmatprep.subr.bf16.mxu0 0
    %3047 = vmatpush2.bf16.msra.mxu0 %v2841
    %3048 = vmatprep.subr.bf16.mxu0 0
    %3049 = vmatpush2.bf16.msra.mxu0 %v2838
    %3050 = vmatprep.subr.bf16.mxu0 0
    %3051 = vmatpush2.bf16.msra.mxu0 %v2835
    %3052 = vmatprep.subr.bf16.mxu0 0
    %3053 = vmatpush2.bf16.msra.mxu0 %v2832
    %3054 = vmatprep.subr.bf16.mxu0 0
    %3055 = vmatpush2.bf16.msra.mxu0 %v2829
    %3056 = vmatprep.subr.bf16.mxu0 0
    %3057 = vmatpush2.bf16.msra.mxu0 %v2826
    %3058 = vmatprep.mubr.bf16.mxu0 %v2445
    %3059 = vmatmul.mubr.bf16.gmra.mxu0 %v2444
    %v3060 = vpop.f32.mrf.mxu0
    %v3061 = vadd.f32 %v2556, %v3060
    %v3062 = vpop.f32.mrf.mxu0
    %v3063 = vpop.f32.mrf.mxu0
    %v3064 = vpop.f32.mrf.mxu0
    %3065 = vdwg.mxu0
    %3066 = vmatprep.subr.bf16.mxu0 0
    %3067 = vmatpush1.bf16.msra.mxu0 %v2871
    %3068 = vmatprep.subr.bf16.mxu0 0
    %3069 = vmatpush1.bf16.msra.mxu0 %v2868
    %3070 = vmatprep.subr.bf16.mxu0 0
    %3071 = vmatpush1.bf16.msra.mxu0 %v2865
    %3072 = vmatprep.subr.bf16.mxu0 0
    %3073 = vmatpush1.bf16.msra.mxu0 %v2862
    %3074 = vmatprep.subr.bf16.mxu0 0
    %3075 = vmatpush1.bf16.msra.mxu0 %v2859
    %3076 = vmatprep.subr.bf16.mxu0 0
    %3077 = vmatpush1.bf16.msra.mxu0 %v2856
    %3078 = vmatprep.subr.bf16.mxu0 0
    %3079 = vmatpush1.bf16.msra.mxu0 %v2853
    %3080 = vmatprep.subr.bf16.mxu0 0
    %3081 = vmatpush1.bf16.msra.mxu0 %v2850
    %3082 = vmatprep.subr.bf16.mxu0 0
    %3083 = vmatpush2.bf16.msra.mxu0 0
    %3084 = vmatprep.subr.bf16.mxu0 0
    %3085 = vmatpush2.bf16.msra.mxu0 0
    %3086 = vmatprep.subr.bf16.mxu0 0
    %3087 = vmatpush2.bf16.msra.mxu0 0
    %3088 = vmatprep.subr.bf16.mxu0 0
    %3089 = vmatpush2.bf16.msra.mxu0 0
    %3090 = vmatprep.subr.bf16.mxu0 0
    %3091 = vmatpush2.bf16.msra.mxu0 0
    %3092 = vmatprep.subr.bf16.mxu0 0
    %3093 = vmatpush2.bf16.msra.mxu0 0
    %3094 = vmatprep.subr.bf16.mxu0 0
    %3095 = vmatpush2.bf16.msra.mxu0 0
    %3096 = vmatprep.subr.bf16.mxu0 0
    %3097 = vmatpush2.bf16.msra.mxu0 0
    %3098 = vmatprep.mubr.bf16.mxu0 0
    %3099 = vmatmul.mubr.bf16.gmra.mxu0 %v2446
    %v3100 = vpop.f32.mrf.mxu0
    %v3101 = vadd.f32 %v3061, %v3100
    %v3102 = vpop.f32.mrf.mxu0
    %v3103 = vpop.f32.mrf.mxu0
    %v3104 = vpop.f32.mrf.mxu0
    %3105 = vdwg.mxu0
    %v3106 = vmax.f32 %v3020, 0.0
    %v3107 = vmax.f32 %v3022, 0.0
    %v3108 = vmax.f32 %v3101, 0.0
    %v3109 = vand.u32 2147483647, %v3020
    %v3110 = vand.u32 2147483647, %v3022
    %v3111 = vand.u32 2147483647, %v3101
    %v3112 = vsub.f32 0.0, %v3109
    %v3113 = vsub.f32 0.0, %v3110
    %v3114 = vsub.f32 0.0, %v3111
    %v3115 = vmul.f32 %v3112, 1.442695
    %v3116 = vpow.pop %v3115
    %v3117 = vmul.f32 %v3113, 1.442695
    %v3118 = vpow.pop %v3117
    %v3119 = vmul.f32 %v3114, 1.442695
    %v3120 = vpow.pop %v3119
    %v3121 = vadd.f32 %v3116, 1.0
    %v3122 = vlog2.pop %v3121
    %v3123 = vmul.f32 %v3122, 0.6931472
    %v3124 = vmul.f32 -0.5, %v3116
    %v3125 = vadd.f32 %v3124, 1.0
    %v3126 = vmul.f32 %v3125, %v3116
    %v3127 = vand.u32 2147483647, %v3116
    %vm3128 = vcmp.lt.f32.partialorder %v3127, 0.0004427343
    %v3129 = vsel %vm3128, %v3126, %v3123
    %v3130 = vadd.f32 %v3118, 1.0
    %v3131 = vlog2.pop %v3130
    %v3132 = vmul.f32 %v3131, 0.6931472
    %v3133 = vmul.f32 -0.5, %v3118
    %v3134 = vadd.f32 %v3133, 1.0
    %v3135 = vmul.f32 %v3134, %v3118
    %v3136 = vand.u32 2147483647, %v3118
    %vm3137 = vcmp.lt.f32.partialorder %v3136, 0.0004427343
    %v3138 = vsel %vm3137, %v3135, %v3132
    %v3139 = vadd.f32 %v3120, 1.0
    %v3140 = vlog2.pop %v3139
    %v3141 = vmul.f32 %v3140, 0.6931472
    %v3142 = vmul.f32 -0.5, %v3120
    %v3143 = vadd.f32 %v3142, 1.0
    %v3144 = vmul.f32 %v3143, %v3120
    %v3145 = vand.u32 2147483647, %v3120
    %vm3146 = vcmp.lt.f32.partialorder %v3145, 0.0004427343
    %v3147 = vsel %vm3146, %v3144, %v3141
    %v3148 = vadd.f32 %v3106, %v3129
    %v3149 = vadd.f32 %v3107, %v3138
    %v3150 = vadd.f32 %v3108, %v3147
    %v3151 = vpack.c.bf16 %v3148, %v3148
    %v3152 = vpack.c.bf16 %v3149, %v3149
    %v3153 = vpack.c.bf16 %v3150, %v3150
    %v3154 = vld [vmem:[#allocation17] sm:$0xff]
    %v3155 = vld [vmem:[#allocation17 + $0x8] sm:$0xf]
    %v3156 = vld [vmem:[#allocation17 + $0xc] sm:$0xff]
    %v3157 = vld [vmem:[#allocation17 + $0x14] sm:$0xf]
    %v3158 = vld [vmem:[#allocation17 + $0x18] sm:$0xff]
    %v3159 = vld [vmem:[#allocation17 + $0x20] sm:$0xf]
    %v3160 = vld [vmem:[#allocation17 + $0x24] sm:$0xff]
    %v3161 = vld [vmem:[#allocation17 + $0x2c] sm:$0xf]
    %v3162 = vld [vmem:[#allocation17 + $0x30] sm:$0xff]
    %v3163 = vld [vmem:[#allocation17 + $0x38] sm:$0xf]
    %v3164 = vld [vmem:[#allocation17 + $0x3c] sm:$0xff]
    %v3165 = vld [vmem:[#allocation17 + $0x44] sm:$0xf]
    %v3166 = vld [vmem:[#allocation17 + $0x48] sm:$0xff]
    %v3167 = vld [vmem:[#allocation17 + $0x50] sm:$0xf]
    %v3168 = vld [vmem:[#allocation17 + $0x54] sm:$0xff]
    %v3169 = vld [vmem:[#allocation17 + $0x5c] sm:$0xf]
    %v3170 = vld [vmem:[#allocation17 + $0x60] sm:$0xff]
    %v3171 = vld [vmem:[#allocation17 + $0x68] sm:$0xf]
    %v3172 = vld [vmem:[#allocation17 + $0x6c] sm:$0xff]
    %v3173 = vld [vmem:[#allocation17 + $0x74] sm:$0xf]
    %v3174 = vld [vmem:[#allocation17 + $0x78] sm:$0xff]
    %v3175 = vld [vmem:[#allocation17 + $0x80] sm:$0xf]
    %v3176 = vld [vmem:[#allocation17 + $0x84] sm:$0xff]
    %v3177 = vld [vmem:[#allocation17 + $0x8c] sm:$0xf]
    %v3178 = vld [vmem:[#allocation17 + $0x90] sm:$0xff]
    %v3179 = vld [vmem:[#allocation17 + $0x98] sm:$0xf]
    %v3180 = vld [vmem:[#allocation17 + $0x9c] sm:$0xff]
    %v3181 = vld [vmem:[#allocation17 + $0xa4] sm:$0xf]
    %v3182 = vld [vmem:[#allocation17 + $0xa8] sm:$0xff]
    %v3183 = vld [vmem:[#allocation17 + $0xb0] sm:$0xf]
    %v3184 = vld [vmem:[#allocation17 + $0xb4] sm:$0xff]
    %v3185 = vld [vmem:[#allocation17 + $0xbc] sm:$0xf]
    %v3186 = vld [vmem:[#allocation17 + $0xc0] sm:$0xff]
    %v3187 = vld [vmem:[#allocation17 + $0xc8] sm:$0xf]
    %v3188 = vld [vmem:[#allocation17 + $0xcc] sm:$0xff]
    %v3189 = vld [vmem:[#allocation17 + $0xd4] sm:$0xf]
    %v3190 = vld [vmem:[#allocation17 + $0xd8] sm:$0xff]
    %v3191 = vld [vmem:[#allocation17 + $0xe0] sm:$0xf]
    %v3192 = vld [vmem:[#allocation17 + $0xe4] sm:$0xff]
    %v3193 = vld [vmem:[#allocation17 + $0xec] sm:$0xf]
    %v3194 = vld [vmem:[#allocation17 + $0xf0] sm:$0xff]
    %v3195 = vld [vmem:[#allocation17 + $0xf8] sm:$0xf]
    %v3196 = vld [vmem:[#allocation17 + $0xfc] sm:$0xff]
    %v3197 = vld [vmem:[#allocation17 + $0x104] sm:$0xf]
    %v3198 = vld [vmem:[#allocation17 + $0x108] sm:$0xff]
    %v3199 = vld [vmem:[#allocation17 + $0x110] sm:$0xf]
    %v3200 = vld [vmem:[#allocation17 + $0x114] sm:$0xff]
    %v3201 = vld [vmem:[#allocation17 + $0x11c] sm:$0xf]
    %v3202 = vld [vmem:[#allocation17 + $0x120] sm:$0xff]
    %v3203 = vld [vmem:[#allocation17 + $0x128] sm:$0xf]
    %v3204 = vld [vmem:[#allocation17 + $0x12c] sm:$0xff]
    %v3205 = vld [vmem:[#allocation17 + $0x134] sm:$0xf]
    %v3206 = vld [vmem:[#allocation17 + $0x138] sm:$0xff]
    %v3207 = vld [vmem:[#allocation17 + $0x140] sm:$0xf]
    %v3208 = vld [vmem:[#allocation17 + $0x144] sm:$0xff]
    %v3209 = vld [vmem:[#allocation17 + $0x14c] sm:$0xf]
    %v3210 = vld [vmem:[#allocation17 + $0x150] sm:$0xff]
    %v3211 = vld [vmem:[#allocation17 + $0x158] sm:$0xf]
    %v3212 = vld [vmem:[#allocation17 + $0x15c] sm:$0xff]
    %v3213 = vld [vmem:[#allocation17 + $0x164] sm:$0xf]
    %v3214 = vld [vmem:[#allocation17 + $0x168] sm:$0xff]
    %v3215 = vld [vmem:[#allocation17 + $0x170] sm:$0xf]
    %v3216 = vld [vmem:[#allocation17 + $0x174] sm:$0xff]
    %v3217 = vld [vmem:[#allocation17 + $0x17c] sm:$0xf]
    %v3218 = vld [vmem:[#allocation17 + $0x180] sm:$0xff]
    %v3219 = vld [vmem:[#allocation17 + $0x188] sm:$0xf]
    %v3220 = vld [vmem:[#allocation17 + $0x18c] sm:$0xff]
    %v3221 = vld [vmem:[#allocation17 + $0x194] sm:$0xf]
    %v3222 = vld [vmem:[#allocation17 + $0x198] sm:$0xff]
    %v3223 = vld [vmem:[#allocation17 + $0x1a0] sm:$0xf]
    %v3224 = vld [vmem:[#allocation17 + $0x1a4] sm:$0xff]
    %v3225 = vld [vmem:[#allocation17 + $0x1ac] sm:$0xf]
    %v3226 = vld [vmem:[#allocation17 + $0x1b0] sm:$0xff]
    %v3227 = vld [vmem:[#allocation17 + $0x1b8] sm:$0xf]
    %v3228 = vld [vmem:[#allocation17 + $0x1bc] sm:$0xff]
    %v3229 = vld [vmem:[#allocation17 + $0x1c4] sm:$0xf]
    %v3230 = vld [vmem:[#allocation17 + $0x1c8] sm:$0xff]
    %v3231 = vld [vmem:[#allocation17 + $0x1d0] sm:$0xf]
    %v3232 = vld [vmem:[#allocation17 + $0x1d4] sm:$0xff]
    %v3233 = vld [vmem:[#allocation17 + $0x1dc] sm:$0xf]
    %v3234 = vld [vmem:[#allocation17 + $0x1e0] sm:$0xff]
    %v3235 = vld [vmem:[#allocation17 + $0x1e8] sm:$0xf]
    %v3236 = vld [vmem:[#allocation17 + $0x1ec] sm:$0xff]
    %v3237 = vld [vmem:[#allocation17 + $0x1f4] sm:$0xf]
    %v3238 = vld [vmem:[#allocation17 + $0x1f8] sm:$0xff]
    %v3239 = vld [vmem:[#allocation17 + $0x200] sm:$0xf]
    %v3240 = vld [vmem:[#allocation17 + $0x204] sm:$0xff]
    %v3241 = vld [vmem:[#allocation17 + $0x20c] sm:$0xf]
    %v3242 = vld [vmem:[#allocation17 + $0x210] sm:$0xff]
    %v3243 = vld [vmem:[#allocation17 + $0x218] sm:$0xf]
    %v3244 = vld [vmem:[#allocation17 + $0x21c] sm:$0xff]
    %v3245 = vld [vmem:[#allocation17 + $0x224] sm:$0xf]
    %v3246 = vld [vmem:[#allocation17 + $0x228] sm:$0xff]
    %v3247 = vld [vmem:[#allocation17 + $0x230] sm:$0xf]
    %v3248 = vld [vmem:[#allocation17 + $0x234] sm:$0xff]
    %v3249 = vld [vmem:[#allocation17 + $0x23c] sm:$0xf]
    %v3250 = vld [vmem:[%s33] sm:$0x7]
    %v3252 = vlaneseq
    %v3253 = vshrl.u32 %v3252, 7
    %v3254 = vsub.s32 0, %v3253
    %v3255 = vrot.slane %v3250, %v3254
    %v3256 = vlaneseq
    %v3257 = vshrl.u32 %v3256, 7
    %v3258 = vsub.s32 1, %v3257
    %v3259 = vrot.slane %v3250, %v3258
    %v3260 = vlaneseq
    %v3261 = vshrl.u32 %v3260, 7
    %v3262 = vsub.s32 2, %v3261
    %v3263 = vrot.slane %v3250, %v3262
    %v3363 = vunpack.c.l.b16 %v3154
    %v3364 = vunpack.c.h.b16 %v3154
    %v3365 = vunpack.c.l.b16 %v3155
    %v3366 = vunpack.c.l.b16 %v3156
    %v3367 = vunpack.c.h.b16 %v3156
    %v3368 = vunpack.c.l.b16 %v3157
    %v3369 = vunpack.c.l.b16 %v3158
    %v3370 = vunpack.c.h.b16 %v3158
    %v3371 = vunpack.c.l.b16 %v3159
    %v3372 = vunpack.c.l.b16 %v3160
    %v3373 = vunpack.c.h.b16 %v3160
    %v3374 = vunpack.c.l.b16 %v3161
    %v3375 = vunpack.c.l.b16 %v3162
    %v3376 = vunpack.c.h.b16 %v3162
    %v3377 = vunpack.c.l.b16 %v3163
    %v3378 = vunpack.c.l.b16 %v3164
    %v3379 = vunpack.c.h.b16 %v3164
    %v3380 = vunpack.c.l.b16 %v3165
    %v3381 = vunpack.c.l.b16 %v3166
    %v3382 = vunpack.c.h.b16 %v3166
    %v3383 = vunpack.c.l.b16 %v3167
    %v3384 = vunpack.c.l.b16 %v3168
    %v3385 = vunpack.c.h.b16 %v3168
    %v3386 = vunpack.c.l.b16 %v3169
    %v3387 = vunpack.c.l.b16 %v3170
    %v3388 = vunpack.c.h.b16 %v3170
    %v3389 = vunpack.c.l.b16 %v3171
    %v3390 = vunpack.c.l.b16 %v3172
    %v3391 = vunpack.c.h.b16 %v3172
    %v3392 = vunpack.c.l.b16 %v3173
    %v3393 = vunpack.c.l.b16 %v3174
    %v3394 = vunpack.c.h.b16 %v3174
    %v3395 = vunpack.c.l.b16 %v3175
    %v3396 = vunpack.c.l.b16 %v3176
    %v3397 = vunpack.c.h.b16 %v3176
    %v3398 = vunpack.c.l.b16 %v3177
    %v3399 = vunpack.c.l.b16 %v3178
    %v3400 = vunpack.c.h.b16 %v3178
    %v3401 = vunpack.c.l.b16 %v3179
    %v3402 = vunpack.c.l.b16 %v3180
    %v3403 = vunpack.c.h.b16 %v3180
    %v3404 = vunpack.c.l.b16 %v3181
    %v3405 = vunpack.c.l.b16 %v3182
    %v3406 = vunpack.c.h.b16 %v3182
    %v3407 = vunpack.c.l.b16 %v3183
    %v3408 = vunpack.c.l.b16 %v3184
    %v3409 = vunpack.c.h.b16 %v3184
    %v3410 = vunpack.c.l.b16 %v3185
    %v3411 = vunpack.c.l.b16 %v3186
    %v3412 = vunpack.c.h.b16 %v3186
    %v3413 = vunpack.c.l.b16 %v3187
    %v3414 = vunpack.c.l.b16 %v3188
    %v3415 = vunpack.c.h.b16 %v3188
    %v3416 = vunpack.c.l.b16 %v3189
    %v3417 = vunpack.c.l.b16 %v3190
    %v3418 = vunpack.c.h.b16 %v3190
    %v3419 = vunpack.c.l.b16 %v3191
    %v3420 = vunpack.c.l.b16 %v3192
    %v3421 = vunpack.c.h.b16 %v3192
    %v3422 = vunpack.c.l.b16 %v3193
    %v3423 = vunpack.c.l.b16 %v3194
    %v3424 = vunpack.c.h.b16 %v3194
    %v3425 = vunpack.c.l.b16 %v3195
    %v3426 = vunpack.c.l.b16 %v3196
    %v3427 = vunpack.c.h.b16 %v3196
    %v3428 = vunpack.c.l.b16 %v3197
    %v3429 = vunpack.c.l.b16 %v3198
    %v3430 = vunpack.c.h.b16 %v3198
    %v3431 = vunpack.c.l.b16 %v3199
    %v3432 = vunpack.c.l.b16 %v3200
    %v3433 = vunpack.c.h.b16 %v3200
    %v3434 = vunpack.c.l.b16 %v3201
    %v3435 = vunpack.c.l.b16 %v3202
    %v3436 = vunpack.c.h.b16 %v3202
    %v3437 = vunpack.c.l.b16 %v3203
    %v3438 = vunpack.c.l.b16 %v3204
    %v3439 = vunpack.c.h.b16 %v3204
    %v3440 = vunpack.c.l.b16 %v3205
    %v3441 = vunpack.c.l.b16 %v3206
    %v3442 = vunpack.c.h.b16 %v3206
    %v3443 = vunpack.c.l.b16 %v3207
    %v3444 = vunpack.c.l.b16 %v3208
    %v3445 = vunpack.c.h.b16 %v3208
    %v3446 = vunpack.c.l.b16 %v3209
    %v3447 = vunpack.c.l.b16 %v3210
    %v3448 = vunpack.c.h.b16 %v3210
    %v3449 = vunpack.c.l.b16 %v3211
    %v3450 = vunpack.c.l.b16 %v3212
    %v3451 = vunpack.c.h.b16 %v3212
    %v3452 = vunpack.c.l.b16 %v3213
    %v3453 = vunpack.c.l.b16 %v3214
    %v3454 = vunpack.c.h.b16 %v3214
    %v3455 = vunpack.c.l.b16 %v3215
    %v3456 = vunpack.c.l.b16 %v3216
    %v3457 = vunpack.c.h.b16 %v3216
    %v3458 = vunpack.c.l.b16 %v3217
    %v3459 = vunpack.c.l.b16 %v3218
    %v3460 = vunpack.c.h.b16 %v3218
    %v3461 = vunpack.c.l.b16 %v3219
    %v3462 = vunpack.c.l.b16 %v3220
    %v3463 = vunpack.c.h.b16 %v3220
    %v3464 = vunpack.c.l.b16 %v3221
    %v3465 = vunpack.c.l.b16 %v3222
    %v3466 = vunpack.c.h.b16 %v3222
    %v3467 = vunpack.c.l.b16 %v3223
    %v3468 = vunpack.c.l.b16 %v3224
    %v3469 = vunpack.c.h.b16 %v3224
    %v3470 = vunpack.c.l.b16 %v3225
    %v3471 = vunpack.c.l.b16 %v3226
    %v3472 = vunpack.c.h.b16 %v3226
    %v3473 = vunpack.c.l.b16 %v3227
    %v3474 = vunpack.c.l.b16 %v3228
    %v3475 = vunpack.c.h.b16 %v3228
    %v3476 = vunpack.c.l.b16 %v3229
    %v3477 = vunpack.c.l.b16 %v3230
    %v3478 = vunpack.c.h.b16 %v3230
    %v3479 = vunpack.c.l.b16 %v3231
    %v3480 = vunpack.c.l.b16 %v3232
    %v3481 = vunpack.c.h.b16 %v3232
    %v3482 = vunpack.c.l.b16 %v3233
    %v3483 = vunpack.c.l.b16 %v3234
    %v3484 = vunpack.c.h.b16 %v3234
    %v3485 = vunpack.c.l.b16 %v3235
    %v3486 = vunpack.c.l.b16 %v3236
    %v3487 = vunpack.c.h.b16 %v3236
    %v3488 = vunpack.c.l.b16 %v3237
    %v3489 = vunpack.c.l.b16 %v3238
    %v3490 = vunpack.c.h.b16 %v3238
    %v3491 = vunpack.c.l.b16 %v3239
    %v3492 = vunpack.c.l.b16 %v3240
    %v3493 = vunpack.c.h.b16 %v3240
    %v3494 = vunpack.c.l.b16 %v3241
    %v3495 = vunpack.c.l.b16 %v3242
    %v3496 = vunpack.c.h.b16 %v3242
    %v3497 = vunpack.c.l.b16 %v3243
    %v3498 = vunpack.c.l.b16 %v3244
    %v3499 = vunpack.c.h.b16 %v3244
    %v3500 = vunpack.c.l.b16 %v3245
    %v3501 = vunpack.c.l.b16 %v3246
    %v3502 = vunpack.c.h.b16 %v3246
    %v3503 = vunpack.c.l.b16 %v3247
    %v3504 = vunpack.c.l.b16 %v3248
    %v3505 = vunpack.c.h.b16 %v3248
    %v3506 = vunpack.c.l.b16 %v3249
    %v3507 = vpack.c.b16 %v3366, %v3363
    %v3508 = vpack.c.b16 %v3367, %v3364
    %v3509 = vpack.c.b16 %v3368, %v3365
    %v3510 = vpack.c.b16 %v3372, %v3369
    %v3511 = vpack.c.b16 %v3373, %v3370
    %v3512 = vpack.c.b16 %v3374, %v3371
    %v3513 = vpack.c.b16 %v3378, %v3375
    %v3514 = vpack.c.b16 %v3379, %v3376
    %v3515 = vpack.c.b16 %v3380, %v3377
    %v3516 = vpack.c.b16 %v3384, %v3381
    %v3517 = vpack.c.b16 %v3385, %v3382
    %v3518 = vpack.c.b16 %v3386, %v3383
    %v3519 = vpack.c.b16 %v3390, %v3387
    %v3520 = vpack.c.b16 %v3391, %v3388
    %v3521 = vpack.c.b16 %v3392, %v3389
    %v3522 = vpack.c.b16 %v3396, %v3393
    %v3523 = vpack.c.b16 %v3397, %v3394
    %v3524 = vpack.c.b16 %v3398, %v3395
    %v3525 = vpack.c.b16 %v3402, %v3399
    %v3526 = vpack.c.b16 %v3403, %v3400
    %v3527 = vpack.c.b16 %v3404, %v3401
    %v3528 = vpack.c.b16 %v3408, %v3405
    %v3529 = vpack.c.b16 %v3409, %v3406
    %v3530 = vpack.c.b16 %v3410, %v3407
    %v3531 = vpack.c.b16 %v3414, %v3411
    %v3532 = vpack.c.b16 %v3415, %v3412
    %v3533 = vpack.c.b16 %v3416, %v3413
    %v3534 = vpack.c.b16 %v3420, %v3417
    %v3535 = vpack.c.b16 %v3421, %v3418
    %v3536 = vpack.c.b16 %v3422, %v3419
    %v3537 = vpack.c.b16 %v3426, %v3423
    %v3538 = vpack.c.b16 %v3427, %v3424
    %v3539 = vpack.c.b16 %v3428, %v3425
    %v3540 = vpack.c.b16 %v3432, %v3429
    %v3541 = vpack.c.b16 %v3433, %v3430
    %v3542 = vpack.c.b16 %v3434, %v3431
    %v3543 = vpack.c.b16 %v3438, %v3435
    %v3544 = vpack.c.b16 %v3439, %v3436
    %v3545 = vpack.c.b16 %v3440, %v3437
    %v3546 = vpack.c.b16 %v3444, %v3441
    %v3547 = vpack.c.b16 %v3445, %v3442
    %v3548 = vpack.c.b16 %v3446, %v3443
    %v3549 = vpack.c.b16 %v3450, %v3447
    %v3550 = vpack.c.b16 %v3451, %v3448
    %v3551 = vpack.c.b16 %v3452, %v3449
    %v3552 = vpack.c.b16 %v3456, %v3453
    %v3553 = vpack.c.b16 %v3457, %v3454
    %v3554 = vpack.c.b16 %v3458, %v3455
    %v3555 = vpack.c.b16 %v3462, %v3459
    %v3556 = vpack.c.b16 %v3463, %v3460
    %v3557 = vpack.c.b16 %v3464, %v3461
    %v3558 = vpack.c.b16 %v3468, %v3465
    %v3559 = vpack.c.b16 %v3469, %v3466
    %v3560 = vpack.c.b16 %v3470, %v3467
    %v3561 = vpack.c.b16 %v3474, %v3471
    %v3562 = vpack.c.b16 %v3475, %v3472
    %v3563 = vpack.c.b16 %v3476, %v3473
    %v3564 = vpack.c.b16 %v3480, %v3477
    %v3565 = vpack.c.b16 %v3481, %v3478
    %v3566 = vpack.c.b16 %v3482, %v3479
    %v3567 = vpack.c.b16 %v3486, %v3483
    %v3568 = vpack.c.b16 %v3487, %v3484
    %v3569 = vpack.c.b16 %v3488, %v3485
    %v3570 = vpack.c.b16 %v3492, %v3489
    %v3571 = vpack.c.b16 %v3493, %v3490
    %v3572 = vpack.c.b16 %v3494, %v3491
    %v3573 = vpack.c.b16 %v3498, %v3495
    %v3574 = vpack.c.b16 %v3499, %v3496
    %v3575 = vpack.c.b16 %v3500, %v3497
    %v3576 = vpack.c.b16 %v3504, %v3501
    %v3577 = vpack.c.b16 %v3505, %v3502
    %v3578 = vpack.c.b16 %v3506, %v3503
    %3651 = vmatprep.subr.bf16.mxu0 %v3529
    %3652 = vmatpush1.bf16.msra.mxu0 %v3528
    %3653 = vmatprep.subr.bf16.mxu0 %v3526
    %3654 = vmatpush1.bf16.msra.mxu0 %v3525
    %3655 = vmatprep.subr.bf16.mxu0 %v3523
    %3656 = vmatpush1.bf16.msra.mxu0 %v3522
    %3657 = vmatprep.subr.bf16.mxu0 %v3520
    %3658 = vmatpush1.bf16.msra.mxu0 %v3519
    %3659 = vmatprep.subr.bf16.mxu0 %v3517
    %3660 = vmatpush1.bf16.msra.mxu0 %v3516
    %3661 = vmatprep.subr.bf16.mxu0 %v3514
    %3662 = vmatpush1.bf16.msra.mxu0 %v3513
    %3663 = vmatprep.subr.bf16.mxu0 %v3511
    %3664 = vmatpush1.bf16.msra.mxu0 %v3510
    %3665 = vmatprep.subr.bf16.mxu0 %v3508
    %3666 = vmatpush1.bf16.msra.mxu0 %v3507
    %3667 = vmatprep.subr.bf16.mxu0 %v3553
    %3668 = vmatpush2.bf16.msra.mxu0 %v3552
    %3669 = vmatprep.subr.bf16.mxu0 %v3550
    %3670 = vmatpush2.bf16.msra.mxu0 %v3549
    %3671 = vmatprep.subr.bf16.mxu0 %v3547
    %3672 = vmatpush2.bf16.msra.mxu0 %v3546
    %3673 = vmatprep.subr.bf16.mxu0 %v3544
    %3674 = vmatpush2.bf16.msra.mxu0 %v3543
    %3675 = vmatprep.subr.bf16.mxu0 %v3541
    %3676 = vmatpush2.bf16.msra.mxu0 %v3540
    %3677 = vmatprep.subr.bf16.mxu0 %v3538
    %3678 = vmatpush2.bf16.msra.mxu0 %v3537
    %3679 = vmatprep.subr.bf16.mxu0 %v3535
    %3680 = vmatpush2.bf16.msra.mxu0 %v3534
    %3681 = vmatprep.subr.bf16.mxu0 %v3532
    %3682 = vmatpush2.bf16.msra.mxu0 %v3531
    %3683 = vmatprep.mubr.bf16.mxu0 %v3152
    %3684 = vmatmul.mubr.bf16.gmra.mxu0 %v3151
    %v3685 = vpop.f32.mrf.mxu0
    %v3686 = vadd.f32 %v3255, %v3685
    %v3687 = vpop.f32.mrf.mxu0
    %v3688 = vadd.f32 %v3259, %v3687
    %v3689 = vpop.f32.mrf.mxu0
    %v3690 = vpop.f32.mrf.mxu0
    %3691 = vdwg.mxu0
    %3692 = vmatprep.subr.bf16.mxu0 %v3577
    %3693 = vmatpush1.bf16.msra.mxu0 %v3576
    %3694 = vmatprep.subr.bf16.mxu0 %v3574
    %3695 = vmatpush1.bf16.msra.mxu0 %v3573
    %3696 = vmatprep.subr.bf16.mxu0 %v3571
    %3697 = vmatpush1.bf16.msra.mxu0 %v3570
    %3698 = vmatprep.subr.bf16.mxu0 %v3568
    %3699 = vmatpush1.bf16.msra.mxu0 %v3567
    %3700 = vmatprep.subr.bf16.mxu0 %v3565
    %3701 = vmatpush1.bf16.msra.mxu0 %v3564
    %3702 = vmatprep.subr.bf16.mxu0 %v3562
    %3703 = vmatpush1.bf16.msra.mxu0 %v3561
    %3704 = vmatprep.subr.bf16.mxu0 %v3559
    %3705 = vmatpush1.bf16.msra.mxu0 %v3558
    %3706 = vmatprep.subr.bf16.mxu0 %v3556
    %3707 = vmatpush1.bf16.msra.mxu0 %v3555
    %3708 = vmatprep.subr.bf16.mxu0 0
    %3709 = vmatpush2.bf16.msra.mxu0 0
    %3710 = vmatprep.subr.bf16.mxu0 0
    %3711 = vmatpush2.bf16.msra.mxu0 0
    %3712 = vmatprep.subr.bf16.mxu0 0
    %3713 = vmatpush2.bf16.msra.mxu0 0
    %3714 = vmatprep.subr.bf16.mxu0 0
    %3715 = vmatpush2.bf16.msra.mxu0 0
    %3716 = vmatprep.subr.bf16.mxu0 0
    %3717 = vmatpush2.bf16.msra.mxu0 0
    %3718 = vmatprep.subr.bf16.mxu0 0
    %3719 = vmatpush2.bf16.msra.mxu0 0
    %3720 = vmatprep.subr.bf16.mxu0 0
    %3721 = vmatpush2.bf16.msra.mxu0 0
    %3722 = vmatprep.subr.bf16.mxu0 0
    %3723 = vmatpush2.bf16.msra.mxu0 0
    %3724 = vmatprep.mubr.bf16.mxu0 0
    %3725 = vmatmul.mubr.bf16.gmra.mxu0 %v3153
    %v3726 = vpop.f32.mrf.mxu0
    %v3727 = vadd.f32 %v3686, %v3726
    %v3728 = vpop.f32.mrf.mxu0
    %v3729 = vadd.f32 %v3688, %v3728
    %v3730 = vpop.f32.mrf.mxu0
    %v3731 = vpop.f32.mrf.mxu0
    %3732 = vdwg.mxu0
    %3733 = vmatprep.subr.bf16.mxu0 0
    %3734 = vmatpush1.bf16.msra.mxu0 %v3530
    %3735 = vmatprep.subr.bf16.mxu0 0
    %3736 = vmatpush1.bf16.msra.mxu0 %v3527
    %3737 = vmatprep.subr.bf16.mxu0 0
    %3738 = vmatpush1.bf16.msra.mxu0 %v3524
    %3739 = vmatprep.subr.bf16.mxu0 0
    %3740 = vmatpush1.bf16.msra.mxu0 %v3521
    %3741 = vmatprep.subr.bf16.mxu0 0
    %3742 = vmatpush1.bf16.msra.mxu0 %v3518
    %3743 = vmatprep.subr.bf16.mxu0 0
    %3744 = vmatpush1.bf16.msra.mxu0 %v3515
    %3745 = vmatprep.subr.bf16.mxu0 0
    %3746 = vmatpush1.bf16.msra.mxu0 %v3512
    %3747 = vmatprep.subr.bf16.mxu0 0
    %3748 = vmatpush1.bf16.msra.mxu0 %v3509
    %3749 = vmatprep.subr.bf16.mxu0 0
    %3750 = vmatpush2.bf16.msra.mxu0 %v3554
    %3751 = vmatprep.subr.bf16.mxu0 0
    %3752 = vmatpush2.bf16.msra.mxu0 %v3551
    %3753 = vmatprep.subr.bf16.mxu0 0
    %3754 = vmatpush2.bf16.msra.mxu0 %v3548
    %3755 = vmatprep.subr.bf16.mxu0 0
    %3756 = vmatpush2.bf16.msra.mxu0 %v3545
    %3757 = vmatprep.subr.bf16.mxu0 0
    %3758 = vmatpush2.bf16.msra.mxu0 %v3542
    %3759 = vmatprep.subr.bf16.mxu0 0
    %3760 = vmatpush2.bf16.msra.mxu0 %v3539
    %3761 = vmatprep.subr.bf16.mxu0 0
    %3762 = vmatpush2.bf16.msra.mxu0 %v3536
    %3763 = vmatprep.subr.bf16.mxu0 0
    %3764 = vmatpush2.bf16.msra.mxu0 %v3533
    %3765 = vmatprep.mubr.bf16.mxu0 %v3152
    %3766 = vmatmul.mubr.bf16.gmra.mxu0 %v3151
    %v3767 = vpop.f32.mrf.mxu0
    %v3768 = vadd.f32 %v3263, %v3767
    %v3769 = vpop.f32.mrf.mxu0
    %v3770 = vpop.f32.mrf.mxu0
    %v3771 = vpop.f32.mrf.mxu0
    %3772 = vdwg.mxu0
    %3773 = vmatprep.subr.bf16.mxu0 0
    %3774 = vmatpush1.bf16.msra.mxu0 %v3578
    %3775 = vmatprep.subr.bf16.mxu0 0
    %3776 = vmatpush1.bf16.msra.mxu0 %v3575
    %3777 = vmatprep.subr.bf16.mxu0 0
    %3778 = vmatpush1.bf16.msra.mxu0 %v3572
    %3779 = vmatprep.subr.bf16.mxu0 0
    %3780 = vmatpush1.bf16.msra.mxu0 %v3569
    %3781 = vmatprep.subr.bf16.mxu0 0
    %3782 = vmatpush1.bf16.msra.mxu0 %v3566
    %3783 = vmatprep.subr.bf16.mxu0 0
    %3784 = vmatpush1.bf16.msra.mxu0 %v3563
    %3785 = vmatprep.subr.bf16.mxu0 0
    %3786 = vmatpush1.bf16.msra.mxu0 %v3560
    %3787 = vmatprep.subr.bf16.mxu0 0
    %3788 = vmatpush1.bf16.msra.mxu0 %v3557
    %3789 = vmatprep.subr.bf16.mxu0 0
    %3790 = vmatpush2.bf16.msra.mxu0 0
    %3791 = vmatprep.subr.bf16.mxu0 0
    %3792 = vmatpush2.bf16.msra.mxu0 0
    %3793 = vmatprep.subr.bf16.mxu0 0
    %3794 = vmatpush2.bf16.msra.mxu0 0
    %3795 = vmatprep.subr.bf16.mxu0 0
    %3796 = vmatpush2.bf16.msra.mxu0 0
    %3797 = vmatprep.subr.bf16.mxu0 0
    %3798 = vmatpush2.bf16.msra.mxu0 0
    %3799 = vmatprep.subr.bf16.mxu0 0
    %3800 = vmatpush2.bf16.msra.mxu0 0
    %3801 = vmatprep.subr.bf16.mxu0 0
    %3802 = vmatpush2.bf16.msra.mxu0 0
    %3803 = vmatprep.subr.bf16.mxu0 0
    %3804 = vmatpush2.bf16.msra.mxu0 0
    %3805 = vmatprep.mubr.bf16.mxu0 0
    %3806 = vmatmul.mubr.bf16.gmra.mxu0 %v3153
    %v3807 = vpop.f32.mrf.mxu0
    %v3808 = vadd.f32 %v3768, %v3807
    %v3809 = vpop.f32.mrf.mxu0
    %v3810 = vpop.f32.mrf.mxu0
    %v3811 = vpop.f32.mrf.mxu0
    %3812 = vdwg.mxu0
    %v3813 = vpack.c.bf16 %v3727, %v3727
    %v3814 = vpack.c.bf16 %v3729, %v3729
    %v3815 = vpack.c.bf16 %v3808, %v3808
    %v3816 = vld [vmem:[#allocation19] sm:$0xff]
    %v3817 = vld [vmem:[#allocation19 + $0x8] sm:$0xf]
    %v3818 = vld [vmem:[#allocation19 + $0xc] sm:$0xff]
    %v3819 = vld [vmem:[#allocation19 + $0x14] sm:$0xf]
    %v3820 = vld [vmem:[#allocation19 + $0x18] sm:$0xff]
    %v3821 = vld [vmem:[#allocation19 + $0x20] sm:$0xf]
    %v3822 = vld [vmem:[#allocation19 + $0x24] sm:$0xff]
    %v3823 = vld [vmem:[#allocation19 + $0x2c] sm:$0xf]
    %v3824 = vld [vmem:[#allocation19 + $0x30] sm:$0xff]
    %v3825 = vld [vmem:[#allocation19 + $0x38] sm:$0xf]
    %v3826 = vld [vmem:[#allocation19 + $0x3c] sm:$0xff]
    %v3827 = vld [vmem:[#allocation19 + $0x44] sm:$0xf]
    %v3828 = vld [vmem:[#allocation19 + $0x48] sm:$0xff]
    %v3829 = vld [vmem:[#allocation19 + $0x50] sm:$0xf]
    %v3830 = vld [vmem:[#allocation19 + $0x54] sm:$0xff]
    %v3831 = vld [vmem:[#allocation19 + $0x5c] sm:$0xf]
    %v3832 = vld [vmem:[#allocation19 + $0x60] sm:$0xff]
    %v3833 = vld [vmem:[#allocation19 + $0x68] sm:$0xf]
    %v3834 = vld [vmem:[#allocation19 + $0x6c] sm:$0xff]
    %v3835 = vld [vmem:[#allocation19 + $0x74] sm:$0xf]
    %v3836 = vld [vmem:[#allocation19 + $0x78] sm:$0xff]
    %v3837 = vld [vmem:[#allocation19 + $0x80] sm:$0xf]
    %v3838 = vld [vmem:[#allocation19 + $0x84] sm:$0xff]
    %v3839 = vld [vmem:[#allocation19 + $0x8c] sm:$0xf]
    %v3840 = vld [vmem:[#allocation19 + $0x90] sm:$0xff]
    %v3841 = vld [vmem:[#allocation19 + $0x98] sm:$0xf]
    %v3842 = vld [vmem:[#allocation19 + $0x9c] sm:$0xff]
    %v3843 = vld [vmem:[#allocation19 + $0xa4] sm:$0xf]
    %v3844 = vld [vmem:[#allocation19 + $0xa8] sm:$0xff]
    %v3845 = vld [vmem:[#allocation19 + $0xb0] sm:$0xf]
    %v3846 = vld [vmem:[#allocation19 + $0xb4] sm:$0xff]
    %v3847 = vld [vmem:[#allocation19 + $0xbc] sm:$0xf]
    %v3848 = vld [vmem:[#allocation19 + $0xc0] sm:$0xff]
    %v3849 = vld [vmem:[#allocation19 + $0xc8] sm:$0xf]
    %v3850 = vld [vmem:[#allocation19 + $0xcc] sm:$0xff]
    %v3851 = vld [vmem:[#allocation19 + $0xd4] sm:$0xf]
    %v3852 = vld [vmem:[#allocation19 + $0xd8] sm:$0xff]
    %v3853 = vld [vmem:[#allocation19 + $0xe0] sm:$0xf]
    %v3854 = vld [vmem:[#allocation19 + $0xe4] sm:$0xff]
    %v3855 = vld [vmem:[#allocation19 + $0xec] sm:$0xf]
    %v3856 = vld [vmem:[#allocation19 + $0xf0] sm:$0xff]
    %v3857 = vld [vmem:[#allocation19 + $0xf8] sm:$0xf]
    %v3858 = vld [vmem:[#allocation19 + $0xfc] sm:$0xff]
    %v3859 = vld [vmem:[#allocation19 + $0x104] sm:$0xf]
    %v3860 = vld [vmem:[#allocation19 + $0x108] sm:$0xff]
    %v3861 = vld [vmem:[#allocation19 + $0x110] sm:$0xf]
    %v3862 = vld [vmem:[#allocation19 + $0x114] sm:$0xff]
    %v3863 = vld [vmem:[#allocation19 + $0x11c] sm:$0xf]
    %v3864 = vld [vmem:[#allocation19 + $0x120] sm:$0xff]
    %v3865 = vld [vmem:[#allocation19 + $0x128] sm:$0xf]
    %v3866 = vld [vmem:[#allocation19 + $0x12c] sm:$0xff]
    %v3867 = vld [vmem:[#allocation19 + $0x134] sm:$0xf]
    %v3868 = vld [vmem:[#allocation19 + $0x138] sm:$0xff]
    %v3869 = vld [vmem:[#allocation19 + $0x140] sm:$0xf]
    %v3870 = vld [vmem:[#allocation19 + $0x144] sm:$0xff]
    %v3871 = vld [vmem:[#allocation19 + $0x14c] sm:$0xf]
    %v3872 = vld [vmem:[#allocation19 + $0x150] sm:$0xff]
    %v3873 = vld [vmem:[#allocation19 + $0x158] sm:$0xf]
    %v3874 = vld [vmem:[#allocation19 + $0x15c] sm:$0xff]
    %v3875 = vld [vmem:[#allocation19 + $0x164] sm:$0xf]
    %v3876 = vld [vmem:[#allocation19 + $0x168] sm:$0xff]
    %v3877 = vld [vmem:[#allocation19 + $0x170] sm:$0xf]
    %v3878 = vld [vmem:[#allocation19 + $0x174] sm:$0xff]
    %v3879 = vld [vmem:[#allocation19 + $0x17c] sm:$0xf]
    %v3880 = vld [vmem:[#allocation19 + $0x180] sm:$0xff]
    %v3881 = vld [vmem:[#allocation19 + $0x188] sm:$0xf]
    %v3882 = vld [vmem:[#allocation19 + $0x18c] sm:$0xff]
    %v3883 = vld [vmem:[#allocation19 + $0x194] sm:$0xf]
    %v3884 = vld [vmem:[#allocation19 + $0x198] sm:$0xff]
    %v3885 = vld [vmem:[#allocation19 + $0x1a0] sm:$0xf]
    %v3886 = vld [vmem:[#allocation19 + $0x1a4] sm:$0xff]
    %v3887 = vld [vmem:[#allocation19 + $0x1ac] sm:$0xf]
    %v3888 = vld [vmem:[#allocation19 + $0x1b0] sm:$0xff]
    %v3889 = vld [vmem:[#allocation19 + $0x1b8] sm:$0xf]
    %v3890 = vld [vmem:[#allocation19 + $0x1bc] sm:$0xff]
    %v3891 = vld [vmem:[#allocation19 + $0x1c4] sm:$0xf]
    %v3892 = vld [vmem:[#allocation19 + $0x1c8] sm:$0xff]
    %v3893 = vld [vmem:[#allocation19 + $0x1d0] sm:$0xf]
    %v3894 = vld [vmem:[#allocation19 + $0x1d4] sm:$0xff]
    %v3895 = vld [vmem:[#allocation19 + $0x1dc] sm:$0xf]
    %v3896 = vld [vmem:[#allocation19 + $0x1e0] sm:$0xff]
    %v3897 = vld [vmem:[#allocation19 + $0x1e8] sm:$0xf]
    %v3898 = vld [vmem:[#allocation19 + $0x1ec] sm:$0xff]
    %v3899 = vld [vmem:[#allocation19 + $0x1f4] sm:$0xf]
    %v3900 = vld [vmem:[#allocation19 + $0x1f8] sm:$0xff]
    %v3901 = vld [vmem:[#allocation19 + $0x200] sm:$0xf]
    %v3902 = vld [vmem:[#allocation19 + $0x204] sm:$0xff]
    %v3903 = vld [vmem:[#allocation19 + $0x20c] sm:$0xf]
    %v3904 = vld [vmem:[#allocation19 + $0x210] sm:$0xff]
    %v3905 = vld [vmem:[#allocation19 + $0x218] sm:$0xf]
    %v3906 = vld [vmem:[#allocation19 + $0x21c] sm:$0xff]
    %v3907 = vld [vmem:[#allocation19 + $0x224] sm:$0xf]
    %v3908 = vld [vmem:[#allocation19 + $0x228] sm:$0xff]
    %v3909 = vld [vmem:[#allocation19 + $0x230] sm:$0xf]
    %v3910 = vld [vmem:[#allocation19 + $0x234] sm:$0xff]
    %v3911 = vld [vmem:[#allocation19 + $0x23c] sm:$0xf]
    %v3912 = vld [vmem:[#allocation19 + $0x240] sm:$0xff]
    %v3913 = vld [vmem:[#allocation19 + $0x248] sm:$0xf]
    %v3914 = vld [vmem:[#allocation19 + $0x24c] sm:$0xff]
    %v3915 = vld [vmem:[#allocation19 + $0x254] sm:$0xf]
    %v3916 = vld [vmem:[#allocation19 + $0x258] sm:$0xff]
    %v3917 = vld [vmem:[#allocation19 + $0x260] sm:$0xf]
    %v3918 = vld [vmem:[#allocation19 + $0x264] sm:$0xff]
    %v3919 = vld [vmem:[#allocation19 + $0x26c] sm:$0xf]
    %v3920 = vld [vmem:[#allocation19 + $0x270] sm:$0xff]
    %v3921 = vld [vmem:[#allocation19 + $0x278] sm:$0xf]
    %v3922 = vld [vmem:[#allocation19 + $0x27c] sm:$0xff]
    %v3923 = vld [vmem:[#allocation19 + $0x284] sm:$0xf]
    %v3924 = vld [vmem:[#allocation19 + $0x288] sm:$0xff]
    %v3925 = vld [vmem:[#allocation19 + $0x290] sm:$0xf]
    %v3926 = vld [vmem:[#allocation19 + $0x294] sm:$0xff]
    %v3927 = vld [vmem:[#allocation19 + $0x29c] sm:$0xf]
    %v3928 = vld [vmem:[#allocation19 + $0x2a0] sm:$0xff]
    %v3929 = vld [vmem:[#allocation19 + $0x2a8] sm:$0xf]
    %v3930 = vld [vmem:[#allocation19 + $0x2ac] sm:$0xff]
    %v3931 = vld [vmem:[#allocation19 + $0x2b4] sm:$0xf]
    %v3932 = vld [vmem:[#allocation19 + $0x2b8] sm:$0xff]
    %v3933 = vld [vmem:[#allocation19 + $0x2c0] sm:$0xf]
    %v3934 = vld [vmem:[#allocation19 + $0x2c4] sm:$0xff]
    %v3935 = vld [vmem:[#allocation19 + $0x2cc] sm:$0xf]
    %v3936 = vld [vmem:[#allocation19 + $0x2d0] sm:$0xff]
    %v3937 = vld [vmem:[#allocation19 + $0x2d8] sm:$0xf]
    %v3938 = vld [vmem:[#allocation19 + $0x2dc] sm:$0xff]
    %v3939 = vld [vmem:[#allocation19 + $0x2e4] sm:$0xf]
    %v3940 = vld [vmem:[#allocation19 + $0x2e8] sm:$0xff]
    %v3941 = vld [vmem:[#allocation19 + $0x2f0] sm:$0xf]
    %v3942 = vld [vmem:[#allocation19 + $0x2f4] sm:$0xff]
    %v3943 = vld [vmem:[#allocation19 + $0x2fc] sm:$0xf]
    %v3944 = vld [vmem:[#allocation19 + $0x300] sm:$0xff]
    %v3945 = vld [vmem:[#allocation19 + $0x308] sm:$0xf]
    %v3946 = vld [vmem:[#allocation19 + $0x30c] sm:$0xff]
    %v3947 = vld [vmem:[#allocation19 + $0x314] sm:$0xf]
    %v3948 = vld [vmem:[#allocation19 + $0x318] sm:$0xff]
    %v3949 = vld [vmem:[#allocation19 + $0x320] sm:$0xf]
    %v3950 = vld [vmem:[#allocation19 + $0x324] sm:$0xff]
    %v3951 = vld [vmem:[#allocation19 + $0x32c] sm:$0xf]
    %v3952 = vld [vmem:[#allocation19 + $0x330] sm:$0xff]
    %v3953 = vld [vmem:[#allocation19 + $0x338] sm:$0xf]
    %v3954 = vld [vmem:[#allocation19 + $0x33c] sm:$0xff]
    %v3955 = vld [vmem:[#allocation19 + $0x344] sm:$0xf]
    %v3956 = vld [vmem:[#allocation19 + $0x348] sm:$0xff]
    %v3957 = vld [vmem:[#allocation19 + $0x350] sm:$0xf]
    %v3958 = vld [vmem:[#allocation19 + $0x354] sm:$0xff]
    %v3959 = vld [vmem:[#allocation19 + $0x35c] sm:$0xf]
    %v3960 = vld [vmem:[#allocation19 + $0x360] sm:$0xff]
    %v3961 = vld [vmem:[#allocation19 + $0x368] sm:$0xf]
    %v3962 = vld [vmem:[#allocation19 + $0x36c] sm:$0xff]
    %v3963 = vld [vmem:[#allocation19 + $0x374] sm:$0xf]
    %v3964 = vld [vmem:[#allocation19 + $0x378] sm:$0xff]
    %v3965 = vld [vmem:[#allocation19 + $0x380] sm:$0xf]
    %v3966 = vld [vmem:[#allocation19 + $0x384] sm:$0xff]
    %v3967 = vld [vmem:[#allocation19 + $0x38c] sm:$0xf]
    %v3968 = vld [vmem:[#allocation19 + $0x390] sm:$0xff]
    %v3969 = vld [vmem:[#allocation19 + $0x398] sm:$0xf]
    %v3970 = vld [vmem:[#allocation19 + $0x39c] sm:$0xff]
    %v3971 = vld [vmem:[#allocation19 + $0x3a4] sm:$0xf]
    %v3972 = vld [vmem:[#allocation19 + $0x3a8] sm:$0xff]
    %v3973 = vld [vmem:[#allocation19 + $0x3b0] sm:$0xf]
    %v3974 = vld [vmem:[#allocation19 + $0x3b4] sm:$0xff]
    %v3975 = vld [vmem:[#allocation19 + $0x3bc] sm:$0xf]
    %v3976 = vld [vmem:[#allocation19 + $0x3c0] sm:$0xff]
    %v3977 = vld [vmem:[#allocation19 + $0x3c8] sm:$0xf]
    %v3978 = vld [vmem:[#allocation19 + $0x3cc] sm:$0xff]
    %v3979 = vld [vmem:[#allocation19 + $0x3d4] sm:$0xf]
    %v3980 = vld [vmem:[#allocation19 + $0x3d8] sm:$0xff]
    %v3981 = vld [vmem:[#allocation19 + $0x3e0] sm:$0xf]
    %v3982 = vld [vmem:[#allocation19 + $0x3e4] sm:$0xff]
    %v3983 = vld [vmem:[#allocation19 + $0x3ec] sm:$0xf]
    %v3984 = vld [vmem:[#allocation19 + $0x3f0] sm:$0xff]
    %v3985 = vld [vmem:[#allocation19 + $0x3f8] sm:$0xf]
    %v3986 = vld [vmem:[#allocation19 + $0x3fc] sm:$0xff]
    %v3987 = vld [vmem:[#allocation19 + $0x404] sm:$0xf]
    %v3988 = vld [vmem:[#allocation19 + $0x408] sm:$0xff]
    %v3989 = vld [vmem:[#allocation19 + $0x410] sm:$0xf]
    %v3990 = vld [vmem:[#allocation19 + $0x414] sm:$0xff]
    %v3991 = vld [vmem:[#allocation19 + $0x41c] sm:$0xf]
    %v3992 = vld [vmem:[#allocation19 + $0x420] sm:$0xff]
    %v3993 = vld [vmem:[#allocation19 + $0x428] sm:$0xf]
    %v3994 = vld [vmem:[#allocation19 + $0x42c] sm:$0xff]
    %v3995 = vld [vmem:[#allocation19 + $0x434] sm:$0xf]
    %v3996 = vld [vmem:[#allocation19 + $0x438] sm:$0xff]
    %v3997 = vld [vmem:[#allocation19 + $0x440] sm:$0xf]
    %v3998 = vld [vmem:[#allocation19 + $0x444] sm:$0xff]
    %v3999 = vld [vmem:[#allocation19 + $0x44c] sm:$0xf]
    %v4000 = vld [vmem:[#allocation19 + $0x450] sm:$0xff]
    %v4001 = vld [vmem:[#allocation19 + $0x458] sm:$0xf]
    %v4002 = vld [vmem:[#allocation19 + $0x45c] sm:$0xff]
    %v4003 = vld [vmem:[#allocation19 + $0x464] sm:$0xf]
    %v4004 = vld [vmem:[#allocation19 + $0x468] sm:$0xff]
    %v4005 = vld [vmem:[#allocation19 + $0x470] sm:$0xf]
    %v4006 = vld [vmem:[#allocation19 + $0x474] sm:$0xff]
    %v4007 = vld [vmem:[#allocation19 + $0x47c] sm:$0xf]
    %v4104 = vunpack.c.l.b16 %v3912
    %v4105 = vunpack.c.h.b16 %v3912
    %v4106 = vunpack.c.l.b16 %v3913
    %v4107 = vunpack.c.l.b16 %v3914
    %v4108 = vunpack.c.h.b16 %v3914
    %v4109 = vunpack.c.l.b16 %v3915
    %v4110 = vunpack.c.l.b16 %v3916
    %v4111 = vunpack.c.h.b16 %v3916
    %v4112 = vunpack.c.l.b16 %v3917
    %v4113 = vunpack.c.l.b16 %v3918
    %v4114 = vunpack.c.h.b16 %v3918
    %v4115 = vunpack.c.l.b16 %v3919
    %v4116 = vunpack.c.l.b16 %v3920
    %v4117 = vunpack.c.h.b16 %v3920
    %v4118 = vunpack.c.l.b16 %v3921
    %v4119 = vunpack.c.l.b16 %v3922
    %v4120 = vunpack.c.h.b16 %v3922
    %v4121 = vunpack.c.l.b16 %v3923
    %v4122 = vunpack.c.l.b16 %v3924
    %v4123 = vunpack.c.h.b16 %v3924
    %v4124 = vunpack.c.l.b16 %v3925
    %v4125 = vunpack.c.l.b16 %v3926
    %v4126 = vunpack.c.h.b16 %v3926
    %v4127 = vunpack.c.l.b16 %v3927
    %v4128 = vunpack.c.l.b16 %v3928
    %v4129 = vunpack.c.h.b16 %v3928
    %v4130 = vunpack.c.l.b16 %v3929
    %v4131 = vunpack.c.l.b16 %v3930
    %v4132 = vunpack.c.h.b16 %v3930
    %v4133 = vunpack.c.l.b16 %v3931
    %v4134 = vunpack.c.l.b16 %v3932
    %v4135 = vunpack.c.h.b16 %v3932
    %v4136 = vunpack.c.l.b16 %v3933
    %v4137 = vunpack.c.l.b16 %v3934
    %v4138 = vunpack.c.h.b16 %v3934
    %v4139 = vunpack.c.l.b16 %v3935
    %v4140 = vunpack.c.l.b16 %v3936
    %v4141 = vunpack.c.h.b16 %v3936
    %v4142 = vunpack.c.l.b16 %v3937
    %v4143 = vunpack.c.l.b16 %v3938
    %v4144 = vunpack.c.h.b16 %v3938
    %v4145 = vunpack.c.l.b16 %v3939
    %v4146 = vunpack.c.l.b16 %v3940
    %v4147 = vunpack.c.h.b16 %v3940
    %v4148 = vunpack.c.l.b16 %v3941
    %v4149 = vunpack.c.l.b16 %v3942
    %v4150 = vunpack.c.h.b16 %v3942
    %v4151 = vunpack.c.l.b16 %v3943
    %v4152 = vunpack.c.l.b16 %v3944
    %v4153 = vunpack.c.h.b16 %v3944
    %v4154 = vunpack.c.l.b16 %v3945
    %v4155 = vunpack.c.l.b16 %v3946
    %v4156 = vunpack.c.h.b16 %v3946
    %v4157 = vunpack.c.l.b16 %v3947
    %v4158 = vunpack.c.l.b16 %v3948
    %v4159 = vunpack.c.h.b16 %v3948
    %v4160 = vunpack.c.l.b16 %v3949
    %v4161 = vunpack.c.l.b16 %v3950
    %v4162 = vunpack.c.h.b16 %v3950
    %v4163 = vunpack.c.l.b16 %v3951
    %v4164 = vunpack.c.l.b16 %v3952
    %v4165 = vunpack.c.h.b16 %v3952
    %v4166 = vunpack.c.l.b16 %v3953
    %v4167 = vunpack.c.l.b16 %v3954
    %v4168 = vunpack.c.h.b16 %v3954
    %v4169 = vunpack.c.l.b16 %v3955
    %v4170 = vunpack.c.l.b16 %v3956
    %v4171 = vunpack.c.h.b16 %v3956
    %v4172 = vunpack.c.l.b16 %v3957
    %v4173 = vunpack.c.l.b16 %v3958
    %v4174 = vunpack.c.h.b16 %v3958
    %v4175 = vunpack.c.l.b16 %v3959
    %v4176 = vunpack.c.l.b16 %v3960
    %v4177 = vunpack.c.h.b16 %v3960
    %v4178 = vunpack.c.l.b16 %v3961
    %v4179 = vunpack.c.l.b16 %v3962
    %v4180 = vunpack.c.h.b16 %v3962
    %v4181 = vunpack.c.l.b16 %v3963
    %v4182 = vunpack.c.l.b16 %v3964
    %v4183 = vunpack.c.h.b16 %v3964
    %v4184 = vunpack.c.l.b16 %v3965
    %v4185 = vunpack.c.l.b16 %v3966
    %v4186 = vunpack.c.h.b16 %v3966
    %v4187 = vunpack.c.l.b16 %v3967
    %v4188 = vunpack.c.l.b16 %v3968
    %v4189 = vunpack.c.h.b16 %v3968
    %v4190 = vunpack.c.l.b16 %v3969
    %v4191 = vunpack.c.l.b16 %v3970
    %v4192 = vunpack.c.h.b16 %v3970
    %v4193 = vunpack.c.l.b16 %v3971
    %v4194 = vunpack.c.l.b16 %v3972
    %v4195 = vunpack.c.h.b16 %v3972
    %v4196 = vunpack.c.l.b16 %v3973
    %v4197 = vunpack.c.l.b16 %v3974
    %v4198 = vunpack.c.h.b16 %v3974
    %v4199 = vunpack.c.l.b16 %v3975
    %v4200 = vunpack.c.l.b16 %v3976
    %v4201 = vunpack.c.h.b16 %v3976
    %v4202 = vunpack.c.l.b16 %v3977
    %v4203 = vunpack.c.l.b16 %v3978
    %v4204 = vunpack.c.h.b16 %v3978
    %v4205 = vunpack.c.l.b16 %v3979
    %v4206 = vunpack.c.l.b16 %v3980
    %v4207 = vunpack.c.h.b16 %v3980
    %v4208 = vunpack.c.l.b16 %v3981
    %v4209 = vunpack.c.l.b16 %v3982
    %v4210 = vunpack.c.h.b16 %v3982
    %v4211 = vunpack.c.l.b16 %v3983
    %v4212 = vunpack.c.l.b16 %v3984
    %v4213 = vunpack.c.h.b16 %v3984
    %v4214 = vunpack.c.l.b16 %v3985
    %v4215 = vunpack.c.l.b16 %v3986
    %v4216 = vunpack.c.h.b16 %v3986
    %v4217 = vunpack.c.l.b16 %v3987
    %v4218 = vunpack.c.l.b16 %v3988
    %v4219 = vunpack.c.h.b16 %v3988
    %v4220 = vunpack.c.l.b16 %v3989
    %v4221 = vunpack.c.l.b16 %v3990
    %v4222 = vunpack.c.h.b16 %v3990
    %v4223 = vunpack.c.l.b16 %v3991
    %v4224 = vunpack.c.l.b16 %v3992
    %v4225 = vunpack.c.h.b16 %v3992
    %v4226 = vunpack.c.l.b16 %v3993
    %v4227 = vunpack.c.l.b16 %v3994
    %v4228 = vunpack.c.h.b16 %v3994
    %v4229 = vunpack.c.l.b16 %v3995
    %v4230 = vunpack.c.l.b16 %v3996
    %v4231 = vunpack.c.h.b16 %v3996
    %v4232 = vunpack.c.l.b16 %v3997
    %v4233 = vunpack.c.l.b16 %v3998
    %v4234 = vunpack.c.h.b16 %v3998
    %v4235 = vunpack.c.l.b16 %v3999
    %v4236 = vunpack.c.l.b16 %v4000
    %v4237 = vunpack.c.h.b16 %v4000
    %v4238 = vunpack.c.l.b16 %v4001
    %v4239 = vunpack.c.l.b16 %v4002
    %v4240 = vunpack.c.h.b16 %v4002
    %v4241 = vunpack.c.l.b16 %v4003
    %v4242 = vunpack.c.l.b16 %v4004
    %v4243 = vunpack.c.h.b16 %v4004
    %v4244 = vunpack.c.l.b16 %v4005
    %v4245 = vunpack.c.l.b16 %v4006
    %v4246 = vunpack.c.h.b16 %v4006
    %v4247 = vunpack.c.l.b16 %v4007
    %v4248 = vpack.c.b16 %v4107, %v4104
    %v4249 = vpack.c.b16 %v4108, %v4105
    %v4250 = vpack.c.b16 %v4109, %v4106
    %v4251 = vpack.c.b16 %v4113, %v4110
    %v4252 = vpack.c.b16 %v4114, %v4111
    %v4253 = vpack.c.b16 %v4115, %v4112
    %v4254 = vpack.c.b16 %v4119, %v4116
    %v4255 = vpack.c.b16 %v4120, %v4117
    %v4256 = vpack.c.b16 %v4121, %v4118
    %v4257 = vpack.c.b16 %v4125, %v4122
    %v4258 = vpack.c.b16 %v4126, %v4123
    %v4259 = vpack.c.b16 %v4127, %v4124
    %v4260 = vpack.c.b16 %v4131, %v4128
    %v4261 = vpack.c.b16 %v4132, %v4129
    %v4262 = vpack.c.b16 %v4133, %v4130
    %v4263 = vpack.c.b16 %v4137, %v4134
    %v4264 = vpack.c.b16 %v4138, %v4135
    %v4265 = vpack.c.b16 %v4139, %v4136
    %v4266 = vpack.c.b16 %v4143, %v4140
    %v4267 = vpack.c.b16 %v4144, %v4141
    %v4268 = vpack.c.b16 %v4145, %v4142
    %v4269 = vpack.c.b16 %v4149, %v4146
    %v4270 = vpack.c.b16 %v4150, %v4147
    %v4271 = vpack.c.b16 %v4151, %v4148
    %v4272 = vpack.c.b16 %v4155, %v4152
    %v4273 = vpack.c.b16 %v4156, %v4153
    %v4274 = vpack.c.b16 %v4157, %v4154
    %v4275 = vpack.c.b16 %v4161, %v4158
    %v4276 = vpack.c.b16 %v4162, %v4159
    %v4277 = vpack.c.b16 %v4163, %v4160
    %v4278 = vpack.c.b16 %v4167, %v4164
    %v4279 = vpack.c.b16 %v4168, %v4165
    %v4280 = vpack.c.b16 %v4169, %v4166
    %v4281 = vpack.c.b16 %v4173, %v4170
    %v4282 = vpack.c.b16 %v4174, %v4171
    %v4283 = vpack.c.b16 %v4175, %v4172
    %v4284 = vpack.c.b16 %v4179, %v4176
    %v4285 = vpack.c.b16 %v4180, %v4177
    %v4286 = vpack.c.b16 %v4181, %v4178
    %v4287 = vpack.c.b16 %v4185, %v4182
    %v4288 = vpack.c.b16 %v4186, %v4183
    %v4289 = vpack.c.b16 %v4187, %v4184
    %v4290 = vpack.c.b16 %v4191, %v4188
    %v4291 = vpack.c.b16 %v4192, %v4189
    %v4292 = vpack.c.b16 %v4193, %v4190
    %v4293 = vpack.c.b16 %v4197, %v4194
    %v4294 = vpack.c.b16 %v4198, %v4195
    %v4295 = vpack.c.b16 %v4199, %v4196
    %v4296 = vpack.c.b16 %v4203, %v4200
    %v4297 = vpack.c.b16 %v4204, %v4201
    %v4298 = vpack.c.b16 %v4205, %v4202
    %v4299 = vpack.c.b16 %v4209, %v4206
    %v4300 = vpack.c.b16 %v4210, %v4207
    %v4301 = vpack.c.b16 %v4211, %v4208
    %v4302 = vpack.c.b16 %v4215, %v4212
    %v4303 = vpack.c.b16 %v4216, %v4213
    %v4304 = vpack.c.b16 %v4217, %v4214
    %v4305 = vpack.c.b16 %v4221, %v4218
    %v4306 = vpack.c.b16 %v4222, %v4219
    %v4307 = vpack.c.b16 %v4223, %v4220
    %v4308 = vpack.c.b16 %v4227, %v4224
    %v4309 = vpack.c.b16 %v4228, %v4225
    %v4310 = vpack.c.b16 %v4229, %v4226
    %v4311 = vpack.c.b16 %v4233, %v4230
    %v4312 = vpack.c.b16 %v4234, %v4231
    %v4313 = vpack.c.b16 %v4235, %v4232
    %v4314 = vpack.c.b16 %v4239, %v4236
    %v4315 = vpack.c.b16 %v4240, %v4237
    %v4316 = vpack.c.b16 %v4241, %v4238
    %v4317 = vpack.c.b16 %v4245, %v4242
    %v4318 = vpack.c.b16 %v4246, %v4243
    %v4319 = vpack.c.b16 %v4247, %v4244
    %4392 = vmatprep.subr.bf16.mxu0 %v4270
    %4393 = vmatpush1.bf16.msra.mxu0 %v4269
    %4394 = vmatprep.subr.bf16.mxu0 %v4267
    %4395 = vmatpush1.bf16.msra.mxu0 %v4266
    %4396 = vmatprep.subr.bf16.mxu0 %v4264
    %4397 = vmatpush1.bf16.msra.mxu0 %v4263
    %4398 = vmatprep.subr.bf16.mxu0 %v4261
    %4399 = vmatpush1.bf16.msra.mxu0 %v4260
    %4400 = vmatprep.subr.bf16.mxu0 %v4258
    %4401 = vmatpush1.bf16.msra.mxu0 %v4257
    %4402 = vmatprep.subr.bf16.mxu0 %v4255
    %4403 = vmatpush1.bf16.msra.mxu0 %v4254
    %4404 = vmatprep.subr.bf16.mxu0 %v4252
    %4405 = vmatpush1.bf16.msra.mxu0 %v4251
    %4406 = vmatprep.subr.bf16.mxu0 %v4249
    %4407 = vmatpush1.bf16.msra.mxu0 %v4248
    %4408 = vmatprep.subr.bf16.mxu0 %v4294
    %4409 = vmatpush2.bf16.msra.mxu0 %v4293
    %4410 = vmatprep.subr.bf16.mxu0 %v4291
    %4411 = vmatpush2.bf16.msra.mxu0 %v4290
    %4412 = vmatprep.subr.bf16.mxu0 %v4288
    %4413 = vmatpush2.bf16.msra.mxu0 %v4287
    %4414 = vmatprep.subr.bf16.mxu0 %v4285
    %4415 = vmatpush2.bf16.msra.mxu0 %v4284
    %4416 = vmatprep.subr.bf16.mxu0 %v4282
    %4417 = vmatpush2.bf16.msra.mxu0 %v4281
    %4418 = vmatprep.subr.bf16.mxu0 %v4279
    %4419 = vmatpush2.bf16.msra.mxu0 %v4278
    %4420 = vmatprep.subr.bf16.mxu0 %v4276
    %4421 = vmatpush2.bf16.msra.mxu0 %v4275
    %4422 = vmatprep.subr.bf16.mxu0 %v4273
    %4423 = vmatpush2.bf16.msra.mxu0 %v4272
    %4424 = vmatprep.mubr.bf16.mxu0 %v3814
    %4425 = vmatmul.mubr.bf16.gmra.mxu0 %v3813
    %v4426 = vpop.f32.mrf.mxu0
    %v4427 = vadd.f32 0.0, %v4426
    %v4428 = vpop.f32.mrf.mxu0
    %v4429 = vadd.f32 0.0, %v4428
    %v4430 = vpop.f32.mrf.mxu0
    %v4431 = vpop.f32.mrf.mxu0
    %4432 = vdwg.mxu0
    %4433 = vmatprep.subr.bf16.mxu0 %v4318
    %4434 = vmatpush1.bf16.msra.mxu0 %v4317
    %4435 = vmatprep.subr.bf16.mxu0 %v4315
    %4436 = vmatpush1.bf16.msra.mxu0 %v4314
    %4437 = vmatprep.subr.bf16.mxu0 %v4312
    %4438 = vmatpush1.bf16.msra.mxu0 %v4311
    %4439 = vmatprep.subr.bf16.mxu0 %v4309
    %4440 = vmatpush1.bf16.msra.mxu0 %v4308
    %4441 = vmatprep.subr.bf16.mxu0 %v4306
    %4442 = vmatpush1.bf16.msra.mxu0 %v4305
    %4443 = vmatprep.subr.bf16.mxu0 %v4303
    %4444 = vmatpush1.bf16.msra.mxu0 %v4302
    %4445 = vmatprep.subr.bf16.mxu0 %v4300
    %4446 = vmatpush1.bf16.msra.mxu0 %v4299
    %4447 = vmatprep.subr.bf16.mxu0 %v4297
    %4448 = vmatpush1.bf16.msra.mxu0 %v4296
    %4449 = vmatprep.subr.bf16.mxu0 0
    %4450 = vmatpush2.bf16.msra.mxu0 0
    %4451 = vmatprep.subr.bf16.mxu0 0
    %4452 = vmatpush2.bf16.msra.mxu0 0
    %4453 = vmatprep.subr.bf16.mxu0 0
    %4454 = vmatpush2.bf16.msra.mxu0 0
    %4455 = vmatprep.subr.bf16.mxu0 0
    %4456 = vmatpush2.bf16.msra.mxu0 0
    %4457 = vmatprep.subr.bf16.mxu0 0
    %4458 = vmatpush2.bf16.msra.mxu0 0
    %4459 = vmatprep.subr.bf16.mxu0 0
    %4460 = vmatpush2.bf16.msra.mxu0 0
    %4461 = vmatprep.subr.bf16.mxu0 0
    %4462 = vmatpush2.bf16.msra.mxu0 0
    %4463 = vmatprep.subr.bf16.mxu0 0
    %4464 = vmatpush2.bf16.msra.mxu0 0
    %4465 = vmatprep.mubr.bf16.mxu0 0
    %4466 = vmatmul.mubr.bf16.gmra.mxu0 %v3815
    %v4467 = vpop.f32.mrf.mxu0
    %v4468 = vadd.f32 %v4427, %v4467
    %v4469 = vpop.f32.mrf.mxu0
    %v4470 = vadd.f32 %v4429, %v4469
    %v4471 = vpop.f32.mrf.mxu0
    %v4472 = vpop.f32.mrf.mxu0
    %4473 = vdwg.mxu0
    %4474 = vmatprep.subr.bf16.mxu0 0
    %4475 = vmatpush1.bf16.msra.mxu0 %v4271
    %4476 = vmatprep.subr.bf16.mxu0 0
    %4477 = vmatpush1.bf16.msra.mxu0 %v4268
    %4478 = vmatprep.subr.bf16.mxu0 0
    %4479 = vmatpush1.bf16.msra.mxu0 %v4265
    %4480 = vmatprep.subr.bf16.mxu0 0
    %4481 = vmatpush1.bf16.msra.mxu0 %v4262
    %4482 = vmatprep.subr.bf16.mxu0 0
    %4483 = vmatpush1.bf16.msra.mxu0 %v4259
    %4484 = vmatprep.subr.bf16.mxu0 0
    %4485 = vmatpush1.bf16.msra.mxu0 %v4256
    %4486 = vmatprep.subr.bf16.mxu0 0
    %4487 = vmatpush1.bf16.msra.mxu0 %v4253
    %4488 = vmatprep.subr.bf16.mxu0 0
    %4489 = vmatpush1.bf16.msra.mxu0 %v4250
    %4490 = vmatprep.subr.bf16.mxu0 0
    %4491 = vmatpush2.bf16.msra.mxu0 %v4295
    %4492 = vmatprep.subr.bf16.mxu0 0
    %4493 = vmatpush2.bf16.msra.mxu0 %v4292
    %4494 = vmatprep.subr.bf16.mxu0 0
    %4495 = vmatpush2.bf16.msra.mxu0 %v4289
    %4496 = vmatprep.subr.bf16.mxu0 0
    %4497 = vmatpush2.bf16.msra.mxu0 %v4286
    %4498 = vmatprep.subr.bf16.mxu0 0
    %4499 = vmatpush2.bf16.msra.mxu0 %v4283
    %4500 = vmatprep.subr.bf16.mxu0 0
    %4501 = vmatpush2.bf16.msra.mxu0 %v4280
    %4502 = vmatprep.subr.bf16.mxu0 0
    %4503 = vmatpush2.bf16.msra.mxu0 %v4277
    %4504 = vmatprep.subr.bf16.mxu0 0
    %4505 = vmatpush2.bf16.msra.mxu0 %v4274
    %4506 = vmatprep.mubr.bf16.mxu0 %v3814
    %4507 = vmatmul.mubr.bf16.gmra.mxu0 %v3813
    %v4508 = vpop.f32.mrf.mxu0
    %v4509 = vadd.f32 0.0, %v4508
    %v4510 = vpop.f32.mrf.mxu0
    %v4511 = vpop.f32.mrf.mxu0
    %v4512 = vpop.f32.mrf.mxu0
    %4513 = vdwg.mxu0
    %4514 = vmatprep.subr.bf16.mxu0 0
    %4515 = vmatpush1.bf16.msra.mxu0 %v4319
    %4516 = vmatprep.subr.bf16.mxu0 0
    %4517 = vmatpush1.bf16.msra.mxu0 %v4316
    %4518 = vmatprep.subr.bf16.mxu0 0
    %4519 = vmatpush1.bf16.msra.mxu0 %v4313
    %4520 = vmatprep.subr.bf16.mxu0 0
    %4521 = vmatpush1.bf16.msra.mxu0 %v4310
    %4522 = vmatprep.subr.bf16.mxu0 0
    %4523 = vmatpush1.bf16.msra.mxu0 %v4307
    %4524 = vmatprep.subr.bf16.mxu0 0
    %4525 = vmatpush1.bf16.msra.mxu0 %v4304
    %4526 = vmatprep.subr.bf16.mxu0 0
    %4527 = vmatpush1.bf16.msra.mxu0 %v4301
    %4528 = vmatprep.subr.bf16.mxu0 0
    %4529 = vmatpush1.bf16.msra.mxu0 %v4298
    %4530 = vmatprep.subr.bf16.mxu0 0
    %4531 = vmatpush2.bf16.msra.mxu0 0
    %4532 = vmatprep.subr.bf16.mxu0 0
    %4533 = vmatpush2.bf16.msra.mxu0 0
    %4534 = vmatprep.subr.bf16.mxu0 0
    %4535 = vmatpush2.bf16.msra.mxu0 0
    %4536 = vmatprep.subr.bf16.mxu0 0
    %4537 = vmatpush2.bf16.msra.mxu0 0
    %4538 = vmatprep.subr.bf16.mxu0 0
    %4539 = vmatpush2.bf16.msra.mxu0 0
    %4540 = vmatprep.subr.bf16.mxu0 0
    %4541 = vmatpush2.bf16.msra.mxu0 0
    %4542 = vmatprep.subr.bf16.mxu0 0
    %4543 = vmatpush2.bf16.msra.mxu0 0
    %4544 = vmatprep.subr.bf16.mxu0 0
    %4545 = vmatpush2.bf16.msra.mxu0 0
    %4546 = vmatprep.mubr.bf16.mxu0 0
    %4547 = vmatmul.mubr.bf16.gmra.mxu0 %v3815
    %v4548 = vpop.f32.mrf.mxu0
    %v4549 = vadd.f32 %v4509, %v4548
    %v4550 = vpop.f32.mrf.mxu0
    %v4551 = vpop.f32.mrf.mxu0
    %v4552 = vpop.f32.mrf.mxu0
    %4553 = vdwg.mxu0
    %v4650 = vunpack.c.l.b16 %v3816
    %v4651 = vunpack.c.h.b16 %v3816
    %v4652 = vunpack.c.l.b16 %v3817
    %v4653 = vunpack.c.l.b16 %v3818
    %v4654 = vunpack.c.h.b16 %v3818
    %v4655 = vunpack.c.l.b16 %v3819
    %v4656 = vunpack.c.l.b16 %v3820
    %v4657 = vunpack.c.h.b16 %v3820
    %v4658 = vunpack.c.l.b16 %v3821
    %v4659 = vunpack.c.l.b16 %v3822
    %v4660 = vunpack.c.h.b16 %v3822
    %v4661 = vunpack.c.l.b16 %v3823
    %v4662 = vunpack.c.l.b16 %v3824
    %v4663 = vunpack.c.h.b16 %v3824
    %v4664 = vunpack.c.l.b16 %v3825
    %v4665 = vunpack.c.l.b16 %v3826
    %v4666 = vunpack.c.h.b16 %v3826
    %v4667 = vunpack.c.l.b16 %v3827
    %v4668 = vunpack.c.l.b16 %v3828
    %v4669 = vunpack.c.h.b16 %v3828
    %v4670 = vunpack.c.l.b16 %v3829
    %v4671 = vunpack.c.l.b16 %v3830
    %v4672 = vunpack.c.h.b16 %v3830
    %v4673 = vunpack.c.l.b16 %v3831
    %v4674 = vunpack.c.l.b16 %v3832
    %v4675 = vunpack.c.h.b16 %v3832
    %v4676 = vunpack.c.l.b16 %v3833
    %v4677 = vunpack.c.l.b16 %v3834
    %v4678 = vunpack.c.h.b16 %v3834
    %v4679 = vunpack.c.l.b16 %v3835
    %v4680 = vunpack.c.l.b16 %v3836
    %v4681 = vunpack.c.h.b16 %v3836
    %v4682 = vunpack.c.l.b16 %v3837
    %v4683 = vunpack.c.l.b16 %v3838
    %v4684 = vunpack.c.h.b16 %v3838
    %v4685 = vunpack.c.l.b16 %v3839
    %v4686 = vunpack.c.l.b16 %v3840
    %v4687 = vunpack.c.h.b16 %v3840
    %v4688 = vunpack.c.l.b16 %v3841
    %v4689 = vunpack.c.l.b16 %v3842
    %v4690 = vunpack.c.h.b16 %v3842
    %v4691 = vunpack.c.l.b16 %v3843
    %v4692 = vunpack.c.l.b16 %v3844
    %v4693 = vunpack.c.h.b16 %v3844
    %v4694 = vunpack.c.l.b16 %v3845
    %v4695 = vunpack.c.l.b16 %v3846
    %v4696 = vunpack.c.h.b16 %v3846
    %v4697 = vunpack.c.l.b16 %v3847
    %v4698 = vunpack.c.l.b16 %v3848
    %v4699 = vunpack.c.h.b16 %v3848
    %v4700 = vunpack.c.l.b16 %v3849
    %v4701 = vunpack.c.l.b16 %v3850
    %v4702 = vunpack.c.h.b16 %v3850
    %v4703 = vunpack.c.l.b16 %v3851
    %v4704 = vunpack.c.l.b16 %v3852
    %v4705 = vunpack.c.h.b16 %v3852
    %v4706 = vunpack.c.l.b16 %v3853
    %v4707 = vunpack.c.l.b16 %v3854
    %v4708 = vunpack.c.h.b16 %v3854
    %v4709 = vunpack.c.l.b16 %v3855
    %v4710 = vunpack.c.l.b16 %v3856
    %v4711 = vunpack.c.h.b16 %v3856
    %v4712 = vunpack.c.l.b16 %v3857
    %v4713 = vunpack.c.l.b16 %v3858
    %v4714 = vunpack.c.h.b16 %v3858
    %v4715 = vunpack.c.l.b16 %v3859
    %v4716 = vunpack.c.l.b16 %v3860
    %v4717 = vunpack.c.h.b16 %v3860
    %v4718 = vunpack.c.l.b16 %v3861
    %v4719 = vunpack.c.l.b16 %v3862
    %v4720 = vunpack.c.h.b16 %v3862
    %v4721 = vunpack.c.l.b16 %v3863
    %v4722 = vunpack.c.l.b16 %v3864
    %v4723 = vunpack.c.h.b16 %v3864
    %v4724 = vunpack.c.l.b16 %v3865
    %v4725 = vunpack.c.l.b16 %v3866
    %v4726 = vunpack.c.h.b16 %v3866
    %v4727 = vunpack.c.l.b16 %v3867
    %v4728 = vunpack.c.l.b16 %v3868
    %v4729 = vunpack.c.h.b16 %v3868
    %v4730 = vunpack.c.l.b16 %v3869
    %v4731 = vunpack.c.l.b16 %v3870
    %v4732 = vunpack.c.h.b16 %v3870
    %v4733 = vunpack.c.l.b16 %v3871
    %v4734 = vunpack.c.l.b16 %v3872
    %v4735 = vunpack.c.h.b16 %v3872
    %v4736 = vunpack.c.l.b16 %v3873
    %v4737 = vunpack.c.l.b16 %v3874
    %v4738 = vunpack.c.h.b16 %v3874
    %v4739 = vunpack.c.l.b16 %v3875
    %v4740 = vunpack.c.l.b16 %v3876
    %v4741 = vunpack.c.h.b16 %v3876
    %v4742 = vunpack.c.l.b16 %v3877
    %v4743 = vunpack.c.l.b16 %v3878
    %v4744 = vunpack.c.h.b16 %v3878
    %v4745 = vunpack.c.l.b16 %v3879
    %v4746 = vunpack.c.l.b16 %v3880
    %v4747 = vunpack.c.h.b16 %v3880
    %v4748 = vunpack.c.l.b16 %v3881
    %v4749 = vunpack.c.l.b16 %v3882
    %v4750 = vunpack.c.h.b16 %v3882
    %v4751 = vunpack.c.l.b16 %v3883
    %v4752 = vunpack.c.l.b16 %v3884
    %v4753 = vunpack.c.h.b16 %v3884
    %v4754 = vunpack.c.l.b16 %v3885
    %v4755 = vunpack.c.l.b16 %v3886
    %v4756 = vunpack.c.h.b16 %v3886
    %v4757 = vunpack.c.l.b16 %v3887
    %v4758 = vunpack.c.l.b16 %v3888
    %v4759 = vunpack.c.h.b16 %v3888
    %v4760 = vunpack.c.l.b16 %v3889
    %v4761 = vunpack.c.l.b16 %v3890
    %v4762 = vunpack.c.h.b16 %v3890
    %v4763 = vunpack.c.l.b16 %v3891
    %v4764 = vunpack.c.l.b16 %v3892
    %v4765 = vunpack.c.h.b16 %v3892
    %v4766 = vunpack.c.l.b16 %v3893
    %v4767 = vunpack.c.l.b16 %v3894
    %v4768 = vunpack.c.h.b16 %v3894
    %v4769 = vunpack.c.l.b16 %v3895
    %v4770 = vunpack.c.l.b16 %v3896
    %v4771 = vunpack.c.h.b16 %v3896
    %v4772 = vunpack.c.l.b16 %v3897
    %v4773 = vunpack.c.l.b16 %v3898
    %v4774 = vunpack.c.h.b16 %v3898
    %v4775 = vunpack.c.l.b16 %v3899
    %v4776 = vunpack.c.l.b16 %v3900
    %v4777 = vunpack.c.h.b16 %v3900
    %v4778 = vunpack.c.l.b16 %v3901
    %v4779 = vunpack.c.l.b16 %v3902
    %v4780 = vunpack.c.h.b16 %v3902
    %v4781 = vunpack.c.l.b16 %v3903
    %v4782 = vunpack.c.l.b16 %v3904
    %v4783 = vunpack.c.h.b16 %v3904
    %v4784 = vunpack.c.l.b16 %v3905
    %v4785 = vunpack.c.l.b16 %v3906
    %v4786 = vunpack.c.h.b16 %v3906
    %v4787 = vunpack.c.l.b16 %v3907
    %v4788 = vunpack.c.l.b16 %v3908
    %v4789 = vunpack.c.h.b16 %v3908
    %v4790 = vunpack.c.l.b16 %v3909
    %v4791 = vunpack.c.l.b16 %v3910
    %v4792 = vunpack.c.h.b16 %v3910
    %v4793 = vunpack.c.l.b16 %v3911
    %v4794 = vpack.c.b16 %v4653, %v4650
    %v4795 = vpack.c.b16 %v4654, %v4651
    %v4796 = vpack.c.b16 %v4655, %v4652
    %v4797 = vpack.c.b16 %v4659, %v4656
    %v4798 = vpack.c.b16 %v4660, %v4657
    %v4799 = vpack.c.b16 %v4661, %v4658
    %v4800 = vpack.c.b16 %v4665, %v4662
    %v4801 = vpack.c.b16 %v4666, %v4663
    %v4802 = vpack.c.b16 %v4667, %v4664
    %v4803 = vpack.c.b16 %v4671, %v4668
    %v4804 = vpack.c.b16 %v4672, %v4669
    %v4805 = vpack.c.b16 %v4673, %v4670
    %v4806 = vpack.c.b16 %v4677, %v4674
    %v4807 = vpack.c.b16 %v4678, %v4675
    %v4808 = vpack.c.b16 %v4679, %v4676
    %v4809 = vpack.c.b16 %v4683, %v4680
    %v4810 = vpack.c.b16 %v4684, %v4681
    %v4811 = vpack.c.b16 %v4685, %v4682
    %v4812 = vpack.c.b16 %v4689, %v4686
    %v4813 = vpack.c.b16 %v4690, %v4687
    %v4814 = vpack.c.b16 %v4691, %v4688
    %v4815 = vpack.c.b16 %v4695, %v4692
    %v4816 = vpack.c.b16 %v4696, %v4693
    %v4817 = vpack.c.b16 %v4697, %v4694
    %v4818 = vpack.c.b16 %v4701, %v4698
    %v4819 = vpack.c.b16 %v4702, %v4699
    %v4820 = vpack.c.b16 %v4703, %v4700
    %v4821 = vpack.c.b16 %v4707, %v4704
    %v4822 = vpack.c.b16 %v4708, %v4705
    %v4823 = vpack.c.b16 %v4709, %v4706
    %v4824 = vpack.c.b16 %v4713, %v4710
    %v4825 = vpack.c.b16 %v4714, %v4711
    %v4826 = vpack.c.b16 %v4715, %v4712
    %v4827 = vpack.c.b16 %v4719, %v4716
    %v4828 = vpack.c.b16 %v4720, %v4717
    %v4829 = vpack.c.b16 %v4721, %v4718
    %v4830 = vpack.c.b16 %v4725, %v4722
    %v4831 = vpack.c.b16 %v4726, %v4723
    %v4832 = vpack.c.b16 %v4727, %v4724
    %v4833 = vpack.c.b16 %v4731, %v4728
    %v4834 = vpack.c.b16 %v4732, %v4729
    %v4835 = vpack.c.b16 %v4733, %v4730
    %v4836 = vpack.c.b16 %v4737, %v4734
    %v4837 = vpack.c.b16 %v4738, %v4735
    %v4838 = vpack.c.b16 %v4739, %v4736
    %v4839 = vpack.c.b16 %v4743, %v4740
    %v4840 = vpack.c.b16 %v4744, %v4741
    %v4841 = vpack.c.b16 %v4745, %v4742
    %v4842 = vpack.c.b16 %v4749, %v4746
    %v4843 = vpack.c.b16 %v4750, %v4747
    %v4844 = vpack.c.b16 %v4751, %v4748
    %v4845 = vpack.c.b16 %v4755, %v4752
    %v4846 = vpack.c.b16 %v4756, %v4753
    %v4847 = vpack.c.b16 %v4757, %v4754
    %v4848 = vpack.c.b16 %v4761, %v4758
    %v4849 = vpack.c.b16 %v4762, %v4759
    %v4850 = vpack.c.b16 %v4763, %v4760
    %v4851 = vpack.c.b16 %v4767, %v4764
    %v4852 = vpack.c.b16 %v4768, %v4765
    %v4853 = vpack.c.b16 %v4769, %v4766
    %v4854 = vpack.c.b16 %v4773, %v4770
    %v4855 = vpack.c.b16 %v4774, %v4771
    %v4856 = vpack.c.b16 %v4775, %v4772
    %v4857 = vpack.c.b16 %v4779, %v4776
    %v4858 = vpack.c.b16 %v4780, %v4777
    %v4859 = vpack.c.b16 %v4781, %v4778
    %v4860 = vpack.c.b16 %v4785, %v4782
    %v4861 = vpack.c.b16 %v4786, %v4783
    %v4862 = vpack.c.b16 %v4787, %v4784
    %v4863 = vpack.c.b16 %v4791, %v4788
    %v4864 = vpack.c.b16 %v4792, %v4789
    %v4865 = vpack.c.b16 %v4793, %v4790
    %4938 = vmatprep.subr.bf16.mxu0 %v4816
    %4939 = vmatpush1.bf16.msra.mxu0 %v4815
    %4940 = vmatprep.subr.bf16.mxu0 %v4813
    %4941 = vmatpush1.bf16.msra.mxu0 %v4812
    %4942 = vmatprep.subr.bf16.mxu0 %v4810
    %4943 = vmatpush1.bf16.msra.mxu0 %v4809
    %4944 = vmatprep.subr.bf16.mxu0 %v4807
    %4945 = vmatpush1.bf16.msra.mxu0 %v4806
    %4946 = vmatprep.subr.bf16.mxu0 %v4804
    %4947 = vmatpush1.bf16.msra.mxu0 %v4803
    %4948 = vmatprep.subr.bf16.mxu0 %v4801
    %4949 = vmatpush1.bf16.msra.mxu0 %v4800
    %4950 = vmatprep.subr.bf16.mxu0 %v4798
    %4951 = vmatpush1.bf16.msra.mxu0 %v4797
    %4952 = vmatprep.subr.bf16.mxu0 %v4795
    %4953 = vmatpush1.bf16.msra.mxu0 %v4794
    %4954 = vmatprep.subr.bf16.mxu0 %v4840
    %4955 = vmatpush2.bf16.msra.mxu0 %v4839
    %4956 = vmatprep.subr.bf16.mxu0 %v4837
    %4957 = vmatpush2.bf16.msra.mxu0 %v4836
    %4958 = vmatprep.subr.bf16.mxu0 %v4834
    %4959 = vmatpush2.bf16.msra.mxu0 %v4833
    %4960 = vmatprep.subr.bf16.mxu0 %v4831
    %4961 = vmatpush2.bf16.msra.mxu0 %v4830
    %4962 = vmatprep.subr.bf16.mxu0 %v4828
    %4963 = vmatpush2.bf16.msra.mxu0 %v4827
    %4964 = vmatprep.subr.bf16.mxu0 %v4825
    %4965 = vmatpush2.bf16.msra.mxu0 %v4824
    %4966 = vmatprep.subr.bf16.mxu0 %v4822
    %4967 = vmatpush2.bf16.msra.mxu0 %v4821
    %4968 = vmatprep.subr.bf16.mxu0 %v4819
    %4969 = vmatpush2.bf16.msra.mxu0 %v4818
    %4970 = vmatprep.mubr.bf16.mxu0 %v1031
    %4971 = vmatmul.mubr.bf16.gmra.mxu0 %v1030
    %v4972 = vpop.f32.mrf.mxu0
    %v4973 = vadd.f32 %v4468, %v4972
    %v4974 = vpop.f32.mrf.mxu0
    %v4975 = vadd.f32 %v4470, %v4974
    %v4976 = vpop.f32.mrf.mxu0
    %v4977 = vpop.f32.mrf.mxu0
    %4978 = vdwg.mxu0
    %4979 = vmatprep.subr.bf16.mxu0 %v4864
    %4980 = vmatpush1.bf16.msra.mxu0 %v4863
    %4981 = vmatprep.subr.bf16.mxu0 %v4861
    %4982 = vmatpush1.bf16.msra.mxu0 %v4860
    %4983 = vmatprep.subr.bf16.mxu0 %v4858
    %4984 = vmatpush1.bf16.msra.mxu0 %v4857
    %4985 = vmatprep.subr.bf16.mxu0 %v4855
    %4986 = vmatpush1.bf16.msra.mxu0 %v4854
    %4987 = vmatprep.subr.bf16.mxu0 %v4852
    %4988 = vmatpush1.bf16.msra.mxu0 %v4851
    %4989 = vmatprep.subr.bf16.mxu0 %v4849
    %4990 = vmatpush1.bf16.msra.mxu0 %v4848
    %4991 = vmatprep.subr.bf16.mxu0 %v4846
    %4992 = vmatpush1.bf16.msra.mxu0 %v4845
    %4993 = vmatprep.subr.bf16.mxu0 %v4843
    %4994 = vmatpush1.bf16.msra.mxu0 %v4842
    %4995 = vmatprep.subr.bf16.mxu0 0
    %4996 = vmatpush2.bf16.msra.mxu0 0
    %4997 = vmatprep.subr.bf16.mxu0 0
    %4998 = vmatpush2.bf16.msra.mxu0 0
    %4999 = vmatprep.subr.bf16.mxu0 0
    %5000 = vmatpush2.bf16.msra.mxu0 0
    %5001 = vmatprep.subr.bf16.mxu0 0
    %5002 = vmatpush2.bf16.msra.mxu0 0
    %5003 = vmatprep.subr.bf16.mxu0 0
    %5004 = vmatpush2.bf16.msra.mxu0 0
    %5005 = vmatprep.subr.bf16.mxu0 0
    %5006 = vmatpush2.bf16.msra.mxu0 0
    %5007 = vmatprep.subr.bf16.mxu0 0
    %5008 = vmatpush2.bf16.msra.mxu0 0
    %5009 = vmatprep.subr.bf16.mxu0 0
    %5010 = vmatpush2.bf16.msra.mxu0 0
    %5011 = vmatprep.mubr.bf16.mxu0 0
    %5012 = vmatmul.mubr.bf16.gmra.mxu0 %v1032
    %v5013 = vpop.f32.mrf.mxu0
    %v5014 = vadd.f32 %v4973, %v5013
    %v5015 = vpop.f32.mrf.mxu0
    %v5016 = vadd.f32 %v4975, %v5015
    %v5017 = vpop.f32.mrf.mxu0
    %v5018 = vpop.f32.mrf.mxu0
    %5019 = vdwg.mxu0
    %5020 = vmatprep.subr.bf16.mxu0 0
    %5021 = vmatpush1.bf16.msra.mxu0 %v4817
    %5022 = vmatprep.subr.bf16.mxu0 0
    %5023 = vmatpush1.bf16.msra.mxu0 %v4814
    %5024 = vmatprep.subr.bf16.mxu0 0
    %5025 = vmatpush1.bf16.msra.mxu0 %v4811
    %5026 = vmatprep.subr.bf16.mxu0 0
    %5027 = vmatpush1.bf16.msra.mxu0 %v4808
    %5028 = vmatprep.subr.bf16.mxu0 0
    %5029 = vmatpush1.bf16.msra.mxu0 %v4805
    %5030 = vmatprep.subr.bf16.mxu0 0
    %5031 = vmatpush1.bf16.msra.mxu0 %v4802
    %5032 = vmatprep.subr.bf16.mxu0 0
    %5033 = vmatpush1.bf16.msra.mxu0 %v4799
    %5034 = vmatprep.subr.bf16.mxu0 0
    %5035 = vmatpush1.bf16.msra.mxu0 %v4796
    %5036 = vmatprep.subr.bf16.mxu0 0
    %5037 = vmatpush2.bf16.msra.mxu0 %v4841
    %5038 = vmatprep.subr.bf16.mxu0 0
    %5039 = vmatpush2.bf16.msra.mxu0 %v4838
    %5040 = vmatprep.subr.bf16.mxu0 0
    %5041 = vmatpush2.bf16.msra.mxu0 %v4835
    %5042 = vmatprep.subr.bf16.mxu0 0
    %5043 = vmatpush2.bf16.msra.mxu0 %v4832
    %5044 = vmatprep.subr.bf16.mxu0 0
    %5045 = vmatpush2.bf16.msra.mxu0 %v4829
    %5046 = vmatprep.subr.bf16.mxu0 0
    %5047 = vmatpush2.bf16.msra.mxu0 %v4826
    %5048 = vmatprep.subr.bf16.mxu0 0
    %5049 = vmatpush2.bf16.msra.mxu0 %v4823
    %5050 = vmatprep.subr.bf16.mxu0 0
    %5051 = vmatpush2.bf16.msra.mxu0 %v4820
    %5052 = vmatprep.mubr.bf16.mxu0 %v1031
    %5053 = vmatmul.mubr.bf16.gmra.mxu0 %v1030
    %v5054 = vpop.f32.mrf.mxu0
    %v5055 = vadd.f32 %v4549, %v5054
    %v5056 = vpop.f32.mrf.mxu0
    %v5057 = vpop.f32.mrf.mxu0
    %v5058 = vpop.f32.mrf.mxu0
    %5059 = vdwg.mxu0
    %5060 = vmatprep.subr.bf16.mxu0 0
    %5061 = vmatpush1.bf16.msra.mxu0 %v4865
    %5062 = vmatprep.subr.bf16.mxu0 0
    %5063 = vmatpush1.bf16.msra.mxu0 %v4862
    %5064 = vmatprep.subr.bf16.mxu0 0
    %5065 = vmatpush1.bf16.msra.mxu0 %v4859
    %5066 = vmatprep.subr.bf16.mxu0 0
    %5067 = vmatpush1.bf16.msra.mxu0 %v4856
    %5068 = vmatprep.subr.bf16.mxu0 0
    %5069 = vmatpush1.bf16.msra.mxu0 %v4853
    %5070 = vmatprep.subr.bf16.mxu0 0
    %5071 = vmatpush1.bf16.msra.mxu0 %v4850
    %5072 = vmatprep.subr.bf16.mxu0 0
    %5073 = vmatpush1.bf16.msra.mxu0 %v4847
    %5074 = vmatprep.subr.bf16.mxu0 0
    %5075 = vmatpush1.bf16.msra.mxu0 %v4844
    %5076 = vmatprep.subr.bf16.mxu0 0
    %5077 = vmatpush2.bf16.msra.mxu0 0
    %5078 = vmatprep.subr.bf16.mxu0 0
    %5079 = vmatpush2.bf16.msra.mxu0 0
    %5080 = vmatprep.subr.bf16.mxu0 0
    %5081 = vmatpush2.bf16.msra.mxu0 0
    %5082 = vmatprep.subr.bf16.mxu0 0
    %5083 = vmatpush2.bf16.msra.mxu0 0
    %5084 = vmatprep.subr.bf16.mxu0 0
    %5085 = vmatpush2.bf16.msra.mxu0 0
    %5086 = vmatprep.subr.bf16.mxu0 0
    %5087 = vmatpush2.bf16.msra.mxu0 0
    %5088 = vmatprep.subr.bf16.mxu0 0
    %5089 = vmatpush2.bf16.msra.mxu0 0
    %5090 = vmatprep.subr.bf16.mxu0 0
    %5091 = vmatpush2.bf16.msra.mxu0 0
    %5092 = vmatprep.mubr.bf16.mxu0 0
    %5093 = vmatmul.mubr.bf16.gmra.mxu0 %v1032
    %v5094 = vpop.f32.mrf.mxu0
    %v5095 = vadd.f32 %v5055, %v5094
    %v5096 = vpop.f32.mrf.mxu0
    %v5097 = vpop.f32.mrf.mxu0
    %v5098 = vpop.f32.mrf.mxu0
    %5099 = vdwg.mxu0
    %v5100 = vld [vmem:[%s37] sm:$0x7]
    %v5102 = vlaneseq
    %v5103 = vshrl.u32 %v5102, 7
    %v5104 = vsub.s32 0, %v5103
    %v5105 = vrot.slane %v5100, %v5104
    %v5106 = vlaneseq
    %v5107 = vshrl.u32 %v5106, 7
    %v5108 = vsub.s32 1, %v5107
    %v5109 = vrot.slane %v5100, %v5108
    %v5110 = vlaneseq
    %v5111 = vshrl.u32 %v5110, 7
    %v5112 = vsub.s32 2, %v5111
    %v5113 = vrot.slane %v5100, %v5112
    %v5117 = vadd.f32 %v5014, %v5105
    %v5118 = vadd.f32 %v5016, %v5109
    %v5119 = vadd.f32 %v5095, %v5113
    %v5120 = vmax.f32 %v5117, 0.0
    %v5121 = vmax.f32 %v5118, 0.0
    %v5122 = vmax.f32 %v5119, 0.0
    %v5123 = vand.u32 2147483647, %v5117
    %v5124 = vand.u32 2147483647, %v5118
    %v5125 = vand.u32 2147483647, %v5119
    %v5126 = vsub.f32 0.0, %v5123
    %v5127 = vsub.f32 0.0, %v5124
    %v5128 = vsub.f32 0.0, %v5125
    %v5129 = vmul.f32 %v5126, 1.442695
    %v5130 = vpow.pop %v5129
    %v5131 = vmul.f32 %v5127, 1.442695
    %v5132 = vpow.pop %v5131
    %v5133 = vmul.f32 %v5128, 1.442695
    %v5134 = vpow.pop %v5133
    %v5135 = vadd.f32 %v5130, 1.0
    %v5136 = vlog2.pop %v5135
    %v5137 = vmul.f32 %v5136, 0.6931472
    %v5138 = vmul.f32 -0.5, %v5130
    %v5139 = vadd.f32 %v5138, 1.0
    %v5140 = vmul.f32 %v5139, %v5130
    %v5141 = vand.u32 2147483647, %v5130
    %vm5142 = vcmp.lt.f32.partialorder %v5141, 0.0004427343
    %v5143 = vsel %vm5142, %v5140, %v5137
    %v5144 = vadd.f32 %v5132, 1.0
    %v5145 = vlog2.pop %v5144
    %v5146 = vmul.f32 %v5145, 0.6931472
    %v5147 = vmul.f32 -0.5, %v5132
    %v5148 = vadd.f32 %v5147, 1.0
    %v5149 = vmul.f32 %v5148, %v5132
    %v5150 = vand.u32 2147483647, %v5132
    %vm5151 = vcmp.lt.f32.partialorder %v5150, 0.0004427343
    %v5152 = vsel %vm5151, %v5149, %v5146
    %v5153 = vadd.f32 %v5134, 1.0
    %v5154 = vlog2.pop %v5153
    %v5155 = vmul.f32 %v5154, 0.6931472
    %v5156 = vmul.f32 -0.5, %v5134
    %v5157 = vadd.f32 %v5156, 1.0
    %v5158 = vmul.f32 %v5157, %v5134
    %v5159 = vand.u32 2147483647, %v5134
    %vm5160 = vcmp.lt.f32.partialorder %v5159, 0.0004427343
    %v5161 = vsel %vm5160, %v5158, %v5155
    %v5162 = vadd.f32 %v5120, %v5143
    %v5163 = vadd.f32 %v5121, %v5152
    %v5164 = vadd.f32 %v5122, %v5161
    %v5165 = vpack.c.bf16 %v5162, %v5162
    %v5166 = vpack.c.bf16 %v5163, %v5163
    %v5167 = vpack.c.bf16 %v5164, %v5164
    %v5168 = vld [vmem:[#allocation20] sm:$0xff]
    %v5169 = vld [vmem:[#allocation20 + $0x8] sm:$0xf]
    %v5170 = vld [vmem:[#allocation20 + $0xc] sm:$0xff]
    %v5171 = vld [vmem:[#allocation20 + $0x14] sm:$0xf]
    %v5172 = vld [vmem:[#allocation20 + $0x18] sm:$0xff]
    %v5173 = vld [vmem:[#allocation20 + $0x20] sm:$0xf]
    %v5174 = vld [vmem:[#allocation20 + $0x24] sm:$0xff]
    %v5175 = vld [vmem:[#allocation20 + $0x2c] sm:$0xf]
    %v5176 = vld [vmem:[#allocation20 + $0x30] sm:$0xff]
    %v5177 = vld [vmem:[#allocation20 + $0x38] sm:$0xf]
    %v5178 = vld [vmem:[#allocation20 + $0x3c] sm:$0xff]
    %v5179 = vld [vmem:[#allocation20 + $0x44] sm:$0xf]
    %v5180 = vld [vmem:[#allocation20 + $0x48] sm:$0xff]
    %v5181 = vld [vmem:[#allocation20 + $0x50] sm:$0xf]
    %v5182 = vld [vmem:[#allocation20 + $0x54] sm:$0xff]
    %v5183 = vld [vmem:[#allocation20 + $0x5c] sm:$0xf]
    %v5184 = vld [vmem:[#allocation20 + $0x60] sm:$0xff]
    %v5185 = vld [vmem:[#allocation20 + $0x68] sm:$0xf]
    %v5186 = vld [vmem:[#allocation20 + $0x6c] sm:$0xff]
    %v5187 = vld [vmem:[#allocation20 + $0x74] sm:$0xf]
    %v5188 = vld [vmem:[#allocation20 + $0x78] sm:$0xff]
    %v5189 = vld [vmem:[#allocation20 + $0x80] sm:$0xf]
    %v5190 = vld [vmem:[#allocation20 + $0x84] sm:$0xff]
    %v5191 = vld [vmem:[#allocation20 + $0x8c] sm:$0xf]
    %v5192 = vld [vmem:[#allocation20 + $0x90] sm:$0xff]
    %v5193 = vld [vmem:[#allocation20 + $0x98] sm:$0xf]
    %v5194 = vld [vmem:[#allocation20 + $0x9c] sm:$0xff]
    %v5195 = vld [vmem:[#allocation20 + $0xa4] sm:$0xf]
    %v5196 = vld [vmem:[#allocation20 + $0xa8] sm:$0xff]
    %v5197 = vld [vmem:[#allocation20 + $0xb0] sm:$0xf]
    %v5198 = vld [vmem:[#allocation20 + $0xb4] sm:$0xff]
    %v5199 = vld [vmem:[#allocation20 + $0xbc] sm:$0xf]
    %v5200 = vld [vmem:[#allocation20 + $0xc0] sm:$0xff]
    %v5201 = vld [vmem:[#allocation20 + $0xc8] sm:$0xf]
    %v5202 = vld [vmem:[#allocation20 + $0xcc] sm:$0xff]
    %v5203 = vld [vmem:[#allocation20 + $0xd4] sm:$0xf]
    %v5204 = vld [vmem:[#allocation20 + $0xd8] sm:$0xff]
    %v5205 = vld [vmem:[#allocation20 + $0xe0] sm:$0xf]
    %v5206 = vld [vmem:[#allocation20 + $0xe4] sm:$0xff]
    %v5207 = vld [vmem:[#allocation20 + $0xec] sm:$0xf]
    %v5208 = vld [vmem:[#allocation20 + $0xf0] sm:$0xff]
    %v5209 = vld [vmem:[#allocation20 + $0xf8] sm:$0xf]
    %v5210 = vld [vmem:[#allocation20 + $0xfc] sm:$0xff]
    %v5211 = vld [vmem:[#allocation20 + $0x104] sm:$0xf]
    %v5212 = vld [vmem:[#allocation20 + $0x108] sm:$0xff]
    %v5213 = vld [vmem:[#allocation20 + $0x110] sm:$0xf]
    %v5214 = vld [vmem:[#allocation20 + $0x114] sm:$0xff]
    %v5215 = vld [vmem:[#allocation20 + $0x11c] sm:$0xf]
    %v5216 = vld [vmem:[#allocation20 + $0x120] sm:$0xff]
    %v5217 = vld [vmem:[#allocation20 + $0x128] sm:$0xf]
    %v5218 = vld [vmem:[#allocation20 + $0x12c] sm:$0xff]
    %v5219 = vld [vmem:[#allocation20 + $0x134] sm:$0xf]
    %v5220 = vld [vmem:[#allocation20 + $0x138] sm:$0xff]
    %v5221 = vld [vmem:[#allocation20 + $0x140] sm:$0xf]
    %v5222 = vld [vmem:[#allocation20 + $0x144] sm:$0xff]
    %v5223 = vld [vmem:[#allocation20 + $0x14c] sm:$0xf]
    %v5224 = vld [vmem:[#allocation20 + $0x150] sm:$0xff]
    %v5225 = vld [vmem:[#allocation20 + $0x158] sm:$0xf]
    %v5226 = vld [vmem:[#allocation20 + $0x15c] sm:$0xff]
    %v5227 = vld [vmem:[#allocation20 + $0x164] sm:$0xf]
    %v5228 = vld [vmem:[#allocation20 + $0x168] sm:$0xff]
    %v5229 = vld [vmem:[#allocation20 + $0x170] sm:$0xf]
    %v5230 = vld [vmem:[#allocation20 + $0x174] sm:$0xff]
    %v5231 = vld [vmem:[#allocation20 + $0x17c] sm:$0xf]
    %v5232 = vld [vmem:[#allocation20 + $0x180] sm:$0xff]
    %v5233 = vld [vmem:[#allocation20 + $0x188] sm:$0xf]
    %v5234 = vld [vmem:[#allocation20 + $0x18c] sm:$0xff]
    %v5235 = vld [vmem:[#allocation20 + $0x194] sm:$0xf]
    %v5236 = vld [vmem:[#allocation20 + $0x198] sm:$0xff]
    %v5237 = vld [vmem:[#allocation20 + $0x1a0] sm:$0xf]
    %v5238 = vld [vmem:[#allocation20 + $0x1a4] sm:$0xff]
    %v5239 = vld [vmem:[#allocation20 + $0x1ac] sm:$0xf]
    %v5240 = vld [vmem:[#allocation20 + $0x1b0] sm:$0xff]
    %v5241 = vld [vmem:[#allocation20 + $0x1b8] sm:$0xf]
    %v5242 = vld [vmem:[#allocation20 + $0x1bc] sm:$0xff]
    %v5243 = vld [vmem:[#allocation20 + $0x1c4] sm:$0xf]
    %v5244 = vld [vmem:[#allocation20 + $0x1c8] sm:$0xff]
    %v5245 = vld [vmem:[#allocation20 + $0x1d0] sm:$0xf]
    %v5246 = vld [vmem:[#allocation20 + $0x1d4] sm:$0xff]
    %v5247 = vld [vmem:[#allocation20 + $0x1dc] sm:$0xf]
    %v5248 = vld [vmem:[#allocation20 + $0x1e0] sm:$0xff]
    %v5249 = vld [vmem:[#allocation20 + $0x1e8] sm:$0xf]
    %v5250 = vld [vmem:[#allocation20 + $0x1ec] sm:$0xff]
    %v5251 = vld [vmem:[#allocation20 + $0x1f4] sm:$0xf]
    %v5252 = vld [vmem:[#allocation20 + $0x1f8] sm:$0xff]
    %v5253 = vld [vmem:[#allocation20 + $0x200] sm:$0xf]
    %v5254 = vld [vmem:[#allocation20 + $0x204] sm:$0xff]
    %v5255 = vld [vmem:[#allocation20 + $0x20c] sm:$0xf]
    %v5256 = vld [vmem:[#allocation20 + $0x210] sm:$0xff]
    %v5257 = vld [vmem:[#allocation20 + $0x218] sm:$0xf]
    %v5258 = vld [vmem:[#allocation20 + $0x21c] sm:$0xff]
    %v5259 = vld [vmem:[#allocation20 + $0x224] sm:$0xf]
    %v5260 = vld [vmem:[#allocation20 + $0x228] sm:$0xff]
    %v5261 = vld [vmem:[#allocation20 + $0x230] sm:$0xf]
    %v5262 = vld [vmem:[#allocation20 + $0x234] sm:$0xff]
    %v5263 = vld [vmem:[#allocation20 + $0x23c] sm:$0xf]
    %v5264 = vld [vmem:[%s41] sm:$0x7]
    %v5266 = vlaneseq
    %v5267 = vshrl.u32 %v5266, 7
    %v5268 = vsub.s32 0, %v5267
    %v5269 = vrot.slane %v5264, %v5268
    %v5270 = vlaneseq
    %v5271 = vshrl.u32 %v5270, 7
    %v5272 = vsub.s32 1, %v5271
    %v5273 = vrot.slane %v5264, %v5272
    %v5274 = vlaneseq
    %v5275 = vshrl.u32 %v5274, 7
    %v5276 = vsub.s32 2, %v5275
    %v5277 = vrot.slane %v5264, %v5276
    %v5377 = vunpack.c.l.b16 %v5168
    %v5378 = vunpack.c.h.b16 %v5168
    %v5379 = vunpack.c.l.b16 %v5169
    %v5380 = vunpack.c.l.b16 %v5170
    %v5381 = vunpack.c.h.b16 %v5170
    %v5382 = vunpack.c.l.b16 %v5171
    %v5383 = vunpack.c.l.b16 %v5172
    %v5384 = vunpack.c.h.b16 %v5172
    %v5385 = vunpack.c.l.b16 %v5173
    %v5386 = vunpack.c.l.b16 %v5174
    %v5387 = vunpack.c.h.b16 %v5174
    %v5388 = vunpack.c.l.b16 %v5175
    %v5389 = vunpack.c.l.b16 %v5176
    %v5390 = vunpack.c.h.b16 %v5176
    %v5391 = vunpack.c.l.b16 %v5177
    %v5392 = vunpack.c.l.b16 %v5178
    %v5393 = vunpack.c.h.b16 %v5178
    %v5394 = vunpack.c.l.b16 %v5179
    %v5395 = vunpack.c.l.b16 %v5180
    %v5396 = vunpack.c.h.b16 %v5180
    %v5397 = vunpack.c.l.b16 %v5181
    %v5398 = vunpack.c.l.b16 %v5182
    %v5399 = vunpack.c.h.b16 %v5182
    %v5400 = vunpack.c.l.b16 %v5183
    %v5401 = vunpack.c.l.b16 %v5184
    %v5402 = vunpack.c.h.b16 %v5184
    %v5403 = vunpack.c.l.b16 %v5185
    %v5404 = vunpack.c.l.b16 %v5186
    %v5405 = vunpack.c.h.b16 %v5186
    %v5406 = vunpack.c.l.b16 %v5187
    %v5407 = vunpack.c.l.b16 %v5188
    %v5408 = vunpack.c.h.b16 %v5188
    %v5409 = vunpack.c.l.b16 %v5189
    %v5410 = vunpack.c.l.b16 %v5190
    %v5411 = vunpack.c.h.b16 %v5190
    %v5412 = vunpack.c.l.b16 %v5191
    %v5413 = vunpack.c.l.b16 %v5192
    %v5414 = vunpack.c.h.b16 %v5192
    %v5415 = vunpack.c.l.b16 %v5193
    %v5416 = vunpack.c.l.b16 %v5194
    %v5417 = vunpack.c.h.b16 %v5194
    %v5418 = vunpack.c.l.b16 %v5195
    %v5419 = vunpack.c.l.b16 %v5196
    %v5420 = vunpack.c.h.b16 %v5196
    %v5421 = vunpack.c.l.b16 %v5197
    %v5422 = vunpack.c.l.b16 %v5198
    %v5423 = vunpack.c.h.b16 %v5198
    %v5424 = vunpack.c.l.b16 %v5199
    %v5425 = vunpack.c.l.b16 %v5200
    %v5426 = vunpack.c.h.b16 %v5200
    %v5427 = vunpack.c.l.b16 %v5201
    %v5428 = vunpack.c.l.b16 %v5202
    %v5429 = vunpack.c.h.b16 %v5202
    %v5430 = vunpack.c.l.b16 %v5203
    %v5431 = vunpack.c.l.b16 %v5204
    %v5432 = vunpack.c.h.b16 %v5204
    %v5433 = vunpack.c.l.b16 %v5205
    %v5434 = vunpack.c.l.b16 %v5206
    %v5435 = vunpack.c.h.b16 %v5206
    %v5436 = vunpack.c.l.b16 %v5207
    %v5437 = vunpack.c.l.b16 %v5208
    %v5438 = vunpack.c.h.b16 %v5208
    %v5439 = vunpack.c.l.b16 %v5209
    %v5440 = vunpack.c.l.b16 %v5210
    %v5441 = vunpack.c.h.b16 %v5210
    %v5442 = vunpack.c.l.b16 %v5211
    %v5443 = vunpack.c.l.b16 %v5212
    %v5444 = vunpack.c.h.b16 %v5212
    %v5445 = vunpack.c.l.b16 %v5213
    %v5446 = vunpack.c.l.b16 %v5214
    %v5447 = vunpack.c.h.b16 %v5214
    %v5448 = vunpack.c.l.b16 %v5215
    %v5449 = vunpack.c.l.b16 %v5216
    %v5450 = vunpack.c.h.b16 %v5216
    %v5451 = vunpack.c.l.b16 %v5217
    %v5452 = vunpack.c.l.b16 %v5218
    %v5453 = vunpack.c.h.b16 %v5218
    %v5454 = vunpack.c.l.b16 %v5219
    %v5455 = vunpack.c.l.b16 %v5220
    %v5456 = vunpack.c.h.b16 %v5220
    %v5457 = vunpack.c.l.b16 %v5221
    %v5458 = vunpack.c.l.b16 %v5222
    %v5459 = vunpack.c.h.b16 %v5222
    %v5460 = vunpack.c.l.b16 %v5223
    %v5461 = vunpack.c.l.b16 %v5224
    %v5462 = vunpack.c.h.b16 %v5224
    %v5463 = vunpack.c.l.b16 %v5225
    %v5464 = vunpack.c.l.b16 %v5226
    %v5465 = vunpack.c.h.b16 %v5226
    %v5466 = vunpack.c.l.b16 %v5227
    %v5467 = vunpack.c.l.b16 %v5228
    %v5468 = vunpack.c.h.b16 %v5228
    %v5469 = vunpack.c.l.b16 %v5229
    %v5470 = vunpack.c.l.b16 %v5230
    %v5471 = vunpack.c.h.b16 %v5230
    %v5472 = vunpack.c.l.b16 %v5231
    %v5473 = vunpack.c.l.b16 %v5232
    %v5474 = vunpack.c.h.b16 %v5232
    %v5475 = vunpack.c.l.b16 %v5233
    %v5476 = vunpack.c.l.b16 %v5234
    %v5477 = vunpack.c.h.b16 %v5234
    %v5478 = vunpack.c.l.b16 %v5235
    %v5479 = vunpack.c.l.b16 %v5236
    %v5480 = vunpack.c.h.b16 %v5236
    %v5481 = vunpack.c.l.b16 %v5237
    %v5482 = vunpack.c.l.b16 %v5238
    %v5483 = vunpack.c.h.b16 %v5238
    %v5484 = vunpack.c.l.b16 %v5239
    %v5485 = vunpack.c.l.b16 %v5240
    %v5486 = vunpack.c.h.b16 %v5240
    %v5487 = vunpack.c.l.b16 %v5241
    %v5488 = vunpack.c.l.b16 %v5242
    %v5489 = vunpack.c.h.b16 %v5242
    %v5490 = vunpack.c.l.b16 %v5243
    %v5491 = vunpack.c.l.b16 %v5244
    %v5492 = vunpack.c.h.b16 %v5244
    %v5493 = vunpack.c.l.b16 %v5245
    %v5494 = vunpack.c.l.b16 %v5246
    %v5495 = vunpack.c.h.b16 %v5246
    %v5496 = vunpack.c.l.b16 %v5247
    %v5497 = vunpack.c.l.b16 %v5248
    %v5498 = vunpack.c.h.b16 %v5248
    %v5499 = vunpack.c.l.b16 %v5249
    %v5500 = vunpack.c.l.b16 %v5250
    %v5501 = vunpack.c.h.b16 %v5250
    %v5502 = vunpack.c.l.b16 %v5251
    %v5503 = vunpack.c.l.b16 %v5252
    %v5504 = vunpack.c.h.b16 %v5252
    %v5505 = vunpack.c.l.b16 %v5253
    %v5506 = vunpack.c.l.b16 %v5254
    %v5507 = vunpack.c.h.b16 %v5254
    %v5508 = vunpack.c.l.b16 %v5255
    %v5509 = vunpack.c.l.b16 %v5256
    %v5510 = vunpack.c.h.b16 %v5256
    %v5511 = vunpack.c.l.b16 %v5257
    %v5512 = vunpack.c.l.b16 %v5258
    %v5513 = vunpack.c.h.b16 %v5258
    %v5514 = vunpack.c.l.b16 %v5259
    %v5515 = vunpack.c.l.b16 %v5260
    %v5516 = vunpack.c.h.b16 %v5260
    %v5517 = vunpack.c.l.b16 %v5261
    %v5518 = vunpack.c.l.b16 %v5262
    %v5519 = vunpack.c.h.b16 %v5262
    %v5520 = vunpack.c.l.b16 %v5263
    %v5521 = vpack.c.b16 %v5380, %v5377
    %v5522 = vpack.c.b16 %v5381, %v5378
    %v5523 = vpack.c.b16 %v5382, %v5379
    %v5524 = vpack.c.b16 %v5386, %v5383
    %v5525 = vpack.c.b16 %v5387, %v5384
    %v5526 = vpack.c.b16 %v5388, %v5385
    %v5527 = vpack.c.b16 %v5392, %v5389
    %v5528 = vpack.c.b16 %v5393, %v5390
    %v5529 = vpack.c.b16 %v5394, %v5391
    %v5530 = vpack.c.b16 %v5398, %v5395
    %v5531 = vpack.c.b16 %v5399, %v5396
    %v5532 = vpack.c.b16 %v5400, %v5397
    %v5533 = vpack.c.b16 %v5404, %v5401
    %v5534 = vpack.c.b16 %v5405, %v5402
    %v5535 = vpack.c.b16 %v5406, %v5403
    %v5536 = vpack.c.b16 %v5410, %v5407
    %v5537 = vpack.c.b16 %v5411, %v5408
    %v5538 = vpack.c.b16 %v5412, %v5409
    %v5539 = vpack.c.b16 %v5416, %v5413
    %v5540 = vpack.c.b16 %v5417, %v5414
    %v5541 = vpack.c.b16 %v5418, %v5415
    %v5542 = vpack.c.b16 %v5422, %v5419
    %v5543 = vpack.c.b16 %v5423, %v5420
    %v5544 = vpack.c.b16 %v5424, %v5421
    %v5545 = vpack.c.b16 %v5428, %v5425
    %v5546 = vpack.c.b16 %v5429, %v5426
    %v5547 = vpack.c.b16 %v5430, %v5427
    %v5548 = vpack.c.b16 %v5434, %v5431
    %v5549 = vpack.c.b16 %v5435, %v5432
    %v5550 = vpack.c.b16 %v5436, %v5433
    %v5551 = vpack.c.b16 %v5440, %v5437
    %v5552 = vpack.c.b16 %v5441, %v5438
    %v5553 = vpack.c.b16 %v5442, %v5439
    %v5554 = vpack.c.b16 %v5446, %v5443
    %v5555 = vpack.c.b16 %v5447, %v5444
    %v5556 = vpack.c.b16 %v5448, %v5445
    %v5557 = vpack.c.b16 %v5452, %v5449
    %v5558 = vpack.c.b16 %v5453, %v5450
    %v5559 = vpack.c.b16 %v5454, %v5451
    %v5560 = vpack.c.b16 %v5458, %v5455
    %v5561 = vpack.c.b16 %v5459, %v5456
    %v5562 = vpack.c.b16 %v5460, %v5457
    %v5563 = vpack.c.b16 %v5464, %v5461
    %v5564 = vpack.c.b16 %v5465, %v5462
    %v5565 = vpack.c.b16 %v5466, %v5463
    %v5566 = vpack.c.b16 %v5470, %v5467
    %v5567 = vpack.c.b16 %v5471, %v5468
    %v5568 = vpack.c.b16 %v5472, %v5469
    %v5569 = vpack.c.b16 %v5476, %v5473
    %v5570 = vpack.c.b16 %v5477, %v5474
    %v5571 = vpack.c.b16 %v5478, %v5475
    %v5572 = vpack.c.b16 %v5482, %v5479
    %v5573 = vpack.c.b16 %v5483, %v5480
    %v5574 = vpack.c.b16 %v5484, %v5481
    %v5575 = vpack.c.b16 %v5488, %v5485
    %v5576 = vpack.c.b16 %v5489, %v5486
    %v5577 = vpack.c.b16 %v5490, %v5487
    %v5578 = vpack.c.b16 %v5494, %v5491
    %v5579 = vpack.c.b16 %v5495, %v5492
    %v5580 = vpack.c.b16 %v5496, %v5493
    %v5581 = vpack.c.b16 %v5500, %v5497
    %v5582 = vpack.c.b16 %v5501, %v5498
    %v5583 = vpack.c.b16 %v5502, %v5499
    %v5584 = vpack.c.b16 %v5506, %v5503
    %v5585 = vpack.c.b16 %v5507, %v5504
    %v5586 = vpack.c.b16 %v5508, %v5505
    %v5587 = vpack.c.b16 %v5512, %v5509
    %v5588 = vpack.c.b16 %v5513, %v5510
    %v5589 = vpack.c.b16 %v5514, %v5511
    %v5590 = vpack.c.b16 %v5518, %v5515
    %v5591 = vpack.c.b16 %v5519, %v5516
    %v5592 = vpack.c.b16 %v5520, %v5517
    %5665 = vmatprep.subr.bf16.mxu0 %v5543
    %5666 = vmatpush1.bf16.msra.mxu0 %v5542
    %5667 = vmatprep.subr.bf16.mxu0 %v5540
    %5668 = vmatpush1.bf16.msra.mxu0 %v5539
    %5669 = vmatprep.subr.bf16.mxu0 %v5537
    %5670 = vmatpush1.bf16.msra.mxu0 %v5536
    %5671 = vmatprep.subr.bf16.mxu0 %v5534
    %5672 = vmatpush1.bf16.msra.mxu0 %v5533
    %5673 = vmatprep.subr.bf16.mxu0 %v5531
    %5674 = vmatpush1.bf16.msra.mxu0 %v5530
    %5675 = vmatprep.subr.bf16.mxu0 %v5528
    %5676 = vmatpush1.bf16.msra.mxu0 %v5527
    %5677 = vmatprep.subr.bf16.mxu0 %v5525
    %5678 = vmatpush1.bf16.msra.mxu0 %v5524
    %5679 = vmatprep.subr.bf16.mxu0 %v5522
    %5680 = vmatpush1.bf16.msra.mxu0 %v5521
    %5681 = vmatprep.subr.bf16.mxu0 %v5567
    %5682 = vmatpush2.bf16.msra.mxu0 %v5566
    %5683 = vmatprep.subr.bf16.mxu0 %v5564
    %5684 = vmatpush2.bf16.msra.mxu0 %v5563
    %5685 = vmatprep.subr.bf16.mxu0 %v5561
    %5686 = vmatpush2.bf16.msra.mxu0 %v5560
    %5687 = vmatprep.subr.bf16.mxu0 %v5558
    %5688 = vmatpush2.bf16.msra.mxu0 %v5557
    %5689 = vmatprep.subr.bf16.mxu0 %v5555
    %5690 = vmatpush2.bf16.msra.mxu0 %v5554
    %5691 = vmatprep.subr.bf16.mxu0 %v5552
    %5692 = vmatpush2.bf16.msra.mxu0 %v5551
    %5693 = vmatprep.subr.bf16.mxu0 %v5549
    %5694 = vmatpush2.bf16.msra.mxu0 %v5548
    %5695 = vmatprep.subr.bf16.mxu0 %v5546
    %5696 = vmatpush2.bf16.msra.mxu0 %v5545
    %5697 = vmatprep.mubr.bf16.mxu0 %v5166
    %5698 = vmatmul.mubr.bf16.gmra.mxu0 %v5165
    %v5699 = vpop.f32.mrf.mxu0
    %v5700 = vadd.f32 %v5269, %v5699
    %v5701 = vpop.f32.mrf.mxu0
    %v5702 = vadd.f32 %v5273, %v5701
    %v5703 = vpop.f32.mrf.mxu0
    %v5704 = vpop.f32.mrf.mxu0
    %5705 = vdwg.mxu0
    %5706 = vmatprep.subr.bf16.mxu0 %v5591
    %5707 = vmatpush1.bf16.msra.mxu0 %v5590
    %5708 = vmatprep.subr.bf16.mxu0 %v5588
    %5709 = vmatpush1.bf16.msra.mxu0 %v5587
    %5710 = vmatprep.subr.bf16.mxu0 %v5585
    %5711 = vmatpush1.bf16.msra.mxu0 %v5584
    %5712 = vmatprep.subr.bf16.mxu0 %v5582
    %5713 = vmatpush1.bf16.msra.mxu0 %v5581
    %5714 = vmatprep.subr.bf16.mxu0 %v5579
    %5715 = vmatpush1.bf16.msra.mxu0 %v5578
    %5716 = vmatprep.subr.bf16.mxu0 %v5576
    %5717 = vmatpush1.bf16.msra.mxu0 %v5575
    %5718 = vmatprep.subr.bf16.mxu0 %v5573
    %5719 = vmatpush1.bf16.msra.mxu0 %v5572
    %5720 = vmatprep.subr.bf16.mxu0 %v5570
    %5721 = vmatpush1.bf16.msra.mxu0 %v5569
    %5722 = vmatprep.subr.bf16.mxu0 0
    %5723 = vmatpush2.bf16.msra.mxu0 0
    %5724 = vmatprep.subr.bf16.mxu0 0
    %5725 = vmatpush2.bf16.msra.mxu0 0
    %5726 = vmatprep.subr.bf16.mxu0 0
    %5727 = vmatpush2.bf16.msra.mxu0 0
    %5728 = vmatprep.subr.bf16.mxu0 0
    %5729 = vmatpush2.bf16.msra.mxu0 0
    %5730 = vmatprep.subr.bf16.mxu0 0
    %5731 = vmatpush2.bf16.msra.mxu0 0
    %5732 = vmatprep.subr.bf16.mxu0 0
    %5733 = vmatpush2.bf16.msra.mxu0 0
    %5734 = vmatprep.subr.bf16.mxu0 0
    %5735 = vmatpush2.bf16.msra.mxu0 0
    %5736 = vmatprep.subr.bf16.mxu0 0
    %5737 = vmatpush2.bf16.msra.mxu0 0
    %5738 = vmatprep.mubr.bf16.mxu0 0
    %5739 = vmatmul.mubr.bf16.gmra.mxu0 %v5167
    %v5740 = vpop.f32.mrf.mxu0
    %v5741 = vadd.f32 %v5700, %v5740
    %v5742 = vpop.f32.mrf.mxu0
    %v5743 = vadd.f32 %v5702, %v5742
    %v5744 = vpop.f32.mrf.mxu0
    %v5745 = vpop.f32.mrf.mxu0
    %5746 = vdwg.mxu0
    %5747 = vmatprep.subr.bf16.mxu0 0
    %5748 = vmatpush1.bf16.msra.mxu0 %v5544
    %5749 = vmatprep.subr.bf16.mxu0 0
    %5750 = vmatpush1.bf16.msra.mxu0 %v5541
    %5751 = vmatprep.subr.bf16.mxu0 0
    %5752 = vmatpush1.bf16.msra.mxu0 %v5538
    %5753 = vmatprep.subr.bf16.mxu0 0
    %5754 = vmatpush1.bf16.msra.mxu0 %v5535
    %5755 = vmatprep.subr.bf16.mxu0 0
    %5756 = vmatpush1.bf16.msra.mxu0 %v5532
    %5757 = vmatprep.subr.bf16.mxu0 0
    %5758 = vmatpush1.bf16.msra.mxu0 %v5529
    %5759 = vmatprep.subr.bf16.mxu0 0
    %5760 = vmatpush1.bf16.msra.mxu0 %v5526
    %5761 = vmatprep.subr.bf16.mxu0 0
    %5762 = vmatpush1.bf16.msra.mxu0 %v5523
    %5763 = vmatprep.subr.bf16.mxu0 0
    %5764 = vmatpush2.bf16.msra.mxu0 %v5568
    %5765 = vmatprep.subr.bf16.mxu0 0
    %5766 = vmatpush2.bf16.msra.mxu0 %v5565
    %5767 = vmatprep.subr.bf16.mxu0 0
    %5768 = vmatpush2.bf16.msra.mxu0 %v5562
    %5769 = vmatprep.subr.bf16.mxu0 0
    %5770 = vmatpush2.bf16.msra.mxu0 %v5559
    %5771 = vmatprep.subr.bf16.mxu0 0
    %5772 = vmatpush2.bf16.msra.mxu0 %v5556
    %5773 = vmatprep.subr.bf16.mxu0 0
    %5774 = vmatpush2.bf16.msra.mxu0 %v5553
    %5775 = vmatprep.subr.bf16.mxu0 0
    %5776 = vmatpush2.bf16.msra.mxu0 %v5550
    %5777 = vmatprep.subr.bf16.mxu0 0
    %5778 = vmatpush2.bf16.msra.mxu0 %v5547
    %5779 = vmatprep.mubr.bf16.mxu0 %v5166
    %5780 = vmatmul.mubr.bf16.gmra.mxu0 %v5165
    %v5781 = vpop.f32.mrf.mxu0
    %v5782 = vadd.f32 %v5277, %v5781
    %v5783 = vpop.f32.mrf.mxu0
    %v5784 = vpop.f32.mrf.mxu0
    %v5785 = vpop.f32.mrf.mxu0
    %5786 = vdwg.mxu0
    %5787 = vmatprep.subr.bf16.mxu0 0
    %5788 = vmatpush1.bf16.msra.mxu0 %v5592
    %5789 = vmatprep.subr.bf16.mxu0 0
    %5790 = vmatpush1.bf16.msra.mxu0 %v5589
    %5791 = vmatprep.subr.bf16.mxu0 0
    %5792 = vmatpush1.bf16.msra.mxu0 %v5586
    %5793 = vmatprep.subr.bf16.mxu0 0
    %5794 = vmatpush1.bf16.msra.mxu0 %v5583
    %5795 = vmatprep.subr.bf16.mxu0 0
    %5796 = vmatpush1.bf16.msra.mxu0 %v5580
    %5797 = vmatprep.subr.bf16.mxu0 0
    %5798 = vmatpush1.bf16.msra.mxu0 %v5577
    %5799 = vmatprep.subr.bf16.mxu0 0
    %5800 = vmatpush1.bf16.msra.mxu0 %v5574
    %5801 = vmatprep.subr.bf16.mxu0 0
    %5802 = vmatpush1.bf16.msra.mxu0 %v5571
    %5803 = vmatprep.subr.bf16.mxu0 0
    %5804 = vmatpush2.bf16.msra.mxu0 0
    %5805 = vmatprep.subr.bf16.mxu0 0
    %5806 = vmatpush2.bf16.msra.mxu0 0
    %5807 = vmatprep.subr.bf16.mxu0 0
    %5808 = vmatpush2.bf16.msra.mxu0 0
    %5809 = vmatprep.subr.bf16.mxu0 0
    %5810 = vmatpush2.bf16.msra.mxu0 0
    %5811 = vmatprep.subr.bf16.mxu0 0
    %5812 = vmatpush2.bf16.msra.mxu0 0
    %5813 = vmatprep.subr.bf16.mxu0 0
    %5814 = vmatpush2.bf16.msra.mxu0 0
    %5815 = vmatprep.subr.bf16.mxu0 0
    %5816 = vmatpush2.bf16.msra.mxu0 0
    %5817 = vmatprep.subr.bf16.mxu0 0
    %5818 = vmatpush2.bf16.msra.mxu0 0
    %5819 = vmatprep.mubr.bf16.mxu0 0
    %5820 = vmatmul.mubr.bf16.gmra.mxu0 %v5167
    %v5821 = vpop.f32.mrf.mxu0
    %v5822 = vadd.f32 %v5782, %v5821
    %v5823 = vpop.f32.mrf.mxu0
    %v5824 = vpop.f32.mrf.mxu0
    %v5825 = vpop.f32.mrf.mxu0
    %5826 = vdwg.mxu0
    %v5827 = vmax.f32 %v5741, 0.0
    %v5828 = vmax.f32 %v5743, 0.0
    %v5829 = vmax.f32 %v5822, 0.0
    %v5830 = vand.u32 2147483647, %v5741
    %v5831 = vand.u32 2147483647, %v5743
    %v5832 = vand.u32 2147483647, %v5822
    %v5833 = vsub.f32 0.0, %v5830
    %v5834 = vsub.f32 0.0, %v5831
    %v5835 = vsub.f32 0.0, %v5832
    %v5836 = vmul.f32 %v5833, 1.442695
    %v5837 = vpow.pop %v5836
    %v5838 = vmul.f32 %v5834, 1.442695
    %v5839 = vpow.pop %v5838
    %v5840 = vmul.f32 %v5835, 1.442695
    %v5841 = vpow.pop %v5840
    %v5842 = vadd.f32 %v5837, 1.0
    %v5843 = vlog2.pop %v5842
    %v5844 = vmul.f32 %v5843, 0.6931472
    %v5845 = vmul.f32 -0.5, %v5837
    %v5846 = vadd.f32 %v5845, 1.0
    %v5847 = vmul.f32 %v5846, %v5837
    %v5848 = vand.u32 2147483647, %v5837
    %vm5849 = vcmp.lt.f32.partialorder %v5848, 0.0004427343
    %v5850 = vsel %vm5849, %v5847, %v5844
    %v5851 = vadd.f32 %v5839, 1.0
    %v5852 = vlog2.pop %v5851
    %v5853 = vmul.f32 %v5852, 0.6931472
    %v5854 = vmul.f32 -0.5, %v5839
    %v5855 = vadd.f32 %v5854, 1.0
    %v5856 = vmul.f32 %v5855, %v5839
    %v5857 = vand.u32 2147483647, %v5839
    %vm5858 = vcmp.lt.f32.partialorder %v5857, 0.0004427343
    %v5859 = vsel %vm5858, %v5856, %v5853
    %v5860 = vadd.f32 %v5841, 1.0
    %v5861 = vlog2.pop %v5860
    %v5862 = vmul.f32 %v5861, 0.6931472
    %v5863 = vmul.f32 -0.5, %v5841
    %v5864 = vadd.f32 %v5863, 1.0
    %v5865 = vmul.f32 %v5864, %v5841
    %v5866 = vand.u32 2147483647, %v5841
    %vm5867 = vcmp.lt.f32.partialorder %v5866, 0.0004427343
    %v5868 = vsel %vm5867, %v5865, %v5862
    %v5869 = vadd.f32 %v5827, %v5850
    %v5870 = vadd.f32 %v5828, %v5859
    %v5871 = vadd.f32 %v5829, %v5868
    %v5872 = vpack.c.bf16 %v5869, %v5869
    %v5873 = vpack.c.bf16 %v5870, %v5870
    %v5874 = vpack.c.bf16 %v5871, %v5871
    %v5875 = vld [vmem:[#allocation22] sm:$0xff]
    %v5876 = vld [vmem:[#allocation22 + $0x8] sm:$0xf]
    %v5877 = vld [vmem:[#allocation22 + $0xc] sm:$0xff]
    %v5878 = vld [vmem:[#allocation22 + $0x14] sm:$0xf]
    %v5879 = vld [vmem:[#allocation22 + $0x18] sm:$0xff]
    %v5880 = vld [vmem:[#allocation22 + $0x20] sm:$0xf]
    %v5881 = vld [vmem:[#allocation22 + $0x24] sm:$0xff]
    %v5882 = vld [vmem:[#allocation22 + $0x2c] sm:$0xf]
    %v5883 = vld [vmem:[#allocation22 + $0x30] sm:$0xff]
    %v5884 = vld [vmem:[#allocation22 + $0x38] sm:$0xf]
    %v5885 = vld [vmem:[#allocation22 + $0x3c] sm:$0xff]
    %v5886 = vld [vmem:[#allocation22 + $0x44] sm:$0xf]
    %v5887 = vld [vmem:[#allocation22 + $0x48] sm:$0xff]
    %v5888 = vld [vmem:[#allocation22 + $0x50] sm:$0xf]
    %v5889 = vld [vmem:[#allocation22 + $0x54] sm:$0xff]
    %v5890 = vld [vmem:[#allocation22 + $0x5c] sm:$0xf]
    %v5891 = vld [vmem:[#allocation22 + $0x60] sm:$0xff]
    %v5892 = vld [vmem:[#allocation22 + $0x68] sm:$0xf]
    %v5893 = vld [vmem:[#allocation22 + $0x6c] sm:$0xff]
    %v5894 = vld [vmem:[#allocation22 + $0x74] sm:$0xf]
    %v5895 = vld [vmem:[#allocation22 + $0x78] sm:$0xff]
    %v5896 = vld [vmem:[#allocation22 + $0x80] sm:$0xf]
    %v5897 = vld [vmem:[#allocation22 + $0x84] sm:$0xff]
    %v5898 = vld [vmem:[#allocation22 + $0x8c] sm:$0xf]
    %v5899 = vld [vmem:[#allocation22 + $0x90] sm:$0xff]
    %v5900 = vld [vmem:[#allocation22 + $0x98] sm:$0xf]
    %v5901 = vld [vmem:[#allocation22 + $0x9c] sm:$0xff]
    %v5902 = vld [vmem:[#allocation22 + $0xa4] sm:$0xf]
    %v5903 = vld [vmem:[#allocation22 + $0xa8] sm:$0xff]
    %v5904 = vld [vmem:[#allocation22 + $0xb0] sm:$0xf]
    %v5905 = vld [vmem:[#allocation22 + $0xb4] sm:$0xff]
    %v5906 = vld [vmem:[#allocation22 + $0xbc] sm:$0xf]
    %v5907 = vld [vmem:[#allocation22 + $0xc0] sm:$0xff]
    %v5908 = vld [vmem:[#allocation22 + $0xc8] sm:$0xf]
    %v5909 = vld [vmem:[#allocation22 + $0xcc] sm:$0xff]
    %v5910 = vld [vmem:[#allocation22 + $0xd4] sm:$0xf]
    %v5911 = vld [vmem:[#allocation22 + $0xd8] sm:$0xff]
    %v5912 = vld [vmem:[#allocation22 + $0xe0] sm:$0xf]
    %v5913 = vld [vmem:[#allocation22 + $0xe4] sm:$0xff]
    %v5914 = vld [vmem:[#allocation22 + $0xec] sm:$0xf]
    %v5915 = vld [vmem:[#allocation22 + $0xf0] sm:$0xff]
    %v5916 = vld [vmem:[#allocation22 + $0xf8] sm:$0xf]
    %v5917 = vld [vmem:[#allocation22 + $0xfc] sm:$0xff]
    %v5918 = vld [vmem:[#allocation22 + $0x104] sm:$0xf]
    %v5919 = vld [vmem:[#allocation22 + $0x108] sm:$0xff]
    %v5920 = vld [vmem:[#allocation22 + $0x110] sm:$0xf]
    %v5921 = vld [vmem:[#allocation22 + $0x114] sm:$0xff]
    %v5922 = vld [vmem:[#allocation22 + $0x11c] sm:$0xf]
    %v5923 = vld [vmem:[#allocation22 + $0x120] sm:$0xff]
    %v5924 = vld [vmem:[#allocation22 + $0x128] sm:$0xf]
    %v5925 = vld [vmem:[#allocation22 + $0x12c] sm:$0xff]
    %v5926 = vld [vmem:[#allocation22 + $0x134] sm:$0xf]
    %v5927 = vld [vmem:[#allocation22 + $0x138] sm:$0xff]
    %v5928 = vld [vmem:[#allocation22 + $0x140] sm:$0xf]
    %v5929 = vld [vmem:[#allocation22 + $0x144] sm:$0xff]
    %v5930 = vld [vmem:[#allocation22 + $0x14c] sm:$0xf]
    %v5931 = vld [vmem:[#allocation22 + $0x150] sm:$0xff]
    %v5932 = vld [vmem:[#allocation22 + $0x158] sm:$0xf]
    %v5933 = vld [vmem:[#allocation22 + $0x15c] sm:$0xff]
    %v5934 = vld [vmem:[#allocation22 + $0x164] sm:$0xf]
    %v5935 = vld [vmem:[#allocation22 + $0x168] sm:$0xff]
    %v5936 = vld [vmem:[#allocation22 + $0x170] sm:$0xf]
    %v5937 = vld [vmem:[#allocation22 + $0x174] sm:$0xff]
    %v5938 = vld [vmem:[#allocation22 + $0x17c] sm:$0xf]
    %v5939 = vld [vmem:[#allocation22 + $0x180] sm:$0xff]
    %v5940 = vld [vmem:[#allocation22 + $0x188] sm:$0xf]
    %v5941 = vld [vmem:[#allocation22 + $0x18c] sm:$0xff]
    %v5942 = vld [vmem:[#allocation22 + $0x194] sm:$0xf]
    %v5943 = vld [vmem:[#allocation22 + $0x198] sm:$0xff]
    %v5944 = vld [vmem:[#allocation22 + $0x1a0] sm:$0xf]
    %v5945 = vld [vmem:[#allocation22 + $0x1a4] sm:$0xff]
    %v5946 = vld [vmem:[#allocation22 + $0x1ac] sm:$0xf]
    %v5947 = vld [vmem:[#allocation22 + $0x1b0] sm:$0xff]
    %v5948 = vld [vmem:[#allocation22 + $0x1b8] sm:$0xf]
    %v5949 = vld [vmem:[#allocation22 + $0x1bc] sm:$0xff]
    %v5950 = vld [vmem:[#allocation22 + $0x1c4] sm:$0xf]
    %v5951 = vld [vmem:[#allocation22 + $0x1c8] sm:$0xff]
    %v5952 = vld [vmem:[#allocation22 + $0x1d0] sm:$0xf]
    %v5953 = vld [vmem:[#allocation22 + $0x1d4] sm:$0xff]
    %v5954 = vld [vmem:[#allocation22 + $0x1dc] sm:$0xf]
    %v5955 = vld [vmem:[#allocation22 + $0x1e0] sm:$0xff]
    %v5956 = vld [vmem:[#allocation22 + $0x1e8] sm:$0xf]
    %v5957 = vld [vmem:[#allocation22 + $0x1ec] sm:$0xff]
    %v5958 = vld [vmem:[#allocation22 + $0x1f4] sm:$0xf]
    %v5959 = vld [vmem:[#allocation22 + $0x1f8] sm:$0xff]
    %v5960 = vld [vmem:[#allocation22 + $0x200] sm:$0xf]
    %v5961 = vld [vmem:[#allocation22 + $0x204] sm:$0xff]
    %v5962 = vld [vmem:[#allocation22 + $0x20c] sm:$0xf]
    %v5963 = vld [vmem:[#allocation22 + $0x210] sm:$0xff]
    %v5964 = vld [vmem:[#allocation22 + $0x218] sm:$0xf]
    %v5965 = vld [vmem:[#allocation22 + $0x21c] sm:$0xff]
    %v5966 = vld [vmem:[#allocation22 + $0x224] sm:$0xf]
    %v5967 = vld [vmem:[#allocation22 + $0x228] sm:$0xff]
    %v5968 = vld [vmem:[#allocation22 + $0x230] sm:$0xf]
    %v5969 = vld [vmem:[#allocation22 + $0x234] sm:$0xff]
    %v5970 = vld [vmem:[#allocation22 + $0x23c] sm:$0xf]
    %v5971 = vld [vmem:[%s45] sm:$0x7]
    %v5973 = vlaneseq
    %v5974 = vshrl.u32 %v5973, 7
    %v5975 = vsub.s32 0, %v5974
    %v5976 = vrot.slane %v5971, %v5975
    %v5977 = vlaneseq
    %v5978 = vshrl.u32 %v5977, 7
    %v5979 = vsub.s32 1, %v5978
    %v5980 = vrot.slane %v5971, %v5979
    %v5981 = vlaneseq
    %v5982 = vshrl.u32 %v5981, 7
    %v5983 = vsub.s32 2, %v5982
    %v5984 = vrot.slane %v5971, %v5983
    %v6084 = vunpack.c.l.b16 %v5875
    %v6085 = vunpack.c.h.b16 %v5875
    %v6086 = vunpack.c.l.b16 %v5876
    %v6087 = vunpack.c.l.b16 %v5877
    %v6088 = vunpack.c.h.b16 %v5877
    %v6089 = vunpack.c.l.b16 %v5878
    %v6090 = vunpack.c.l.b16 %v5879
    %v6091 = vunpack.c.h.b16 %v5879
    %v6092 = vunpack.c.l.b16 %v5880
    %v6093 = vunpack.c.l.b16 %v5881
    %v6094 = vunpack.c.h.b16 %v5881
    %v6095 = vunpack.c.l.b16 %v5882
    %v6096 = vunpack.c.l.b16 %v5883
    %v6097 = vunpack.c.h.b16 %v5883
    %v6098 = vunpack.c.l.b16 %v5884
    %v6099 = vunpack.c.l.b16 %v5885
    %v6100 = vunpack.c.h.b16 %v5885
    %v6101 = vunpack.c.l.b16 %v5886
    %v6102 = vunpack.c.l.b16 %v5887
    %v6103 = vunpack.c.h.b16 %v5887
    %v6104 = vunpack.c.l.b16 %v5888
    %v6105 = vunpack.c.l.b16 %v5889
    %v6106 = vunpack.c.h.b16 %v5889
    %v6107 = vunpack.c.l.b16 %v5890
    %v6108 = vunpack.c.l.b16 %v5891
    %v6109 = vunpack.c.h.b16 %v5891
    %v6110 = vunpack.c.l.b16 %v5892
    %v6111 = vunpack.c.l.b16 %v5893
    %v6112 = vunpack.c.h.b16 %v5893
    %v6113 = vunpack.c.l.b16 %v5894
    %v6114 = vunpack.c.l.b16 %v5895
    %v6115 = vunpack.c.h.b16 %v5895
    %v6116 = vunpack.c.l.b16 %v5896
    %v6117 = vunpack.c.l.b16 %v5897
    %v6118 = vunpack.c.h.b16 %v5897
    %v6119 = vunpack.c.l.b16 %v5898
    %v6120 = vunpack.c.l.b16 %v5899
    %v6121 = vunpack.c.h.b16 %v5899
    %v6122 = vunpack.c.l.b16 %v5900
    %v6123 = vunpack.c.l.b16 %v5901
    %v6124 = vunpack.c.h.b16 %v5901
    %v6125 = vunpack.c.l.b16 %v5902
    %v6126 = vunpack.c.l.b16 %v5903
    %v6127 = vunpack.c.h.b16 %v5903
    %v6128 = vunpack.c.l.b16 %v5904
    %v6129 = vunpack.c.l.b16 %v5905
    %v6130 = vunpack.c.h.b16 %v5905
    %v6131 = vunpack.c.l.b16 %v5906
    %v6132 = vunpack.c.l.b16 %v5907
    %v6133 = vunpack.c.h.b16 %v5907
    %v6134 = vunpack.c.l.b16 %v5908
    %v6135 = vunpack.c.l.b16 %v5909
    %v6136 = vunpack.c.h.b16 %v5909
    %v6137 = vunpack.c.l.b16 %v5910
    %v6138 = vunpack.c.l.b16 %v5911
    %v6139 = vunpack.c.h.b16 %v5911
    %v6140 = vunpack.c.l.b16 %v5912
    %v6141 = vunpack.c.l.b16 %v5913
    %v6142 = vunpack.c.h.b16 %v5913
    %v6143 = vunpack.c.l.b16 %v5914
    %v6144 = vunpack.c.l.b16 %v5915
    %v6145 = vunpack.c.h.b16 %v5915
    %v6146 = vunpack.c.l.b16 %v5916
    %v6147 = vunpack.c.l.b16 %v5917
    %v6148 = vunpack.c.h.b16 %v5917
    %v6149 = vunpack.c.l.b16 %v5918
    %v6150 = vunpack.c.l.b16 %v5919
    %v6151 = vunpack.c.h.b16 %v5919
    %v6152 = vunpack.c.l.b16 %v5920
    %v6153 = vunpack.c.l.b16 %v5921
    %v6154 = vunpack.c.h.b16 %v5921
    %v6155 = vunpack.c.l.b16 %v5922
    %v6156 = vunpack.c.l.b16 %v5923
    %v6157 = vunpack.c.h.b16 %v5923
    %v6158 = vunpack.c.l.b16 %v5924
    %v6159 = vunpack.c.l.b16 %v5925
    %v6160 = vunpack.c.h.b16 %v5925
    %v6161 = vunpack.c.l.b16 %v5926
    %v6162 = vunpack.c.l.b16 %v5927
    %v6163 = vunpack.c.h.b16 %v5927
    %v6164 = vunpack.c.l.b16 %v5928
    %v6165 = vunpack.c.l.b16 %v5929
    %v6166 = vunpack.c.h.b16 %v5929
    %v6167 = vunpack.c.l.b16 %v5930
    %v6168 = vunpack.c.l.b16 %v5931
    %v6169 = vunpack.c.h.b16 %v5931
    %v6170 = vunpack.c.l.b16 %v5932
    %v6171 = vunpack.c.l.b16 %v5933
    %v6172 = vunpack.c.h.b16 %v5933
    %v6173 = vunpack.c.l.b16 %v5934
    %v6174 = vunpack.c.l.b16 %v5935
    %v6175 = vunpack.c.h.b16 %v5935
    %v6176 = vunpack.c.l.b16 %v5936
    %v6177 = vunpack.c.l.b16 %v5937
    %v6178 = vunpack.c.h.b16 %v5937
    %v6179 = vunpack.c.l.b16 %v5938
    %v6180 = vunpack.c.l.b16 %v5939
    %v6181 = vunpack.c.h.b16 %v5939
    %v6182 = vunpack.c.l.b16 %v5940
    %v6183 = vunpack.c.l.b16 %v5941
    %v6184 = vunpack.c.h.b16 %v5941
    %v6185 = vunpack.c.l.b16 %v5942
    %v6186 = vunpack.c.l.b16 %v5943
    %v6187 = vunpack.c.h.b16 %v5943
    %v6188 = vunpack.c.l.b16 %v5944
    %v6189 = vunpack.c.l.b16 %v5945
    %v6190 = vunpack.c.h.b16 %v5945
    %v6191 = vunpack.c.l.b16 %v5946
    %v6192 = vunpack.c.l.b16 %v5947
    %v6193 = vunpack.c.h.b16 %v5947
    %v6194 = vunpack.c.l.b16 %v5948
    %v6195 = vunpack.c.l.b16 %v5949
    %v6196 = vunpack.c.h.b16 %v5949
    %v6197 = vunpack.c.l.b16 %v5950
    %v6198 = vunpack.c.l.b16 %v5951
    %v6199 = vunpack.c.h.b16 %v5951
    %v6200 = vunpack.c.l.b16 %v5952
    %v6201 = vunpack.c.l.b16 %v5953
    %v6202 = vunpack.c.h.b16 %v5953
    %v6203 = vunpack.c.l.b16 %v5954
    %v6204 = vunpack.c.l.b16 %v5955
    %v6205 = vunpack.c.h.b16 %v5955
    %v6206 = vunpack.c.l.b16 %v5956
    %v6207 = vunpack.c.l.b16 %v5957
    %v6208 = vunpack.c.h.b16 %v5957
    %v6209 = vunpack.c.l.b16 %v5958
    %v6210 = vunpack.c.l.b16 %v5959
    %v6211 = vunpack.c.h.b16 %v5959
    %v6212 = vunpack.c.l.b16 %v5960
    %v6213 = vunpack.c.l.b16 %v5961
    %v6214 = vunpack.c.h.b16 %v5961
    %v6215 = vunpack.c.l.b16 %v5962
    %v6216 = vunpack.c.l.b16 %v5963
    %v6217 = vunpack.c.h.b16 %v5963
    %v6218 = vunpack.c.l.b16 %v5964
    %v6219 = vunpack.c.l.b16 %v5965
    %v6220 = vunpack.c.h.b16 %v5965
    %v6221 = vunpack.c.l.b16 %v5966
    %v6222 = vunpack.c.l.b16 %v5967
    %v6223 = vunpack.c.h.b16 %v5967
    %v6224 = vunpack.c.l.b16 %v5968
    %v6225 = vunpack.c.l.b16 %v5969
    %v6226 = vunpack.c.h.b16 %v5969
    %v6227 = vunpack.c.l.b16 %v5970
    %v6228 = vpack.c.b16 %v6087, %v6084
    %v6229 = vpack.c.b16 %v6088, %v6085
    %v6230 = vpack.c.b16 %v6089, %v6086
    %v6231 = vpack.c.b16 %v6093, %v6090
    %v6232 = vpack.c.b16 %v6094, %v6091
    %v6233 = vpack.c.b16 %v6095, %v6092
    %v6234 = vpack.c.b16 %v6099, %v6096
    %v6235 = vpack.c.b16 %v6100, %v6097
    %v6236 = vpack.c.b16 %v6101, %v6098
    %v6237 = vpack.c.b16 %v6105, %v6102
    %v6238 = vpack.c.b16 %v6106, %v6103
    %v6239 = vpack.c.b16 %v6107, %v6104
    %v6240 = vpack.c.b16 %v6111, %v6108
    %v6241 = vpack.c.b16 %v6112, %v6109
    %v6242 = vpack.c.b16 %v6113, %v6110
    %v6243 = vpack.c.b16 %v6117, %v6114
    %v6244 = vpack.c.b16 %v6118, %v6115
    %v6245 = vpack.c.b16 %v6119, %v6116
    %v6246 = vpack.c.b16 %v6123, %v6120
    %v6247 = vpack.c.b16 %v6124, %v6121
    %v6248 = vpack.c.b16 %v6125, %v6122
    %v6249 = vpack.c.b16 %v6129, %v6126
    %v6250 = vpack.c.b16 %v6130, %v6127
    %v6251 = vpack.c.b16 %v6131, %v6128
    %v6252 = vpack.c.b16 %v6135, %v6132
    %v6253 = vpack.c.b16 %v6136, %v6133
    %v6254 = vpack.c.b16 %v6137, %v6134
    %v6255 = vpack.c.b16 %v6141, %v6138
    %v6256 = vpack.c.b16 %v6142, %v6139
    %v6257 = vpack.c.b16 %v6143, %v6140
    %v6258 = vpack.c.b16 %v6147, %v6144
    %v6259 = vpack.c.b16 %v6148, %v6145
    %v6260 = vpack.c.b16 %v6149, %v6146
    %v6261 = vpack.c.b16 %v6153, %v6150
    %v6262 = vpack.c.b16 %v6154, %v6151
    %v6263 = vpack.c.b16 %v6155, %v6152
    %v6264 = vpack.c.b16 %v6159, %v6156
    %v6265 = vpack.c.b16 %v6160, %v6157
    %v6266 = vpack.c.b16 %v6161, %v6158
    %v6267 = vpack.c.b16 %v6165, %v6162
    %v6268 = vpack.c.b16 %v6166, %v6163
    %v6269 = vpack.c.b16 %v6167, %v6164
    %v6270 = vpack.c.b16 %v6171, %v6168
    %v6271 = vpack.c.b16 %v6172, %v6169
    %v6272 = vpack.c.b16 %v6173, %v6170
    %v6273 = vpack.c.b16 %v6177, %v6174
    %v6274 = vpack.c.b16 %v6178, %v6175
    %v6275 = vpack.c.b16 %v6179, %v6176
    %v6276 = vpack.c.b16 %v6183, %v6180
    %v6277 = vpack.c.b16 %v6184, %v6181
    %v6278 = vpack.c.b16 %v6185, %v6182
    %v6279 = vpack.c.b16 %v6189, %v6186
    %v6280 = vpack.c.b16 %v6190, %v6187
    %v6281 = vpack.c.b16 %v6191, %v6188
    %v6282 = vpack.c.b16 %v6195, %v6192
    %v6283 = vpack.c.b16 %v6196, %v6193
    %v6284 = vpack.c.b16 %v6197, %v6194
    %v6285 = vpack.c.b16 %v6201, %v6198
    %v6286 = vpack.c.b16 %v6202, %v6199
    %v6287 = vpack.c.b16 %v6203, %v6200
    %v6288 = vpack.c.b16 %v6207, %v6204
    %v6289 = vpack.c.b16 %v6208, %v6205
    %v6290 = vpack.c.b16 %v6209, %v6206
    %v6291 = vpack.c.b16 %v6213, %v6210
    %v6292 = vpack.c.b16 %v6214, %v6211
    %v6293 = vpack.c.b16 %v6215, %v6212
    %v6294 = vpack.c.b16 %v6219, %v6216
    %v6295 = vpack.c.b16 %v6220, %v6217
    %v6296 = vpack.c.b16 %v6221, %v6218
    %v6297 = vpack.c.b16 %v6225, %v6222
    %v6298 = vpack.c.b16 %v6226, %v6223
    %v6299 = vpack.c.b16 %v6227, %v6224
    %6372 = vmatprep.subr.bf16.mxu0 %v6250
    %6373 = vmatpush1.bf16.msra.mxu0 %v6249
    %6374 = vmatprep.subr.bf16.mxu0 %v6247
    %6375 = vmatpush1.bf16.msra.mxu0 %v6246
    %6376 = vmatprep.subr.bf16.mxu0 %v6244
    %6377 = vmatpush1.bf16.msra.mxu0 %v6243
    %6378 = vmatprep.subr.bf16.mxu0 %v6241
    %6379 = vmatpush1.bf16.msra.mxu0 %v6240
    %6380 = vmatprep.subr.bf16.mxu0 %v6238
    %6381 = vmatpush1.bf16.msra.mxu0 %v6237
    %6382 = vmatprep.subr.bf16.mxu0 %v6235
    %6383 = vmatpush1.bf16.msra.mxu0 %v6234
    %6384 = vmatprep.subr.bf16.mxu0 %v6232
    %6385 = vmatpush1.bf16.msra.mxu0 %v6231
    %6386 = vmatprep.subr.bf16.mxu0 %v6229
    %6387 = vmatpush1.bf16.msra.mxu0 %v6228
    %6388 = vmatprep.subr.bf16.mxu0 %v6274
    %6389 = vmatpush2.bf16.msra.mxu0 %v6273
    %6390 = vmatprep.subr.bf16.mxu0 %v6271
    %6391 = vmatpush2.bf16.msra.mxu0 %v6270
    %6392 = vmatprep.subr.bf16.mxu0 %v6268
    %6393 = vmatpush2.bf16.msra.mxu0 %v6267
    %6394 = vmatprep.subr.bf16.mxu0 %v6265
    %6395 = vmatpush2.bf16.msra.mxu0 %v6264
    %6396 = vmatprep.subr.bf16.mxu0 %v6262
    %6397 = vmatpush2.bf16.msra.mxu0 %v6261
    %6398 = vmatprep.subr.bf16.mxu0 %v6259
    %6399 = vmatpush2.bf16.msra.mxu0 %v6258
    %6400 = vmatprep.subr.bf16.mxu0 %v6256
    %6401 = vmatpush2.bf16.msra.mxu0 %v6255
    %6402 = vmatprep.subr.bf16.mxu0 %v6253
    %6403 = vmatpush2.bf16.msra.mxu0 %v6252
    %6404 = vmatprep.mubr.bf16.mxu0 %v5873
    %6405 = vmatmul.mubr.bf16.gmra.mxu0 %v5872
    %v6406 = vpop.f32.mrf.mxu0
    %v6407 = vadd.f32 %v5976, %v6406
    %v6408 = vpop.f32.mrf.mxu0
    %v6409 = vadd.f32 %v5980, %v6408
    %v6410 = vpop.f32.mrf.mxu0
    %v6411 = vpop.f32.mrf.mxu0
    %6412 = vdwg.mxu0
    %6413 = vmatprep.subr.bf16.mxu0 %v6298
    %6414 = vmatpush1.bf16.msra.mxu0 %v6297
    %6415 = vmatprep.subr.bf16.mxu0 %v6295
    %6416 = vmatpush1.bf16.msra.mxu0 %v6294
    %6417 = vmatprep.subr.bf16.mxu0 %v6292
    %6418 = vmatpush1.bf16.msra.mxu0 %v6291
    %6419 = vmatprep.subr.bf16.mxu0 %v6289
    %6420 = vmatpush1.bf16.msra.mxu0 %v6288
    %6421 = vmatprep.subr.bf16.mxu0 %v6286
    %6422 = vmatpush1.bf16.msra.mxu0 %v6285
    %6423 = vmatprep.subr.bf16.mxu0 %v6283
    %6424 = vmatpush1.bf16.msra.mxu0 %v6282
    %6425 = vmatprep.subr.bf16.mxu0 %v6280
    %6426 = vmatpush1.bf16.msra.mxu0 %v6279
    %6427 = vmatprep.subr.bf16.mxu0 %v6277
    %6428 = vmatpush1.bf16.msra.mxu0 %v6276
    %6429 = vmatprep.subr.bf16.mxu0 0
    %6430 = vmatpush2.bf16.msra.mxu0 0
    %6431 = vmatprep.subr.bf16.mxu0 0
    %6432 = vmatpush2.bf16.msra.mxu0 0
    %6433 = vmatprep.subr.bf16.mxu0 0
    %6434 = vmatpush2.bf16.msra.mxu0 0
    %6435 = vmatprep.subr.bf16.mxu0 0
    %6436 = vmatpush2.bf16.msra.mxu0 0
    %6437 = vmatprep.subr.bf16.mxu0 0
    %6438 = vmatpush2.bf16.msra.mxu0 0
    %6439 = vmatprep.subr.bf16.mxu0 0
    %6440 = vmatpush2.bf16.msra.mxu0 0
    %6441 = vmatprep.subr.bf16.mxu0 0
    %6442 = vmatpush2.bf16.msra.mxu0 0
    %6443 = vmatprep.subr.bf16.mxu0 0
    %6444 = vmatpush2.bf16.msra.mxu0 0
    %6445 = vmatprep.mubr.bf16.mxu0 0
    %6446 = vmatmul.mubr.bf16.gmra.mxu0 %v5874
    %v6447 = vpop.f32.mrf.mxu0
    %v6448 = vadd.f32 %v6407, %v6447
    %v6449 = vpop.f32.mrf.mxu0
    %v6450 = vadd.f32 %v6409, %v6449
    %v6451 = vpop.f32.mrf.mxu0
    %v6452 = vpop.f32.mrf.mxu0
    %6453 = vdwg.mxu0
    %6454 = vmatprep.subr.bf16.mxu0 0
    %6455 = vmatpush1.bf16.msra.mxu0 %v6251
    %6456 = vmatprep.subr.bf16.mxu0 0
    %6457 = vmatpush1.bf16.msra.mxu0 %v6248
    %6458 = vmatprep.subr.bf16.mxu0 0
    %6459 = vmatpush1.bf16.msra.mxu0 %v6245
    %6460 = vmatprep.subr.bf16.mxu0 0
    %6461 = vmatpush1.bf16.msra.mxu0 %v6242
    %6462 = vmatprep.subr.bf16.mxu0 0
    %6463 = vmatpush1.bf16.msra.mxu0 %v6239
    %6464 = vmatprep.subr.bf16.mxu0 0
    %6465 = vmatpush1.bf16.msra.mxu0 %v6236
    %6466 = vmatprep.subr.bf16.mxu0 0
    %6467 = vmatpush1.bf16.msra.mxu0 %v6233
    %6468 = vmatprep.subr.bf16.mxu0 0
    %6469 = vmatpush1.bf16.msra.mxu0 %v6230
    %6470 = vmatprep.subr.bf16.mxu0 0
    %6471 = vmatpush2.bf16.msra.mxu0 %v6275
    %6472 = vmatprep.subr.bf16.mxu0 0
    %6473 = vmatpush2.bf16.msra.mxu0 %v6272
    %6474 = vmatprep.subr.bf16.mxu0 0
    %6475 = vmatpush2.bf16.msra.mxu0 %v6269
    %6476 = vmatprep.subr.bf16.mxu0 0
    %6477 = vmatpush2.bf16.msra.mxu0 %v6266
    %6478 = vmatprep.subr.bf16.mxu0 0
    %6479 = vmatpush2.bf16.msra.mxu0 %v6263
    %6480 = vmatprep.subr.bf16.mxu0 0
    %6481 = vmatpush2.bf16.msra.mxu0 %v6260
    %6482 = vmatprep.subr.bf16.mxu0 0
    %6483 = vmatpush2.bf16.msra.mxu0 %v6257
    %6484 = vmatprep.subr.bf16.mxu0 0
    %6485 = vmatpush2.bf16.msra.mxu0 %v6254
    %6486 = vmatprep.mubr.bf16.mxu0 %v5873
    %6487 = vmatmul.mubr.bf16.gmra.mxu0 %v5872
    %v6488 = vpop.f32.mrf.mxu0
    %v6489 = vadd.f32 %v5984, %v6488
    %v6490 = vpop.f32.mrf.mxu0
    %v6491 = vpop.f32.mrf.mxu0
    %v6492 = vpop.f32.mrf.mxu0
    %6493 = vdwg.mxu0
    %6494 = vmatprep.subr.bf16.mxu0 0
    %6495 = vmatpush1.bf16.msra.mxu0 %v6299
    %6496 = vmatprep.subr.bf16.mxu0 0
    %6497 = vmatpush1.bf16.msra.mxu0 %v6296
    %6498 = vmatprep.subr.bf16.mxu0 0
    %6499 = vmatpush1.bf16.msra.mxu0 %v6293
    %6500 = vmatprep.subr.bf16.mxu0 0
    %6501 = vmatpush1.bf16.msra.mxu0 %v6290
    %6502 = vmatprep.subr.bf16.mxu0 0
    %6503 = vmatpush1.bf16.msra.mxu0 %v6287
    %6504 = vmatprep.subr.bf16.mxu0 0
    %6505 = vmatpush1.bf16.msra.mxu0 %v6284
    %6506 = vmatprep.subr.bf16.mxu0 0
    %6507 = vmatpush1.bf16.msra.mxu0 %v6281
    %6508 = vmatprep.subr.bf16.mxu0 0
    %6509 = vmatpush1.bf16.msra.mxu0 %v6278
    %6510 = vmatprep.subr.bf16.mxu0 0
    %6511 = vmatpush2.bf16.msra.mxu0 0
    %6512 = vmatprep.subr.bf16.mxu0 0
    %6513 = vmatpush2.bf16.msra.mxu0 0
    %6514 = vmatprep.subr.bf16.mxu0 0
    %6515 = vmatpush2.bf16.msra.mxu0 0
    %6516 = vmatprep.subr.bf16.mxu0 0
    %6517 = vmatpush2.bf16.msra.mxu0 0
    %6518 = vmatprep.subr.bf16.mxu0 0
    %6519 = vmatpush2.bf16.msra.mxu0 0
    %6520 = vmatprep.subr.bf16.mxu0 0
    %6521 = vmatpush2.bf16.msra.mxu0 0
    %6522 = vmatprep.subr.bf16.mxu0 0
    %6523 = vmatpush2.bf16.msra.mxu0 0
    %6524 = vmatprep.subr.bf16.mxu0 0
    %6525 = vmatpush2.bf16.msra.mxu0 0
    %6526 = vmatprep.mubr.bf16.mxu0 0
    %6527 = vmatmul.mubr.bf16.gmra.mxu0 %v5874
    %v6528 = vpop.f32.mrf.mxu0
    %v6529 = vadd.f32 %v6489, %v6528
    %v6530 = vpop.f32.mrf.mxu0
    %v6531 = vpop.f32.mrf.mxu0
    %v6532 = vpop.f32.mrf.mxu0
    %6533 = vdwg.mxu0
    %v6534 = vmax.f32 %v6448, 0.0
    %v6535 = vmax.f32 %v6450, 0.0
    %v6536 = vmax.f32 %v6529, 0.0
    %v6537 = vand.u32 2147483647, %v6448
    %v6538 = vand.u32 2147483647, %v6450
    %v6539 = vand.u32 2147483647, %v6529
    %v6540 = vsub.f32 0.0, %v6537
    %v6541 = vsub.f32 0.0, %v6538
    %v6542 = vsub.f32 0.0, %v6539
    %v6543 = vmul.f32 %v6540, 1.442695
    %v6544 = vpow.pop %v6543
    %v6545 = vmul.f32 %v6541, 1.442695
    %v6546 = vpow.pop %v6545
    %v6547 = vmul.f32 %v6542, 1.442695
    %v6548 = vpow.pop %v6547
    %v6549 = vadd.f32 %v6544, 1.0
    %v6550 = vlog2.pop %v6549
    %v6551 = vmul.f32 %v6550, 0.6931472
    %v6552 = vmul.f32 -0.5, %v6544
    %v6553 = vadd.f32 %v6552, 1.0
    %v6554 = vmul.f32 %v6553, %v6544
    %v6555 = vand.u32 2147483647, %v6544
    %vm6556 = vcmp.lt.f32.partialorder %v6555, 0.0004427343
    %v6557 = vsel %vm6556, %v6554, %v6551
    %v6558 = vadd.f32 %v6546, 1.0
    %v6559 = vlog2.pop %v6558
    %v6560 = vmul.f32 %v6559, 0.6931472
    %v6561 = vmul.f32 -0.5, %v6546
    %v6562 = vadd.f32 %v6561, 1.0
    %v6563 = vmul.f32 %v6562, %v6546
    %v6564 = vand.u32 2147483647, %v6546
    %vm6565 = vcmp.lt.f32.partialorder %v6564, 0.0004427343
    %v6566 = vsel %vm6565, %v6563, %v6560
    %v6567 = vadd.f32 %v6548, 1.0
    %v6568 = vlog2.pop %v6567
    %v6569 = vmul.f32 %v6568, 0.6931472
    %v6570 = vmul.f32 -0.5, %v6548
    %v6571 = vadd.f32 %v6570, 1.0
    %v6572 = vmul.f32 %v6571, %v6548
    %v6573 = vand.u32 2147483647, %v6548
    %vm6574 = vcmp.lt.f32.partialorder %v6573, 0.0004427343
    %v6575 = vsel %vm6574, %v6572, %v6569
    %v6576 = vadd.f32 %v6534, %v6557
    %v6577 = vadd.f32 %v6535, %v6566
    %v6578 = vadd.f32 %v6536, %v6575
    %v6579 = vpack.c.bf16 %v6576, %v6576
    %v6580 = vpack.c.bf16 %v6577, %v6577
    %v6581 = vpack.c.bf16 %v6578, %v6578
    %v6582 = vld [vmem:[#allocation23] sm:$0xff]
    %v6583 = vld [vmem:[#allocation23 + $0x8] sm:$0xf]
    %v6584 = vld [vmem:[#allocation23 + $0xc] sm:$0xff]
    %v6585 = vld [vmem:[#allocation23 + $0x14] sm:$0xf]
    %v6586 = vld [vmem:[#allocation23 + $0x18] sm:$0xff]
    %v6587 = vld [vmem:[#allocation23 + $0x20] sm:$0xf]
    %v6588 = vld [vmem:[#allocation23 + $0x24] sm:$0xff]
    %v6589 = vld [vmem:[#allocation23 + $0x2c] sm:$0xf]
    %v6590 = vld [vmem:[#allocation23 + $0x30] sm:$0xff]
    %v6591 = vld [vmem:[#allocation23 + $0x38] sm:$0xf]
    %v6592 = vld [vmem:[#allocation23 + $0x3c] sm:$0xff]
    %v6593 = vld [vmem:[#allocation23 + $0x44] sm:$0xf]
    %v6594 = vld [vmem:[#allocation23 + $0x48] sm:$0xff]
    %v6595 = vld [vmem:[#allocation23 + $0x50] sm:$0xf]
    %v6596 = vld [vmem:[#allocation23 + $0x54] sm:$0xff]
    %v6597 = vld [vmem:[#allocation23 + $0x5c] sm:$0xf]
    %v6598 = vld [vmem:[#allocation23 + $0x60] sm:$0xff]
    %v6599 = vld [vmem:[#allocation23 + $0x68] sm:$0xf]
    %v6600 = vld [vmem:[#allocation23 + $0x6c] sm:$0xff]
    %v6601 = vld [vmem:[#allocation23 + $0x74] sm:$0xf]
    %v6602 = vld [vmem:[#allocation23 + $0x78] sm:$0xff]
    %v6603 = vld [vmem:[#allocation23 + $0x80] sm:$0xf]
    %v6604 = vld [vmem:[#allocation23 + $0x84] sm:$0xff]
    %v6605 = vld [vmem:[#allocation23 + $0x8c] sm:$0xf]
    %v6606 = vld [vmem:[#allocation23 + $0x90] sm:$0xff]
    %v6607 = vld [vmem:[#allocation23 + $0x98] sm:$0xf]
    %v6608 = vld [vmem:[#allocation23 + $0x9c] sm:$0xff]
    %v6609 = vld [vmem:[#allocation23 + $0xa4] sm:$0xf]
    %v6610 = vld [vmem:[#allocation23 + $0xa8] sm:$0xff]
    %v6611 = vld [vmem:[#allocation23 + $0xb0] sm:$0xf]
    %v6612 = vld [vmem:[#allocation23 + $0xb4] sm:$0xff]
    %v6613 = vld [vmem:[#allocation23 + $0xbc] sm:$0xf]
    %v6614 = vld [vmem:[#allocation23 + $0xc0] sm:$0xff]
    %v6615 = vld [vmem:[#allocation23 + $0xc8] sm:$0xf]
    %v6616 = vld [vmem:[#allocation23 + $0xcc] sm:$0xff]
    %v6617 = vld [vmem:[#allocation23 + $0xd4] sm:$0xf]
    %v6618 = vld [vmem:[#allocation23 + $0xd8] sm:$0xff]
    %v6619 = vld [vmem:[#allocation23 + $0xe0] sm:$0xf]
    %v6620 = vld [vmem:[#allocation23 + $0xe4] sm:$0xff]
    %v6621 = vld [vmem:[#allocation23 + $0xec] sm:$0xf]
    %v6622 = vld [vmem:[#allocation23 + $0xf0] sm:$0xff]
    %v6623 = vld [vmem:[#allocation23 + $0xf8] sm:$0xf]
    %v6624 = vld [vmem:[#allocation23 + $0xfc] sm:$0xff]
    %v6625 = vld [vmem:[#allocation23 + $0x104] sm:$0xf]
    %v6626 = vld [vmem:[#allocation23 + $0x108] sm:$0xff]
    %v6627 = vld [vmem:[#allocation23 + $0x110] sm:$0xf]
    %v6628 = vld [vmem:[#allocation23 + $0x114] sm:$0xff]
    %v6629 = vld [vmem:[#allocation23 + $0x11c] sm:$0xf]
    %v6630 = vld [vmem:[#allocation23 + $0x120] sm:$0xff]
    %v6631 = vld [vmem:[#allocation23 + $0x128] sm:$0xf]
    %v6632 = vld [vmem:[#allocation23 + $0x12c] sm:$0xff]
    %v6633 = vld [vmem:[#allocation23 + $0x134] sm:$0xf]
    %v6634 = vld [vmem:[#allocation23 + $0x138] sm:$0xff]
    %v6635 = vld [vmem:[#allocation23 + $0x140] sm:$0xf]
    %v6636 = vld [vmem:[#allocation23 + $0x144] sm:$0xff]
    %v6637 = vld [vmem:[#allocation23 + $0x14c] sm:$0xf]
    %v6638 = vld [vmem:[#allocation23 + $0x150] sm:$0xff]
    %v6639 = vld [vmem:[#allocation23 + $0x158] sm:$0xf]
    %v6640 = vld [vmem:[#allocation23 + $0x15c] sm:$0xff]
    %v6641 = vld [vmem:[#allocation23 + $0x164] sm:$0xf]
    %v6642 = vld [vmem:[#allocation23 + $0x168] sm:$0xff]
    %v6643 = vld [vmem:[#allocation23 + $0x170] sm:$0xf]
    %v6644 = vld [vmem:[#allocation23 + $0x174] sm:$0xff]
    %v6645 = vld [vmem:[#allocation23 + $0x17c] sm:$0xf]
    %v6646 = vld [vmem:[#allocation23 + $0x180] sm:$0xff]
    %v6647 = vld [vmem:[#allocation23 + $0x188] sm:$0xf]
    %v6648 = vld [vmem:[#allocation23 + $0x18c] sm:$0xff]
    %v6649 = vld [vmem:[#allocation23 + $0x194] sm:$0xf]
    %v6650 = vld [vmem:[#allocation23 + $0x198] sm:$0xff]
    %v6651 = vld [vmem:[#allocation23 + $0x1a0] sm:$0xf]
    %v6652 = vld [vmem:[#allocation23 + $0x1a4] sm:$0xff]
    %v6653 = vld [vmem:[#allocation23 + $0x1ac] sm:$0xf]
    %v6654 = vld [vmem:[#allocation23 + $0x1b0] sm:$0xff]
    %v6655 = vld [vmem:[#allocation23 + $0x1b8] sm:$0xf]
    %v6656 = vld [vmem:[#allocation23 + $0x1bc] sm:$0xff]
    %v6657 = vld [vmem:[#allocation23 + $0x1c4] sm:$0xf]
    %v6658 = vld [vmem:[#allocation23 + $0x1c8] sm:$0xff]
    %v6659 = vld [vmem:[#allocation23 + $0x1d0] sm:$0xf]
    %v6660 = vld [vmem:[#allocation23 + $0x1d4] sm:$0xff]
    %v6661 = vld [vmem:[#allocation23 + $0x1dc] sm:$0xf]
    %v6662 = vld [vmem:[#allocation23 + $0x1e0] sm:$0xff]
    %v6663 = vld [vmem:[#allocation23 + $0x1e8] sm:$0xf]
    %v6664 = vld [vmem:[#allocation23 + $0x1ec] sm:$0xff]
    %v6665 = vld [vmem:[#allocation23 + $0x1f4] sm:$0xf]
    %v6666 = vld [vmem:[#allocation23 + $0x1f8] sm:$0xff]
    %v6667 = vld [vmem:[#allocation23 + $0x200] sm:$0xf]
    %v6668 = vld [vmem:[#allocation23 + $0x204] sm:$0xff]
    %v6669 = vld [vmem:[#allocation23 + $0x20c] sm:$0xf]
    %v6670 = vld [vmem:[#allocation23 + $0x210] sm:$0xff]
    %v6671 = vld [vmem:[#allocation23 + $0x218] sm:$0xf]
    %v6672 = vld [vmem:[#allocation23 + $0x21c] sm:$0xff]
    %v6673 = vld [vmem:[#allocation23 + $0x224] sm:$0xf]
    %v6674 = vld [vmem:[#allocation23 + $0x228] sm:$0xff]
    %v6675 = vld [vmem:[#allocation23 + $0x230] sm:$0xf]
    %v6676 = vld [vmem:[#allocation23 + $0x234] sm:$0xff]
    %v6677 = vld [vmem:[#allocation23 + $0x23c] sm:$0xf]
    %v6678 = vld [vmem:[%s49] sm:$0x7]
    %v6680 = vlaneseq
    %v6681 = vshrl.u32 %v6680, 7
    %v6682 = vsub.s32 0, %v6681
    %v6683 = vrot.slane %v6678, %v6682
    %v6684 = vlaneseq
    %v6685 = vshrl.u32 %v6684, 7
    %v6686 = vsub.s32 1, %v6685
    %v6687 = vrot.slane %v6678, %v6686
    %v6688 = vlaneseq
    %v6689 = vshrl.u32 %v6688, 7
    %v6690 = vsub.s32 2, %v6689
    %v6691 = vrot.slane %v6678, %v6690
    %v6791 = vunpack.c.l.b16 %v6582
    %v6792 = vunpack.c.h.b16 %v6582
    %v6793 = vunpack.c.l.b16 %v6583
    %v6794 = vunpack.c.l.b16 %v6584
    %v6795 = vunpack.c.h.b16 %v6584
    %v6796 = vunpack.c.l.b16 %v6585
    %v6797 = vunpack.c.l.b16 %v6586
    %v6798 = vunpack.c.h.b16 %v6586
    %v6799 = vunpack.c.l.b16 %v6587
    %v6800 = vunpack.c.l.b16 %v6588
    %v6801 = vunpack.c.h.b16 %v6588
    %v6802 = vunpack.c.l.b16 %v6589
    %v6803 = vunpack.c.l.b16 %v6590
    %v6804 = vunpack.c.h.b16 %v6590
    %v6805 = vunpack.c.l.b16 %v6591
    %v6806 = vunpack.c.l.b16 %v6592
    %v6807 = vunpack.c.h.b16 %v6592
    %v6808 = vunpack.c.l.b16 %v6593
    %v6809 = vunpack.c.l.b16 %v6594
    %v6810 = vunpack.c.h.b16 %v6594
    %v6811 = vunpack.c.l.b16 %v6595
    %v6812 = vunpack.c.l.b16 %v6596
    %v6813 = vunpack.c.h.b16 %v6596
    %v6814 = vunpack.c.l.b16 %v6597
    %v6815 = vunpack.c.l.b16 %v6598
    %v6816 = vunpack.c.h.b16 %v6598
    %v6817 = vunpack.c.l.b16 %v6599
    %v6818 = vunpack.c.l.b16 %v6600
    %v6819 = vunpack.c.h.b16 %v6600
    %v6820 = vunpack.c.l.b16 %v6601
    %v6821 = vunpack.c.l.b16 %v6602
    %v6822 = vunpack.c.h.b16 %v6602
    %v6823 = vunpack.c.l.b16 %v6603
    %v6824 = vunpack.c.l.b16 %v6604
    %v6825 = vunpack.c.h.b16 %v6604
    %v6826 = vunpack.c.l.b16 %v6605
    %v6827 = vunpack.c.l.b16 %v6606
    %v6828 = vunpack.c.h.b16 %v6606
    %v6829 = vunpack.c.l.b16 %v6607
    %v6830 = vunpack.c.l.b16 %v6608
    %v6831 = vunpack.c.h.b16 %v6608
    %v6832 = vunpack.c.l.b16 %v6609
    %v6833 = vunpack.c.l.b16 %v6610
    %v6834 = vunpack.c.h.b16 %v6610
    %v6835 = vunpack.c.l.b16 %v6611
    %v6836 = vunpack.c.l.b16 %v6612
    %v6837 = vunpack.c.h.b16 %v6612
    %v6838 = vunpack.c.l.b16 %v6613
    %v6839 = vunpack.c.l.b16 %v6614
    %v6840 = vunpack.c.h.b16 %v6614
    %v6841 = vunpack.c.l.b16 %v6615
    %v6842 = vunpack.c.l.b16 %v6616
    %v6843 = vunpack.c.h.b16 %v6616
    %v6844 = vunpack.c.l.b16 %v6617
    %v6845 = vunpack.c.l.b16 %v6618
    %v6846 = vunpack.c.h.b16 %v6618
    %v6847 = vunpack.c.l.b16 %v6619
    %v6848 = vunpack.c.l.b16 %v6620
    %v6849 = vunpack.c.h.b16 %v6620
    %v6850 = vunpack.c.l.b16 %v6621
    %v6851 = vunpack.c.l.b16 %v6622
    %v6852 = vunpack.c.h.b16 %v6622
    %v6853 = vunpack.c.l.b16 %v6623
    %v6854 = vunpack.c.l.b16 %v6624
    %v6855 = vunpack.c.h.b16 %v6624
    %v6856 = vunpack.c.l.b16 %v6625
    %v6857 = vunpack.c.l.b16 %v6626
    %v6858 = vunpack.c.h.b16 %v6626
    %v6859 = vunpack.c.l.b16 %v6627
    %v6860 = vunpack.c.l.b16 %v6628
    %v6861 = vunpack.c.h.b16 %v6628
    %v6862 = vunpack.c.l.b16 %v6629
    %v6863 = vunpack.c.l.b16 %v6630
    %v6864 = vunpack.c.h.b16 %v6630
    %v6865 = vunpack.c.l.b16 %v6631
    %v6866 = vunpack.c.l.b16 %v6632
    %v6867 = vunpack.c.h.b16 %v6632
    %v6868 = vunpack.c.l.b16 %v6633
    %v6869 = vunpack.c.l.b16 %v6634
    %v6870 = vunpack.c.h.b16 %v6634
    %v6871 = vunpack.c.l.b16 %v6635
    %v6872 = vunpack.c.l.b16 %v6636
    %v6873 = vunpack.c.h.b16 %v6636
    %v6874 = vunpack.c.l.b16 %v6637
    %v6875 = vunpack.c.l.b16 %v6638
    %v6876 = vunpack.c.h.b16 %v6638
    %v6877 = vunpack.c.l.b16 %v6639
    %v6878 = vunpack.c.l.b16 %v6640
    %v6879 = vunpack.c.h.b16 %v6640
    %v6880 = vunpack.c.l.b16 %v6641
    %v6881 = vunpack.c.l.b16 %v6642
    %v6882 = vunpack.c.h.b16 %v6642
    %v6883 = vunpack.c.l.b16 %v6643
    %v6884 = vunpack.c.l.b16 %v6644
    %v6885 = vunpack.c.h.b16 %v6644
    %v6886 = vunpack.c.l.b16 %v6645
    %v6887 = vunpack.c.l.b16 %v6646
    %v6888 = vunpack.c.h.b16 %v6646
    %v6889 = vunpack.c.l.b16 %v6647
    %v6890 = vunpack.c.l.b16 %v6648
    %v6891 = vunpack.c.h.b16 %v6648
    %v6892 = vunpack.c.l.b16 %v6649
    %v6893 = vunpack.c.l.b16 %v6650
    %v6894 = vunpack.c.h.b16 %v6650
    %v6895 = vunpack.c.l.b16 %v6651
    %v6896 = vunpack.c.l.b16 %v6652
    %v6897 = vunpack.c.h.b16 %v6652
    %v6898 = vunpack.c.l.b16 %v6653
    %v6899 = vunpack.c.l.b16 %v6654
    %v6900 = vunpack.c.h.b16 %v6654
    %v6901 = vunpack.c.l.b16 %v6655
    %v6902 = vunpack.c.l.b16 %v6656
    %v6903 = vunpack.c.h.b16 %v6656
    %v6904 = vunpack.c.l.b16 %v6657
    %v6905 = vunpack.c.l.b16 %v6658
    %v6906 = vunpack.c.h.b16 %v6658
    %v6907 = vunpack.c.l.b16 %v6659
    %v6908 = vunpack.c.l.b16 %v6660
    %v6909 = vunpack.c.h.b16 %v6660
    %v6910 = vunpack.c.l.b16 %v6661
    %v6911 = vunpack.c.l.b16 %v6662
    %v6912 = vunpack.c.h.b16 %v6662
    %v6913 = vunpack.c.l.b16 %v6663
    %v6914 = vunpack.c.l.b16 %v6664
    %v6915 = vunpack.c.h.b16 %v6664
    %v6916 = vunpack.c.l.b16 %v6665
    %v6917 = vunpack.c.l.b16 %v6666
    %v6918 = vunpack.c.h.b16 %v6666
    %v6919 = vunpack.c.l.b16 %v6667
    %v6920 = vunpack.c.l.b16 %v6668
    %v6921 = vunpack.c.h.b16 %v6668
    %v6922 = vunpack.c.l.b16 %v6669
    %v6923 = vunpack.c.l.b16 %v6670
    %v6924 = vunpack.c.h.b16 %v6670
    %v6925 = vunpack.c.l.b16 %v6671
    %v6926 = vunpack.c.l.b16 %v6672
    %v6927 = vunpack.c.h.b16 %v6672
    %v6928 = vunpack.c.l.b16 %v6673
    %v6929 = vunpack.c.l.b16 %v6674
    %v6930 = vunpack.c.h.b16 %v6674
    %v6931 = vunpack.c.l.b16 %v6675
    %v6932 = vunpack.c.l.b16 %v6676
    %v6933 = vunpack.c.h.b16 %v6676
    %v6934 = vunpack.c.l.b16 %v6677
    %v6935 = vpack.c.b16 %v6794, %v6791
    %v6936 = vpack.c.b16 %v6795, %v6792
    %v6937 = vpack.c.b16 %v6796, %v6793
    %v6938 = vpack.c.b16 %v6800, %v6797
    %v6939 = vpack.c.b16 %v6801, %v6798
    %v6940 = vpack.c.b16 %v6802, %v6799
    %v6941 = vpack.c.b16 %v6806, %v6803
    %v6942 = vpack.c.b16 %v6807, %v6804
    %v6943 = vpack.c.b16 %v6808, %v6805
    %v6944 = vpack.c.b16 %v6812, %v6809
    %v6945 = vpack.c.b16 %v6813, %v6810
    %v6946 = vpack.c.b16 %v6814, %v6811
    %v6947 = vpack.c.b16 %v6818, %v6815
    %v6948 = vpack.c.b16 %v6819, %v6816
    %v6949 = vpack.c.b16 %v6820, %v6817
    %v6950 = vpack.c.b16 %v6824, %v6821
    %v6951 = vpack.c.b16 %v6825, %v6822
    %v6952 = vpack.c.b16 %v6826, %v6823
    %v6953 = vpack.c.b16 %v6830, %v6827
    %v6954 = vpack.c.b16 %v6831, %v6828
    %v6955 = vpack.c.b16 %v6832, %v6829
    %v6956 = vpack.c.b16 %v6836, %v6833
    %v6957 = vpack.c.b16 %v6837, %v6834
    %v6958 = vpack.c.b16 %v6838, %v6835
    %v6959 = vpack.c.b16 %v6842, %v6839
    %v6960 = vpack.c.b16 %v6843, %v6840
    %v6961 = vpack.c.b16 %v6844, %v6841
    %v6962 = vpack.c.b16 %v6848, %v6845
    %v6963 = vpack.c.b16 %v6849, %v6846
    %v6964 = vpack.c.b16 %v6850, %v6847
    %v6965 = vpack.c.b16 %v6854, %v6851
    %v6966 = vpack.c.b16 %v6855, %v6852
    %v6967 = vpack.c.b16 %v6856, %v6853
    %v6968 = vpack.c.b16 %v6860, %v6857
    %v6969 = vpack.c.b16 %v6861, %v6858
    %v6970 = vpack.c.b16 %v6862, %v6859
    %v6971 = vpack.c.b16 %v6866, %v6863
    %v6972 = vpack.c.b16 %v6867, %v6864
    %v6973 = vpack.c.b16 %v6868, %v6865
    %v6974 = vpack.c.b16 %v6872, %v6869
    %v6975 = vpack.c.b16 %v6873, %v6870
    %v6976 = vpack.c.b16 %v6874, %v6871
    %v6977 = vpack.c.b16 %v6878, %v6875
    %v6978 = vpack.c.b16 %v6879, %v6876
    %v6979 = vpack.c.b16 %v6880, %v6877
    %v6980 = vpack.c.b16 %v6884, %v6881
    %v6981 = vpack.c.b16 %v6885, %v6882
    %v6982 = vpack.c.b16 %v6886, %v6883
    %v6983 = vpack.c.b16 %v6890, %v6887
    %v6984 = vpack.c.b16 %v6891, %v6888
    %v6985 = vpack.c.b16 %v6892, %v6889
    %v6986 = vpack.c.b16 %v6896, %v6893
    %v6987 = vpack.c.b16 %v6897, %v6894
    %v6988 = vpack.c.b16 %v6898, %v6895
    %v6989 = vpack.c.b16 %v6902, %v6899
    %v6990 = vpack.c.b16 %v6903, %v6900
    %v6991 = vpack.c.b16 %v6904, %v6901
    %v6992 = vpack.c.b16 %v6908, %v6905
    %v6993 = vpack.c.b16 %v6909, %v6906
    %v6994 = vpack.c.b16 %v6910, %v6907
    %v6995 = vpack.c.b16 %v6914, %v6911
    %v6996 = vpack.c.b16 %v6915, %v6912
    %v6997 = vpack.c.b16 %v6916, %v6913
    %v6998 = vpack.c.b16 %v6920, %v6917
    %v6999 = vpack.c.b16 %v6921, %v6918
    %v7000 = vpack.c.b16 %v6922, %v6919
    %v7001 = vpack.c.b16 %v6926, %v6923
    %v7002 = vpack.c.b16 %v6927, %v6924
    %v7003 = vpack.c.b16 %v6928, %v6925
    %v7004 = vpack.c.b16 %v6932, %v6929
    %v7005 = vpack.c.b16 %v6933, %v6930
    %v7006 = vpack.c.b16 %v6934, %v6931
    %7079 = vmatprep.subr.bf16.mxu0 %v6957
    %7080 = vmatpush1.bf16.msra.mxu0 %v6956
    %7081 = vmatprep.subr.bf16.mxu0 %v6954
    %7082 = vmatpush1.bf16.msra.mxu0 %v6953
    %7083 = vmatprep.subr.bf16.mxu0 %v6951
    %7084 = vmatpush1.bf16.msra.mxu0 %v6950
    %7085 = vmatprep.subr.bf16.mxu0 %v6948
    %7086 = vmatpush1.bf16.msra.mxu0 %v6947
    %7087 = vmatprep.subr.bf16.mxu0 %v6945
    %7088 = vmatpush1.bf16.msra.mxu0 %v6944
    %7089 = vmatprep.subr.bf16.mxu0 %v6942
    %7090 = vmatpush1.bf16.msra.mxu0 %v6941
    %7091 = vmatprep.subr.bf16.mxu0 %v6939
    %7092 = vmatpush1.bf16.msra.mxu0 %v6938
    %7093 = vmatprep.subr.bf16.mxu0 %v6936
    %7094 = vmatpush1.bf16.msra.mxu0 %v6935
    %7095 = vmatprep.subr.bf16.mxu0 %v6981
    %7096 = vmatpush2.bf16.msra.mxu0 %v6980
    %7097 = vmatprep.subr.bf16.mxu0 %v6978
    %7098 = vmatpush2.bf16.msra.mxu0 %v6977
    %7099 = vmatprep.subr.bf16.mxu0 %v6975
    %7100 = vmatpush2.bf16.msra.mxu0 %v6974
    %7101 = vmatprep.subr.bf16.mxu0 %v6972
    %7102 = vmatpush2.bf16.msra.mxu0 %v6971
    %7103 = vmatprep.subr.bf16.mxu0 %v6969
    %7104 = vmatpush2.bf16.msra.mxu0 %v6968
    %7105 = vmatprep.subr.bf16.mxu0 %v6966
    %7106 = vmatpush2.bf16.msra.mxu0 %v6965
    %7107 = vmatprep.subr.bf16.mxu0 %v6963
    %7108 = vmatpush2.bf16.msra.mxu0 %v6962
    %7109 = vmatprep.subr.bf16.mxu0 %v6960
    %7110 = vmatpush2.bf16.msra.mxu0 %v6959
    %7111 = vmatprep.mubr.bf16.mxu0 %v6580
    %7112 = vmatmul.mubr.bf16.gmra.mxu0 %v6579
    %v7113 = vpop.f32.mrf.mxu0
    %v7114 = vadd.f32 %v6683, %v7113
    %v7115 = vpop.f32.mrf.mxu0
    %v7116 = vadd.f32 %v6687, %v7115
    %v7117 = vpop.f32.mrf.mxu0
    %v7118 = vpop.f32.mrf.mxu0
    %7119 = vdwg.mxu0
    %7120 = vmatprep.subr.bf16.mxu0 %v7005
    %7121 = vmatpush1.bf16.msra.mxu0 %v7004
    %7122 = vmatprep.subr.bf16.mxu0 %v7002
    %7123 = vmatpush1.bf16.msra.mxu0 %v7001
    %7124 = vmatprep.subr.bf16.mxu0 %v6999
    %7125 = vmatpush1.bf16.msra.mxu0 %v6998
    %7126 = vmatprep.subr.bf16.mxu0 %v6996
    %7127 = vmatpush1.bf16.msra.mxu0 %v6995
    %7128 = vmatprep.subr.bf16.mxu0 %v6993
    %7129 = vmatpush1.bf16.msra.mxu0 %v6992
    %7130 = vmatprep.subr.bf16.mxu0 %v6990
    %7131 = vmatpush1.bf16.msra.mxu0 %v6989
    %7132 = vmatprep.subr.bf16.mxu0 %v6987
    %7133 = vmatpush1.bf16.msra.mxu0 %v6986
    %7134 = vmatprep.subr.bf16.mxu0 %v6984
    %7135 = vmatpush1.bf16.msra.mxu0 %v6983
    %7136 = vmatprep.subr.bf16.mxu0 0
    %7137 = vmatpush2.bf16.msra.mxu0 0
    %7138 = vmatprep.subr.bf16.mxu0 0
    %7139 = vmatpush2.bf16.msra.mxu0 0
    %7140 = vmatprep.subr.bf16.mxu0 0
    %7141 = vmatpush2.bf16.msra.mxu0 0
    %7142 = vmatprep.subr.bf16.mxu0 0
    %7143 = vmatpush2.bf16.msra.mxu0 0
    %7144 = vmatprep.subr.bf16.mxu0 0
    %7145 = vmatpush2.bf16.msra.mxu0 0
    %7146 = vmatprep.subr.bf16.mxu0 0
    %7147 = vmatpush2.bf16.msra.mxu0 0
    %7148 = vmatprep.subr.bf16.mxu0 0
    %7149 = vmatpush2.bf16.msra.mxu0 0
    %7150 = vmatprep.subr.bf16.mxu0 0
    %7151 = vmatpush2.bf16.msra.mxu0 0
    %7152 = vmatprep.mubr.bf16.mxu0 0
    %7153 = vmatmul.mubr.bf16.gmra.mxu0 %v6581
    %v7154 = vpop.f32.mrf.mxu0
    %v7155 = vadd.f32 %v7114, %v7154
    %v7156 = vpop.f32.mrf.mxu0
    %v7157 = vadd.f32 %v7116, %v7156
    %v7158 = vpop.f32.mrf.mxu0
    %v7159 = vpop.f32.mrf.mxu0
    %7160 = vdwg.mxu0
    %7161 = vmatprep.subr.bf16.mxu0 0
    %7162 = vmatpush1.bf16.msra.mxu0 %v6958
    %7163 = vmatprep.subr.bf16.mxu0 0
    %7164 = vmatpush1.bf16.msra.mxu0 %v6955
    %7165 = vmatprep.subr.bf16.mxu0 0
    %7166 = vmatpush1.bf16.msra.mxu0 %v6952
    %7167 = vmatprep.subr.bf16.mxu0 0
    %7168 = vmatpush1.bf16.msra.mxu0 %v6949
    %7169 = vmatprep.subr.bf16.mxu0 0
    %7170 = vmatpush1.bf16.msra.mxu0 %v6946
    %7171 = vmatprep.subr.bf16.mxu0 0
    %7172 = vmatpush1.bf16.msra.mxu0 %v6943
    %7173 = vmatprep.subr.bf16.mxu0 0
    %7174 = vmatpush1.bf16.msra.mxu0 %v6940
    %7175 = vmatprep.subr.bf16.mxu0 0
    %7176 = vmatpush1.bf16.msra.mxu0 %v6937
    %7177 = vmatprep.subr.bf16.mxu0 0
    %7178 = vmatpush2.bf16.msra.mxu0 %v6982
    %7179 = vmatprep.subr.bf16.mxu0 0
    %7180 = vmatpush2.bf16.msra.mxu0 %v6979
    %7181 = vmatprep.subr.bf16.mxu0 0
    %7182 = vmatpush2.bf16.msra.mxu0 %v6976
    %7183 = vmatprep.subr.bf16.mxu0 0
    %7184 = vmatpush2.bf16.msra.mxu0 %v6973
    %7185 = vmatprep.subr.bf16.mxu0 0
    %7186 = vmatpush2.bf16.msra.mxu0 %v6970
    %7187 = vmatprep.subr.bf16.mxu0 0
    %7188 = vmatpush2.bf16.msra.mxu0 %v6967
    %7189 = vmatprep.subr.bf16.mxu0 0
    %7190 = vmatpush2.bf16.msra.mxu0 %v6964
    %7191 = vmatprep.subr.bf16.mxu0 0
    %7192 = vmatpush2.bf16.msra.mxu0 %v6961
    %7193 = vmatprep.mubr.bf16.mxu0 %v6580
    %7194 = vmatmul.mubr.bf16.gmra.mxu0 %v6579
    %v7195 = vpop.f32.mrf.mxu0
    %v7196 = vadd.f32 %v6691, %v7195
    %v7197 = vpop.f32.mrf.mxu0
    %v7198 = vpop.f32.mrf.mxu0
    %v7199 = vpop.f32.mrf.mxu0
    %7200 = vdwg.mxu0
    %7201 = vmatprep.subr.bf16.mxu0 0
    %7202 = vmatpush1.bf16.msra.mxu0 %v7006
    %7203 = vmatprep.subr.bf16.mxu0 0
    %7204 = vmatpush1.bf16.msra.mxu0 %v7003
    %7205 = vmatprep.subr.bf16.mxu0 0
    %7206 = vmatpush1.bf16.msra.mxu0 %v7000
    %7207 = vmatprep.subr.bf16.mxu0 0
    %7208 = vmatpush1.bf16.msra.mxu0 %v6997
    %7209 = vmatprep.subr.bf16.mxu0 0
    %7210 = vmatpush1.bf16.msra.mxu0 %v6994
    %7211 = vmatprep.subr.bf16.mxu0 0
    %7212 = vmatpush1.bf16.msra.mxu0 %v6991
    %7213 = vmatprep.subr.bf16.mxu0 0
    %7214 = vmatpush1.bf16.msra.mxu0 %v6988
    %7215 = vmatprep.subr.bf16.mxu0 0
    %7216 = vmatpush1.bf16.msra.mxu0 %v6985
    %7217 = vmatprep.subr.bf16.mxu0 0
    %7218 = vmatpush2.bf16.msra.mxu0 0
    %7219 = vmatprep.subr.bf16.mxu0 0
    %7220 = vmatpush2.bf16.msra.mxu0 0
    %7221 = vmatprep.subr.bf16.mxu0 0
    %7222 = vmatpush2.bf16.msra.mxu0 0
    %7223 = vmatprep.subr.bf16.mxu0 0
    %7224 = vmatpush2.bf16.msra.mxu0 0
    %7225 = vmatprep.subr.bf16.mxu0 0
    %7226 = vmatpush2.bf16.msra.mxu0 0
    %7227 = vmatprep.subr.bf16.mxu0 0
    %7228 = vmatpush2.bf16.msra.mxu0 0
    %7229 = vmatprep.subr.bf16.mxu0 0
    %7230 = vmatpush2.bf16.msra.mxu0 0
    %7231 = vmatprep.subr.bf16.mxu0 0
    %7232 = vmatpush2.bf16.msra.mxu0 0
    %7233 = vmatprep.mubr.bf16.mxu0 0
    %7234 = vmatmul.mubr.bf16.gmra.mxu0 %v6581
    %v7235 = vpop.f32.mrf.mxu0
    %v7236 = vadd.f32 %v7196, %v7235
    %v7237 = vpop.f32.mrf.mxu0
    %v7238 = vpop.f32.mrf.mxu0
    %v7239 = vpop.f32.mrf.mxu0
    %7240 = vdwg.mxu0
    %v7241 = vmax.f32 %v7155, 0.0
    %v7242 = vmax.f32 %v7157, 0.0
    %v7243 = vmax.f32 %v7236, 0.0
    %v7244 = vand.u32 2147483647, %v7155
    %v7245 = vand.u32 2147483647, %v7157
    %v7246 = vand.u32 2147483647, %v7236
    %v7247 = vsub.f32 0.0, %v7244
    %v7248 = vsub.f32 0.0, %v7245
    %v7249 = vsub.f32 0.0, %v7246
    %v7250 = vmul.f32 %v7247, 1.442695
    %v7251 = vpow.pop %v7250
    %v7252 = vmul.f32 %v7248, 1.442695
    %v7253 = vpow.pop %v7252
    %v7254 = vmul.f32 %v7249, 1.442695
    %v7255 = vpow.pop %v7254
    %v7256 = vadd.f32 %v7251, 1.0
    %v7257 = vlog2.pop %v7256
    %v7258 = vmul.f32 %v7257, 0.6931472
    %v7259 = vmul.f32 -0.5, %v7251
    %v7260 = vadd.f32 %v7259, 1.0
    %v7261 = vmul.f32 %v7260, %v7251
    %v7262 = vand.u32 2147483647, %v7251
    %vm7263 = vcmp.lt.f32.partialorder %v7262, 0.0004427343
    %v7264 = vsel %vm7263, %v7261, %v7258
    %v7265 = vadd.f32 %v7253, 1.0
    %v7266 = vlog2.pop %v7265
    %v7267 = vmul.f32 %v7266, 0.6931472
    %v7268 = vmul.f32 -0.5, %v7253
    %v7269 = vadd.f32 %v7268, 1.0
    %v7270 = vmul.f32 %v7269, %v7253
    %v7271 = vand.u32 2147483647, %v7253
    %vm7272 = vcmp.lt.f32.partialorder %v7271, 0.0004427343
    %v7273 = vsel %vm7272, %v7270, %v7267
    %v7274 = vadd.f32 %v7255, 1.0
    %v7275 = vlog2.pop %v7274
    %v7276 = vmul.f32 %v7275, 0.6931472
    %v7277 = vmul.f32 -0.5, %v7255
    %v7278 = vadd.f32 %v7277, 1.0
    %v7279 = vmul.f32 %v7278, %v7255
    %v7280 = vand.u32 2147483647, %v7255
    %vm7281 = vcmp.lt.f32.partialorder %v7280, 0.0004427343
    %v7282 = vsel %vm7281, %v7279, %v7276
    %v7283 = vadd.f32 %v7241, %v7264
    %v7284 = vadd.f32 %v7242, %v7273
    %v7285 = vadd.f32 %v7243, %v7282
    %v7286 = vpack.c.bf16 %v7283, %v7283
    %v7287 = vpack.c.bf16 %v7284, %v7284
    %v7288 = vpack.c.bf16 %v7285, %v7285
    %v7289 = vld [vmem:[#allocation25] sm:$0xff]
    %v7290 = vld [vmem:[#allocation25 + $0x8] sm:$0xf]
    %v7291 = vld [vmem:[#allocation25 + $0xc] sm:$0xff]
    %v7292 = vld [vmem:[#allocation25 + $0x14] sm:$0xf]
    %v7293 = vld [vmem:[#allocation25 + $0x18] sm:$0xff]
    %v7294 = vld [vmem:[#allocation25 + $0x20] sm:$0xf]
    %v7295 = vld [vmem:[#allocation25 + $0x24] sm:$0xff]
    %v7296 = vld [vmem:[#allocation25 + $0x2c] sm:$0xf]
    %v7297 = vld [vmem:[#allocation25 + $0x30] sm:$0xff]
    %v7298 = vld [vmem:[#allocation25 + $0x38] sm:$0xf]
    %v7299 = vld [vmem:[#allocation25 + $0x3c] sm:$0xff]
    %v7300 = vld [vmem:[#allocation25 + $0x44] sm:$0xf]
    %v7301 = vld [vmem:[#allocation25 + $0x48] sm:$0xff]
    %v7302 = vld [vmem:[#allocation25 + $0x50] sm:$0xf]
    %v7303 = vld [vmem:[#allocation25 + $0x54] sm:$0xff]
    %v7304 = vld [vmem:[#allocation25 + $0x5c] sm:$0xf]
    %v7305 = vld [vmem:[#allocation25 + $0x60] sm:$0xff]
    %v7306 = vld [vmem:[#allocation25 + $0x68] sm:$0xf]
    %v7307 = vld [vmem:[#allocation25 + $0x6c] sm:$0xff]
    %v7308 = vld [vmem:[#allocation25 + $0x74] sm:$0xf]
    %v7309 = vld [vmem:[#allocation25 + $0x78] sm:$0xff]
    %v7310 = vld [vmem:[#allocation25 + $0x80] sm:$0xf]
    %v7311 = vld [vmem:[#allocation25 + $0x84] sm:$0xff]
    %v7312 = vld [vmem:[#allocation25 + $0x8c] sm:$0xf]
    %v7313 = vld [vmem:[#allocation25 + $0x90] sm:$0xff]
    %v7314 = vld [vmem:[#allocation25 + $0x98] sm:$0xf]
    %v7315 = vld [vmem:[#allocation25 + $0x9c] sm:$0xff]
    %v7316 = vld [vmem:[#allocation25 + $0xa4] sm:$0xf]
    %v7317 = vld [vmem:[#allocation25 + $0xa8] sm:$0xff]
    %v7318 = vld [vmem:[#allocation25 + $0xb0] sm:$0xf]
    %v7319 = vld [vmem:[#allocation25 + $0xb4] sm:$0xff]
    %v7320 = vld [vmem:[#allocation25 + $0xbc] sm:$0xf]
    %v7321 = vld [vmem:[#allocation25 + $0xc0] sm:$0xff]
    %v7322 = vld [vmem:[#allocation25 + $0xc8] sm:$0xf]
    %v7323 = vld [vmem:[#allocation25 + $0xcc] sm:$0xff]
    %v7324 = vld [vmem:[#allocation25 + $0xd4] sm:$0xf]
    %v7325 = vld [vmem:[#allocation25 + $0xd8] sm:$0xff]
    %v7326 = vld [vmem:[#allocation25 + $0xe0] sm:$0xf]
    %v7327 = vld [vmem:[#allocation25 + $0xe4] sm:$0xff]
    %v7328 = vld [vmem:[#allocation25 + $0xec] sm:$0xf]
    %v7329 = vld [vmem:[#allocation25 + $0xf0] sm:$0xff]
    %v7330 = vld [vmem:[#allocation25 + $0xf8] sm:$0xf]
    %v7331 = vld [vmem:[#allocation25 + $0xfc] sm:$0xff]
    %v7332 = vld [vmem:[#allocation25 + $0x104] sm:$0xf]
    %v7333 = vld [vmem:[#allocation25 + $0x108] sm:$0xff]
    %v7334 = vld [vmem:[#allocation25 + $0x110] sm:$0xf]
    %v7335 = vld [vmem:[#allocation25 + $0x114] sm:$0xff]
    %v7336 = vld [vmem:[#allocation25 + $0x11c] sm:$0xf]
    %v7337 = vld [vmem:[#allocation25 + $0x120] sm:$0xff]
    %v7338 = vld [vmem:[#allocation25 + $0x128] sm:$0xf]
    %v7339 = vld [vmem:[#allocation25 + $0x12c] sm:$0xff]
    %v7340 = vld [vmem:[#allocation25 + $0x134] sm:$0xf]
    %v7341 = vld [vmem:[#allocation25 + $0x138] sm:$0xff]
    %v7342 = vld [vmem:[#allocation25 + $0x140] sm:$0xf]
    %v7343 = vld [vmem:[#allocation25 + $0x144] sm:$0xff]
    %v7344 = vld [vmem:[#allocation25 + $0x14c] sm:$0xf]
    %v7345 = vld [vmem:[#allocation25 + $0x150] sm:$0xff]
    %v7346 = vld [vmem:[#allocation25 + $0x158] sm:$0xf]
    %v7347 = vld [vmem:[#allocation25 + $0x15c] sm:$0xff]
    %v7348 = vld [vmem:[#allocation25 + $0x164] sm:$0xf]
    %v7349 = vld [vmem:[#allocation25 + $0x168] sm:$0xff]
    %v7350 = vld [vmem:[#allocation25 + $0x170] sm:$0xf]
    %v7351 = vld [vmem:[#allocation25 + $0x174] sm:$0xff]
    %v7352 = vld [vmem:[#allocation25 + $0x17c] sm:$0xf]
    %v7353 = vld [vmem:[#allocation25 + $0x180] sm:$0xff]
    %v7354 = vld [vmem:[#allocation25 + $0x188] sm:$0xf]
    %v7355 = vld [vmem:[#allocation25 + $0x18c] sm:$0xff]
    %v7356 = vld [vmem:[#allocation25 + $0x194] sm:$0xf]
    %v7357 = vld [vmem:[#allocation25 + $0x198] sm:$0xff]
    %v7358 = vld [vmem:[#allocation25 + $0x1a0] sm:$0xf]
    %v7359 = vld [vmem:[#allocation25 + $0x1a4] sm:$0xff]
    %v7360 = vld [vmem:[#allocation25 + $0x1ac] sm:$0xf]
    %v7361 = vld [vmem:[#allocation25 + $0x1b0] sm:$0xff]
    %v7362 = vld [vmem:[#allocation25 + $0x1b8] sm:$0xf]
    %v7363 = vld [vmem:[#allocation25 + $0x1bc] sm:$0xff]
    %v7364 = vld [vmem:[#allocation25 + $0x1c4] sm:$0xf]
    %v7365 = vld [vmem:[#allocation25 + $0x1c8] sm:$0xff]
    %v7366 = vld [vmem:[#allocation25 + $0x1d0] sm:$0xf]
    %v7367 = vld [vmem:[#allocation25 + $0x1d4] sm:$0xff]
    %v7368 = vld [vmem:[#allocation25 + $0x1dc] sm:$0xf]
    %v7369 = vld [vmem:[#allocation25 + $0x1e0] sm:$0xff]
    %v7370 = vld [vmem:[#allocation25 + $0x1e8] sm:$0xf]
    %v7371 = vld [vmem:[#allocation25 + $0x1ec] sm:$0xff]
    %v7372 = vld [vmem:[#allocation25 + $0x1f4] sm:$0xf]
    %v7373 = vld [vmem:[#allocation25 + $0x1f8] sm:$0xff]
    %v7374 = vld [vmem:[#allocation25 + $0x200] sm:$0xf]
    %v7375 = vld [vmem:[#allocation25 + $0x204] sm:$0xff]
    %v7376 = vld [vmem:[#allocation25 + $0x20c] sm:$0xf]
    %v7377 = vld [vmem:[#allocation25 + $0x210] sm:$0xff]
    %v7378 = vld [vmem:[#allocation25 + $0x218] sm:$0xf]
    %v7379 = vld [vmem:[#allocation25 + $0x21c] sm:$0xff]
    %v7380 = vld [vmem:[#allocation25 + $0x224] sm:$0xf]
    %v7381 = vld [vmem:[#allocation25 + $0x228] sm:$0xff]
    %v7382 = vld [vmem:[#allocation25 + $0x230] sm:$0xf]
    %v7383 = vld [vmem:[#allocation25 + $0x234] sm:$0xff]
    %v7384 = vld [vmem:[#allocation25 + $0x23c] sm:$0xf]
    %v7385 = vld [vmem:[%s53] sm:$0x7]
    %v7387 = vlaneseq
    %v7388 = vshrl.u32 %v7387, 7
    %v7389 = vsub.s32 0, %v7388
    %v7390 = vrot.slane %v7385, %v7389
    %v7391 = vlaneseq
    %v7392 = vshrl.u32 %v7391, 7
    %v7393 = vsub.s32 1, %v7392
    %v7394 = vrot.slane %v7385, %v7393
    %v7395 = vlaneseq
    %v7396 = vshrl.u32 %v7395, 7
    %v7397 = vsub.s32 2, %v7396
    %v7398 = vrot.slane %v7385, %v7397
    %v7498 = vunpack.c.l.b16 %v7289
    %v7499 = vunpack.c.h.b16 %v7289
    %v7500 = vunpack.c.l.b16 %v7290
    %v7501 = vunpack.c.l.b16 %v7291
    %v7502 = vunpack.c.h.b16 %v7291
    %v7503 = vunpack.c.l.b16 %v7292
    %v7504 = vunpack.c.l.b16 %v7293
    %v7505 = vunpack.c.h.b16 %v7293
    %v7506 = vunpack.c.l.b16 %v7294
    %v7507 = vunpack.c.l.b16 %v7295
    %v7508 = vunpack.c.h.b16 %v7295
    %v7509 = vunpack.c.l.b16 %v7296
    %v7510 = vunpack.c.l.b16 %v7297
    %v7511 = vunpack.c.h.b16 %v7297
    %v7512 = vunpack.c.l.b16 %v7298
    %v7513 = vunpack.c.l.b16 %v7299
    %v7514 = vunpack.c.h.b16 %v7299
    %v7515 = vunpack.c.l.b16 %v7300
    %v7516 = vunpack.c.l.b16 %v7301
    %v7517 = vunpack.c.h.b16 %v7301
    %v7518 = vunpack.c.l.b16 %v7302
    %v7519 = vunpack.c.l.b16 %v7303
    %v7520 = vunpack.c.h.b16 %v7303
    %v7521 = vunpack.c.l.b16 %v7304
    %v7522 = vunpack.c.l.b16 %v7305
    %v7523 = vunpack.c.h.b16 %v7305
    %v7524 = vunpack.c.l.b16 %v7306
    %v7525 = vunpack.c.l.b16 %v7307
    %v7526 = vunpack.c.h.b16 %v7307
    %v7527 = vunpack.c.l.b16 %v7308
    %v7528 = vunpack.c.l.b16 %v7309
    %v7529 = vunpack.c.h.b16 %v7309
    %v7530 = vunpack.c.l.b16 %v7310
    %v7531 = vunpack.c.l.b16 %v7311
    %v7532 = vunpack.c.h.b16 %v7311
    %v7533 = vunpack.c.l.b16 %v7312
    %v7534 = vunpack.c.l.b16 %v7313
    %v7535 = vunpack.c.h.b16 %v7313
    %v7536 = vunpack.c.l.b16 %v7314
    %v7537 = vunpack.c.l.b16 %v7315
    %v7538 = vunpack.c.h.b16 %v7315
    %v7539 = vunpack.c.l.b16 %v7316
    %v7540 = vunpack.c.l.b16 %v7317
    %v7541 = vunpack.c.h.b16 %v7317
    %v7542 = vunpack.c.l.b16 %v7318
    %v7543 = vunpack.c.l.b16 %v7319
    %v7544 = vunpack.c.h.b16 %v7319
    %v7545 = vunpack.c.l.b16 %v7320
    %v7546 = vunpack.c.l.b16 %v7321
    %v7547 = vunpack.c.h.b16 %v7321
    %v7548 = vunpack.c.l.b16 %v7322
    %v7549 = vunpack.c.l.b16 %v7323
    %v7550 = vunpack.c.h.b16 %v7323
    %v7551 = vunpack.c.l.b16 %v7324
    %v7552 = vunpack.c.l.b16 %v7325
    %v7553 = vunpack.c.h.b16 %v7325
    %v7554 = vunpack.c.l.b16 %v7326
    %v7555 = vunpack.c.l.b16 %v7327
    %v7556 = vunpack.c.h.b16 %v7327
    %v7557 = vunpack.c.l.b16 %v7328
    %v7558 = vunpack.c.l.b16 %v7329
    %v7559 = vunpack.c.h.b16 %v7329
    %v7560 = vunpack.c.l.b16 %v7330
    %v7561 = vunpack.c.l.b16 %v7331
    %v7562 = vunpack.c.h.b16 %v7331
    %v7563 = vunpack.c.l.b16 %v7332
    %v7564 = vunpack.c.l.b16 %v7333
    %v7565 = vunpack.c.h.b16 %v7333
    %v7566 = vunpack.c.l.b16 %v7334
    %v7567 = vunpack.c.l.b16 %v7335
    %v7568 = vunpack.c.h.b16 %v7335
    %v7569 = vunpack.c.l.b16 %v7336
    %v7570 = vunpack.c.l.b16 %v7337
    %v7571 = vunpack.c.h.b16 %v7337
    %v7572 = vunpack.c.l.b16 %v7338
    %v7573 = vunpack.c.l.b16 %v7339
    %v7574 = vunpack.c.h.b16 %v7339
    %v7575 = vunpack.c.l.b16 %v7340
    %v7576 = vunpack.c.l.b16 %v7341
    %v7577 = vunpack.c.h.b16 %v7341
    %v7578 = vunpack.c.l.b16 %v7342
    %v7579 = vunpack.c.l.b16 %v7343
    %v7580 = vunpack.c.h.b16 %v7343
    %v7581 = vunpack.c.l.b16 %v7344
    %v7582 = vunpack.c.l.b16 %v7345
    %v7583 = vunpack.c.h.b16 %v7345
    %v7584 = vunpack.c.l.b16 %v7346
    %v7585 = vunpack.c.l.b16 %v7347
    %v7586 = vunpack.c.h.b16 %v7347
    %v7587 = vunpack.c.l.b16 %v7348
    %v7588 = vunpack.c.l.b16 %v7349
    %v7589 = vunpack.c.h.b16 %v7349
    %v7590 = vunpack.c.l.b16 %v7350
    %v7591 = vunpack.c.l.b16 %v7351
    %v7592 = vunpack.c.h.b16 %v7351
    %v7593 = vunpack.c.l.b16 %v7352
    %v7594 = vunpack.c.l.b16 %v7353
    %v7595 = vunpack.c.h.b16 %v7353
    %v7596 = vunpack.c.l.b16 %v7354
    %v7597 = vunpack.c.l.b16 %v7355
    %v7598 = vunpack.c.h.b16 %v7355
    %v7599 = vunpack.c.l.b16 %v7356
    %v7600 = vunpack.c.l.b16 %v7357
    %v7601 = vunpack.c.h.b16 %v7357
    %v7602 = vunpack.c.l.b16 %v7358
    %v7603 = vunpack.c.l.b16 %v7359
    %v7604 = vunpack.c.h.b16 %v7359
    %v7605 = vunpack.c.l.b16 %v7360
    %v7606 = vunpack.c.l.b16 %v7361
    %v7607 = vunpack.c.h.b16 %v7361
    %v7608 = vunpack.c.l.b16 %v7362
    %v7609 = vunpack.c.l.b16 %v7363
    %v7610 = vunpack.c.h.b16 %v7363
    %v7611 = vunpack.c.l.b16 %v7364
    %v7612 = vunpack.c.l.b16 %v7365
    %v7613 = vunpack.c.h.b16 %v7365
    %v7614 = vunpack.c.l.b16 %v7366
    %v7615 = vunpack.c.l.b16 %v7367
    %v7616 = vunpack.c.h.b16 %v7367
    %v7617 = vunpack.c.l.b16 %v7368
    %v7618 = vunpack.c.l.b16 %v7369
    %v7619 = vunpack.c.h.b16 %v7369
    %v7620 = vunpack.c.l.b16 %v7370
    %v7621 = vunpack.c.l.b16 %v7371
    %v7622 = vunpack.c.h.b16 %v7371
    %v7623 = vunpack.c.l.b16 %v7372
    %v7624 = vunpack.c.l.b16 %v7373
    %v7625 = vunpack.c.h.b16 %v7373
    %v7626 = vunpack.c.l.b16 %v7374
    %v7627 = vunpack.c.l.b16 %v7375
    %v7628 = vunpack.c.h.b16 %v7375
    %v7629 = vunpack.c.l.b16 %v7376
    %v7630 = vunpack.c.l.b16 %v7377
    %v7631 = vunpack.c.h.b16 %v7377
    %v7632 = vunpack.c.l.b16 %v7378
    %v7633 = vunpack.c.l.b16 %v7379
    %v7634 = vunpack.c.h.b16 %v7379
    %v7635 = vunpack.c.l.b16 %v7380
    %v7636 = vunpack.c.l.b16 %v7381
    %v7637 = vunpack.c.h.b16 %v7381
    %v7638 = vunpack.c.l.b16 %v7382
    %v7639 = vunpack.c.l.b16 %v7383
    %v7640 = vunpack.c.h.b16 %v7383
    %v7641 = vunpack.c.l.b16 %v7384
    %v7642 = vpack.c.b16 %v7501, %v7498
    %v7643 = vpack.c.b16 %v7502, %v7499
    %v7644 = vpack.c.b16 %v7503, %v7500
    %v7645 = vpack.c.b16 %v7507, %v7504
    %v7646 = vpack.c.b16 %v7508, %v7505
    %v7647 = vpack.c.b16 %v7509, %v7506
    %v7648 = vpack.c.b16 %v7513, %v7510
    %v7649 = vpack.c.b16 %v7514, %v7511
    %v7650 = vpack.c.b16 %v7515, %v7512
    %v7651 = vpack.c.b16 %v7519, %v7516
    %v7652 = vpack.c.b16 %v7520, %v7517
    %v7653 = vpack.c.b16 %v7521, %v7518
    %v7654 = vpack.c.b16 %v7525, %v7522
    %v7655 = vpack.c.b16 %v7526, %v7523
    %v7656 = vpack.c.b16 %v7527, %v7524
    %v7657 = vpack.c.b16 %v7531, %v7528
    %v7658 = vpack.c.b16 %v7532, %v7529
    %v7659 = vpack.c.b16 %v7533, %v7530
    %v7660 = vpack.c.b16 %v7537, %v7534
    %v7661 = vpack.c.b16 %v7538, %v7535
    %v7662 = vpack.c.b16 %v7539, %v7536
    %v7663 = vpack.c.b16 %v7543, %v7540
    %v7664 = vpack.c.b16 %v7544, %v7541
    %v7665 = vpack.c.b16 %v7545, %v7542
    %v7666 = vpack.c.b16 %v7549, %v7546
    %v7667 = vpack.c.b16 %v7550, %v7547
    %v7668 = vpack.c.b16 %v7551, %v7548
    %v7669 = vpack.c.b16 %v7555, %v7552
    %v7670 = vpack.c.b16 %v7556, %v7553
    %v7671 = vpack.c.b16 %v7557, %v7554
    %v7672 = vpack.c.b16 %v7561, %v7558
    %v7673 = vpack.c.b16 %v7562, %v7559
    %v7674 = vpack.c.b16 %v7563, %v7560
    %v7675 = vpack.c.b16 %v7567, %v7564
    %v7676 = vpack.c.b16 %v7568, %v7565
    %v7677 = vpack.c.b16 %v7569, %v7566
    %v7678 = vpack.c.b16 %v7573, %v7570
    %v7679 = vpack.c.b16 %v7574, %v7571
    %v7680 = vpack.c.b16 %v7575, %v7572
    %v7681 = vpack.c.b16 %v7579, %v7576
    %v7682 = vpack.c.b16 %v7580, %v7577
    %v7683 = vpack.c.b16 %v7581, %v7578
    %v7684 = vpack.c.b16 %v7585, %v7582
    %v7685 = vpack.c.b16 %v7586, %v7583
    %v7686 = vpack.c.b16 %v7587, %v7584
    %v7687 = vpack.c.b16 %v7591, %v7588
    %v7688 = vpack.c.b16 %v7592, %v7589
    %v7689 = vpack.c.b16 %v7593, %v7590
    %v7690 = vpack.c.b16 %v7597, %v7594
    %v7691 = vpack.c.b16 %v7598, %v7595
    %v7692 = vpack.c.b16 %v7599, %v7596
    %v7693 = vpack.c.b16 %v7603, %v7600
    %v7694 = vpack.c.b16 %v7604, %v7601
    %v7695 = vpack.c.b16 %v7605, %v7602
    %v7696 = vpack.c.b16 %v7609, %v7606
    %v7697 = vpack.c.b16 %v7610, %v7607
    %v7698 = vpack.c.b16 %v7611, %v7608
    %v7699 = vpack.c.b16 %v7615, %v7612
    %v7700 = vpack.c.b16 %v7616, %v7613
    %v7701 = vpack.c.b16 %v7617, %v7614
    %v7702 = vpack.c.b16 %v7621, %v7618
    %v7703 = vpack.c.b16 %v7622, %v7619
    %v7704 = vpack.c.b16 %v7623, %v7620
    %v7705 = vpack.c.b16 %v7627, %v7624
    %v7706 = vpack.c.b16 %v7628, %v7625
    %v7707 = vpack.c.b16 %v7629, %v7626
    %v7708 = vpack.c.b16 %v7633, %v7630
    %v7709 = vpack.c.b16 %v7634, %v7631
    %v7710 = vpack.c.b16 %v7635, %v7632
    %v7711 = vpack.c.b16 %v7639, %v7636
    %v7712 = vpack.c.b16 %v7640, %v7637
    %v7713 = vpack.c.b16 %v7641, %v7638
    %7786 = vmatprep.subr.bf16.mxu0 %v7664
    %7787 = vmatpush1.bf16.msra.mxu0 %v7663
    %7788 = vmatprep.subr.bf16.mxu0 %v7661
    %7789 = vmatpush1.bf16.msra.mxu0 %v7660
    %7790 = vmatprep.subr.bf16.mxu0 %v7658
    %7791 = vmatpush1.bf16.msra.mxu0 %v7657
    %7792 = vmatprep.subr.bf16.mxu0 %v7655
    %7793 = vmatpush1.bf16.msra.mxu0 %v7654
    %7794 = vmatprep.subr.bf16.mxu0 %v7652
    %7795 = vmatpush1.bf16.msra.mxu0 %v7651
    %7796 = vmatprep.subr.bf16.mxu0 %v7649
    %7797 = vmatpush1.bf16.msra.mxu0 %v7648
    %7798 = vmatprep.subr.bf16.mxu0 %v7646
    %7799 = vmatpush1.bf16.msra.mxu0 %v7645
    %7800 = vmatprep.subr.bf16.mxu0 %v7643
    %7801 = vmatpush1.bf16.msra.mxu0 %v7642
    %7802 = vmatprep.subr.bf16.mxu0 %v7688
    %7803 = vmatpush2.bf16.msra.mxu0 %v7687
    %7804 = vmatprep.subr.bf16.mxu0 %v7685
    %7805 = vmatpush2.bf16.msra.mxu0 %v7684
    %7806 = vmatprep.subr.bf16.mxu0 %v7682
    %7807 = vmatpush2.bf16.msra.mxu0 %v7681
    %7808 = vmatprep.subr.bf16.mxu0 %v7679
    %7809 = vmatpush2.bf16.msra.mxu0 %v7678
    %7810 = vmatprep.subr.bf16.mxu0 %v7676
    %7811 = vmatpush2.bf16.msra.mxu0 %v7675
    %7812 = vmatprep.subr.bf16.mxu0 %v7673
    %7813 = vmatpush2.bf16.msra.mxu0 %v7672
    %7814 = vmatprep.subr.bf16.mxu0 %v7670
    %7815 = vmatpush2.bf16.msra.mxu0 %v7669
    %7816 = vmatprep.subr.bf16.mxu0 %v7667
    %7817 = vmatpush2.bf16.msra.mxu0 %v7666
    %7818 = vmatprep.mubr.bf16.mxu0 %v7287
    %7819 = vmatmul.mubr.bf16.gmra.mxu0 %v7286
    %v7820 = vpop.f32.mrf.mxu0
    %v7821 = vadd.f32 %v7390, %v7820
    %v7822 = vpop.f32.mrf.mxu0
    %v7823 = vadd.f32 %v7394, %v7822
    %v7824 = vpop.f32.mrf.mxu0
    %v7825 = vpop.f32.mrf.mxu0
    %7826 = vdwg.mxu0
    %7827 = vmatprep.subr.bf16.mxu0 %v7712
    %7828 = vmatpush1.bf16.msra.mxu0 %v7711
    %7829 = vmatprep.subr.bf16.mxu0 %v7709
    %7830 = vmatpush1.bf16.msra.mxu0 %v7708
    %7831 = vmatprep.subr.bf16.mxu0 %v7706
    %7832 = vmatpush1.bf16.msra.mxu0 %v7705
    %7833 = vmatprep.subr.bf16.mxu0 %v7703
    %7834 = vmatpush1.bf16.msra.mxu0 %v7702
    %7835 = vmatprep.subr.bf16.mxu0 %v7700
    %7836 = vmatpush1.bf16.msra.mxu0 %v7699
    %7837 = vmatprep.subr.bf16.mxu0 %v7697
    %7838 = vmatpush1.bf16.msra.mxu0 %v7696
    %7839 = vmatprep.subr.bf16.mxu0 %v7694
    %7840 = vmatpush1.bf16.msra.mxu0 %v7693
    %7841 = vmatprep.subr.bf16.mxu0 %v7691
    %7842 = vmatpush1.bf16.msra.mxu0 %v7690
    %7843 = vmatprep.subr.bf16.mxu0 0
    %7844 = vmatpush2.bf16.msra.mxu0 0
    %7845 = vmatprep.subr.bf16.mxu0 0
    %7846 = vmatpush2.bf16.msra.mxu0 0
    %7847 = vmatprep.subr.bf16.mxu0 0
    %7848 = vmatpush2.bf16.msra.mxu0 0
    %7849 = vmatprep.subr.bf16.mxu0 0
    %7850 = vmatpush2.bf16.msra.mxu0 0
    %7851 = vmatprep.subr.bf16.mxu0 0
    %7852 = vmatpush2.bf16.msra.mxu0 0
    %7853 = vmatprep.subr.bf16.mxu0 0
    %7854 = vmatpush2.bf16.msra.mxu0 0
    %7855 = vmatprep.subr.bf16.mxu0 0
    %7856 = vmatpush2.bf16.msra.mxu0 0
    %7857 = vmatprep.subr.bf16.mxu0 0
    %7858 = vmatpush2.bf16.msra.mxu0 0
    %7859 = vmatprep.mubr.bf16.mxu0 0
    %7860 = vmatmul.mubr.bf16.gmra.mxu0 %v7288
    %v7861 = vpop.f32.mrf.mxu0
    %v7862 = vadd.f32 %v7821, %v7861
    %v7863 = vpop.f32.mrf.mxu0
    %v7864 = vadd.f32 %v7823, %v7863
    %v7865 = vpop.f32.mrf.mxu0
    %v7866 = vpop.f32.mrf.mxu0
    %7867 = vdwg.mxu0
    %7868 = vmatprep.subr.bf16.mxu0 0
    %7869 = vmatpush1.bf16.msra.mxu0 %v7665
    %7870 = vmatprep.subr.bf16.mxu0 0
    %7871 = vmatpush1.bf16.msra.mxu0 %v7662
    %7872 = vmatprep.subr.bf16.mxu0 0
    %7873 = vmatpush1.bf16.msra.mxu0 %v7659
    %7874 = vmatprep.subr.bf16.mxu0 0
    %7875 = vmatpush1.bf16.msra.mxu0 %v7656
    %7876 = vmatprep.subr.bf16.mxu0 0
    %7877 = vmatpush1.bf16.msra.mxu0 %v7653
    %7878 = vmatprep.subr.bf16.mxu0 0
    %7879 = vmatpush1.bf16.msra.mxu0 %v7650
    %7880 = vmatprep.subr.bf16.mxu0 0
    %7881 = vmatpush1.bf16.msra.mxu0 %v7647
    %7882 = vmatprep.subr.bf16.mxu0 0
    %7883 = vmatpush1.bf16.msra.mxu0 %v7644
    %7884 = vmatprep.subr.bf16.mxu0 0
    %7885 = vmatpush2.bf16.msra.mxu0 %v7689
    %7886 = vmatprep.subr.bf16.mxu0 0
    %7887 = vmatpush2.bf16.msra.mxu0 %v7686
    %7888 = vmatprep.subr.bf16.mxu0 0
    %7889 = vmatpush2.bf16.msra.mxu0 %v7683
    %7890 = vmatprep.subr.bf16.mxu0 0
    %7891 = vmatpush2.bf16.msra.mxu0 %v7680
    %7892 = vmatprep.subr.bf16.mxu0 0
    %7893 = vmatpush2.bf16.msra.mxu0 %v7677
    %7894 = vmatprep.subr.bf16.mxu0 0
    %7895 = vmatpush2.bf16.msra.mxu0 %v7674
    %7896 = vmatprep.subr.bf16.mxu0 0
    %7897 = vmatpush2.bf16.msra.mxu0 %v7671
    %7898 = vmatprep.subr.bf16.mxu0 0
    %7899 = vmatpush2.bf16.msra.mxu0 %v7668
    %7900 = vmatprep.mubr.bf16.mxu0 %v7287
    %7901 = vmatmul.mubr.bf16.gmra.mxu0 %v7286
    %v7902 = vpop.f32.mrf.mxu0
    %v7903 = vadd.f32 %v7398, %v7902
    %v7904 = vpop.f32.mrf.mxu0
    %v7905 = vpop.f32.mrf.mxu0
    %v7906 = vpop.f32.mrf.mxu0
    %7907 = vdwg.mxu0
    %7908 = vmatprep.subr.bf16.mxu0 0
    %7909 = vmatpush1.bf16.msra.mxu0 %v7713
    %7910 = vmatprep.subr.bf16.mxu0 0
    %7911 = vmatpush1.bf16.msra.mxu0 %v7710
    %7912 = vmatprep.subr.bf16.mxu0 0
    %7913 = vmatpush1.bf16.msra.mxu0 %v7707
    %7914 = vmatprep.subr.bf16.mxu0 0
    %7915 = vmatpush1.bf16.msra.mxu0 %v7704
    %7916 = vmatprep.subr.bf16.mxu0 0
    %7917 = vmatpush1.bf16.msra.mxu0 %v7701
    %7918 = vmatprep.subr.bf16.mxu0 0
    %7919 = vmatpush1.bf16.msra.mxu0 %v7698
    %7920 = vmatprep.subr.bf16.mxu0 0
    %7921 = vmatpush1.bf16.msra.mxu0 %v7695
    %7922 = vmatprep.subr.bf16.mxu0 0
    %7923 = vmatpush1.bf16.msra.mxu0 %v7692
    %7924 = vmatprep.subr.bf16.mxu0 0
    %7925 = vmatpush2.bf16.msra.mxu0 0
    %7926 = vmatprep.subr.bf16.mxu0 0
    %7927 = vmatpush2.bf16.msra.mxu0 0
    %7928 = vmatprep.subr.bf16.mxu0 0
    %7929 = vmatpush2.bf16.msra.mxu0 0
    %7930 = vmatprep.subr.bf16.mxu0 0
    %7931 = vmatpush2.bf16.msra.mxu0 0
    %7932 = vmatprep.subr.bf16.mxu0 0
    %7933 = vmatpush2.bf16.msra.mxu0 0
    %7934 = vmatprep.subr.bf16.mxu0 0
    %7935 = vmatpush2.bf16.msra.mxu0 0
    %7936 = vmatprep.subr.bf16.mxu0 0
    %7937 = vmatpush2.bf16.msra.mxu0 0
    %7938 = vmatprep.subr.bf16.mxu0 0
    %7939 = vmatpush2.bf16.msra.mxu0 0
    %7940 = vmatprep.mubr.bf16.mxu0 0
    %7941 = vmatmul.mubr.bf16.gmra.mxu0 %v7288
    %v7942 = vpop.f32.mrf.mxu0
    %v7943 = vadd.f32 %v7903, %v7942
    %v7944 = vpop.f32.mrf.mxu0
    %v7945 = vpop.f32.mrf.mxu0
    %v7946 = vpop.f32.mrf.mxu0
    %7947 = vdwg.mxu0
    %v7948 = vpack.c.bf16 %v7862, %v7862
    %v7949 = vpack.c.bf16 %v7864, %v7864
    %v7950 = vpack.c.bf16 %v7943, %v7943
    %v7951 = vld [vmem:[#allocation26] sm:$0xff]
    %v7952 = vld [vmem:[#allocation26 + $0x8] sm:$0xf]
    %v7953 = vld [vmem:[#allocation26 + $0xc] sm:$0xff]
    %v7954 = vld [vmem:[#allocation26 + $0x14] sm:$0xf]
    %v7955 = vld [vmem:[#allocation26 + $0x18] sm:$0xff]
    %v7956 = vld [vmem:[#allocation26 + $0x20] sm:$0xf]
    %v7957 = vld [vmem:[#allocation26 + $0x24] sm:$0xff]
    %v7958 = vld [vmem:[#allocation26 + $0x2c] sm:$0xf]
    %v7959 = vld [vmem:[#allocation26 + $0x30] sm:$0xff]
    %v7960 = vld [vmem:[#allocation26 + $0x38] sm:$0xf]
    %v7961 = vld [vmem:[#allocation26 + $0x3c] sm:$0xff]
    %v7962 = vld [vmem:[#allocation26 + $0x44] sm:$0xf]
    %v7963 = vld [vmem:[#allocation26 + $0x48] sm:$0xff]
    %v7964 = vld [vmem:[#allocation26 + $0x50] sm:$0xf]
    %v7965 = vld [vmem:[#allocation26 + $0x54] sm:$0xff]
    %v7966 = vld [vmem:[#allocation26 + $0x5c] sm:$0xf]
    %v7967 = vld [vmem:[#allocation26 + $0x60] sm:$0xff]
    %v7968 = vld [vmem:[#allocation26 + $0x68] sm:$0xf]
    %v7969 = vld [vmem:[#allocation26 + $0x6c] sm:$0xff]
    %v7970 = vld [vmem:[#allocation26 + $0x74] sm:$0xf]
    %v7971 = vld [vmem:[#allocation26 + $0x78] sm:$0xff]
    %v7972 = vld [vmem:[#allocation26 + $0x80] sm:$0xf]
    %v7973 = vld [vmem:[#allocation26 + $0x84] sm:$0xff]
    %v7974 = vld [vmem:[#allocation26 + $0x8c] sm:$0xf]
    %v7975 = vld [vmem:[#allocation26 + $0x90] sm:$0xff]
    %v7976 = vld [vmem:[#allocation26 + $0x98] sm:$0xf]
    %v7977 = vld [vmem:[#allocation26 + $0x9c] sm:$0xff]
    %v7978 = vld [vmem:[#allocation26 + $0xa4] sm:$0xf]
    %v7979 = vld [vmem:[#allocation26 + $0xa8] sm:$0xff]
    %v7980 = vld [vmem:[#allocation26 + $0xb0] sm:$0xf]
    %v7981 = vld [vmem:[#allocation26 + $0xb4] sm:$0xff]
    %v7982 = vld [vmem:[#allocation26 + $0xbc] sm:$0xf]
    %v7983 = vld [vmem:[#allocation26 + $0xc0] sm:$0xff]
    %v7984 = vld [vmem:[#allocation26 + $0xc8] sm:$0xf]
    %v7985 = vld [vmem:[#allocation26 + $0xcc] sm:$0xff]
    %v7986 = vld [vmem:[#allocation26 + $0xd4] sm:$0xf]
    %v7987 = vld [vmem:[#allocation26 + $0xd8] sm:$0xff]
    %v7988 = vld [vmem:[#allocation26 + $0xe0] sm:$0xf]
    %v7989 = vld [vmem:[#allocation26 + $0xe4] sm:$0xff]
    %v7990 = vld [vmem:[#allocation26 + $0xec] sm:$0xf]
    %v7991 = vld [vmem:[#allocation26 + $0xf0] sm:$0xff]
    %v7992 = vld [vmem:[#allocation26 + $0xf8] sm:$0xf]
    %v7993 = vld [vmem:[#allocation26 + $0xfc] sm:$0xff]
    %v7994 = vld [vmem:[#allocation26 + $0x104] sm:$0xf]
    %v7995 = vld [vmem:[#allocation26 + $0x108] sm:$0xff]
    %v7996 = vld [vmem:[#allocation26 + $0x110] sm:$0xf]
    %v7997 = vld [vmem:[#allocation26 + $0x114] sm:$0xff]
    %v7998 = vld [vmem:[#allocation26 + $0x11c] sm:$0xf]
    %v7999 = vld [vmem:[#allocation26 + $0x120] sm:$0xff]
    %v8000 = vld [vmem:[#allocation26 + $0x128] sm:$0xf]
    %v8001 = vld [vmem:[#allocation26 + $0x12c] sm:$0xff]
    %v8002 = vld [vmem:[#allocation26 + $0x134] sm:$0xf]
    %v8003 = vld [vmem:[#allocation26 + $0x138] sm:$0xff]
    %v8004 = vld [vmem:[#allocation26 + $0x140] sm:$0xf]
    %v8005 = vld [vmem:[#allocation26 + $0x144] sm:$0xff]
    %v8006 = vld [vmem:[#allocation26 + $0x14c] sm:$0xf]
    %v8007 = vld [vmem:[#allocation26 + $0x150] sm:$0xff]
    %v8008 = vld [vmem:[#allocation26 + $0x158] sm:$0xf]
    %v8009 = vld [vmem:[#allocation26 + $0x15c] sm:$0xff]
    %v8010 = vld [vmem:[#allocation26 + $0x164] sm:$0xf]
    %v8011 = vld [vmem:[#allocation26 + $0x168] sm:$0xff]
    %v8012 = vld [vmem:[#allocation26 + $0x170] sm:$0xf]
    %v8013 = vld [vmem:[#allocation26 + $0x174] sm:$0xff]
    %v8014 = vld [vmem:[#allocation26 + $0x17c] sm:$0xf]
    %v8015 = vld [vmem:[#allocation26 + $0x180] sm:$0xff]
    %v8016 = vld [vmem:[#allocation26 + $0x188] sm:$0xf]
    %v8017 = vld [vmem:[#allocation26 + $0x18c] sm:$0xff]
    %v8018 = vld [vmem:[#allocation26 + $0x194] sm:$0xf]
    %v8019 = vld [vmem:[#allocation26 + $0x198] sm:$0xff]
    %v8020 = vld [vmem:[#allocation26 + $0x1a0] sm:$0xf]
    %v8021 = vld [vmem:[#allocation26 + $0x1a4] sm:$0xff]
    %v8022 = vld [vmem:[#allocation26 + $0x1ac] sm:$0xf]
    %v8023 = vld [vmem:[#allocation26 + $0x1b0] sm:$0xff]
    %v8024 = vld [vmem:[#allocation26 + $0x1b8] sm:$0xf]
    %v8025 = vld [vmem:[#allocation26 + $0x1bc] sm:$0xff]
    %v8026 = vld [vmem:[#allocation26 + $0x1c4] sm:$0xf]
    %v8027 = vld [vmem:[#allocation26 + $0x1c8] sm:$0xff]
    %v8028 = vld [vmem:[#allocation26 + $0x1d0] sm:$0xf]
    %v8029 = vld [vmem:[#allocation26 + $0x1d4] sm:$0xff]
    %v8030 = vld [vmem:[#allocation26 + $0x1dc] sm:$0xf]
    %v8031 = vld [vmem:[#allocation26 + $0x1e0] sm:$0xff]
    %v8032 = vld [vmem:[#allocation26 + $0x1e8] sm:$0xf]
    %v8033 = vld [vmem:[#allocation26 + $0x1ec] sm:$0xff]
    %v8034 = vld [vmem:[#allocation26 + $0x1f4] sm:$0xf]
    %v8035 = vld [vmem:[#allocation26 + $0x1f8] sm:$0xff]
    %v8036 = vld [vmem:[#allocation26 + $0x200] sm:$0xf]
    %v8037 = vld [vmem:[#allocation26 + $0x204] sm:$0xff]
    %v8038 = vld [vmem:[#allocation26 + $0x20c] sm:$0xf]
    %v8039 = vld [vmem:[#allocation26 + $0x210] sm:$0xff]
    %v8040 = vld [vmem:[#allocation26 + $0x218] sm:$0xf]
    %v8041 = vld [vmem:[#allocation26 + $0x21c] sm:$0xff]
    %v8042 = vld [vmem:[#allocation26 + $0x224] sm:$0xf]
    %v8043 = vld [vmem:[#allocation26 + $0x228] sm:$0xff]
    %v8044 = vld [vmem:[#allocation26 + $0x230] sm:$0xf]
    %v8045 = vld [vmem:[#allocation26 + $0x234] sm:$0xff]
    %v8046 = vld [vmem:[#allocation26 + $0x23c] sm:$0xf]
    %v8047 = vld [vmem:[#allocation26 + $0x240] sm:$0xff]
    %v8048 = vld [vmem:[#allocation26 + $0x248] sm:$0xf]
    %v8049 = vld [vmem:[#allocation26 + $0x24c] sm:$0xff]
    %v8050 = vld [vmem:[#allocation26 + $0x254] sm:$0xf]
    %v8051 = vld [vmem:[#allocation26 + $0x258] sm:$0xff]
    %v8052 = vld [vmem:[#allocation26 + $0x260] sm:$0xf]
    %v8053 = vld [vmem:[#allocation26 + $0x264] sm:$0xff]
    %v8054 = vld [vmem:[#allocation26 + $0x26c] sm:$0xf]
    %v8055 = vld [vmem:[#allocation26 + $0x270] sm:$0xff]
    %v8056 = vld [vmem:[#allocation26 + $0x278] sm:$0xf]
    %v8057 = vld [vmem:[#allocation26 + $0x27c] sm:$0xff]
    %v8058 = vld [vmem:[#allocation26 + $0x284] sm:$0xf]
    %v8059 = vld [vmem:[#allocation26 + $0x288] sm:$0xff]
    %v8060 = vld [vmem:[#allocation26 + $0x290] sm:$0xf]
    %v8061 = vld [vmem:[#allocation26 + $0x294] sm:$0xff]
    %v8062 = vld [vmem:[#allocation26 + $0x29c] sm:$0xf]
    %v8063 = vld [vmem:[#allocation26 + $0x2a0] sm:$0xff]
    %v8064 = vld [vmem:[#allocation26 + $0x2a8] sm:$0xf]
    %v8065 = vld [vmem:[#allocation26 + $0x2ac] sm:$0xff]
    %v8066 = vld [vmem:[#allocation26 + $0x2b4] sm:$0xf]
    %v8067 = vld [vmem:[#allocation26 + $0x2b8] sm:$0xff]
    %v8068 = vld [vmem:[#allocation26 + $0x2c0] sm:$0xf]
    %v8069 = vld [vmem:[#allocation26 + $0x2c4] sm:$0xff]
    %v8070 = vld [vmem:[#allocation26 + $0x2cc] sm:$0xf]
    %v8071 = vld [vmem:[#allocation26 + $0x2d0] sm:$0xff]
    %v8072 = vld [vmem:[#allocation26 + $0x2d8] sm:$0xf]
    %v8073 = vld [vmem:[#allocation26 + $0x2dc] sm:$0xff]
    %v8074 = vld [vmem:[#allocation26 + $0x2e4] sm:$0xf]
    %v8075 = vld [vmem:[#allocation26 + $0x2e8] sm:$0xff]
    %v8076 = vld [vmem:[#allocation26 + $0x2f0] sm:$0xf]
    %v8077 = vld [vmem:[#allocation26 + $0x2f4] sm:$0xff]
    %v8078 = vld [vmem:[#allocation26 + $0x2fc] sm:$0xf]
    %v8079 = vld [vmem:[#allocation26 + $0x300] sm:$0xff]
    %v8080 = vld [vmem:[#allocation26 + $0x308] sm:$0xf]
    %v8081 = vld [vmem:[#allocation26 + $0x30c] sm:$0xff]
    %v8082 = vld [vmem:[#allocation26 + $0x314] sm:$0xf]
    %v8083 = vld [vmem:[#allocation26 + $0x318] sm:$0xff]
    %v8084 = vld [vmem:[#allocation26 + $0x320] sm:$0xf]
    %v8085 = vld [vmem:[#allocation26 + $0x324] sm:$0xff]
    %v8086 = vld [vmem:[#allocation26 + $0x32c] sm:$0xf]
    %v8087 = vld [vmem:[#allocation26 + $0x330] sm:$0xff]
    %v8088 = vld [vmem:[#allocation26 + $0x338] sm:$0xf]
    %v8089 = vld [vmem:[#allocation26 + $0x33c] sm:$0xff]
    %v8090 = vld [vmem:[#allocation26 + $0x344] sm:$0xf]
    %v8091 = vld [vmem:[#allocation26 + $0x348] sm:$0xff]
    %v8092 = vld [vmem:[#allocation26 + $0x350] sm:$0xf]
    %v8093 = vld [vmem:[#allocation26 + $0x354] sm:$0xff]
    %v8094 = vld [vmem:[#allocation26 + $0x35c] sm:$0xf]
    %v8095 = vld [vmem:[#allocation26 + $0x360] sm:$0xff]
    %v8096 = vld [vmem:[#allocation26 + $0x368] sm:$0xf]
    %v8097 = vld [vmem:[#allocation26 + $0x36c] sm:$0xff]
    %v8098 = vld [vmem:[#allocation26 + $0x374] sm:$0xf]
    %v8099 = vld [vmem:[#allocation26 + $0x378] sm:$0xff]
    %v8100 = vld [vmem:[#allocation26 + $0x380] sm:$0xf]
    %v8101 = vld [vmem:[#allocation26 + $0x384] sm:$0xff]
    %v8102 = vld [vmem:[#allocation26 + $0x38c] sm:$0xf]
    %v8103 = vld [vmem:[#allocation26 + $0x390] sm:$0xff]
    %v8104 = vld [vmem:[#allocation26 + $0x398] sm:$0xf]
    %v8105 = vld [vmem:[#allocation26 + $0x39c] sm:$0xff]
    %v8106 = vld [vmem:[#allocation26 + $0x3a4] sm:$0xf]
    %v8107 = vld [vmem:[#allocation26 + $0x3a8] sm:$0xff]
    %v8108 = vld [vmem:[#allocation26 + $0x3b0] sm:$0xf]
    %v8109 = vld [vmem:[#allocation26 + $0x3b4] sm:$0xff]
    %v8110 = vld [vmem:[#allocation26 + $0x3bc] sm:$0xf]
    %v8111 = vld [vmem:[#allocation26 + $0x3c0] sm:$0xff]
    %v8112 = vld [vmem:[#allocation26 + $0x3c8] sm:$0xf]
    %v8113 = vld [vmem:[#allocation26 + $0x3cc] sm:$0xff]
    %v8114 = vld [vmem:[#allocation26 + $0x3d4] sm:$0xf]
    %v8115 = vld [vmem:[#allocation26 + $0x3d8] sm:$0xff]
    %v8116 = vld [vmem:[#allocation26 + $0x3e0] sm:$0xf]
    %v8117 = vld [vmem:[#allocation26 + $0x3e4] sm:$0xff]
    %v8118 = vld [vmem:[#allocation26 + $0x3ec] sm:$0xf]
    %v8119 = vld [vmem:[#allocation26 + $0x3f0] sm:$0xff]
    %v8120 = vld [vmem:[#allocation26 + $0x3f8] sm:$0xf]
    %v8121 = vld [vmem:[#allocation26 + $0x3fc] sm:$0xff]
    %v8122 = vld [vmem:[#allocation26 + $0x404] sm:$0xf]
    %v8123 = vld [vmem:[#allocation26 + $0x408] sm:$0xff]
    %v8124 = vld [vmem:[#allocation26 + $0x410] sm:$0xf]
    %v8125 = vld [vmem:[#allocation26 + $0x414] sm:$0xff]
    %v8126 = vld [vmem:[#allocation26 + $0x41c] sm:$0xf]
    %v8127 = vld [vmem:[#allocation26 + $0x420] sm:$0xff]
    %v8128 = vld [vmem:[#allocation26 + $0x428] sm:$0xf]
    %v8129 = vld [vmem:[#allocation26 + $0x42c] sm:$0xff]
    %v8130 = vld [vmem:[#allocation26 + $0x434] sm:$0xf]
    %v8131 = vld [vmem:[#allocation26 + $0x438] sm:$0xff]
    %v8132 = vld [vmem:[#allocation26 + $0x440] sm:$0xf]
    %v8133 = vld [vmem:[#allocation26 + $0x444] sm:$0xff]
    %v8134 = vld [vmem:[#allocation26 + $0x44c] sm:$0xf]
    %v8135 = vld [vmem:[#allocation26 + $0x450] sm:$0xff]
    %v8136 = vld [vmem:[#allocation26 + $0x458] sm:$0xf]
    %v8137 = vld [vmem:[#allocation26 + $0x45c] sm:$0xff]
    %v8138 = vld [vmem:[#allocation26 + $0x464] sm:$0xf]
    %v8139 = vld [vmem:[#allocation26 + $0x468] sm:$0xff]
    %v8140 = vld [vmem:[#allocation26 + $0x470] sm:$0xf]
    %v8141 = vld [vmem:[#allocation26 + $0x474] sm:$0xff]
    %v8142 = vld [vmem:[#allocation26 + $0x47c] sm:$0xf]
    %v8239 = vunpack.c.l.b16 %v8047
    %v8240 = vunpack.c.h.b16 %v8047
    %v8241 = vunpack.c.l.b16 %v8048
    %v8242 = vunpack.c.l.b16 %v8049
    %v8243 = vunpack.c.h.b16 %v8049
    %v8244 = vunpack.c.l.b16 %v8050
    %v8245 = vunpack.c.l.b16 %v8051
    %v8246 = vunpack.c.h.b16 %v8051
    %v8247 = vunpack.c.l.b16 %v8052
    %v8248 = vunpack.c.l.b16 %v8053
    %v8249 = vunpack.c.h.b16 %v8053
    %v8250 = vunpack.c.l.b16 %v8054
    %v8251 = vunpack.c.l.b16 %v8055
    %v8252 = vunpack.c.h.b16 %v8055
    %v8253 = vunpack.c.l.b16 %v8056
    %v8254 = vunpack.c.l.b16 %v8057
    %v8255 = vunpack.c.h.b16 %v8057
    %v8256 = vunpack.c.l.b16 %v8058
    %v8257 = vunpack.c.l.b16 %v8059
    %v8258 = vunpack.c.h.b16 %v8059
    %v8259 = vunpack.c.l.b16 %v8060
    %v8260 = vunpack.c.l.b16 %v8061
    %v8261 = vunpack.c.h.b16 %v8061
    %v8262 = vunpack.c.l.b16 %v8062
    %v8263 = vunpack.c.l.b16 %v8063
    %v8264 = vunpack.c.h.b16 %v8063
    %v8265 = vunpack.c.l.b16 %v8064
    %v8266 = vunpack.c.l.b16 %v8065
    %v8267 = vunpack.c.h.b16 %v8065
    %v8268 = vunpack.c.l.b16 %v8066
    %v8269 = vunpack.c.l.b16 %v8067
    %v8270 = vunpack.c.h.b16 %v8067
    %v8271 = vunpack.c.l.b16 %v8068
    %v8272 = vunpack.c.l.b16 %v8069
    %v8273 = vunpack.c.h.b16 %v8069
    %v8274 = vunpack.c.l.b16 %v8070
    %v8275 = vunpack.c.l.b16 %v8071
    %v8276 = vunpack.c.h.b16 %v8071
    %v8277 = vunpack.c.l.b16 %v8072
    %v8278 = vunpack.c.l.b16 %v8073
    %v8279 = vunpack.c.h.b16 %v8073
    %v8280 = vunpack.c.l.b16 %v8074
    %v8281 = vunpack.c.l.b16 %v8075
    %v8282 = vunpack.c.h.b16 %v8075
    %v8283 = vunpack.c.l.b16 %v8076
    %v8284 = vunpack.c.l.b16 %v8077
    %v8285 = vunpack.c.h.b16 %v8077
    %v8286 = vunpack.c.l.b16 %v8078
    %v8287 = vunpack.c.l.b16 %v8079
    %v8288 = vunpack.c.h.b16 %v8079
    %v8289 = vunpack.c.l.b16 %v8080
    %v8290 = vunpack.c.l.b16 %v8081
    %v8291 = vunpack.c.h.b16 %v8081
    %v8292 = vunpack.c.l.b16 %v8082
    %v8293 = vunpack.c.l.b16 %v8083
    %v8294 = vunpack.c.h.b16 %v8083
    %v8295 = vunpack.c.l.b16 %v8084
    %v8296 = vunpack.c.l.b16 %v8085
    %v8297 = vunpack.c.h.b16 %v8085
    %v8298 = vunpack.c.l.b16 %v8086
    %v8299 = vunpack.c.l.b16 %v8087
    %v8300 = vunpack.c.h.b16 %v8087
    %v8301 = vunpack.c.l.b16 %v8088
    %v8302 = vunpack.c.l.b16 %v8089
    %v8303 = vunpack.c.h.b16 %v8089
    %v8304 = vunpack.c.l.b16 %v8090
    %v8305 = vunpack.c.l.b16 %v8091
    %v8306 = vunpack.c.h.b16 %v8091
    %v8307 = vunpack.c.l.b16 %v8092
    %v8308 = vunpack.c.l.b16 %v8093
    %v8309 = vunpack.c.h.b16 %v8093
    %v8310 = vunpack.c.l.b16 %v8094
    %v8311 = vunpack.c.l.b16 %v8095
    %v8312 = vunpack.c.h.b16 %v8095
    %v8313 = vunpack.c.l.b16 %v8096
    %v8314 = vunpack.c.l.b16 %v8097
    %v8315 = vunpack.c.h.b16 %v8097
    %v8316 = vunpack.c.l.b16 %v8098
    %v8317 = vunpack.c.l.b16 %v8099
    %v8318 = vunpack.c.h.b16 %v8099
    %v8319 = vunpack.c.l.b16 %v8100
    %v8320 = vunpack.c.l.b16 %v8101
    %v8321 = vunpack.c.h.b16 %v8101
    %v8322 = vunpack.c.l.b16 %v8102
    %v8323 = vunpack.c.l.b16 %v8103
    %v8324 = vunpack.c.h.b16 %v8103
    %v8325 = vunpack.c.l.b16 %v8104
    %v8326 = vunpack.c.l.b16 %v8105
    %v8327 = vunpack.c.h.b16 %v8105
    %v8328 = vunpack.c.l.b16 %v8106
    %v8329 = vunpack.c.l.b16 %v8107
    %v8330 = vunpack.c.h.b16 %v8107
    %v8331 = vunpack.c.l.b16 %v8108
    %v8332 = vunpack.c.l.b16 %v8109
    %v8333 = vunpack.c.h.b16 %v8109
    %v8334 = vunpack.c.l.b16 %v8110
    %v8335 = vunpack.c.l.b16 %v8111
    %v8336 = vunpack.c.h.b16 %v8111
    %v8337 = vunpack.c.l.b16 %v8112
    %v8338 = vunpack.c.l.b16 %v8113
    %v8339 = vunpack.c.h.b16 %v8113
    %v8340 = vunpack.c.l.b16 %v8114
    %v8341 = vunpack.c.l.b16 %v8115
    %v8342 = vunpack.c.h.b16 %v8115
    %v8343 = vunpack.c.l.b16 %v8116
    %v8344 = vunpack.c.l.b16 %v8117
    %v8345 = vunpack.c.h.b16 %v8117
    %v8346 = vunpack.c.l.b16 %v8118
    %v8347 = vunpack.c.l.b16 %v8119
    %v8348 = vunpack.c.h.b16 %v8119
    %v8349 = vunpack.c.l.b16 %v8120
    %v8350 = vunpack.c.l.b16 %v8121
    %v8351 = vunpack.c.h.b16 %v8121
    %v8352 = vunpack.c.l.b16 %v8122
    %v8353 = vunpack.c.l.b16 %v8123
    %v8354 = vunpack.c.h.b16 %v8123
    %v8355 = vunpack.c.l.b16 %v8124
    %v8356 = vunpack.c.l.b16 %v8125
    %v8357 = vunpack.c.h.b16 %v8125
    %v8358 = vunpack.c.l.b16 %v8126
    %v8359 = vunpack.c.l.b16 %v8127
    %v8360 = vunpack.c.h.b16 %v8127
    %v8361 = vunpack.c.l.b16 %v8128
    %v8362 = vunpack.c.l.b16 %v8129
    %v8363 = vunpack.c.h.b16 %v8129
    %v8364 = vunpack.c.l.b16 %v8130
    %v8365 = vunpack.c.l.b16 %v8131
    %v8366 = vunpack.c.h.b16 %v8131
    %v8367 = vunpack.c.l.b16 %v8132
    %v8368 = vunpack.c.l.b16 %v8133
    %v8369 = vunpack.c.h.b16 %v8133
    %v8370 = vunpack.c.l.b16 %v8134
    %v8371 = vunpack.c.l.b16 %v8135
    %v8372 = vunpack.c.h.b16 %v8135
    %v8373 = vunpack.c.l.b16 %v8136
    %v8374 = vunpack.c.l.b16 %v8137
    %v8375 = vunpack.c.h.b16 %v8137
    %v8376 = vunpack.c.l.b16 %v8138
    %v8377 = vunpack.c.l.b16 %v8139
    %v8378 = vunpack.c.h.b16 %v8139
    %v8379 = vunpack.c.l.b16 %v8140
    %v8380 = vunpack.c.l.b16 %v8141
    %v8381 = vunpack.c.h.b16 %v8141
    %v8382 = vunpack.c.l.b16 %v8142
    %v8383 = vpack.c.b16 %v8242, %v8239
    %v8384 = vpack.c.b16 %v8243, %v8240
    %v8385 = vpack.c.b16 %v8244, %v8241
    %v8386 = vpack.c.b16 %v8248, %v8245
    %v8387 = vpack.c.b16 %v8249, %v8246
    %v8388 = vpack.c.b16 %v8250, %v8247
    %v8389 = vpack.c.b16 %v8254, %v8251
    %v8390 = vpack.c.b16 %v8255, %v8252
    %v8391 = vpack.c.b16 %v8256, %v8253
    %v8392 = vpack.c.b16 %v8260, %v8257
    %v8393 = vpack.c.b16 %v8261, %v8258
    %v8394 = vpack.c.b16 %v8262, %v8259
    %v8395 = vpack.c.b16 %v8266, %v8263
    %v8396 = vpack.c.b16 %v8267, %v8264
    %v8397 = vpack.c.b16 %v8268, %v8265
    %v8398 = vpack.c.b16 %v8272, %v8269
    %v8399 = vpack.c.b16 %v8273, %v8270
    %v8400 = vpack.c.b16 %v8274, %v8271
    %v8401 = vpack.c.b16 %v8278, %v8275
    %v8402 = vpack.c.b16 %v8279, %v8276
    %v8403 = vpack.c.b16 %v8280, %v8277
    %v8404 = vpack.c.b16 %v8284, %v8281
    %v8405 = vpack.c.b16 %v8285, %v8282
    %v8406 = vpack.c.b16 %v8286, %v8283
    %v8407 = vpack.c.b16 %v8290, %v8287
    %v8408 = vpack.c.b16 %v8291, %v8288
    %v8409 = vpack.c.b16 %v8292, %v8289
    %v8410 = vpack.c.b16 %v8296, %v8293
    %v8411 = vpack.c.b16 %v8297, %v8294
    %v8412 = vpack.c.b16 %v8298, %v8295
    %v8413 = vpack.c.b16 %v8302, %v8299
    %v8414 = vpack.c.b16 %v8303, %v8300
    %v8415 = vpack.c.b16 %v8304, %v8301
    %v8416 = vpack.c.b16 %v8308, %v8305
    %v8417 = vpack.c.b16 %v8309, %v8306
    %v8418 = vpack.c.b16 %v8310, %v8307
    %v8419 = vpack.c.b16 %v8314, %v8311
    %v8420 = vpack.c.b16 %v8315, %v8312
    %v8421 = vpack.c.b16 %v8316, %v8313
    %v8422 = vpack.c.b16 %v8320, %v8317
    %v8423 = vpack.c.b16 %v8321, %v8318
    %v8424 = vpack.c.b16 %v8322, %v8319
    %v8425 = vpack.c.b16 %v8326, %v8323
    %v8426 = vpack.c.b16 %v8327, %v8324
    %v8427 = vpack.c.b16 %v8328, %v8325
    %v8428 = vpack.c.b16 %v8332, %v8329
    %v8429 = vpack.c.b16 %v8333, %v8330
    %v8430 = vpack.c.b16 %v8334, %v8331
    %v8431 = vpack.c.b16 %v8338, %v8335
    %v8432 = vpack.c.b16 %v8339, %v8336
    %v8433 = vpack.c.b16 %v8340, %v8337
    %v8434 = vpack.c.b16 %v8344, %v8341
    %v8435 = vpack.c.b16 %v8345, %v8342
    %v8436 = vpack.c.b16 %v8346, %v8343
    %v8437 = vpack.c.b16 %v8350, %v8347
    %v8438 = vpack.c.b16 %v8351, %v8348
    %v8439 = vpack.c.b16 %v8352, %v8349
    %v8440 = vpack.c.b16 %v8356, %v8353
    %v8441 = vpack.c.b16 %v8357, %v8354
    %v8442 = vpack.c.b16 %v8358, %v8355
    %v8443 = vpack.c.b16 %v8362, %v8359
    %v8444 = vpack.c.b16 %v8363, %v8360
    %v8445 = vpack.c.b16 %v8364, %v8361
    %v8446 = vpack.c.b16 %v8368, %v8365
    %v8447 = vpack.c.b16 %v8369, %v8366
    %v8448 = vpack.c.b16 %v8370, %v8367
    %v8449 = vpack.c.b16 %v8374, %v8371
    %v8450 = vpack.c.b16 %v8375, %v8372
    %v8451 = vpack.c.b16 %v8376, %v8373
    %v8452 = vpack.c.b16 %v8380, %v8377
    %v8453 = vpack.c.b16 %v8381, %v8378
    %v8454 = vpack.c.b16 %v8382, %v8379
    %8527 = vmatprep.subr.bf16.mxu0 %v8405
    %8528 = vmatpush1.bf16.msra.mxu0 %v8404
    %8529 = vmatprep.subr.bf16.mxu0 %v8402
    %8530 = vmatpush1.bf16.msra.mxu0 %v8401
    %8531 = vmatprep.subr.bf16.mxu0 %v8399
    %8532 = vmatpush1.bf16.msra.mxu0 %v8398
    %8533 = vmatprep.subr.bf16.mxu0 %v8396
    %8534 = vmatpush1.bf16.msra.mxu0 %v8395
    %8535 = vmatprep.subr.bf16.mxu0 %v8393
    %8536 = vmatpush1.bf16.msra.mxu0 %v8392
    %8537 = vmatprep.subr.bf16.mxu0 %v8390
    %8538 = vmatpush1.bf16.msra.mxu0 %v8389
    %8539 = vmatprep.subr.bf16.mxu0 %v8387
    %8540 = vmatpush1.bf16.msra.mxu0 %v8386
    %8541 = vmatprep.subr.bf16.mxu0 %v8384
    %8542 = vmatpush1.bf16.msra.mxu0 %v8383
    %8543 = vmatprep.subr.bf16.mxu0 %v8429
    %8544 = vmatpush2.bf16.msra.mxu0 %v8428
    %8545 = vmatprep.subr.bf16.mxu0 %v8426
    %8546 = vmatpush2.bf16.msra.mxu0 %v8425
    %8547 = vmatprep.subr.bf16.mxu0 %v8423
    %8548 = vmatpush2.bf16.msra.mxu0 %v8422
    %8549 = vmatprep.subr.bf16.mxu0 %v8420
    %8550 = vmatpush2.bf16.msra.mxu0 %v8419
    %8551 = vmatprep.subr.bf16.mxu0 %v8417
    %8552 = vmatpush2.bf16.msra.mxu0 %v8416
    %8553 = vmatprep.subr.bf16.mxu0 %v8414
    %8554 = vmatpush2.bf16.msra.mxu0 %v8413
    %8555 = vmatprep.subr.bf16.mxu0 %v8411
    %8556 = vmatpush2.bf16.msra.mxu0 %v8410
    %8557 = vmatprep.subr.bf16.mxu0 %v8408
    %8558 = vmatpush2.bf16.msra.mxu0 %v8407
    %8559 = vmatprep.mubr.bf16.mxu0 %v7949
    %8560 = vmatmul.mubr.bf16.gmra.mxu0 %v7948
    %v8561 = vpop.f32.mrf.mxu0
    %v8562 = vadd.f32 0.0, %v8561
    %v8563 = vpop.f32.mrf.mxu0
    %v8564 = vadd.f32 0.0, %v8563
    %v8565 = vpop.f32.mrf.mxu0
    %v8566 = vpop.f32.mrf.mxu0
    %8567 = vdwg.mxu0
    %8568 = vmatprep.subr.bf16.mxu0 %v8453
    %8569 = vmatpush1.bf16.msra.mxu0 %v8452
    %8570 = vmatprep.subr.bf16.mxu0 %v8450
    %8571 = vmatpush1.bf16.msra.mxu0 %v8449
    %8572 = vmatprep.subr.bf16.mxu0 %v8447
    %8573 = vmatpush1.bf16.msra.mxu0 %v8446
    %8574 = vmatprep.subr.bf16.mxu0 %v8444
    %8575 = vmatpush1.bf16.msra.mxu0 %v8443
    %8576 = vmatprep.subr.bf16.mxu0 %v8441
    %8577 = vmatpush1.bf16.msra.mxu0 %v8440
    %8578 = vmatprep.subr.bf16.mxu0 %v8438
    %8579 = vmatpush1.bf16.msra.mxu0 %v8437
    %8580 = vmatprep.subr.bf16.mxu0 %v8435
    %8581 = vmatpush1.bf16.msra.mxu0 %v8434
    %8582 = vmatprep.subr.bf16.mxu0 %v8432
    %8583 = vmatpush1.bf16.msra.mxu0 %v8431
    %8584 = vmatprep.subr.bf16.mxu0 0
    %8585 = vmatpush2.bf16.msra.mxu0 0
    %8586 = vmatprep.subr.bf16.mxu0 0
    %8587 = vmatpush2.bf16.msra.mxu0 0
    %8588 = vmatprep.subr.bf16.mxu0 0
    %8589 = vmatpush2.bf16.msra.mxu0 0
    %8590 = vmatprep.subr.bf16.mxu0 0
    %8591 = vmatpush2.bf16.msra.mxu0 0
    %8592 = vmatprep.subr.bf16.mxu0 0
    %8593 = vmatpush2.bf16.msra.mxu0 0
    %8594 = vmatprep.subr.bf16.mxu0 0
    %8595 = vmatpush2.bf16.msra.mxu0 0
    %8596 = vmatprep.subr.bf16.mxu0 0
    %8597 = vmatpush2.bf16.msra.mxu0 0
    %8598 = vmatprep.subr.bf16.mxu0 0
    %8599 = vmatpush2.bf16.msra.mxu0 0
    %8600 = vmatprep.mubr.bf16.mxu0 0
    %8601 = vmatmul.mubr.bf16.gmra.mxu0 %v7950
    %v8602 = vpop.f32.mrf.mxu0
    %v8603 = vadd.f32 %v8562, %v8602
    %v8604 = vpop.f32.mrf.mxu0
    %v8605 = vadd.f32 %v8564, %v8604
    %v8606 = vpop.f32.mrf.mxu0
    %v8607 = vpop.f32.mrf.mxu0
    %8608 = vdwg.mxu0
    %8609 = vmatprep.subr.bf16.mxu0 0
    %8610 = vmatpush1.bf16.msra.mxu0 %v8406
    %8611 = vmatprep.subr.bf16.mxu0 0
    %8612 = vmatpush1.bf16.msra.mxu0 %v8403
    %8613 = vmatprep.subr.bf16.mxu0 0
    %8614 = vmatpush1.bf16.msra.mxu0 %v8400
    %8615 = vmatprep.subr.bf16.mxu0 0
    %8616 = vmatpush1.bf16.msra.mxu0 %v8397
    %8617 = vmatprep.subr.bf16.mxu0 0
    %8618 = vmatpush1.bf16.msra.mxu0 %v8394
    %8619 = vmatprep.subr.bf16.mxu0 0
    %8620 = vmatpush1.bf16.msra.mxu0 %v8391
    %8621 = vmatprep.subr.bf16.mxu0 0
    %8622 = vmatpush1.bf16.msra.mxu0 %v8388
    %8623 = vmatprep.subr.bf16.mxu0 0
    %8624 = vmatpush1.bf16.msra.mxu0 %v8385
    %8625 = vmatprep.subr.bf16.mxu0 0
    %8626 = vmatpush2.bf16.msra.mxu0 %v8430
    %8627 = vmatprep.subr.bf16.mxu0 0
    %8628 = vmatpush2.bf16.msra.mxu0 %v8427
    %8629 = vmatprep.subr.bf16.mxu0 0
    %8630 = vmatpush2.bf16.msra.mxu0 %v8424
    %8631 = vmatprep.subr.bf16.mxu0 0
    %8632 = vmatpush2.bf16.msra.mxu0 %v8421
    %8633 = vmatprep.subr.bf16.mxu0 0
    %8634 = vmatpush2.bf16.msra.mxu0 %v8418
    %8635 = vmatprep.subr.bf16.mxu0 0
    %8636 = vmatpush2.bf16.msra.mxu0 %v8415
    %8637 = vmatprep.subr.bf16.mxu0 0
    %8638 = vmatpush2.bf16.msra.mxu0 %v8412
    %8639 = vmatprep.subr.bf16.mxu0 0
    %8640 = vmatpush2.bf16.msra.mxu0 %v8409
    %8641 = vmatprep.mubr.bf16.mxu0 %v7949
    %8642 = vmatmul.mubr.bf16.gmra.mxu0 %v7948
    %v8643 = vpop.f32.mrf.mxu0
    %v8644 = vadd.f32 0.0, %v8643
    %v8645 = vpop.f32.mrf.mxu0
    %v8646 = vpop.f32.mrf.mxu0
    %v8647 = vpop.f32.mrf.mxu0
    %8648 = vdwg.mxu0
    %8649 = vmatprep.subr.bf16.mxu0 0
    %8650 = vmatpush1.bf16.msra.mxu0 %v8454
    %8651 = vmatprep.subr.bf16.mxu0 0
    %8652 = vmatpush1.bf16.msra.mxu0 %v8451
    %8653 = vmatprep.subr.bf16.mxu0 0
    %8654 = vmatpush1.bf16.msra.mxu0 %v8448
    %8655 = vmatprep.subr.bf16.mxu0 0
    %8656 = vmatpush1.bf16.msra.mxu0 %v8445
    %8657 = vmatprep.subr.bf16.mxu0 0
    %8658 = vmatpush1.bf16.msra.mxu0 %v8442
    %8659 = vmatprep.subr.bf16.mxu0 0
    %8660 = vmatpush1.bf16.msra.mxu0 %v8439
    %8661 = vmatprep.subr.bf16.mxu0 0
    %8662 = vmatpush1.bf16.msra.mxu0 %v8436
    %8663 = vmatprep.subr.bf16.mxu0 0
    %8664 = vmatpush1.bf16.msra.mxu0 %v8433
    %8665 = vmatprep.subr.bf16.mxu0 0
    %8666 = vmatpush2.bf16.msra.mxu0 0
    %8667 = vmatprep.subr.bf16.mxu0 0
    %8668 = vmatpush2.bf16.msra.mxu0 0
    %8669 = vmatprep.subr.bf16.mxu0 0
    %8670 = vmatpush2.bf16.msra.mxu0 0
    %8671 = vmatprep.subr.bf16.mxu0 0
    %8672 = vmatpush2.bf16.msra.mxu0 0
    %8673 = vmatprep.subr.bf16.mxu0 0
    %8674 = vmatpush2.bf16.msra.mxu0 0
    %8675 = vmatprep.subr.bf16.mxu0 0
    %8676 = vmatpush2.bf16.msra.mxu0 0
    %8677 = vmatprep.subr.bf16.mxu0 0
    %8678 = vmatpush2.bf16.msra.mxu0 0
    %8679 = vmatprep.subr.bf16.mxu0 0
    %8680 = vmatpush2.bf16.msra.mxu0 0
    %8681 = vmatprep.mubr.bf16.mxu0 0
    %8682 = vmatmul.mubr.bf16.gmra.mxu0 %v7950
    %v8683 = vpop.f32.mrf.mxu0
    %v8684 = vadd.f32 %v8644, %v8683
    %v8685 = vpop.f32.mrf.mxu0
    %v8686 = vpop.f32.mrf.mxu0
    %v8687 = vpop.f32.mrf.mxu0
    %8688 = vdwg.mxu0
    %v8785 = vunpack.c.l.b16 %v7951
    %v8786 = vunpack.c.h.b16 %v7951
    %v8787 = vunpack.c.l.b16 %v7952
    %v8788 = vunpack.c.l.b16 %v7953
    %v8789 = vunpack.c.h.b16 %v7953
    %v8790 = vunpack.c.l.b16 %v7954
    %v8791 = vunpack.c.l.b16 %v7955
    %v8792 = vunpack.c.h.b16 %v7955
    %v8793 = vunpack.c.l.b16 %v7956
    %v8794 = vunpack.c.l.b16 %v7957
    %v8795 = vunpack.c.h.b16 %v7957
    %v8796 = vunpack.c.l.b16 %v7958
    %v8797 = vunpack.c.l.b16 %v7959
    %v8798 = vunpack.c.h.b16 %v7959
    %v8799 = vunpack.c.l.b16 %v7960
    %v8800 = vunpack.c.l.b16 %v7961
    %v8801 = vunpack.c.h.b16 %v7961
    %v8802 = vunpack.c.l.b16 %v7962
    %v8803 = vunpack.c.l.b16 %v7963
    %v8804 = vunpack.c.h.b16 %v7963
    %v8805 = vunpack.c.l.b16 %v7964
    %v8806 = vunpack.c.l.b16 %v7965
    %v8807 = vunpack.c.h.b16 %v7965
    %v8808 = vunpack.c.l.b16 %v7966
    %v8809 = vunpack.c.l.b16 %v7967
    %v8810 = vunpack.c.h.b16 %v7967
    %v8811 = vunpack.c.l.b16 %v7968
    %v8812 = vunpack.c.l.b16 %v7969
    %v8813 = vunpack.c.h.b16 %v7969
    %v8814 = vunpack.c.l.b16 %v7970
    %v8815 = vunpack.c.l.b16 %v7971
    %v8816 = vunpack.c.h.b16 %v7971
    %v8817 = vunpack.c.l.b16 %v7972
    %v8818 = vunpack.c.l.b16 %v7973
    %v8819 = vunpack.c.h.b16 %v7973
    %v8820 = vunpack.c.l.b16 %v7974
    %v8821 = vunpack.c.l.b16 %v7975
    %v8822 = vunpack.c.h.b16 %v7975
    %v8823 = vunpack.c.l.b16 %v7976
    %v8824 = vunpack.c.l.b16 %v7977
    %v8825 = vunpack.c.h.b16 %v7977
    %v8826 = vunpack.c.l.b16 %v7978
    %v8827 = vunpack.c.l.b16 %v7979
    %v8828 = vunpack.c.h.b16 %v7979
    %v8829 = vunpack.c.l.b16 %v7980
    %v8830 = vunpack.c.l.b16 %v7981
    %v8831 = vunpack.c.h.b16 %v7981
    %v8832 = vunpack.c.l.b16 %v7982
    %v8833 = vunpack.c.l.b16 %v7983
    %v8834 = vunpack.c.h.b16 %v7983
    %v8835 = vunpack.c.l.b16 %v7984
    %v8836 = vunpack.c.l.b16 %v7985
    %v8837 = vunpack.c.h.b16 %v7985
    %v8838 = vunpack.c.l.b16 %v7986
    %v8839 = vunpack.c.l.b16 %v7987
    %v8840 = vunpack.c.h.b16 %v7987
    %v8841 = vunpack.c.l.b16 %v7988
    %v8842 = vunpack.c.l.b16 %v7989
    %v8843 = vunpack.c.h.b16 %v7989
    %v8844 = vunpack.c.l.b16 %v7990
    %v8845 = vunpack.c.l.b16 %v7991
    %v8846 = vunpack.c.h.b16 %v7991
    %v8847 = vunpack.c.l.b16 %v7992
    %v8848 = vunpack.c.l.b16 %v7993
    %v8849 = vunpack.c.h.b16 %v7993
    %v8850 = vunpack.c.l.b16 %v7994
    %v8851 = vunpack.c.l.b16 %v7995
    %v8852 = vunpack.c.h.b16 %v7995
    %v8853 = vunpack.c.l.b16 %v7996
    %v8854 = vunpack.c.l.b16 %v7997
    %v8855 = vunpack.c.h.b16 %v7997
    %v8856 = vunpack.c.l.b16 %v7998
    %v8857 = vunpack.c.l.b16 %v7999
    %v8858 = vunpack.c.h.b16 %v7999
    %v8859 = vunpack.c.l.b16 %v8000
    %v8860 = vunpack.c.l.b16 %v8001
    %v8861 = vunpack.c.h.b16 %v8001
    %v8862 = vunpack.c.l.b16 %v8002
    %v8863 = vunpack.c.l.b16 %v8003
    %v8864 = vunpack.c.h.b16 %v8003
    %v8865 = vunpack.c.l.b16 %v8004
    %v8866 = vunpack.c.l.b16 %v8005
    %v8867 = vunpack.c.h.b16 %v8005
    %v8868 = vunpack.c.l.b16 %v8006
    %v8869 = vunpack.c.l.b16 %v8007
    %v8870 = vunpack.c.h.b16 %v8007
    %v8871 = vunpack.c.l.b16 %v8008
    %v8872 = vunpack.c.l.b16 %v8009
    %v8873 = vunpack.c.h.b16 %v8009
    %v8874 = vunpack.c.l.b16 %v8010
    %v8875 = vunpack.c.l.b16 %v8011
    %v8876 = vunpack.c.h.b16 %v8011
    %v8877 = vunpack.c.l.b16 %v8012
    %v8878 = vunpack.c.l.b16 %v8013
    %v8879 = vunpack.c.h.b16 %v8013
    %v8880 = vunpack.c.l.b16 %v8014
    %v8881 = vunpack.c.l.b16 %v8015
    %v8882 = vunpack.c.h.b16 %v8015
    %v8883 = vunpack.c.l.b16 %v8016
    %v8884 = vunpack.c.l.b16 %v8017
    %v8885 = vunpack.c.h.b16 %v8017
    %v8886 = vunpack.c.l.b16 %v8018
    %v8887 = vunpack.c.l.b16 %v8019
    %v8888 = vunpack.c.h.b16 %v8019
    %v8889 = vunpack.c.l.b16 %v8020
    %v8890 = vunpack.c.l.b16 %v8021
    %v8891 = vunpack.c.h.b16 %v8021
    %v8892 = vunpack.c.l.b16 %v8022
    %v8893 = vunpack.c.l.b16 %v8023
    %v8894 = vunpack.c.h.b16 %v8023
    %v8895 = vunpack.c.l.b16 %v8024
    %v8896 = vunpack.c.l.b16 %v8025
    %v8897 = vunpack.c.h.b16 %v8025
    %v8898 = vunpack.c.l.b16 %v8026
    %v8899 = vunpack.c.l.b16 %v8027
    %v8900 = vunpack.c.h.b16 %v8027
    %v8901 = vunpack.c.l.b16 %v8028
    %v8902 = vunpack.c.l.b16 %v8029
    %v8903 = vunpack.c.h.b16 %v8029
    %v8904 = vunpack.c.l.b16 %v8030
    %v8905 = vunpack.c.l.b16 %v8031
    %v8906 = vunpack.c.h.b16 %v8031
    %v8907 = vunpack.c.l.b16 %v8032
    %v8908 = vunpack.c.l.b16 %v8033
    %v8909 = vunpack.c.h.b16 %v8033
    %v8910 = vunpack.c.l.b16 %v8034
    %v8911 = vunpack.c.l.b16 %v8035
    %v8912 = vunpack.c.h.b16 %v8035
    %v8913 = vunpack.c.l.b16 %v8036
    %v8914 = vunpack.c.l.b16 %v8037
    %v8915 = vunpack.c.h.b16 %v8037
    %v8916 = vunpack.c.l.b16 %v8038
    %v8917 = vunpack.c.l.b16 %v8039
    %v8918 = vunpack.c.h.b16 %v8039
    %v8919 = vunpack.c.l.b16 %v8040
    %v8920 = vunpack.c.l.b16 %v8041
    %v8921 = vunpack.c.h.b16 %v8041
    %v8922 = vunpack.c.l.b16 %v8042
    %v8923 = vunpack.c.l.b16 %v8043
    %v8924 = vunpack.c.h.b16 %v8043
    %v8925 = vunpack.c.l.b16 %v8044
    %v8926 = vunpack.c.l.b16 %v8045
    %v8927 = vunpack.c.h.b16 %v8045
    %v8928 = vunpack.c.l.b16 %v8046
    %v8929 = vpack.c.b16 %v8788, %v8785
    %v8930 = vpack.c.b16 %v8789, %v8786
    %v8931 = vpack.c.b16 %v8790, %v8787
    %v8932 = vpack.c.b16 %v8794, %v8791
    %v8933 = vpack.c.b16 %v8795, %v8792
    %v8934 = vpack.c.b16 %v8796, %v8793
    %v8935 = vpack.c.b16 %v8800, %v8797
    %v8936 = vpack.c.b16 %v8801, %v8798
    %v8937 = vpack.c.b16 %v8802, %v8799
    %v8938 = vpack.c.b16 %v8806, %v8803
    %v8939 = vpack.c.b16 %v8807, %v8804
    %v8940 = vpack.c.b16 %v8808, %v8805
    %v8941 = vpack.c.b16 %v8812, %v8809
    %v8942 = vpack.c.b16 %v8813, %v8810
    %v8943 = vpack.c.b16 %v8814, %v8811
    %v8944 = vpack.c.b16 %v8818, %v8815
    %v8945 = vpack.c.b16 %v8819, %v8816
    %v8946 = vpack.c.b16 %v8820, %v8817
    %v8947 = vpack.c.b16 %v8824, %v8821
    %v8948 = vpack.c.b16 %v8825, %v8822
    %v8949 = vpack.c.b16 %v8826, %v8823
    %v8950 = vpack.c.b16 %v8830, %v8827
    %v8951 = vpack.c.b16 %v8831, %v8828
    %v8952 = vpack.c.b16 %v8832, %v8829
    %v8953 = vpack.c.b16 %v8836, %v8833
    %v8954 = vpack.c.b16 %v8837, %v8834
    %v8955 = vpack.c.b16 %v8838, %v8835
    %v8956 = vpack.c.b16 %v8842, %v8839
    %v8957 = vpack.c.b16 %v8843, %v8840
    %v8958 = vpack.c.b16 %v8844, %v8841
    %v8959 = vpack.c.b16 %v8848, %v8845
    %v8960 = vpack.c.b16 %v8849, %v8846
    %v8961 = vpack.c.b16 %v8850, %v8847
    %v8962 = vpack.c.b16 %v8854, %v8851
    %v8963 = vpack.c.b16 %v8855, %v8852
    %v8964 = vpack.c.b16 %v8856, %v8853
    %v8965 = vpack.c.b16 %v8860, %v8857
    %v8966 = vpack.c.b16 %v8861, %v8858
    %v8967 = vpack.c.b16 %v8862, %v8859
    %v8968 = vpack.c.b16 %v8866, %v8863
    %v8969 = vpack.c.b16 %v8867, %v8864
    %v8970 = vpack.c.b16 %v8868, %v8865
    %v8971 = vpack.c.b16 %v8872, %v8869
    %v8972 = vpack.c.b16 %v8873, %v8870
    %v8973 = vpack.c.b16 %v8874, %v8871
    %v8974 = vpack.c.b16 %v8878, %v8875
    %v8975 = vpack.c.b16 %v8879, %v8876
    %v8976 = vpack.c.b16 %v8880, %v8877
    %v8977 = vpack.c.b16 %v8884, %v8881
    %v8978 = vpack.c.b16 %v8885, %v8882
    %v8979 = vpack.c.b16 %v8886, %v8883
    %v8980 = vpack.c.b16 %v8890, %v8887
    %v8981 = vpack.c.b16 %v8891, %v8888
    %v8982 = vpack.c.b16 %v8892, %v8889
    %v8983 = vpack.c.b16 %v8896, %v8893
    %v8984 = vpack.c.b16 %v8897, %v8894
    %v8985 = vpack.c.b16 %v8898, %v8895
    %v8986 = vpack.c.b16 %v8902, %v8899
    %v8987 = vpack.c.b16 %v8903, %v8900
    %v8988 = vpack.c.b16 %v8904, %v8901
    %v8989 = vpack.c.b16 %v8908, %v8905
    %v8990 = vpack.c.b16 %v8909, %v8906
    %v8991 = vpack.c.b16 %v8910, %v8907
    %v8992 = vpack.c.b16 %v8914, %v8911
    %v8993 = vpack.c.b16 %v8915, %v8912
    %v8994 = vpack.c.b16 %v8916, %v8913
    %v8995 = vpack.c.b16 %v8920, %v8917
    %v8996 = vpack.c.b16 %v8921, %v8918
    %v8997 = vpack.c.b16 %v8922, %v8919
    %v8998 = vpack.c.b16 %v8926, %v8923
    %v8999 = vpack.c.b16 %v8927, %v8924
    %v9000 = vpack.c.b16 %v8928, %v8925
    %9073 = vmatprep.subr.bf16.mxu0 %v8951
    %9074 = vmatpush1.bf16.msra.mxu0 %v8950
    %9075 = vmatprep.subr.bf16.mxu0 %v8948
    %9076 = vmatpush1.bf16.msra.mxu0 %v8947
    %9077 = vmatprep.subr.bf16.mxu0 %v8945
    %9078 = vmatpush1.bf16.msra.mxu0 %v8944
    %9079 = vmatprep.subr.bf16.mxu0 %v8942
    %9080 = vmatpush1.bf16.msra.mxu0 %v8941
    %9081 = vmatprep.subr.bf16.mxu0 %v8939
    %9082 = vmatpush1.bf16.msra.mxu0 %v8938
    %9083 = vmatprep.subr.bf16.mxu0 %v8936
    %9084 = vmatpush1.bf16.msra.mxu0 %v8935
    %9085 = vmatprep.subr.bf16.mxu0 %v8933
    %9086 = vmatpush1.bf16.msra.mxu0 %v8932
    %9087 = vmatprep.subr.bf16.mxu0 %v8930
    %9088 = vmatpush1.bf16.msra.mxu0 %v8929
    %9089 = vmatprep.subr.bf16.mxu0 %v8975
    %9090 = vmatpush2.bf16.msra.mxu0 %v8974
    %9091 = vmatprep.subr.bf16.mxu0 %v8972
    %9092 = vmatpush2.bf16.msra.mxu0 %v8971
    %9093 = vmatprep.subr.bf16.mxu0 %v8969
    %9094 = vmatpush2.bf16.msra.mxu0 %v8968
    %9095 = vmatprep.subr.bf16.mxu0 %v8966
    %9096 = vmatpush2.bf16.msra.mxu0 %v8965
    %9097 = vmatprep.subr.bf16.mxu0 %v8963
    %9098 = vmatpush2.bf16.msra.mxu0 %v8962
    %9099 = vmatprep.subr.bf16.mxu0 %v8960
    %9100 = vmatpush2.bf16.msra.mxu0 %v8959
    %9101 = vmatprep.subr.bf16.mxu0 %v8957
    %9102 = vmatpush2.bf16.msra.mxu0 %v8956
    %9103 = vmatprep.subr.bf16.mxu0 %v8954
    %9104 = vmatpush2.bf16.msra.mxu0 %v8953
    %9105 = vmatprep.mubr.bf16.mxu0 %v5166
    %9106 = vmatmul.mubr.bf16.gmra.mxu0 %v5165
    %v9107 = vpop.f32.mrf.mxu0
    %v9108 = vadd.f32 %v8603, %v9107
    %v9109 = vpop.f32.mrf.mxu0
    %v9110 = vadd.f32 %v8605, %v9109
    %v9111 = vpop.f32.mrf.mxu0
    %v9112 = vpop.f32.mrf.mxu0
    %9113 = vdwg.mxu0
    %9114 = vmatprep.subr.bf16.mxu0 %v8999
    %9115 = vmatpush1.bf16.msra.mxu0 %v8998
    %9116 = vmatprep.subr.bf16.mxu0 %v8996
    %9117 = vmatpush1.bf16.msra.mxu0 %v8995
    %9118 = vmatprep.subr.bf16.mxu0 %v8993
    %9119 = vmatpush1.bf16.msra.mxu0 %v8992
    %9120 = vmatprep.subr.bf16.mxu0 %v8990
    %9121 = vmatpush1.bf16.msra.mxu0 %v8989
    %9122 = vmatprep.subr.bf16.mxu0 %v8987
    %9123 = vmatpush1.bf16.msra.mxu0 %v8986
    %9124 = vmatprep.subr.bf16.mxu0 %v8984
    %9125 = vmatpush1.bf16.msra.mxu0 %v8983
    %9126 = vmatprep.subr.bf16.mxu0 %v8981
    %9127 = vmatpush1.bf16.msra.mxu0 %v8980
    %9128 = vmatprep.subr.bf16.mxu0 %v8978
    %9129 = vmatpush1.bf16.msra.mxu0 %v8977
    %9130 = vmatprep.subr.bf16.mxu0 0
    %9131 = vmatpush2.bf16.msra.mxu0 0
    %9132 = vmatprep.subr.bf16.mxu0 0
    %9133 = vmatpush2.bf16.msra.mxu0 0
    %9134 = vmatprep.subr.bf16.mxu0 0
    %9135 = vmatpush2.bf16.msra.mxu0 0
    %9136 = vmatprep.subr.bf16.mxu0 0
    %9137 = vmatpush2.bf16.msra.mxu0 0
    %9138 = vmatprep.subr.bf16.mxu0 0
    %9139 = vmatpush2.bf16.msra.mxu0 0
    %9140 = vmatprep.subr.bf16.mxu0 0
    %9141 = vmatpush2.bf16.msra.mxu0 0
    %9142 = vmatprep.subr.bf16.mxu0 0
    %9143 = vmatpush2.bf16.msra.mxu0 0
    %9144 = vmatprep.subr.bf16.mxu0 0
    %9145 = vmatpush2.bf16.msra.mxu0 0
    %9146 = vmatprep.mubr.bf16.mxu0 0
    %9147 = vmatmul.mubr.bf16.gmra.mxu0 %v5167
    %v9148 = vpop.f32.mrf.mxu0
    %v9149 = vadd.f32 %v9108, %v9148
    %v9150 = vpop.f32.mrf.mxu0
    %v9151 = vadd.f32 %v9110, %v9150
    %v9152 = vpop.f32.mrf.mxu0
    %v9153 = vpop.f32.mrf.mxu0
    %9154 = vdwg.mxu0
    %9155 = vmatprep.subr.bf16.mxu0 0
    %9156 = vmatpush1.bf16.msra.mxu0 %v8952
    %9157 = vmatprep.subr.bf16.mxu0 0
    %9158 = vmatpush1.bf16.msra.mxu0 %v8949
    %9159 = vmatprep.subr.bf16.mxu0 0
    %9160 = vmatpush1.bf16.msra.mxu0 %v8946
    %9161 = vmatprep.subr.bf16.mxu0 0
    %9162 = vmatpush1.bf16.msra.mxu0 %v8943
    %9163 = vmatprep.subr.bf16.mxu0 0
    %9164 = vmatpush1.bf16.msra.mxu0 %v8940
    %9165 = vmatprep.subr.bf16.mxu0 0
    %9166 = vmatpush1.bf16.msra.mxu0 %v8937
    %9167 = vmatprep.subr.bf16.mxu0 0
    %9168 = vmatpush1.bf16.msra.mxu0 %v8934
    %9169 = vmatprep.subr.bf16.mxu0 0
    %9170 = vmatpush1.bf16.msra.mxu0 %v8931
    %9171 = vmatprep.subr.bf16.mxu0 0
    %9172 = vmatpush2.bf16.msra.mxu0 %v8976
    %9173 = vmatprep.subr.bf16.mxu0 0
    %9174 = vmatpush2.bf16.msra.mxu0 %v8973
    %9175 = vmatprep.subr.bf16.mxu0 0
    %9176 = vmatpush2.bf16.msra.mxu0 %v8970
    %9177 = vmatprep.subr.bf16.mxu0 0
    %9178 = vmatpush2.bf16.msra.mxu0 %v8967
    %9179 = vmatprep.subr.bf16.mxu0 0
    %9180 = vmatpush2.bf16.msra.mxu0 %v8964
    %9181 = vmatprep.subr.bf16.mxu0 0
    %9182 = vmatpush2.bf16.msra.mxu0 %v8961
    %9183 = vmatprep.subr.bf16.mxu0 0
    %9184 = vmatpush2.bf16.msra.mxu0 %v8958
    %9185 = vmatprep.subr.bf16.mxu0 0
    %9186 = vmatpush2.bf16.msra.mxu0 %v8955
    %9187 = vmatprep.mubr.bf16.mxu0 %v5166
    %9188 = vmatmul.mubr.bf16.gmra.mxu0 %v5165
    %v9189 = vpop.f32.mrf.mxu0
    %v9190 = vadd.f32 %v8684, %v9189
    %v9191 = vpop.f32.mrf.mxu0
    %v9192 = vpop.f32.mrf.mxu0
    %v9193 = vpop.f32.mrf.mxu0
    %9194 = vdwg.mxu0
    %9195 = vmatprep.subr.bf16.mxu0 0
    %9196 = vmatpush1.bf16.msra.mxu0 %v9000
    %9197 = vmatprep.subr.bf16.mxu0 0
    %9198 = vmatpush1.bf16.msra.mxu0 %v8997
    %9199 = vmatprep.subr.bf16.mxu0 0
    %9200 = vmatpush1.bf16.msra.mxu0 %v8994
    %9201 = vmatprep.subr.bf16.mxu0 0
    %9202 = vmatpush1.bf16.msra.mxu0 %v8991
    %9203 = vmatprep.subr.bf16.mxu0 0
    %9204 = vmatpush1.bf16.msra.mxu0 %v8988
    %9205 = vmatprep.subr.bf16.mxu0 0
    %9206 = vmatpush1.bf16.msra.mxu0 %v8985
    %9207 = vmatprep.subr.bf16.mxu0 0
    %9208 = vmatpush1.bf16.msra.mxu0 %v8982
    %9209 = vmatprep.subr.bf16.mxu0 0
    %9210 = vmatpush1.bf16.msra.mxu0 %v8979
    %9211 = vmatprep.subr.bf16.mxu0 0
    %9212 = vmatpush2.bf16.msra.mxu0 0
    %9213 = vmatprep.subr.bf16.mxu0 0
    %9214 = vmatpush2.bf16.msra.mxu0 0
    %9215 = vmatprep.subr.bf16.mxu0 0
    %9216 = vmatpush2.bf16.msra.mxu0 0
    %9217 = vmatprep.subr.bf16.mxu0 0
    %9218 = vmatpush2.bf16.msra.mxu0 0
    %9219 = vmatprep.subr.bf16.mxu0 0
    %9220 = vmatpush2.bf16.msra.mxu0 0
    %9221 = vmatprep.subr.bf16.mxu0 0
    %9222 = vmatpush2.bf16.msra.mxu0 0
    %9223 = vmatprep.subr.bf16.mxu0 0
    %9224 = vmatpush2.bf16.msra.mxu0 0
    %9225 = vmatprep.subr.bf16.mxu0 0
    %9226 = vmatpush2.bf16.msra.mxu0 0
    %9227 = vmatprep.mubr.bf16.mxu0 0
    %9228 = vmatmul.mubr.bf16.gmra.mxu0 %v5167
    %v9229 = vpop.f32.mrf.mxu0
    %v9230 = vadd.f32 %v9190, %v9229
    %v9231 = vpop.f32.mrf.mxu0
    %v9232 = vpop.f32.mrf.mxu0
    %v9233 = vpop.f32.mrf.mxu0
    %9234 = vdwg.mxu0
    %v9235 = vld [vmem:[%s57] sm:$0x7]
    %v9237 = vlaneseq
    %v9238 = vshrl.u32 %v9237, 7
    %v9239 = vsub.s32 0, %v9238
    %v9240 = vrot.slane %v9235, %v9239
    %v9241 = vlaneseq
    %v9242 = vshrl.u32 %v9241, 7
    %v9243 = vsub.s32 1, %v9242
    %v9244 = vrot.slane %v9235, %v9243
    %v9245 = vlaneseq
    %v9246 = vshrl.u32 %v9245, 7
    %v9247 = vsub.s32 2, %v9246
    %v9248 = vrot.slane %v9235, %v9247
    %v9252 = vadd.f32 %v9149, %v9240
    %v9253 = vadd.f32 %v9151, %v9244
    %v9254 = vadd.f32 %v9230, %v9248
    %v9255 = vmax.f32 %v9252, 0.0
    %v9256 = vmax.f32 %v9253, 0.0
    %v9257 = vmax.f32 %v9254, 0.0
    %v9258 = vand.u32 2147483647, %v9252
    %v9259 = vand.u32 2147483647, %v9253
    %v9260 = vand.u32 2147483647, %v9254
    %v9261 = vsub.f32 0.0, %v9258
    %v9262 = vsub.f32 0.0, %v9259
    %v9263 = vsub.f32 0.0, %v9260
    %v9264 = vmul.f32 %v9261, 1.442695
    %v9265 = vpow.pop %v9264
    %v9266 = vmul.f32 %v9262, 1.442695
    %v9267 = vpow.pop %v9266
    %v9268 = vmul.f32 %v9263, 1.442695
    %v9269 = vpow.pop %v9268
    %v9270 = vadd.f32 %v9265, 1.0
    %v9271 = vlog2.pop %v9270
    %v9272 = vmul.f32 %v9271, 0.6931472
    %v9273 = vmul.f32 -0.5, %v9265
    %v9274 = vadd.f32 %v9273, 1.0
    %v9275 = vmul.f32 %v9274, %v9265
    %v9276 = vand.u32 2147483647, %v9265
    %vm9277 = vcmp.lt.f32.partialorder %v9276, 0.0004427343
    %v9278 = vsel %vm9277, %v9275, %v9272
    %v9279 = vadd.f32 %v9267, 1.0
    %v9280 = vlog2.pop %v9279
    %v9281 = vmul.f32 %v9280, 0.6931472
    %v9282 = vmul.f32 -0.5, %v9267
    %v9283 = vadd.f32 %v9282, 1.0
    %v9284 = vmul.f32 %v9283, %v9267
    %v9285 = vand.u32 2147483647, %v9267
    %vm9286 = vcmp.lt.f32.partialorder %v9285, 0.0004427343
    %v9287 = vsel %vm9286, %v9284, %v9281
    %v9288 = vadd.f32 %v9269, 1.0
    %v9289 = vlog2.pop %v9288
    %v9290 = vmul.f32 %v9289, 0.6931472
    %v9291 = vmul.f32 -0.5, %v9269
    %v9292 = vadd.f32 %v9291, 1.0
    %v9293 = vmul.f32 %v9292, %v9269
    %v9294 = vand.u32 2147483647, %v9269
    %vm9295 = vcmp.lt.f32.partialorder %v9294, 0.0004427343
    %v9296 = vsel %vm9295, %v9293, %v9290
    %v9297 = vadd.f32 %v9255, %v9278
    %v9298 = vadd.f32 %v9256, %v9287
    %v9299 = vadd.f32 %v9257, %v9296
    %v9300 = vpack.c.bf16 %v9297, %v9297
    %v9301 = vpack.c.bf16 %v9298, %v9298
    %v9302 = vpack.c.bf16 %v9299, %v9299
    %v9303 = vld [vmem:[#allocation28] sm:$0xff]
    %v9304 = vld [vmem:[#allocation28 + $0x8] sm:$0xf]
    %v9305 = vld [vmem:[#allocation28 + $0xc] sm:$0xff]
    %v9306 = vld [vmem:[#allocation28 + $0x14] sm:$0xf]
    %v9307 = vld [vmem:[#allocation28 + $0x18] sm:$0xff]
    %v9308 = vld [vmem:[#allocation28 + $0x20] sm:$0xf]
    %v9309 = vld [vmem:[#allocation28 + $0x24] sm:$0xff]
    %v9310 = vld [vmem:[#allocation28 + $0x2c] sm:$0xf]
    %v9311 = vld [vmem:[#allocation28 + $0x30] sm:$0xff]
    %v9312 = vld [vmem:[#allocation28 + $0x38] sm:$0xf]
    %v9313 = vld [vmem:[#allocation28 + $0x3c] sm:$0xff]
    %v9314 = vld [vmem:[#allocation28 + $0x44] sm:$0xf]
    %v9315 = vld [vmem:[#allocation28 + $0x48] sm:$0xff]
    %v9316 = vld [vmem:[#allocation28 + $0x50] sm:$0xf]
    %v9317 = vld [vmem:[#allocation28 + $0x54] sm:$0xff]
    %v9318 = vld [vmem:[#allocation28 + $0x5c] sm:$0xf]
    %v9319 = vld [vmem:[#allocation28 + $0x60] sm:$0xff]
    %v9320 = vld [vmem:[#allocation28 + $0x68] sm:$0xf]
    %v9321 = vld [vmem:[#allocation28 + $0x6c] sm:$0xff]
    %v9322 = vld [vmem:[#allocation28 + $0x74] sm:$0xf]
    %v9323 = vld [vmem:[#allocation28 + $0x78] sm:$0xff]
    %v9324 = vld [vmem:[#allocation28 + $0x80] sm:$0xf]
    %v9325 = vld [vmem:[#allocation28 + $0x84] sm:$0xff]
    %v9326 = vld [vmem:[#allocation28 + $0x8c] sm:$0xf]
    %v9327 = vld [vmem:[#allocation28 + $0x90] sm:$0xff]
    %v9328 = vld [vmem:[#allocation28 + $0x98] sm:$0xf]
    %v9329 = vld [vmem:[#allocation28 + $0x9c] sm:$0xff]
    %v9330 = vld [vmem:[#allocation28 + $0xa4] sm:$0xf]
    %v9331 = vld [vmem:[#allocation28 + $0xa8] sm:$0xff]
    %v9332 = vld [vmem:[#allocation28 + $0xb0] sm:$0xf]
    %v9333 = vld [vmem:[#allocation28 + $0xb4] sm:$0xff]
    %v9334 = vld [vmem:[#allocation28 + $0xbc] sm:$0xf]
    %v9335 = vld [vmem:[#allocation28 + $0xc0] sm:$0xff]
    %v9336 = vld [vmem:[#allocation28 + $0xc8] sm:$0xf]
    %v9337 = vld [vmem:[#allocation28 + $0xcc] sm:$0xff]
    %v9338 = vld [vmem:[#allocation28 + $0xd4] sm:$0xf]
    %v9339 = vld [vmem:[#allocation28 + $0xd8] sm:$0xff]
    %v9340 = vld [vmem:[#allocation28 + $0xe0] sm:$0xf]
    %v9341 = vld [vmem:[#allocation28 + $0xe4] sm:$0xff]
    %v9342 = vld [vmem:[#allocation28 + $0xec] sm:$0xf]
    %v9343 = vld [vmem:[#allocation28 + $0xf0] sm:$0xff]
    %v9344 = vld [vmem:[#allocation28 + $0xf8] sm:$0xf]
    %v9345 = vld [vmem:[#allocation28 + $0xfc] sm:$0xff]
    %v9346 = vld [vmem:[#allocation28 + $0x104] sm:$0xf]
    %v9347 = vld [vmem:[#allocation28 + $0x108] sm:$0xff]
    %v9348 = vld [vmem:[#allocation28 + $0x110] sm:$0xf]
    %v9349 = vld [vmem:[#allocation28 + $0x114] sm:$0xff]
    %v9350 = vld [vmem:[#allocation28 + $0x11c] sm:$0xf]
    %v9351 = vld [vmem:[#allocation28 + $0x120] sm:$0xff]
    %v9352 = vld [vmem:[#allocation28 + $0x128] sm:$0xf]
    %v9353 = vld [vmem:[#allocation28 + $0x12c] sm:$0xff]
    %v9354 = vld [vmem:[#allocation28 + $0x134] sm:$0xf]
    %v9355 = vld [vmem:[#allocation28 + $0x138] sm:$0xff]
    %v9356 = vld [vmem:[#allocation28 + $0x140] sm:$0xf]
    %v9357 = vld [vmem:[#allocation28 + $0x144] sm:$0xff]
    %v9358 = vld [vmem:[#allocation28 + $0x14c] sm:$0xf]
    %v9359 = vld [vmem:[#allocation28 + $0x150] sm:$0xff]
    %v9360 = vld [vmem:[#allocation28 + $0x158] sm:$0xf]
    %v9361 = vld [vmem:[#allocation28 + $0x15c] sm:$0xff]
    %v9362 = vld [vmem:[#allocation28 + $0x164] sm:$0xf]
    %v9363 = vld [vmem:[#allocation28 + $0x168] sm:$0xff]
    %v9364 = vld [vmem:[#allocation28 + $0x170] sm:$0xf]
    %v9365 = vld [vmem:[#allocation28 + $0x174] sm:$0xff]
    %v9366 = vld [vmem:[#allocation28 + $0x17c] sm:$0xf]
    %v9367 = vld [vmem:[#allocation28 + $0x180] sm:$0xff]
    %v9368 = vld [vmem:[#allocation28 + $0x188] sm:$0xf]
    %v9369 = vld [vmem:[#allocation28 + $0x18c] sm:$0xff]
    %v9370 = vld [vmem:[#allocation28 + $0x194] sm:$0xf]
    %v9371 = vld [vmem:[#allocation28 + $0x198] sm:$0xff]
    %v9372 = vld [vmem:[#allocation28 + $0x1a0] sm:$0xf]
    %v9373 = vld [vmem:[#allocation28 + $0x1a4] sm:$0xff]
    %v9374 = vld [vmem:[#allocation28 + $0x1ac] sm:$0xf]
    %v9375 = vld [vmem:[#allocation28 + $0x1b0] sm:$0xff]
    %v9376 = vld [vmem:[#allocation28 + $0x1b8] sm:$0xf]
    %v9377 = vld [vmem:[#allocation28 + $0x1bc] sm:$0xff]
    %v9378 = vld [vmem:[#allocation28 + $0x1c4] sm:$0xf]
    %v9379 = vld [vmem:[#allocation28 + $0x1c8] sm:$0xff]
    %v9380 = vld [vmem:[#allocation28 + $0x1d0] sm:$0xf]
    %v9381 = vld [vmem:[#allocation28 + $0x1d4] sm:$0xff]
    %v9382 = vld [vmem:[#allocation28 + $0x1dc] sm:$0xf]
    %v9383 = vld [vmem:[#allocation28 + $0x1e0] sm:$0xff]
    %v9384 = vld [vmem:[#allocation28 + $0x1e8] sm:$0xf]
    %v9385 = vld [vmem:[#allocation28 + $0x1ec] sm:$0xff]
    %v9386 = vld [vmem:[#allocation28 + $0x1f4] sm:$0xf]
    %v9387 = vld [vmem:[#allocation28 + $0x1f8] sm:$0xff]
    %v9388 = vld [vmem:[#allocation28 + $0x200] sm:$0xf]
    %v9389 = vld [vmem:[#allocation28 + $0x204] sm:$0xff]
    %v9390 = vld [vmem:[#allocation28 + $0x20c] sm:$0xf]
    %v9391 = vld [vmem:[#allocation28 + $0x210] sm:$0xff]
    %v9392 = vld [vmem:[#allocation28 + $0x218] sm:$0xf]
    %v9393 = vld [vmem:[#allocation28 + $0x21c] sm:$0xff]
    %v9394 = vld [vmem:[#allocation28 + $0x224] sm:$0xf]
    %v9395 = vld [vmem:[#allocation28 + $0x228] sm:$0xff]
    %v9396 = vld [vmem:[#allocation28 + $0x230] sm:$0xf]
    %v9397 = vld [vmem:[#allocation28 + $0x234] sm:$0xff]
    %v9398 = vld [vmem:[#allocation28 + $0x23c] sm:$0xf]
    %v9399 = vld [vmem:[%s61] sm:$0x7]
    %v9401 = vlaneseq
    %v9402 = vshrl.u32 %v9401, 7
    %v9403 = vsub.s32 0, %v9402
    %v9404 = vrot.slane %v9399, %v9403
    %v9405 = vlaneseq
    %v9406 = vshrl.u32 %v9405, 7
    %v9407 = vsub.s32 1, %v9406
    %v9408 = vrot.slane %v9399, %v9407
    %v9409 = vlaneseq
    %v9410 = vshrl.u32 %v9409, 7
    %v9411 = vsub.s32 2, %v9410
    %v9412 = vrot.slane %v9399, %v9411
    %v9512 = vunpack.c.l.b16 %v9303
    %v9513 = vunpack.c.h.b16 %v9303
    %v9514 = vunpack.c.l.b16 %v9304
    %v9515 = vunpack.c.l.b16 %v9305
    %v9516 = vunpack.c.h.b16 %v9305
    %v9517 = vunpack.c.l.b16 %v9306
    %v9518 = vunpack.c.l.b16 %v9307
    %v9519 = vunpack.c.h.b16 %v9307
    %v9520 = vunpack.c.l.b16 %v9308
    %v9521 = vunpack.c.l.b16 %v9309
    %v9522 = vunpack.c.h.b16 %v9309
    %v9523 = vunpack.c.l.b16 %v9310
    %v9524 = vunpack.c.l.b16 %v9311
    %v9525 = vunpack.c.h.b16 %v9311
    %v9526 = vunpack.c.l.b16 %v9312
    %v9527 = vunpack.c.l.b16 %v9313
    %v9528 = vunpack.c.h.b16 %v9313
    %v9529 = vunpack.c.l.b16 %v9314
    %v9530 = vunpack.c.l.b16 %v9315
    %v9531 = vunpack.c.h.b16 %v9315
    %v9532 = vunpack.c.l.b16 %v9316
    %v9533 = vunpack.c.l.b16 %v9317
    %v9534 = vunpack.c.h.b16 %v9317
    %v9535 = vunpack.c.l.b16 %v9318
    %v9536 = vunpack.c.l.b16 %v9319
    %v9537 = vunpack.c.h.b16 %v9319
    %v9538 = vunpack.c.l.b16 %v9320
    %v9539 = vunpack.c.l.b16 %v9321
    %v9540 = vunpack.c.h.b16 %v9321
    %v9541 = vunpack.c.l.b16 %v9322
    %v9542 = vunpack.c.l.b16 %v9323
    %v9543 = vunpack.c.h.b16 %v9323
    %v9544 = vunpack.c.l.b16 %v9324
    %v9545 = vunpack.c.l.b16 %v9325
    %v9546 = vunpack.c.h.b16 %v9325
    %v9547 = vunpack.c.l.b16 %v9326
    %v9548 = vunpack.c.l.b16 %v9327
    %v9549 = vunpack.c.h.b16 %v9327
    %v9550 = vunpack.c.l.b16 %v9328
    %v9551 = vunpack.c.l.b16 %v9329
    %v9552 = vunpack.c.h.b16 %v9329
    %v9553 = vunpack.c.l.b16 %v9330
    %v9554 = vunpack.c.l.b16 %v9331
    %v9555 = vunpack.c.h.b16 %v9331
    %v9556 = vunpack.c.l.b16 %v9332
    %v9557 = vunpack.c.l.b16 %v9333
    %v9558 = vunpack.c.h.b16 %v9333
    %v9559 = vunpack.c.l.b16 %v9334
    %v9560 = vunpack.c.l.b16 %v9335
    %v9561 = vunpack.c.h.b16 %v9335
    %v9562 = vunpack.c.l.b16 %v9336
    %v9563 = vunpack.c.l.b16 %v9337
    %v9564 = vunpack.c.h.b16 %v9337
    %v9565 = vunpack.c.l.b16 %v9338
    %v9566 = vunpack.c.l.b16 %v9339
    %v9567 = vunpack.c.h.b16 %v9339
    %v9568 = vunpack.c.l.b16 %v9340
    %v9569 = vunpack.c.l.b16 %v9341
    %v9570 = vunpack.c.h.b16 %v9341
    %v9571 = vunpack.c.l.b16 %v9342
    %v9572 = vunpack.c.l.b16 %v9343
    %v9573 = vunpack.c.h.b16 %v9343
    %v9574 = vunpack.c.l.b16 %v9344
    %v9575 = vunpack.c.l.b16 %v9345
    %v9576 = vunpack.c.h.b16 %v9345
    %v9577 = vunpack.c.l.b16 %v9346
    %v9578 = vunpack.c.l.b16 %v9347
    %v9579 = vunpack.c.h.b16 %v9347
    %v9580 = vunpack.c.l.b16 %v9348
    %v9581 = vunpack.c.l.b16 %v9349
    %v9582 = vunpack.c.h.b16 %v9349
    %v9583 = vunpack.c.l.b16 %v9350
    %v9584 = vunpack.c.l.b16 %v9351
    %v9585 = vunpack.c.h.b16 %v9351
    %v9586 = vunpack.c.l.b16 %v9352
    %v9587 = vunpack.c.l.b16 %v9353
    %v9588 = vunpack.c.h.b16 %v9353
    %v9589 = vunpack.c.l.b16 %v9354
    %v9590 = vunpack.c.l.b16 %v9355
    %v9591 = vunpack.c.h.b16 %v9355
    %v9592 = vunpack.c.l.b16 %v9356
    %v9593 = vunpack.c.l.b16 %v9357
    %v9594 = vunpack.c.h.b16 %v9357
    %v9595 = vunpack.c.l.b16 %v9358
    %v9596 = vunpack.c.l.b16 %v9359
    %v9597 = vunpack.c.h.b16 %v9359
    %v9598 = vunpack.c.l.b16 %v9360
    %v9599 = vunpack.c.l.b16 %v9361
    %v9600 = vunpack.c.h.b16 %v9361
    %v9601 = vunpack.c.l.b16 %v9362
    %v9602 = vunpack.c.l.b16 %v9363
    %v9603 = vunpack.c.h.b16 %v9363
    %v9604 = vunpack.c.l.b16 %v9364
    %v9605 = vunpack.c.l.b16 %v9365
    %v9606 = vunpack.c.h.b16 %v9365
    %v9607 = vunpack.c.l.b16 %v9366
    %v9608 = vunpack.c.l.b16 %v9367
    %v9609 = vunpack.c.h.b16 %v9367
    %v9610 = vunpack.c.l.b16 %v9368
    %v9611 = vunpack.c.l.b16 %v9369
    %v9612 = vunpack.c.h.b16 %v9369
    %v9613 = vunpack.c.l.b16 %v9370
    %v9614 = vunpack.c.l.b16 %v9371
    %v9615 = vunpack.c.h.b16 %v9371
    %v9616 = vunpack.c.l.b16 %v9372
    %v9617 = vunpack.c.l.b16 %v9373
    %v9618 = vunpack.c.h.b16 %v9373
    %v9619 = vunpack.c.l.b16 %v9374
    %v9620 = vunpack.c.l.b16 %v9375
    %v9621 = vunpack.c.h.b16 %v9375
    %v9622 = vunpack.c.l.b16 %v9376
    %v9623 = vunpack.c.l.b16 %v9377
    %v9624 = vunpack.c.h.b16 %v9377
    %v9625 = vunpack.c.l.b16 %v9378
    %v9626 = vunpack.c.l.b16 %v9379
    %v9627 = vunpack.c.h.b16 %v9379
    %v9628 = vunpack.c.l.b16 %v9380
    %v9629 = vunpack.c.l.b16 %v9381
    %v9630 = vunpack.c.h.b16 %v9381
    %v9631 = vunpack.c.l.b16 %v9382
    %v9632 = vunpack.c.l.b16 %v9383
    %v9633 = vunpack.c.h.b16 %v9383
    %v9634 = vunpack.c.l.b16 %v9384
    %v9635 = vunpack.c.l.b16 %v9385
    %v9636 = vunpack.c.h.b16 %v9385
    %v9637 = vunpack.c.l.b16 %v9386
    %v9638 = vunpack.c.l.b16 %v9387
    %v9639 = vunpack.c.h.b16 %v9387
    %v9640 = vunpack.c.l.b16 %v9388
    %v9641 = vunpack.c.l.b16 %v9389
    %v9642 = vunpack.c.h.b16 %v9389
    %v9643 = vunpack.c.l.b16 %v9390
    %v9644 = vunpack.c.l.b16 %v9391
    %v9645 = vunpack.c.h.b16 %v9391
    %v9646 = vunpack.c.l.b16 %v9392
    %v9647 = vunpack.c.l.b16 %v9393
    %v9648 = vunpack.c.h.b16 %v9393
    %v9649 = vunpack.c.l.b16 %v9394
    %v9650 = vunpack.c.l.b16 %v9395
    %v9651 = vunpack.c.h.b16 %v9395
    %v9652 = vunpack.c.l.b16 %v9396
    %v9653 = vunpack.c.l.b16 %v9397
    %v9654 = vunpack.c.h.b16 %v9397
    %v9655 = vunpack.c.l.b16 %v9398
    %v9656 = vpack.c.b16 %v9515, %v9512
    %v9657 = vpack.c.b16 %v9516, %v9513
    %v9658 = vpack.c.b16 %v9517, %v9514
    %v9659 = vpack.c.b16 %v9521, %v9518
    %v9660 = vpack.c.b16 %v9522, %v9519
    %v9661 = vpack.c.b16 %v9523, %v9520
    %v9662 = vpack.c.b16 %v9527, %v9524
    %v9663 = vpack.c.b16 %v9528, %v9525
    %v9664 = vpack.c.b16 %v9529, %v9526
    %v9665 = vpack.c.b16 %v9533, %v9530
    %v9666 = vpack.c.b16 %v9534, %v9531
    %v9667 = vpack.c.b16 %v9535, %v9532
    %v9668 = vpack.c.b16 %v9539, %v9536
    %v9669 = vpack.c.b16 %v9540, %v9537
    %v9670 = vpack.c.b16 %v9541, %v9538
    %v9671 = vpack.c.b16 %v9545, %v9542
    %v9672 = vpack.c.b16 %v9546, %v9543
    %v9673 = vpack.c.b16 %v9547, %v9544
    %v9674 = vpack.c.b16 %v9551, %v9548
    %v9675 = vpack.c.b16 %v9552, %v9549
    %v9676 = vpack.c.b16 %v9553, %v9550
    %v9677 = vpack.c.b16 %v9557, %v9554
    %v9678 = vpack.c.b16 %v9558, %v9555
    %v9679 = vpack.c.b16 %v9559, %v9556
    %v9680 = vpack.c.b16 %v9563, %v9560
    %v9681 = vpack.c.b16 %v9564, %v9561
    %v9682 = vpack.c.b16 %v9565, %v9562
    %v9683 = vpack.c.b16 %v9569, %v9566
    %v9684 = vpack.c.b16 %v9570, %v9567
    %v9685 = vpack.c.b16 %v9571, %v9568
    %v9686 = vpack.c.b16 %v9575, %v9572
    %v9687 = vpack.c.b16 %v9576, %v9573
    %v9688 = vpack.c.b16 %v9577, %v9574
    %v9689 = vpack.c.b16 %v9581, %v9578
    %v9690 = vpack.c.b16 %v9582, %v9579
    %v9691 = vpack.c.b16 %v9583, %v9580
    %v9692 = vpack.c.b16 %v9587, %v9584
    %v9693 = vpack.c.b16 %v9588, %v9585
    %v9694 = vpack.c.b16 %v9589, %v9586
    %v9695 = vpack.c.b16 %v9593, %v9590
    %v9696 = vpack.c.b16 %v9594, %v9591
    %v9697 = vpack.c.b16 %v9595, %v9592
    %v9698 = vpack.c.b16 %v9599, %v9596
    %v9699 = vpack.c.b16 %v9600, %v9597
    %v9700 = vpack.c.b16 %v9601, %v9598
    %v9701 = vpack.c.b16 %v9605, %v9602
    %v9702 = vpack.c.b16 %v9606, %v9603
    %v9703 = vpack.c.b16 %v9607, %v9604
    %v9704 = vpack.c.b16 %v9611, %v9608
    %v9705 = vpack.c.b16 %v9612, %v9609
    %v9706 = vpack.c.b16 %v9613, %v9610
    %v9707 = vpack.c.b16 %v9617, %v9614
    %v9708 = vpack.c.b16 %v9618, %v9615
    %v9709 = vpack.c.b16 %v9619, %v9616
    %v9710 = vpack.c.b16 %v9623, %v9620
    %v9711 = vpack.c.b16 %v9624, %v9621
    %v9712 = vpack.c.b16 %v9625, %v9622
    %v9713 = vpack.c.b16 %v9629, %v9626
    %v9714 = vpack.c.b16 %v9630, %v9627
    %v9715 = vpack.c.b16 %v9631, %v9628
    %v9716 = vpack.c.b16 %v9635, %v9632
    %v9717 = vpack.c.b16 %v9636, %v9633
    %v9718 = vpack.c.b16 %v9637, %v9634
    %v9719 = vpack.c.b16 %v9641, %v9638
    %v9720 = vpack.c.b16 %v9642, %v9639
    %v9721 = vpack.c.b16 %v9643, %v9640
    %v9722 = vpack.c.b16 %v9647, %v9644
    %v9723 = vpack.c.b16 %v9648, %v9645
    %v9724 = vpack.c.b16 %v9649, %v9646
    %v9725 = vpack.c.b16 %v9653, %v9650
    %v9726 = vpack.c.b16 %v9654, %v9651
    %v9727 = vpack.c.b16 %v9655, %v9652
    %9800 = vmatprep.subr.bf16.mxu0 %v9678
    %9801 = vmatpush1.bf16.msra.mxu0 %v9677
    %9802 = vmatprep.subr.bf16.mxu0 %v9675
    %9803 = vmatpush1.bf16.msra.mxu0 %v9674
    %9804 = vmatprep.subr.bf16.mxu0 %v9672
    %9805 = vmatpush1.bf16.msra.mxu0 %v9671
    %9806 = vmatprep.subr.bf16.mxu0 %v9669
    %9807 = vmatpush1.bf16.msra.mxu0 %v9668
    %9808 = vmatprep.subr.bf16.mxu0 %v9666
    %9809 = vmatpush1.bf16.msra.mxu0 %v9665
    %9810 = vmatprep.subr.bf16.mxu0 %v9663
    %9811 = vmatpush1.bf16.msra.mxu0 %v9662
    %9812 = vmatprep.subr.bf16.mxu0 %v9660
    %9813 = vmatpush1.bf16.msra.mxu0 %v9659
    %9814 = vmatprep.subr.bf16.mxu0 %v9657
    %9815 = vmatpush1.bf16.msra.mxu0 %v9656
    %9816 = vmatprep.subr.bf16.mxu0 %v9702
    %9817 = vmatpush2.bf16.msra.mxu0 %v9701
    %9818 = vmatprep.subr.bf16.mxu0 %v9699
    %9819 = vmatpush2.bf16.msra.mxu0 %v9698
    %9820 = vmatprep.subr.bf16.mxu0 %v9696
    %9821 = vmatpush2.bf16.msra.mxu0 %v9695
    %9822 = vmatprep.subr.bf16.mxu0 %v9693
    %9823 = vmatpush2.bf16.msra.mxu0 %v9692
    %9824 = vmatprep.subr.bf16.mxu0 %v9690
    %9825 = vmatpush2.bf16.msra.mxu0 %v9689
    %9826 = vmatprep.subr.bf16.mxu0 %v9687
    %9827 = vmatpush2.bf16.msra.mxu0 %v9686
    %9828 = vmatprep.subr.bf16.mxu0 %v9684
    %9829 = vmatpush2.bf16.msra.mxu0 %v9683
    %9830 = vmatprep.subr.bf16.mxu0 %v9681
    %9831 = vmatpush2.bf16.msra.mxu0 %v9680
    %9832 = vmatprep.mubr.bf16.mxu0 %v9301
    %9833 = vmatmul.mubr.bf16.gmra.mxu0 %v9300
    %v9834 = vpop.f32.mrf.mxu0
    %v9835 = vadd.f32 %v9404, %v9834
    %v9836 = vpop.f32.mrf.mxu0
    %v9837 = vadd.f32 %v9408, %v9836
    %v9838 = vpop.f32.mrf.mxu0
    %v9839 = vpop.f32.mrf.mxu0
    %9840 = vdwg.mxu0
    %9841 = vmatprep.subr.bf16.mxu0 %v9726
    %9842 = vmatpush1.bf16.msra.mxu0 %v9725
    %9843 = vmatprep.subr.bf16.mxu0 %v9723
    %9844 = vmatpush1.bf16.msra.mxu0 %v9722
    %9845 = vmatprep.subr.bf16.mxu0 %v9720
    %9846 = vmatpush1.bf16.msra.mxu0 %v9719
    %9847 = vmatprep.subr.bf16.mxu0 %v9717
    %9848 = vmatpush1.bf16.msra.mxu0 %v9716
    %9849 = vmatprep.subr.bf16.mxu0 %v9714
    %9850 = vmatpush1.bf16.msra.mxu0 %v9713
    %9851 = vmatprep.subr.bf16.mxu0 %v9711
    %9852 = vmatpush1.bf16.msra.mxu0 %v9710
    %9853 = vmatprep.subr.bf16.mxu0 %v9708
    %9854 = vmatpush1.bf16.msra.mxu0 %v9707
    %9855 = vmatprep.subr.bf16.mxu0 %v9705
    %9856 = vmatpush1.bf16.msra.mxu0 %v9704
    %9857 = vmatprep.subr.bf16.mxu0 0
    %9858 = vmatpush2.bf16.msra.mxu0 0
    %9859 = vmatprep.subr.bf16.mxu0 0
    %9860 = vmatpush2.bf16.msra.mxu0 0
    %9861 = vmatprep.subr.bf16.mxu0 0
    %9862 = vmatpush2.bf16.msra.mxu0 0
    %9863 = vmatprep.subr.bf16.mxu0 0
    %9864 = vmatpush2.bf16.msra.mxu0 0
    %9865 = vmatprep.subr.bf16.mxu0 0
    %9866 = vmatpush2.bf16.msra.mxu0 0
    %9867 = vmatprep.subr.bf16.mxu0 0
    %9868 = vmatpush2.bf16.msra.mxu0 0
    %9869 = vmatprep.subr.bf16.mxu0 0
    %9870 = vmatpush2.bf16.msra.mxu0 0
    %9871 = vmatprep.subr.bf16.mxu0 0
    %9872 = vmatpush2.bf16.msra.mxu0 0
    %9873 = vmatprep.mubr.bf16.mxu0 0
    %9874 = vmatmul.mubr.bf16.gmra.mxu0 %v9302
    %v9875 = vpop.f32.mrf.mxu0
    %v9876 = vadd.f32 %v9835, %v9875
    %v9877 = vpop.f32.mrf.mxu0
    %v9878 = vadd.f32 %v9837, %v9877
    %v9879 = vpop.f32.mrf.mxu0
    %v9880 = vpop.f32.mrf.mxu0
    %9881 = vdwg.mxu0
    %9882 = vmatprep.subr.bf16.mxu0 0
    %9883 = vmatpush1.bf16.msra.mxu0 %v9679
    %9884 = vmatprep.subr.bf16.mxu0 0
    %9885 = vmatpush1.bf16.msra.mxu0 %v9676
    %9886 = vmatprep.subr.bf16.mxu0 0
    %9887 = vmatpush1.bf16.msra.mxu0 %v9673
    %9888 = vmatprep.subr.bf16.mxu0 0
    %9889 = vmatpush1.bf16.msra.mxu0 %v9670
    %9890 = vmatprep.subr.bf16.mxu0 0
    %9891 = vmatpush1.bf16.msra.mxu0 %v9667
    %9892 = vmatprep.subr.bf16.mxu0 0
    %9893 = vmatpush1.bf16.msra.mxu0 %v9664
    %9894 = vmatprep.subr.bf16.mxu0 0
    %9895 = vmatpush1.bf16.msra.mxu0 %v9661
    %9896 = vmatprep.subr.bf16.mxu0 0
    %9897 = vmatpush1.bf16.msra.mxu0 %v9658
    %9898 = vmatprep.subr.bf16.mxu0 0
    %9899 = vmatpush2.bf16.msra.mxu0 %v9703
    %9900 = vmatprep.subr.bf16.mxu0 0
    %9901 = vmatpush2.bf16.msra.mxu0 %v9700
    %9902 = vmatprep.subr.bf16.mxu0 0
    %9903 = vmatpush2.bf16.msra.mxu0 %v9697
    %9904 = vmatprep.subr.bf16.mxu0 0
    %9905 = vmatpush2.bf16.msra.mxu0 %v9694
    %9906 = vmatprep.subr.bf16.mxu0 0
    %9907 = vmatpush2.bf16.msra.mxu0 %v9691
    %9908 = vmatprep.subr.bf16.mxu0 0
    %9909 = vmatpush2.bf16.msra.mxu0 %v9688
    %9910 = vmatprep.subr.bf16.mxu0 0
    %9911 = vmatpush2.bf16.msra.mxu0 %v9685
    %9912 = vmatprep.subr.bf16.mxu0 0
    %9913 = vmatpush2.bf16.msra.mxu0 %v9682
    %9914 = vmatprep.mubr.bf16.mxu0 %v9301
    %9915 = vmatmul.mubr.bf16.gmra.mxu0 %v9300
    %v9916 = vpop.f32.mrf.mxu0
    %v9917 = vadd.f32 %v9412, %v9916
    %v9918 = vpop.f32.mrf.mxu0
    %v9919 = vpop.f32.mrf.mxu0
    %v9920 = vpop.f32.mrf.mxu0
    %9921 = vdwg.mxu0
    %9922 = vmatprep.subr.bf16.mxu0 0
    %9923 = vmatpush1.bf16.msra.mxu0 %v9727
    %9924 = vmatprep.subr.bf16.mxu0 0
    %9925 = vmatpush1.bf16.msra.mxu0 %v9724
    %9926 = vmatprep.subr.bf16.mxu0 0
    %9927 = vmatpush1.bf16.msra.mxu0 %v9721
    %9928 = vmatprep.subr.bf16.mxu0 0
    %9929 = vmatpush1.bf16.msra.mxu0 %v9718
    %9930 = vmatprep.subr.bf16.mxu0 0
    %9931 = vmatpush1.bf16.msra.mxu0 %v9715
    %9932 = vmatprep.subr.bf16.mxu0 0
    %9933 = vmatpush1.bf16.msra.mxu0 %v9712
    %9934 = vmatprep.subr.bf16.mxu0 0
    %9935 = vmatpush1.bf16.msra.mxu0 %v9709
    %9936 = vmatprep.subr.bf16.mxu0 0
    %9937 = vmatpush1.bf16.msra.mxu0 %v9706
    %9938 = vmatprep.subr.bf16.mxu0 0
    %9939 = vmatpush2.bf16.msra.mxu0 0
    %9940 = vmatprep.subr.bf16.mxu0 0
    %9941 = vmatpush2.bf16.msra.mxu0 0
    %9942 = vmatprep.subr.bf16.mxu0 0
    %9943 = vmatpush2.bf16.msra.mxu0 0
    %9944 = vmatprep.subr.bf16.mxu0 0
    %9945 = vmatpush2.bf16.msra.mxu0 0
    %9946 = vmatprep.subr.bf16.mxu0 0
    %9947 = vmatpush2.bf16.msra.mxu0 0
    %9948 = vmatprep.subr.bf16.mxu0 0
    %9949 = vmatpush2.bf16.msra.mxu0 0
    %9950 = vmatprep.subr.bf16.mxu0 0
    %9951 = vmatpush2.bf16.msra.mxu0 0
    %9952 = vmatprep.subr.bf16.mxu0 0
    %9953 = vmatpush2.bf16.msra.mxu0 0
    %9954 = vmatprep.mubr.bf16.mxu0 0
    %9955 = vmatmul.mubr.bf16.gmra.mxu0 %v9302
    %v9956 = vpop.f32.mrf.mxu0
    %v9957 = vadd.f32 %v9917, %v9956
    %v9958 = vpop.f32.mrf.mxu0
    %v9959 = vpop.f32.mrf.mxu0
    %v9960 = vpop.f32.mrf.mxu0
    %9961 = vdwg.mxu0
    %v9962 = vmax.f32 %v9876, 0.0
    %v9963 = vmax.f32 %v9878, 0.0
    %v9964 = vmax.f32 %v9957, 0.0
    %v9965 = vand.u32 2147483647, %v9876
    %v9966 = vand.u32 2147483647, %v9878
    %v9967 = vand.u32 2147483647, %v9957
    %v9968 = vsub.f32 0.0, %v9965
    %v9969 = vsub.f32 0.0, %v9966
    %v9970 = vsub.f32 0.0, %v9967
    %v9971 = vmul.f32 %v9968, 1.442695
    %v9972 = vpow.pop %v9971
    %v9973 = vmul.f32 %v9969, 1.442695
    %v9974 = vpow.pop %v9973
    %v9975 = vmul.f32 %v9970, 1.442695
    %v9976 = vpow.pop %v9975
    %v9977 = vadd.f32 %v9972, 1.0
    %v9978 = vlog2.pop %v9977
    %v9979 = vmul.f32 %v9978, 0.6931472
    %v9980 = vmul.f32 -0.5, %v9972
    %v9981 = vadd.f32 %v9980, 1.0
    %v9982 = vmul.f32 %v9981, %v9972
    %v9983 = vand.u32 2147483647, %v9972
    %vm9984 = vcmp.lt.f32.partialorder %v9983, 0.0004427343
    %v9985 = vsel %vm9984, %v9982, %v9979
    %v9986 = vadd.f32 %v9974, 1.0
    %v9987 = vlog2.pop %v9986
    %v9988 = vmul.f32 %v9987, 0.6931472
    %v9989 = vmul.f32 -0.5, %v9974
    %v9990 = vadd.f32 %v9989, 1.0
    %v9991 = vmul.f32 %v9990, %v9974
    %v9992 = vand.u32 2147483647, %v9974
    %vm9993 = vcmp.lt.f32.partialorder %v9992, 0.0004427343
    %v9994 = vsel %vm9993, %v9991, %v9988
    %v9995 = vadd.f32 %v9976, 1.0
    %v9996 = vlog2.pop %v9995
    %v9997 = vmul.f32 %v9996, 0.6931472
    %v9998 = vmul.f32 -0.5, %v9976
    %v9999 = vadd.f32 %v9998, 1.0
    %v10000 = vmul.f32 %v9999, %v9976
    %v10001 = vand.u32 2147483647, %v9976
    %vm10002 = vcmp.lt.f32.partialorder %v10001, 0.0004427343
    %v10003 = vsel %vm10002, %v10000, %v9997
    %v10004 = vadd.f32 %v9962, %v9985
    %v10005 = vadd.f32 %v9963, %v9994
    %v10006 = vadd.f32 %v9964, %v10003
    %v10007 = vpack.c.bf16 %v10004, %v10004
    %v10008 = vpack.c.bf16 %v10005, %v10005
    %v10009 = vpack.c.bf16 %v10006, %v10006
    %v10010 = vld [vmem:[#allocation29] sm:$0xff]
    %v10011 = vld [vmem:[#allocation29 + $0x8] sm:$0xf]
    %v10012 = vld [vmem:[#allocation29 + $0xc] sm:$0xff]
    %v10013 = vld [vmem:[#allocation29 + $0x14] sm:$0xf]
    %v10014 = vld [vmem:[#allocation29 + $0x18] sm:$0xff]
    %v10015 = vld [vmem:[#allocation29 + $0x20] sm:$0xf]
    %v10016 = vld [vmem:[#allocation29 + $0x24] sm:$0xff]
    %v10017 = vld [vmem:[#allocation29 + $0x2c] sm:$0xf]
    %v10018 = vld [vmem:[#allocation29 + $0x30] sm:$0xff]
    %v10019 = vld [vmem:[#allocation29 + $0x38] sm:$0xf]
    %v10020 = vld [vmem:[#allocation29 + $0x3c] sm:$0xff]
    %v10021 = vld [vmem:[#allocation29 + $0x44] sm:$0xf]
    %v10022 = vld [vmem:[#allocation29 + $0x48] sm:$0xff]
    %v10023 = vld [vmem:[#allocation29 + $0x50] sm:$0xf]
    %v10024 = vld [vmem:[#allocation29 + $0x54] sm:$0xff]
    %v10025 = vld [vmem:[#allocation29 + $0x5c] sm:$0xf]
    %v10026 = vld [vmem:[#allocation29 + $0x60] sm:$0xff]
    %v10027 = vld [vmem:[#allocation29 + $0x68] sm:$0xf]
    %v10028 = vld [vmem:[#allocation29 + $0x6c] sm:$0xff]
    %v10029 = vld [vmem:[#allocation29 + $0x74] sm:$0xf]
    %v10030 = vld [vmem:[#allocation29 + $0x78] sm:$0xff]
    %v10031 = vld [vmem:[#allocation29 + $0x80] sm:$0xf]
    %v10032 = vld [vmem:[#allocation29 + $0x84] sm:$0xff]
    %v10033 = vld [vmem:[#allocation29 + $0x8c] sm:$0xf]
    %v10034 = vld [vmem:[#allocation29 + $0x90] sm:$0xff]
    %v10035 = vld [vmem:[#allocation29 + $0x98] sm:$0xf]
    %v10036 = vld [vmem:[#allocation29 + $0x9c] sm:$0xff]
    %v10037 = vld [vmem:[#allocation29 + $0xa4] sm:$0xf]
    %v10038 = vld [vmem:[#allocation29 + $0xa8] sm:$0xff]
    %v10039 = vld [vmem:[#allocation29 + $0xb0] sm:$0xf]
    %v10040 = vld [vmem:[#allocation29 + $0xb4] sm:$0xff]
    %v10041 = vld [vmem:[#allocation29 + $0xbc] sm:$0xf]
    %v10042 = vld [vmem:[#allocation29 + $0xc0] sm:$0xff]
    %v10043 = vld [vmem:[#allocation29 + $0xc8] sm:$0xf]
    %v10044 = vld [vmem:[#allocation29 + $0xcc] sm:$0xff]
    %v10045 = vld [vmem:[#allocation29 + $0xd4] sm:$0xf]
    %v10046 = vld [vmem:[#allocation29 + $0xd8] sm:$0xff]
    %v10047 = vld [vmem:[#allocation29 + $0xe0] sm:$0xf]
    %v10048 = vld [vmem:[#allocation29 + $0xe4] sm:$0xff]
    %v10049 = vld [vmem:[#allocation29 + $0xec] sm:$0xf]
    %v10050 = vld [vmem:[#allocation29 + $0xf0] sm:$0xff]
    %v10051 = vld [vmem:[#allocation29 + $0xf8] sm:$0xf]
    %v10052 = vld [vmem:[#allocation29 + $0xfc] sm:$0xff]
    %v10053 = vld [vmem:[#allocation29 + $0x104] sm:$0xf]
    %v10054 = vld [vmem:[#allocation29 + $0x108] sm:$0xff]
    %v10055 = vld [vmem:[#allocation29 + $0x110] sm:$0xf]
    %v10056 = vld [vmem:[#allocation29 + $0x114] sm:$0xff]
    %v10057 = vld [vmem:[#allocation29 + $0x11c] sm:$0xf]
    %v10058 = vld [vmem:[#allocation29 + $0x120] sm:$0xff]
    %v10059 = vld [vmem:[#allocation29 + $0x128] sm:$0xf]
    %v10060 = vld [vmem:[#allocation29 + $0x12c] sm:$0xff]
    %v10061 = vld [vmem:[#allocation29 + $0x134] sm:$0xf]
    %v10062 = vld [vmem:[#allocation29 + $0x138] sm:$0xff]
    %v10063 = vld [vmem:[#allocation29 + $0x140] sm:$0xf]
    %v10064 = vld [vmem:[#allocation29 + $0x144] sm:$0xff]
    %v10065 = vld [vmem:[#allocation29 + $0x14c] sm:$0xf]
    %v10066 = vld [vmem:[#allocation29 + $0x150] sm:$0xff]
    %v10067 = vld [vmem:[#allocation29 + $0x158] sm:$0xf]
    %v10068 = vld [vmem:[#allocation29 + $0x15c] sm:$0xff]
    %v10069 = vld [vmem:[#allocation29 + $0x164] sm:$0xf]
    %v10070 = vld [vmem:[#allocation29 + $0x168] sm:$0xff]
    %v10071 = vld [vmem:[#allocation29 + $0x170] sm:$0xf]
    %v10072 = vld [vmem:[#allocation29 + $0x174] sm:$0xff]
    %v10073 = vld [vmem:[#allocation29 + $0x17c] sm:$0xf]
    %v10074 = vld [vmem:[#allocation29 + $0x180] sm:$0xff]
    %v10075 = vld [vmem:[#allocation29 + $0x188] sm:$0xf]
    %v10076 = vld [vmem:[#allocation29 + $0x18c] sm:$0xff]
    %v10077 = vld [vmem:[#allocation29 + $0x194] sm:$0xf]
    %v10078 = vld [vmem:[#allocation29 + $0x198] sm:$0xff]
    %v10079 = vld [vmem:[#allocation29 + $0x1a0] sm:$0xf]
    %v10080 = vld [vmem:[#allocation29 + $0x1a4] sm:$0xff]
    %v10081 = vld [vmem:[#allocation29 + $0x1ac] sm:$0xf]
    %v10082 = vld [vmem:[#allocation29 + $0x1b0] sm:$0xff]
    %v10083 = vld [vmem:[#allocation29 + $0x1b8] sm:$0xf]
    %v10084 = vld [vmem:[#allocation29 + $0x1bc] sm:$0xff]
    %v10085 = vld [vmem:[#allocation29 + $0x1c4] sm:$0xf]
    %v10086 = vld [vmem:[#allocation29 + $0x1c8] sm:$0xff]
    %v10087 = vld [vmem:[#allocation29 + $0x1d0] sm:$0xf]
    %v10088 = vld [vmem:[#allocation29 + $0x1d4] sm:$0xff]
    %v10089 = vld [vmem:[#allocation29 + $0x1dc] sm:$0xf]
    %v10090 = vld [vmem:[#allocation29 + $0x1e0] sm:$0xff]
    %v10091 = vld [vmem:[#allocation29 + $0x1e8] sm:$0xf]
    %v10092 = vld [vmem:[#allocation29 + $0x1ec] sm:$0xff]
    %v10093 = vld [vmem:[#allocation29 + $0x1f4] sm:$0xf]
    %v10094 = vld [vmem:[#allocation29 + $0x1f8] sm:$0xff]
    %v10095 = vld [vmem:[#allocation29 + $0x200] sm:$0xf]
    %v10096 = vld [vmem:[#allocation29 + $0x204] sm:$0xff]
    %v10097 = vld [vmem:[#allocation29 + $0x20c] sm:$0xf]
    %v10098 = vld [vmem:[#allocation29 + $0x210] sm:$0xff]
    %v10099 = vld [vmem:[#allocation29 + $0x218] sm:$0xf]
    %v10100 = vld [vmem:[#allocation29 + $0x21c] sm:$0xff]
    %v10101 = vld [vmem:[#allocation29 + $0x224] sm:$0xf]
    %v10102 = vld [vmem:[#allocation29 + $0x228] sm:$0xff]
    %v10103 = vld [vmem:[#allocation29 + $0x230] sm:$0xf]
    %v10104 = vld [vmem:[#allocation29 + $0x234] sm:$0xff]
    %v10105 = vld [vmem:[#allocation29 + $0x23c] sm:$0xf]
    %v10106 = vld [vmem:[%s65] sm:$0x7]
    %v10108 = vlaneseq
    %v10109 = vshrl.u32 %v10108, 7
    %v10110 = vsub.s32 0, %v10109
    %v10111 = vrot.slane %v10106, %v10110
    %v10112 = vlaneseq
    %v10113 = vshrl.u32 %v10112, 7
    %v10114 = vsub.s32 1, %v10113
    %v10115 = vrot.slane %v10106, %v10114
    %v10116 = vlaneseq
    %v10117 = vshrl.u32 %v10116, 7
    %v10118 = vsub.s32 2, %v10117
    %v10119 = vrot.slane %v10106, %v10118
    %v10219 = vunpack.c.l.b16 %v10010
    %v10220 = vunpack.c.h.b16 %v10010
    %v10221 = vunpack.c.l.b16 %v10011
    %v10222 = vunpack.c.l.b16 %v10012
    %v10223 = vunpack.c.h.b16 %v10012
    %v10224 = vunpack.c.l.b16 %v10013
    %v10225 = vunpack.c.l.b16 %v10014
    %v10226 = vunpack.c.h.b16 %v10014
    %v10227 = vunpack.c.l.b16 %v10015
    %v10228 = vunpack.c.l.b16 %v10016
    %v10229 = vunpack.c.h.b16 %v10016
    %v10230 = vunpack.c.l.b16 %v10017
    %v10231 = vunpack.c.l.b16 %v10018
    %v10232 = vunpack.c.h.b16 %v10018
    %v10233 = vunpack.c.l.b16 %v10019
    %v10234 = vunpack.c.l.b16 %v10020
    %v10235 = vunpack.c.h.b16 %v10020
    %v10236 = vunpack.c.l.b16 %v10021
    %v10237 = vunpack.c.l.b16 %v10022
    %v10238 = vunpack.c.h.b16 %v10022
    %v10239 = vunpack.c.l.b16 %v10023
    %v10240 = vunpack.c.l.b16 %v10024
    %v10241 = vunpack.c.h.b16 %v10024
    %v10242 = vunpack.c.l.b16 %v10025
    %v10243 = vunpack.c.l.b16 %v10026
    %v10244 = vunpack.c.h.b16 %v10026
    %v10245 = vunpack.c.l.b16 %v10027
    %v10246 = vunpack.c.l.b16 %v10028
    %v10247 = vunpack.c.h.b16 %v10028
    %v10248 = vunpack.c.l.b16 %v10029
    %v10249 = vunpack.c.l.b16 %v10030
    %v10250 = vunpack.c.h.b16 %v10030
    %v10251 = vunpack.c.l.b16 %v10031
    %v10252 = vunpack.c.l.b16 %v10032
    %v10253 = vunpack.c.h.b16 %v10032
    %v10254 = vunpack.c.l.b16 %v10033
    %v10255 = vunpack.c.l.b16 %v10034
    %v10256 = vunpack.c.h.b16 %v10034
    %v10257 = vunpack.c.l.b16 %v10035
    %v10258 = vunpack.c.l.b16 %v10036
    %v10259 = vunpack.c.h.b16 %v10036
    %v10260 = vunpack.c.l.b16 %v10037
    %v10261 = vunpack.c.l.b16 %v10038
    %v10262 = vunpack.c.h.b16 %v10038
    %v10263 = vunpack.c.l.b16 %v10039
    %v10264 = vunpack.c.l.b16 %v10040
    %v10265 = vunpack.c.h.b16 %v10040
    %v10266 = vunpack.c.l.b16 %v10041
    %v10267 = vunpack.c.l.b16 %v10042
    %v10268 = vunpack.c.h.b16 %v10042
    %v10269 = vunpack.c.l.b16 %v10043
    %v10270 = vunpack.c.l.b16 %v10044
    %v10271 = vunpack.c.h.b16 %v10044
    %v10272 = vunpack.c.l.b16 %v10045
    %v10273 = vunpack.c.l.b16 %v10046
    %v10274 = vunpack.c.h.b16 %v10046
    %v10275 = vunpack.c.l.b16 %v10047
    %v10276 = vunpack.c.l.b16 %v10048
    %v10277 = vunpack.c.h.b16 %v10048
    %v10278 = vunpack.c.l.b16 %v10049
    %v10279 = vunpack.c.l.b16 %v10050
    %v10280 = vunpack.c.h.b16 %v10050
    %v10281 = vunpack.c.l.b16 %v10051
    %v10282 = vunpack.c.l.b16 %v10052
    %v10283 = vunpack.c.h.b16 %v10052
    %v10284 = vunpack.c.l.b16 %v10053
    %v10285 = vunpack.c.l.b16 %v10054
    %v10286 = vunpack.c.h.b16 %v10054
    %v10287 = vunpack.c.l.b16 %v10055
    %v10288 = vunpack.c.l.b16 %v10056
    %v10289 = vunpack.c.h.b16 %v10056
    %v10290 = vunpack.c.l.b16 %v10057
    %v10291 = vunpack.c.l.b16 %v10058
    %v10292 = vunpack.c.h.b16 %v10058
    %v10293 = vunpack.c.l.b16 %v10059
    %v10294 = vunpack.c.l.b16 %v10060
    %v10295 = vunpack.c.h.b16 %v10060
    %v10296 = vunpack.c.l.b16 %v10061
    %v10297 = vunpack.c.l.b16 %v10062
    %v10298 = vunpack.c.h.b16 %v10062
    %v10299 = vunpack.c.l.b16 %v10063
    %v10300 = vunpack.c.l.b16 %v10064
    %v10301 = vunpack.c.h.b16 %v10064
    %v10302 = vunpack.c.l.b16 %v10065
    %v10303 = vunpack.c.l.b16 %v10066
    %v10304 = vunpack.c.h.b16 %v10066
    %v10305 = vunpack.c.l.b16 %v10067
    %v10306 = vunpack.c.l.b16 %v10068
    %v10307 = vunpack.c.h.b16 %v10068
    %v10308 = vunpack.c.l.b16 %v10069
    %v10309 = vunpack.c.l.b16 %v10070
    %v10310 = vunpack.c.h.b16 %v10070
    %v10311 = vunpack.c.l.b16 %v10071
    %v10312 = vunpack.c.l.b16 %v10072
    %v10313 = vunpack.c.h.b16 %v10072
    %v10314 = vunpack.c.l.b16 %v10073
    %v10315 = vunpack.c.l.b16 %v10074
    %v10316 = vunpack.c.h.b16 %v10074
    %v10317 = vunpack.c.l.b16 %v10075
    %v10318 = vunpack.c.l.b16 %v10076
    %v10319 = vunpack.c.h.b16 %v10076
    %v10320 = vunpack.c.l.b16 %v10077
    %v10321 = vunpack.c.l.b16 %v10078
    %v10322 = vunpack.c.h.b16 %v10078
    %v10323 = vunpack.c.l.b16 %v10079
    %v10324 = vunpack.c.l.b16 %v10080
    %v10325 = vunpack.c.h.b16 %v10080
    %v10326 = vunpack.c.l.b16 %v10081
    %v10327 = vunpack.c.l.b16 %v10082
    %v10328 = vunpack.c.h.b16 %v10082
    %v10329 = vunpack.c.l.b16 %v10083
    %v10330 = vunpack.c.l.b16 %v10084
    %v10331 = vunpack.c.h.b16 %v10084
    %v10332 = vunpack.c.l.b16 %v10085
    %v10333 = vunpack.c.l.b16 %v10086
    %v10334 = vunpack.c.h.b16 %v10086
    %v10335 = vunpack.c.l.b16 %v10087
    %v10336 = vunpack.c.l.b16 %v10088
    %v10337 = vunpack.c.h.b16 %v10088
    %v10338 = vunpack.c.l.b16 %v10089
    %v10339 = vunpack.c.l.b16 %v10090
    %v10340 = vunpack.c.h.b16 %v10090
    %v10341 = vunpack.c.l.b16 %v10091
    %v10342 = vunpack.c.l.b16 %v10092
    %v10343 = vunpack.c.h.b16 %v10092
    %v10344 = vunpack.c.l.b16 %v10093
    %v10345 = vunpack.c.l.b16 %v10094
    %v10346 = vunpack.c.h.b16 %v10094
    %v10347 = vunpack.c.l.b16 %v10095
    %v10348 = vunpack.c.l.b16 %v10096
    %v10349 = vunpack.c.h.b16 %v10096
    %v10350 = vunpack.c.l.b16 %v10097
    %v10351 = vunpack.c.l.b16 %v10098
    %v10352 = vunpack.c.h.b16 %v10098
    %v10353 = vunpack.c.l.b16 %v10099
    %v10354 = vunpack.c.l.b16 %v10100
    %v10355 = vunpack.c.h.b16 %v10100
    %v10356 = vunpack.c.l.b16 %v10101
    %v10357 = vunpack.c.l.b16 %v10102
    %v10358 = vunpack.c.h.b16 %v10102
    %v10359 = vunpack.c.l.b16 %v10103
    %v10360 = vunpack.c.l.b16 %v10104
    %v10361 = vunpack.c.h.b16 %v10104
    %v10362 = vunpack.c.l.b16 %v10105
    %v10363 = vpack.c.b16 %v10222, %v10219
    %v10364 = vpack.c.b16 %v10223, %v10220
    %v10365 = vpack.c.b16 %v10224, %v10221
    %v10366 = vpack.c.b16 %v10228, %v10225
    %v10367 = vpack.c.b16 %v10229, %v10226
    %v10368 = vpack.c.b16 %v10230, %v10227
    %v10369 = vpack.c.b16 %v10234, %v10231
    %v10370 = vpack.c.b16 %v10235, %v10232
    %v10371 = vpack.c.b16 %v10236, %v10233
    %v10372 = vpack.c.b16 %v10240, %v10237
    %v10373 = vpack.c.b16 %v10241, %v10238
    %v10374 = vpack.c.b16 %v10242, %v10239
    %v10375 = vpack.c.b16 %v10246, %v10243
    %v10376 = vpack.c.b16 %v10247, %v10244
    %v10377 = vpack.c.b16 %v10248, %v10245
    %v10378 = vpack.c.b16 %v10252, %v10249
    %v10379 = vpack.c.b16 %v10253, %v10250
    %v10380 = vpack.c.b16 %v10254, %v10251
    %v10381 = vpack.c.b16 %v10258, %v10255
    %v10382 = vpack.c.b16 %v10259, %v10256
    %v10383 = vpack.c.b16 %v10260, %v10257
    %v10384 = vpack.c.b16 %v10264, %v10261
    %v10385 = vpack.c.b16 %v10265, %v10262
    %v10386 = vpack.c.b16 %v10266, %v10263
    %v10387 = vpack.c.b16 %v10270, %v10267
    %v10388 = vpack.c.b16 %v10271, %v10268
    %v10389 = vpack.c.b16 %v10272, %v10269
    %v10390 = vpack.c.b16 %v10276, %v10273
    %v10391 = vpack.c.b16 %v10277, %v10274
    %v10392 = vpack.c.b16 %v10278, %v10275
    %v10393 = vpack.c.b16 %v10282, %v10279
    %v10394 = vpack.c.b16 %v10283, %v10280
    %v10395 = vpack.c.b16 %v10284, %v10281
    %v10396 = vpack.c.b16 %v10288, %v10285
    %v10397 = vpack.c.b16 %v10289, %v10286
    %v10398 = vpack.c.b16 %v10290, %v10287
    %v10399 = vpack.c.b16 %v10294, %v10291
    %v10400 = vpack.c.b16 %v10295, %v10292
    %v10401 = vpack.c.b16 %v10296, %v10293
    %v10402 = vpack.c.b16 %v10300, %v10297
    %v10403 = vpack.c.b16 %v10301, %v10298
    %v10404 = vpack.c.b16 %v10302, %v10299
    %v10405 = vpack.c.b16 %v10306, %v10303
    %v10406 = vpack.c.b16 %v10307, %v10304
    %v10407 = vpack.c.b16 %v10308, %v10305
    %v10408 = vpack.c.b16 %v10312, %v10309
    %v10409 = vpack.c.b16 %v10313, %v10310
    %v10410 = vpack.c.b16 %v10314, %v10311
    %v10411 = vpack.c.b16 %v10318, %v10315
    %v10412 = vpack.c.b16 %v10319, %v10316
    %v10413 = vpack.c.b16 %v10320, %v10317
    %v10414 = vpack.c.b16 %v10324, %v10321
    %v10415 = vpack.c.b16 %v10325, %v10322
    %v10416 = vpack.c.b16 %v10326, %v10323
    %v10417 = vpack.c.b16 %v10330, %v10327
    %v10418 = vpack.c.b16 %v10331, %v10328
    %v10419 = vpack.c.b16 %v10332, %v10329
    %v10420 = vpack.c.b16 %v10336, %v10333
    %v10421 = vpack.c.b16 %v10337, %v10334
    %v10422 = vpack.c.b16 %v10338, %v10335
    %v10423 = vpack.c.b16 %v10342, %v10339
    %v10424 = vpack.c.b16 %v10343, %v10340
    %v10425 = vpack.c.b16 %v10344, %v10341
    %v10426 = vpack.c.b16 %v10348, %v10345
    %v10427 = vpack.c.b16 %v10349, %v10346
    %v10428 = vpack.c.b16 %v10350, %v10347
    %v10429 = vpack.c.b16 %v10354, %v10351
    %v10430 = vpack.c.b16 %v10355, %v10352
    %v10431 = vpack.c.b16 %v10356, %v10353
    %v10432 = vpack.c.b16 %v10360, %v10357
    %v10433 = vpack.c.b16 %v10361, %v10358
    %v10434 = vpack.c.b16 %v10362, %v10359
    %10507 = vmatprep.subr.bf16.mxu0 %v10385
    %10508 = vmatpush1.bf16.msra.mxu0 %v10384
    %10509 = vmatprep.subr.bf16.mxu0 %v10382
    %10510 = vmatpush1.bf16.msra.mxu0 %v10381
    %10511 = vmatprep.subr.bf16.mxu0 %v10379
    %10512 = vmatpush1.bf16.msra.mxu0 %v10378
    %10513 = vmatprep.subr.bf16.mxu0 %v10376
    %10514 = vmatpush1.bf16.msra.mxu0 %v10375
    %10515 = vmatprep.subr.bf16.mxu0 %v10373
    %10516 = vmatpush1.bf16.msra.mxu0 %v10372
    %10517 = vmatprep.subr.bf16.mxu0 %v10370
    %10518 = vmatpush1.bf16.msra.mxu0 %v10369
    %10519 = vmatprep.subr.bf16.mxu0 %v10367
    %10520 = vmatpush1.bf16.msra.mxu0 %v10366
    %10521 = vmatprep.subr.bf16.mxu0 %v10364
    %10522 = vmatpush1.bf16.msra.mxu0 %v10363
    %10523 = vmatprep.subr.bf16.mxu0 %v10409
    %10524 = vmatpush2.bf16.msra.mxu0 %v10408
    %10525 = vmatprep.subr.bf16.mxu0 %v10406
    %10526 = vmatpush2.bf16.msra.mxu0 %v10405
    %10527 = vmatprep.subr.bf16.mxu0 %v10403
    %10528 = vmatpush2.bf16.msra.mxu0 %v10402
    %10529 = vmatprep.subr.bf16.mxu0 %v10400
    %10530 = vmatpush2.bf16.msra.mxu0 %v10399
    %10531 = vmatprep.subr.bf16.mxu0 %v10397
    %10532 = vmatpush2.bf16.msra.mxu0 %v10396
    %10533 = vmatprep.subr.bf16.mxu0 %v10394
    %10534 = vmatpush2.bf16.msra.mxu0 %v10393
    %10535 = vmatprep.subr.bf16.mxu0 %v10391
    %10536 = vmatpush2.bf16.msra.mxu0 %v10390
    %10537 = vmatprep.subr.bf16.mxu0 %v10388
    %10538 = vmatpush2.bf16.msra.mxu0 %v10387
    %10539 = vmatprep.mubr.bf16.mxu0 %v10008
    %10540 = vmatmul.mubr.bf16.gmra.mxu0 %v10007
    %v10541 = vpop.f32.mrf.mxu0
    %v10542 = vadd.f32 %v10111, %v10541
    %v10543 = vpop.f32.mrf.mxu0
    %v10544 = vadd.f32 %v10115, %v10543
    %v10545 = vpop.f32.mrf.mxu0
    %v10546 = vpop.f32.mrf.mxu0
    %10547 = vdwg.mxu0
    %10548 = vmatprep.subr.bf16.mxu0 %v10433
    %10549 = vmatpush1.bf16.msra.mxu0 %v10432
    %10550 = vmatprep.subr.bf16.mxu0 %v10430
    %10551 = vmatpush1.bf16.msra.mxu0 %v10429
    %10552 = vmatprep.subr.bf16.mxu0 %v10427
    %10553 = vmatpush1.bf16.msra.mxu0 %v10426
    %10554 = vmatprep.subr.bf16.mxu0 %v10424
    %10555 = vmatpush1.bf16.msra.mxu0 %v10423
    %10556 = vmatprep.subr.bf16.mxu0 %v10421
    %10557 = vmatpush1.bf16.msra.mxu0 %v10420
    %10558 = vmatprep.subr.bf16.mxu0 %v10418
    %10559 = vmatpush1.bf16.msra.mxu0 %v10417
    %10560 = vmatprep.subr.bf16.mxu0 %v10415
    %10561 = vmatpush1.bf16.msra.mxu0 %v10414
    %10562 = vmatprep.subr.bf16.mxu0 %v10412
    %10563 = vmatpush1.bf16.msra.mxu0 %v10411
    %10564 = vmatprep.subr.bf16.mxu0 0
    %10565 = vmatpush2.bf16.msra.mxu0 0
    %10566 = vmatprep.subr.bf16.mxu0 0
    %10567 = vmatpush2.bf16.msra.mxu0 0
    %10568 = vmatprep.subr.bf16.mxu0 0
    %10569 = vmatpush2.bf16.msra.mxu0 0
    %10570 = vmatprep.subr.bf16.mxu0 0
    %10571 = vmatpush2.bf16.msra.mxu0 0
    %10572 = vmatprep.subr.bf16.mxu0 0
    %10573 = vmatpush2.bf16.msra.mxu0 0
    %10574 = vmatprep.subr.bf16.mxu0 0
    %10575 = vmatpush2.bf16.msra.mxu0 0
    %10576 = vmatprep.subr.bf16.mxu0 0
    %10577 = vmatpush2.bf16.msra.mxu0 0
    %10578 = vmatprep.subr.bf16.mxu0 0
    %10579 = vmatpush2.bf16.msra.mxu0 0
    %10580 = vmatprep.mubr.bf16.mxu0 0
    %10581 = vmatmul.mubr.bf16.gmra.mxu0 %v10009
    %v10582 = vpop.f32.mrf.mxu0
    %v10583 = vadd.f32 %v10542, %v10582
    %v10584 = vpop.f32.mrf.mxu0
    %v10585 = vadd.f32 %v10544, %v10584
    %v10586 = vpop.f32.mrf.mxu0
    %v10587 = vpop.f32.mrf.mxu0
    %10588 = vdwg.mxu0
    %10589 = vmatprep.subr.bf16.mxu0 0
    %10590 = vmatpush1.bf16.msra.mxu0 %v10386
    %10591 = vmatprep.subr.bf16.mxu0 0
    %10592 = vmatpush1.bf16.msra.mxu0 %v10383
    %10593 = vmatprep.subr.bf16.mxu0 0
    %10594 = vmatpush1.bf16.msra.mxu0 %v10380
    %10595 = vmatprep.subr.bf16.mxu0 0
    %10596 = vmatpush1.bf16.msra.mxu0 %v10377
    %10597 = vmatprep.subr.bf16.mxu0 0
    %10598 = vmatpush1.bf16.msra.mxu0 %v10374
    %10599 = vmatprep.subr.bf16.mxu0 0
    %10600 = vmatpush1.bf16.msra.mxu0 %v10371
    %10601 = vmatprep.subr.bf16.mxu0 0
    %10602 = vmatpush1.bf16.msra.mxu0 %v10368
    %10603 = vmatprep.subr.bf16.mxu0 0
    %10604 = vmatpush1.bf16.msra.mxu0 %v10365
    %10605 = vmatprep.subr.bf16.mxu0 0
    %10606 = vmatpush2.bf16.msra.mxu0 %v10410
    %10607 = vmatprep.subr.bf16.mxu0 0
    %10608 = vmatpush2.bf16.msra.mxu0 %v10407
    %10609 = vmatprep.subr.bf16.mxu0 0
    %10610 = vmatpush2.bf16.msra.mxu0 %v10404
    %10611 = vmatprep.subr.bf16.mxu0 0
    %10612 = vmatpush2.bf16.msra.mxu0 %v10401
    %10613 = vmatprep.subr.bf16.mxu0 0
    %10614 = vmatpush2.bf16.msra.mxu0 %v10398
    %10615 = vmatprep.subr.bf16.mxu0 0
    %10616 = vmatpush2.bf16.msra.mxu0 %v10395
    %10617 = vmatprep.subr.bf16.mxu0 0
    %10618 = vmatpush2.bf16.msra.mxu0 %v10392
    %10619 = vmatprep.subr.bf16.mxu0 0
    %10620 = vmatpush2.bf16.msra.mxu0 %v10389
    %10621 = vmatprep.mubr.bf16.mxu0 %v10008
    %10622 = vmatmul.mubr.bf16.gmra.mxu0 %v10007
    %v10623 = vpop.f32.mrf.mxu0
    %v10624 = vadd.f32 %v10119, %v10623
    %v10625 = vpop.f32.mrf.mxu0
    %v10626 = vpop.f32.mrf.mxu0
    %v10627 = vpop.f32.mrf.mxu0
    %10628 = vdwg.mxu0
    %10629 = vmatprep.subr.bf16.mxu0 0
    %10630 = vmatpush1.bf16.msra.mxu0 %v10434
    %10631 = vmatprep.subr.bf16.mxu0 0
    %10632 = vmatpush1.bf16.msra.mxu0 %v10431
    %10633 = vmatprep.subr.bf16.mxu0 0
    %10634 = vmatpush1.bf16.msra.mxu0 %v10428
    %10635 = vmatprep.subr.bf16.mxu0 0
    %10636 = vmatpush1.bf16.msra.mxu0 %v10425
    %10637 = vmatprep.subr.bf16.mxu0 0
    %10638 = vmatpush1.bf16.msra.mxu0 %v10422
    %10639 = vmatprep.subr.bf16.mxu0 0
    %10640 = vmatpush1.bf16.msra.mxu0 %v10419
    %10641 = vmatprep.subr.bf16.mxu0 0
    %10642 = vmatpush1.bf16.msra.mxu0 %v10416
    %10643 = vmatprep.subr.bf16.mxu0 0
    %10644 = vmatpush1.bf16.msra.mxu0 %v10413
    %10645 = vmatprep.subr.bf16.mxu0 0
    %10646 = vmatpush2.bf16.msra.mxu0 0
    %10647 = vmatprep.subr.bf16.mxu0 0
    %10648 = vmatpush2.bf16.msra.mxu0 0
    %10649 = vmatprep.subr.bf16.mxu0 0
    %10650 = vmatpush2.bf16.msra.mxu0 0
    %10651 = vmatprep.subr.bf16.mxu0 0
    %10652 = vmatpush2.bf16.msra.mxu0 0
    %10653 = vmatprep.subr.bf16.mxu0 0
    %10654 = vmatpush2.bf16.msra.mxu0 0
    %10655 = vmatprep.subr.bf16.mxu0 0
    %10656 = vmatpush2.bf16.msra.mxu0 0
    %10657 = vmatprep.subr.bf16.mxu0 0
    %10658 = vmatpush2.bf16.msra.mxu0 0
    %10659 = vmatprep.subr.bf16.mxu0 0
    %10660 = vmatpush2.bf16.msra.mxu0 0
    %10661 = vmatprep.mubr.bf16.mxu0 0
    %10662 = vmatmul.mubr.bf16.gmra.mxu0 %v10009
    %v10663 = vpop.f32.mrf.mxu0
    %v10664 = vadd.f32 %v10624, %v10663
    %v10665 = vpop.f32.mrf.mxu0
    %v10666 = vpop.f32.mrf.mxu0
    %v10667 = vpop.f32.mrf.mxu0
    %10668 = vdwg.mxu0
    %v10669 = vmax.f32 %v10583, 0.0
    %v10670 = vmax.f32 %v10585, 0.0
    %v10671 = vmax.f32 %v10664, 0.0
    %v10672 = vand.u32 2147483647, %v10583
    %v10673 = vand.u32 2147483647, %v10585
    %v10674 = vand.u32 2147483647, %v10664
    %v10675 = vsub.f32 0.0, %v10672
    %v10676 = vsub.f32 0.0, %v10673
    %v10677 = vsub.f32 0.0, %v10674
    %v10678 = vmul.f32 %v10675, 1.442695
    %v10679 = vpow.pop %v10678
    %v10680 = vmul.f32 %v10676, 1.442695
    %v10681 = vpow.pop %v10680
    %v10682 = vmul.f32 %v10677, 1.442695
    %v10683 = vpow.pop %v10682
    %v10684 = vadd.f32 %v10679, 1.0
    %v10685 = vlog2.pop %v10684
    %v10686 = vmul.f32 %v10685, 0.6931472
    %v10687 = vmul.f32 -0.5, %v10679
    %v10688 = vadd.f32 %v10687, 1.0
    %v10689 = vmul.f32 %v10688, %v10679
    %v10690 = vand.u32 2147483647, %v10679
    %vm10691 = vcmp.lt.f32.partialorder %v10690, 0.0004427343
    %v10692 = vsel %vm10691, %v10689, %v10686
    %v10693 = vadd.f32 %v10681, 1.0
    %v10694 = vlog2.pop %v10693
    %v10695 = vmul.f32 %v10694, 0.6931472
    %v10696 = vmul.f32 -0.5, %v10681
    %v10697 = vadd.f32 %v10696, 1.0
    %v10698 = vmul.f32 %v10697, %v10681
    %v10699 = vand.u32 2147483647, %v10681
    %vm10700 = vcmp.lt.f32.partialorder %v10699, 0.0004427343
    %v10701 = vsel %vm10700, %v10698, %v10695
    %v10702 = vadd.f32 %v10683, 1.0
    %v10703 = vlog2.pop %v10702
    %v10704 = vmul.f32 %v10703, 0.6931472
    %v10705 = vmul.f32 -0.5, %v10683
    %v10706 = vadd.f32 %v10705, 1.0
    %v10707 = vmul.f32 %v10706, %v10683
    %v10708 = vand.u32 2147483647, %v10683
    %vm10709 = vcmp.lt.f32.partialorder %v10708, 0.0004427343
    %v10710 = vsel %vm10709, %v10707, %v10704
    %v10711 = vadd.f32 %v10669, %v10692
    %v10712 = vadd.f32 %v10670, %v10701
    %v10713 = vadd.f32 %v10671, %v10710
    %v10714 = vpack.c.bf16 %v10711, %v10711
    %v10715 = vpack.c.bf16 %v10712, %v10712
    %v10716 = vpack.c.bf16 %v10713, %v10713
    %v10717 = vld [vmem:[#allocation31] sm:$0xff]
    %v10718 = vld [vmem:[#allocation31 + $0x8] sm:$0xf]
    %v10719 = vld [vmem:[#allocation31 + $0xc] sm:$0xff]
    %v10720 = vld [vmem:[#allocation31 + $0x14] sm:$0xf]
    %v10721 = vld [vmem:[#allocation31 + $0x18] sm:$0xff]
    %v10722 = vld [vmem:[#allocation31 + $0x20] sm:$0xf]
    %v10723 = vld [vmem:[#allocation31 + $0x24] sm:$0xff]
    %v10724 = vld [vmem:[#allocation31 + $0x2c] sm:$0xf]
    %v10725 = vld [vmem:[#allocation31 + $0x30] sm:$0xff]
    %v10726 = vld [vmem:[#allocation31 + $0x38] sm:$0xf]
    %v10727 = vld [vmem:[#allocation31 + $0x3c] sm:$0xff]
    %v10728 = vld [vmem:[#allocation31 + $0x44] sm:$0xf]
    %v10729 = vld [vmem:[#allocation31 + $0x48] sm:$0xff]
    %v10730 = vld [vmem:[#allocation31 + $0x50] sm:$0xf]
    %v10731 = vld [vmem:[#allocation31 + $0x54] sm:$0xff]
    %v10732 = vld [vmem:[#allocation31 + $0x5c] sm:$0xf]
    %v10733 = vld [vmem:[#allocation31 + $0x60] sm:$0xff]
    %v10734 = vld [vmem:[#allocation31 + $0x68] sm:$0xf]
    %v10735 = vld [vmem:[#allocation31 + $0x6c] sm:$0xff]
    %v10736 = vld [vmem:[#allocation31 + $0x74] sm:$0xf]
    %v10737 = vld [vmem:[#allocation31 + $0x78] sm:$0xff]
    %v10738 = vld [vmem:[#allocation31 + $0x80] sm:$0xf]
    %v10739 = vld [vmem:[#allocation31 + $0x84] sm:$0xff]
    %v10740 = vld [vmem:[#allocation31 + $0x8c] sm:$0xf]
    %v10741 = vld [vmem:[#allocation31 + $0x90] sm:$0xff]
    %v10742 = vld [vmem:[#allocation31 + $0x98] sm:$0xf]
    %v10743 = vld [vmem:[#allocation31 + $0x9c] sm:$0xff]
    %v10744 = vld [vmem:[#allocation31 + $0xa4] sm:$0xf]
    %v10745 = vld [vmem:[#allocation31 + $0xa8] sm:$0xff]
    %v10746 = vld [vmem:[#allocation31 + $0xb0] sm:$0xf]
    %v10747 = vld [vmem:[#allocation31 + $0xb4] sm:$0xff]
    %v10748 = vld [vmem:[#allocation31 + $0xbc] sm:$0xf]
    %v10749 = vld [vmem:[#allocation31 + $0xc0] sm:$0xff]
    %v10750 = vld [vmem:[#allocation31 + $0xc8] sm:$0xf]
    %v10751 = vld [vmem:[#allocation31 + $0xcc] sm:$0xff]
    %v10752 = vld [vmem:[#allocation31 + $0xd4] sm:$0xf]
    %v10753 = vld [vmem:[#allocation31 + $0xd8] sm:$0xff]
    %v10754 = vld [vmem:[#allocation31 + $0xe0] sm:$0xf]
    %v10755 = vld [vmem:[#allocation31 + $0xe4] sm:$0xff]
    %v10756 = vld [vmem:[#allocation31 + $0xec] sm:$0xf]
    %v10757 = vld [vmem:[#allocation31 + $0xf0] sm:$0xff]
    %v10758 = vld [vmem:[#allocation31 + $0xf8] sm:$0xf]
    %v10759 = vld [vmem:[#allocation31 + $0xfc] sm:$0xff]
    %v10760 = vld [vmem:[#allocation31 + $0x104] sm:$0xf]
    %v10761 = vld [vmem:[#allocation31 + $0x108] sm:$0xff]
    %v10762 = vld [vmem:[#allocation31 + $0x110] sm:$0xf]
    %v10763 = vld [vmem:[#allocation31 + $0x114] sm:$0xff]
    %v10764 = vld [vmem:[#allocation31 + $0x11c] sm:$0xf]
    %v10765 = vld [vmem:[#allocation31 + $0x120] sm:$0xff]
    %v10766 = vld [vmem:[#allocation31 + $0x128] sm:$0xf]
    %v10767 = vld [vmem:[#allocation31 + $0x12c] sm:$0xff]
    %v10768 = vld [vmem:[#allocation31 + $0x134] sm:$0xf]
    %v10769 = vld [vmem:[#allocation31 + $0x138] sm:$0xff]
    %v10770 = vld [vmem:[#allocation31 + $0x140] sm:$0xf]
    %v10771 = vld [vmem:[#allocation31 + $0x144] sm:$0xff]
    %v10772 = vld [vmem:[#allocation31 + $0x14c] sm:$0xf]
    %v10773 = vld [vmem:[#allocation31 + $0x150] sm:$0xff]
    %v10774 = vld [vmem:[#allocation31 + $0x158] sm:$0xf]
    %v10775 = vld [vmem:[#allocation31 + $0x15c] sm:$0xff]
    %v10776 = vld [vmem:[#allocation31 + $0x164] sm:$0xf]
    %v10777 = vld [vmem:[#allocation31 + $0x168] sm:$0xff]
    %v10778 = vld [vmem:[#allocation31 + $0x170] sm:$0xf]
    %v10779 = vld [vmem:[#allocation31 + $0x174] sm:$0xff]
    %v10780 = vld [vmem:[#allocation31 + $0x17c] sm:$0xf]
    %v10781 = vld [vmem:[#allocation31 + $0x180] sm:$0xff]
    %v10782 = vld [vmem:[#allocation31 + $0x188] sm:$0xf]
    %v10783 = vld [vmem:[#allocation31 + $0x18c] sm:$0xff]
    %v10784 = vld [vmem:[#allocation31 + $0x194] sm:$0xf]
    %v10785 = vld [vmem:[#allocation31 + $0x198] sm:$0xff]
    %v10786 = vld [vmem:[#allocation31 + $0x1a0] sm:$0xf]
    %v10787 = vld [vmem:[#allocation31 + $0x1a4] sm:$0xff]
    %v10788 = vld [vmem:[#allocation31 + $0x1ac] sm:$0xf]
    %v10789 = vld [vmem:[#allocation31 + $0x1b0] sm:$0xff]
    %v10790 = vld [vmem:[#allocation31 + $0x1b8] sm:$0xf]
    %v10791 = vld [vmem:[#allocation31 + $0x1bc] sm:$0xff]
    %v10792 = vld [vmem:[#allocation31 + $0x1c4] sm:$0xf]
    %v10793 = vld [vmem:[#allocation31 + $0x1c8] sm:$0xff]
    %v10794 = vld [vmem:[#allocation31 + $0x1d0] sm:$0xf]
    %v10795 = vld [vmem:[#allocation31 + $0x1d4] sm:$0xff]
    %v10796 = vld [vmem:[#allocation31 + $0x1dc] sm:$0xf]
    %v10797 = vld [vmem:[#allocation31 + $0x1e0] sm:$0xff]
    %v10798 = vld [vmem:[#allocation31 + $0x1e8] sm:$0xf]
    %v10799 = vld [vmem:[#allocation31 + $0x1ec] sm:$0xff]
    %v10800 = vld [vmem:[#allocation31 + $0x1f4] sm:$0xf]
    %v10801 = vld [vmem:[#allocation31 + $0x1f8] sm:$0xff]
    %v10802 = vld [vmem:[#allocation31 + $0x200] sm:$0xf]
    %v10803 = vld [vmem:[#allocation31 + $0x204] sm:$0xff]
    %v10804 = vld [vmem:[#allocation31 + $0x20c] sm:$0xf]
    %v10805 = vld [vmem:[#allocation31 + $0x210] sm:$0xff]
    %v10806 = vld [vmem:[#allocation31 + $0x218] sm:$0xf]
    %v10807 = vld [vmem:[#allocation31 + $0x21c] sm:$0xff]
    %v10808 = vld [vmem:[#allocation31 + $0x224] sm:$0xf]
    %v10809 = vld [vmem:[#allocation31 + $0x228] sm:$0xff]
    %v10810 = vld [vmem:[#allocation31 + $0x230] sm:$0xf]
    %v10811 = vld [vmem:[#allocation31 + $0x234] sm:$0xff]
    %v10812 = vld [vmem:[#allocation31 + $0x23c] sm:$0xf]
    %v10813 = vld [vmem:[%s69] sm:$0x7]
    %v10815 = vlaneseq
    %v10816 = vshrl.u32 %v10815, 7
    %v10817 = vsub.s32 0, %v10816
    %v10818 = vrot.slane %v10813, %v10817
    %v10819 = vlaneseq
    %v10820 = vshrl.u32 %v10819, 7
    %v10821 = vsub.s32 1, %v10820
    %v10822 = vrot.slane %v10813, %v10821
    %v10823 = vlaneseq
    %v10824 = vshrl.u32 %v10823, 7
    %v10825 = vsub.s32 2, %v10824
    %v10826 = vrot.slane %v10813, %v10825
    %v10926 = vunpack.c.l.b16 %v10717
    %v10927 = vunpack.c.h.b16 %v10717
    %v10928 = vunpack.c.l.b16 %v10718
    %v10929 = vunpack.c.l.b16 %v10719
    %v10930 = vunpack.c.h.b16 %v10719
    %v10931 = vunpack.c.l.b16 %v10720
    %v10932 = vunpack.c.l.b16 %v10721
    %v10933 = vunpack.c.h.b16 %v10721
    %v10934 = vunpack.c.l.b16 %v10722
    %v10935 = vunpack.c.l.b16 %v10723
    %v10936 = vunpack.c.h.b16 %v10723
    %v10937 = vunpack.c.l.b16 %v10724
    %v10938 = vunpack.c.l.b16 %v10725
    %v10939 = vunpack.c.h.b16 %v10725
    %v10940 = vunpack.c.l.b16 %v10726
    %v10941 = vunpack.c.l.b16 %v10727
    %v10942 = vunpack.c.h.b16 %v10727
    %v10943 = vunpack.c.l.b16 %v10728
    %v10944 = vunpack.c.l.b16 %v10729
    %v10945 = vunpack.c.h.b16 %v10729
    %v10946 = vunpack.c.l.b16 %v10730
    %v10947 = vunpack.c.l.b16 %v10731
    %v10948 = vunpack.c.h.b16 %v10731
    %v10949 = vunpack.c.l.b16 %v10732
    %v10950 = vunpack.c.l.b16 %v10733
    %v10951 = vunpack.c.h.b16 %v10733
    %v10952 = vunpack.c.l.b16 %v10734
    %v10953 = vunpack.c.l.b16 %v10735
    %v10954 = vunpack.c.h.b16 %v10735
    %v10955 = vunpack.c.l.b16 %v10736
    %v10956 = vunpack.c.l.b16 %v10737
    %v10957 = vunpack.c.h.b16 %v10737
    %v10958 = vunpack.c.l.b16 %v10738
    %v10959 = vunpack.c.l.b16 %v10739
    %v10960 = vunpack.c.h.b16 %v10739
    %v10961 = vunpack.c.l.b16 %v10740
    %v10962 = vunpack.c.l.b16 %v10741
    %v10963 = vunpack.c.h.b16 %v10741
    %v10964 = vunpack.c.l.b16 %v10742
    %v10965 = vunpack.c.l.b16 %v10743
    %v10966 = vunpack.c.h.b16 %v10743
    %v10967 = vunpack.c.l.b16 %v10744
    %v10968 = vunpack.c.l.b16 %v10745
    %v10969 = vunpack.c.h.b16 %v10745
    %v10970 = vunpack.c.l.b16 %v10746
    %v10971 = vunpack.c.l.b16 %v10747
    %v10972 = vunpack.c.h.b16 %v10747
    %v10973 = vunpack.c.l.b16 %v10748
    %v10974 = vunpack.c.l.b16 %v10749
    %v10975 = vunpack.c.h.b16 %v10749
    %v10976 = vunpack.c.l.b16 %v10750
    %v10977 = vunpack.c.l.b16 %v10751
    %v10978 = vunpack.c.h.b16 %v10751
    %v10979 = vunpack.c.l.b16 %v10752
    %v10980 = vunpack.c.l.b16 %v10753
    %v10981 = vunpack.c.h.b16 %v10753
    %v10982 = vunpack.c.l.b16 %v10754
    %v10983 = vunpack.c.l.b16 %v10755
    %v10984 = vunpack.c.h.b16 %v10755
    %v10985 = vunpack.c.l.b16 %v10756
    %v10986 = vunpack.c.l.b16 %v10757
    %v10987 = vunpack.c.h.b16 %v10757
    %v10988 = vunpack.c.l.b16 %v10758
    %v10989 = vunpack.c.l.b16 %v10759
    %v10990 = vunpack.c.h.b16 %v10759
    %v10991 = vunpack.c.l.b16 %v10760
    %v10992 = vunpack.c.l.b16 %v10761
    %v10993 = vunpack.c.h.b16 %v10761
    %v10994 = vunpack.c.l.b16 %v10762
    %v10995 = vunpack.c.l.b16 %v10763
    %v10996 = vunpack.c.h.b16 %v10763
    %v10997 = vunpack.c.l.b16 %v10764
    %v10998 = vunpack.c.l.b16 %v10765
    %v10999 = vunpack.c.h.b16 %v10765
    %v11000 = vunpack.c.l.b16 %v10766
    %v11001 = vunpack.c.l.b16 %v10767
    %v11002 = vunpack.c.h.b16 %v10767
    %v11003 = vunpack.c.l.b16 %v10768
    %v11004 = vunpack.c.l.b16 %v10769
    %v11005 = vunpack.c.h.b16 %v10769
    %v11006 = vunpack.c.l.b16 %v10770
    %v11007 = vunpack.c.l.b16 %v10771
    %v11008 = vunpack.c.h.b16 %v10771
    %v11009 = vunpack.c.l.b16 %v10772
    %v11010 = vunpack.c.l.b16 %v10773
    %v11011 = vunpack.c.h.b16 %v10773
    %v11012 = vunpack.c.l.b16 %v10774
    %v11013 = vunpack.c.l.b16 %v10775
    %v11014 = vunpack.c.h.b16 %v10775
    %v11015 = vunpack.c.l.b16 %v10776
    %v11016 = vunpack.c.l.b16 %v10777
    %v11017 = vunpack.c.h.b16 %v10777
    %v11018 = vunpack.c.l.b16 %v10778
    %v11019 = vunpack.c.l.b16 %v10779
    %v11020 = vunpack.c.h.b16 %v10779
    %v11021 = vunpack.c.l.b16 %v10780
    %v11022 = vunpack.c.l.b16 %v10781
    %v11023 = vunpack.c.h.b16 %v10781
    %v11024 = vunpack.c.l.b16 %v10782
    %v11025 = vunpack.c.l.b16 %v10783
    %v11026 = vunpack.c.h.b16 %v10783
    %v11027 = vunpack.c.l.b16 %v10784
    %v11028 = vunpack.c.l.b16 %v10785
    %v11029 = vunpack.c.h.b16 %v10785
    %v11030 = vunpack.c.l.b16 %v10786
    %v11031 = vunpack.c.l.b16 %v10787
    %v11032 = vunpack.c.h.b16 %v10787
    %v11033 = vunpack.c.l.b16 %v10788
    %v11034 = vunpack.c.l.b16 %v10789
    %v11035 = vunpack.c.h.b16 %v10789
    %v11036 = vunpack.c.l.b16 %v10790
    %v11037 = vunpack.c.l.b16 %v10791
    %v11038 = vunpack.c.h.b16 %v10791
    %v11039 = vunpack.c.l.b16 %v10792
    %v11040 = vunpack.c.l.b16 %v10793
    %v11041 = vunpack.c.h.b16 %v10793
    %v11042 = vunpack.c.l.b16 %v10794
    %v11043 = vunpack.c.l.b16 %v10795
    %v11044 = vunpack.c.h.b16 %v10795
    %v11045 = vunpack.c.l.b16 %v10796
    %v11046 = vunpack.c.l.b16 %v10797
    %v11047 = vunpack.c.h.b16 %v10797
    %v11048 = vunpack.c.l.b16 %v10798
    %v11049 = vunpack.c.l.b16 %v10799
    %v11050 = vunpack.c.h.b16 %v10799
    %v11051 = vunpack.c.l.b16 %v10800
    %v11052 = vunpack.c.l.b16 %v10801
    %v11053 = vunpack.c.h.b16 %v10801
    %v11054 = vunpack.c.l.b16 %v10802
    %v11055 = vunpack.c.l.b16 %v10803
    %v11056 = vunpack.c.h.b16 %v10803
    %v11057 = vunpack.c.l.b16 %v10804
    %v11058 = vunpack.c.l.b16 %v10805
    %v11059 = vunpack.c.h.b16 %v10805
    %v11060 = vunpack.c.l.b16 %v10806
    %v11061 = vunpack.c.l.b16 %v10807
    %v11062 = vunpack.c.h.b16 %v10807
    %v11063 = vunpack.c.l.b16 %v10808
    %v11064 = vunpack.c.l.b16 %v10809
    %v11065 = vunpack.c.h.b16 %v10809
    %v11066 = vunpack.c.l.b16 %v10810
    %v11067 = vunpack.c.l.b16 %v10811
    %v11068 = vunpack.c.h.b16 %v10811
    %v11069 = vunpack.c.l.b16 %v10812
    %v11070 = vpack.c.b16 %v10929, %v10926
    %v11071 = vpack.c.b16 %v10930, %v10927
    %v11072 = vpack.c.b16 %v10931, %v10928
    %v11073 = vpack.c.b16 %v10935, %v10932
    %v11074 = vpack.c.b16 %v10936, %v10933
    %v11075 = vpack.c.b16 %v10937, %v10934
    %v11076 = vpack.c.b16 %v10941, %v10938
    %v11077 = vpack.c.b16 %v10942, %v10939
    %v11078 = vpack.c.b16 %v10943, %v10940
    %v11079 = vpack.c.b16 %v10947, %v10944
    %v11080 = vpack.c.b16 %v10948, %v10945
    %v11081 = vpack.c.b16 %v10949, %v10946
    %v11082 = vpack.c.b16 %v10953, %v10950
    %v11083 = vpack.c.b16 %v10954, %v10951
    %v11084 = vpack.c.b16 %v10955, %v10952
    %v11085 = vpack.c.b16 %v10959, %v10956
    %v11086 = vpack.c.b16 %v10960, %v10957
    %v11087 = vpack.c.b16 %v10961, %v10958
    %v11088 = vpack.c.b16 %v10965, %v10962
    %v11089 = vpack.c.b16 %v10966, %v10963
    %v11090 = vpack.c.b16 %v10967, %v10964
    %v11091 = vpack.c.b16 %v10971, %v10968
    %v11092 = vpack.c.b16 %v10972, %v10969
    %v11093 = vpack.c.b16 %v10973, %v10970
    %v11094 = vpack.c.b16 %v10977, %v10974
    %v11095 = vpack.c.b16 %v10978, %v10975
    %v11096 = vpack.c.b16 %v10979, %v10976
    %v11097 = vpack.c.b16 %v10983, %v10980
    %v11098 = vpack.c.b16 %v10984, %v10981
    %v11099 = vpack.c.b16 %v10985, %v10982
    %v11100 = vpack.c.b16 %v10989, %v10986
    %v11101 = vpack.c.b16 %v10990, %v10987
    %v11102 = vpack.c.b16 %v10991, %v10988
    %v11103 = vpack.c.b16 %v10995, %v10992
    %v11104 = vpack.c.b16 %v10996, %v10993
    %v11105 = vpack.c.b16 %v10997, %v10994
    %v11106 = vpack.c.b16 %v11001, %v10998
    %v11107 = vpack.c.b16 %v11002, %v10999
    %v11108 = vpack.c.b16 %v11003, %v11000
    %v11109 = vpack.c.b16 %v11007, %v11004
    %v11110 = vpack.c.b16 %v11008, %v11005
    %v11111 = vpack.c.b16 %v11009, %v11006
    %v11112 = vpack.c.b16 %v11013, %v11010
    %v11113 = vpack.c.b16 %v11014, %v11011
    %v11114 = vpack.c.b16 %v11015, %v11012
    %v11115 = vpack.c.b16 %v11019, %v11016
    %v11116 = vpack.c.b16 %v11020, %v11017
    %v11117 = vpack.c.b16 %v11021, %v11018
    %v11118 = vpack.c.b16 %v11025, %v11022
    %v11119 = vpack.c.b16 %v11026, %v11023
    %v11120 = vpack.c.b16 %v11027, %v11024
    %v11121 = vpack.c.b16 %v11031, %v11028
    %v11122 = vpack.c.b16 %v11032, %v11029
    %v11123 = vpack.c.b16 %v11033, %v11030
    %v11124 = vpack.c.b16 %v11037, %v11034
    %v11125 = vpack.c.b16 %v11038, %v11035
    %v11126 = vpack.c.b16 %v11039, %v11036
    %v11127 = vpack.c.b16 %v11043, %v11040
    %v11128 = vpack.c.b16 %v11044, %v11041
    %v11129 = vpack.c.b16 %v11045, %v11042
    %v11130 = vpack.c.b16 %v11049, %v11046
    %v11131 = vpack.c.b16 %v11050, %v11047
    %v11132 = vpack.c.b16 %v11051, %v11048
    %v11133 = vpack.c.b16 %v11055, %v11052
    %v11134 = vpack.c.b16 %v11056, %v11053
    %v11135 = vpack.c.b16 %v11057, %v11054
    %v11136 = vpack.c.b16 %v11061, %v11058
    %v11137 = vpack.c.b16 %v11062, %v11059
    %v11138 = vpack.c.b16 %v11063, %v11060
    %v11139 = vpack.c.b16 %v11067, %v11064
    %v11140 = vpack.c.b16 %v11068, %v11065
    %v11141 = vpack.c.b16 %v11069, %v11066
    %11214 = vmatprep.subr.bf16.mxu0 %v11092
    %11215 = vmatpush1.bf16.msra.mxu0 %v11091
    %11216 = vmatprep.subr.bf16.mxu0 %v11089
    %11217 = vmatpush1.bf16.msra.mxu0 %v11088
    %11218 = vmatprep.subr.bf16.mxu0 %v11086
    %11219 = vmatpush1.bf16.msra.mxu0 %v11085
    %11220 = vmatprep.subr.bf16.mxu0 %v11083
    %11221 = vmatpush1.bf16.msra.mxu0 %v11082
    %11222 = vmatprep.subr.bf16.mxu0 %v11080
    %11223 = vmatpush1.bf16.msra.mxu0 %v11079
    %11224 = vmatprep.subr.bf16.mxu0 %v11077
    %11225 = vmatpush1.bf16.msra.mxu0 %v11076
    %11226 = vmatprep.subr.bf16.mxu0 %v11074
    %11227 = vmatpush1.bf16.msra.mxu0 %v11073
    %11228 = vmatprep.subr.bf16.mxu0 %v11071
    %11229 = vmatpush1.bf16.msra.mxu0 %v11070
    %11230 = vmatprep.subr.bf16.mxu0 %v11116
    %11231 = vmatpush2.bf16.msra.mxu0 %v11115
    %11232 = vmatprep.subr.bf16.mxu0 %v11113
    %11233 = vmatpush2.bf16.msra.mxu0 %v11112
    %11234 = vmatprep.subr.bf16.mxu0 %v11110
    %11235 = vmatpush2.bf16.msra.mxu0 %v11109
    %11236 = vmatprep.subr.bf16.mxu0 %v11107
    %11237 = vmatpush2.bf16.msra.mxu0 %v11106
    %11238 = vmatprep.subr.bf16.mxu0 %v11104
    %11239 = vmatpush2.bf16.msra.mxu0 %v11103
    %11240 = vmatprep.subr.bf16.mxu0 %v11101
    %11241 = vmatpush2.bf16.msra.mxu0 %v11100
    %11242 = vmatprep.subr.bf16.mxu0 %v11098
    %11243 = vmatpush2.bf16.msra.mxu0 %v11097
    %11244 = vmatprep.subr.bf16.mxu0 %v11095
    %11245 = vmatpush2.bf16.msra.mxu0 %v11094
    %11246 = vmatprep.mubr.bf16.mxu0 %v10715
    %11247 = vmatmul.mubr.bf16.gmra.mxu0 %v10714
    %v11248 = vpop.f32.mrf.mxu0
    %v11249 = vadd.f32 %v10818, %v11248
    %v11250 = vpop.f32.mrf.mxu0
    %v11251 = vadd.f32 %v10822, %v11250
    %v11252 = vpop.f32.mrf.mxu0
    %v11253 = vpop.f32.mrf.mxu0
    %11254 = vdwg.mxu0
    %11255 = vmatprep.subr.bf16.mxu0 %v11140
    %11256 = vmatpush1.bf16.msra.mxu0 %v11139
    %11257 = vmatprep.subr.bf16.mxu0 %v11137
    %11258 = vmatpush1.bf16.msra.mxu0 %v11136
    %11259 = vmatprep.subr.bf16.mxu0 %v11134
    %11260 = vmatpush1.bf16.msra.mxu0 %v11133
    %11261 = vmatprep.subr.bf16.mxu0 %v11131
    %11262 = vmatpush1.bf16.msra.mxu0 %v11130
    %11263 = vmatprep.subr.bf16.mxu0 %v11128
    %11264 = vmatpush1.bf16.msra.mxu0 %v11127
    %11265 = vmatprep.subr.bf16.mxu0 %v11125
    %11266 = vmatpush1.bf16.msra.mxu0 %v11124
    %11267 = vmatprep.subr.bf16.mxu0 %v11122
    %11268 = vmatpush1.bf16.msra.mxu0 %v11121
    %11269 = vmatprep.subr.bf16.mxu0 %v11119
    %11270 = vmatpush1.bf16.msra.mxu0 %v11118
    %11271 = vmatprep.subr.bf16.mxu0 0
    %11272 = vmatpush2.bf16.msra.mxu0 0
    %11273 = vmatprep.subr.bf16.mxu0 0
    %11274 = vmatpush2.bf16.msra.mxu0 0
    %11275 = vmatprep.subr.bf16.mxu0 0
    %11276 = vmatpush2.bf16.msra.mxu0 0
    %11277 = vmatprep.subr.bf16.mxu0 0
    %11278 = vmatpush2.bf16.msra.mxu0 0
    %11279 = vmatprep.subr.bf16.mxu0 0
    %11280 = vmatpush2.bf16.msra.mxu0 0
    %11281 = vmatprep.subr.bf16.mxu0 0
    %11282 = vmatpush2.bf16.msra.mxu0 0
    %11283 = vmatprep.subr.bf16.mxu0 0
    %11284 = vmatpush2.bf16.msra.mxu0 0
    %11285 = vmatprep.subr.bf16.mxu0 0
    %11286 = vmatpush2.bf16.msra.mxu0 0
    %11287 = vmatprep.mubr.bf16.mxu0 0
    %11288 = vmatmul.mubr.bf16.gmra.mxu0 %v10716
    %v11289 = vpop.f32.mrf.mxu0
    %v11290 = vadd.f32 %v11249, %v11289
    %v11291 = vpop.f32.mrf.mxu0
    %v11292 = vadd.f32 %v11251, %v11291
    %v11293 = vpop.f32.mrf.mxu0
    %v11294 = vpop.f32.mrf.mxu0
    %11295 = vdwg.mxu0
    %11296 = vmatprep.subr.bf16.mxu0 0
    %11297 = vmatpush1.bf16.msra.mxu0 %v11093
    %11298 = vmatprep.subr.bf16.mxu0 0
    %11299 = vmatpush1.bf16.msra.mxu0 %v11090
    %11300 = vmatprep.subr.bf16.mxu0 0
    %11301 = vmatpush1.bf16.msra.mxu0 %v11087
    %11302 = vmatprep.subr.bf16.mxu0 0
    %11303 = vmatpush1.bf16.msra.mxu0 %v11084
    %11304 = vmatprep.subr.bf16.mxu0 0
    %11305 = vmatpush1.bf16.msra.mxu0 %v11081
    %11306 = vmatprep.subr.bf16.mxu0 0
    %11307 = vmatpush1.bf16.msra.mxu0 %v11078
    %11308 = vmatprep.subr.bf16.mxu0 0
    %11309 = vmatpush1.bf16.msra.mxu0 %v11075
    %11310 = vmatprep.subr.bf16.mxu0 0
    %11311 = vmatpush1.bf16.msra.mxu0 %v11072
    %11312 = vmatprep.subr.bf16.mxu0 0
    %11313 = vmatpush2.bf16.msra.mxu0 %v11117
    %11314 = vmatprep.subr.bf16.mxu0 0
    %11315 = vmatpush2.bf16.msra.mxu0 %v11114
    %11316 = vmatprep.subr.bf16.mxu0 0
    %11317 = vmatpush2.bf16.msra.mxu0 %v11111
    %11318 = vmatprep.subr.bf16.mxu0 0
    %11319 = vmatpush2.bf16.msra.mxu0 %v11108
    %11320 = vmatprep.subr.bf16.mxu0 0
    %11321 = vmatpush2.bf16.msra.mxu0 %v11105
    %11322 = vmatprep.subr.bf16.mxu0 0
    %11323 = vmatpush2.bf16.msra.mxu0 %v11102
    %11324 = vmatprep.subr.bf16.mxu0 0
    %11325 = vmatpush2.bf16.msra.mxu0 %v11099
    %11326 = vmatprep.subr.bf16.mxu0 0
    %11327 = vmatpush2.bf16.msra.mxu0 %v11096
    %11328 = vmatprep.mubr.bf16.mxu0 %v10715
    %11329 = vmatmul.mubr.bf16.gmra.mxu0 %v10714
    %v11330 = vpop.f32.mrf.mxu0
    %v11331 = vadd.f32 %v10826, %v11330
    %v11332 = vpop.f32.mrf.mxu0
    %v11333 = vpop.f32.mrf.mxu0
    %v11334 = vpop.f32.mrf.mxu0
    %11335 = vdwg.mxu0
    %11336 = vmatprep.subr.bf16.mxu0 0
    %11337 = vmatpush1.bf16.msra.mxu0 %v11141
    %11338 = vmatprep.subr.bf16.mxu0 0
    %11339 = vmatpush1.bf16.msra.mxu0 %v11138
    %11340 = vmatprep.subr.bf16.mxu0 0
    %11341 = vmatpush1.bf16.msra.mxu0 %v11135
    %11342 = vmatprep.subr.bf16.mxu0 0
    %11343 = vmatpush1.bf16.msra.mxu0 %v11132
    %11344 = vmatprep.subr.bf16.mxu0 0
    %11345 = vmatpush1.bf16.msra.mxu0 %v11129
    %11346 = vmatprep.subr.bf16.mxu0 0
    %11347 = vmatpush1.bf16.msra.mxu0 %v11126
    %11348 = vmatprep.subr.bf16.mxu0 0
    %11349 = vmatpush1.bf16.msra.mxu0 %v11123
    %11350 = vmatprep.subr.bf16.mxu0 0
    %11351 = vmatpush1.bf16.msra.mxu0 %v11120
    %11352 = vmatprep.subr.bf16.mxu0 0
    %11353 = vmatpush2.bf16.msra.mxu0 0
    %11354 = vmatprep.subr.bf16.mxu0 0
    %11355 = vmatpush2.bf16.msra.mxu0 0
    %11356 = vmatprep.subr.bf16.mxu0 0
    %11357 = vmatpush2.bf16.msra.mxu0 0
    %11358 = vmatprep.subr.bf16.mxu0 0
    %11359 = vmatpush2.bf16.msra.mxu0 0
    %11360 = vmatprep.subr.bf16.mxu0 0
    %11361 = vmatpush2.bf16.msra.mxu0 0
    %11362 = vmatprep.subr.bf16.mxu0 0
    %11363 = vmatpush2.bf16.msra.mxu0 0
    %11364 = vmatprep.subr.bf16.mxu0 0
    %11365 = vmatpush2.bf16.msra.mxu0 0
    %11366 = vmatprep.subr.bf16.mxu0 0
    %11367 = vmatpush2.bf16.msra.mxu0 0
    %11368 = vmatprep.mubr.bf16.mxu0 0
    %11369 = vmatmul.mubr.bf16.gmra.mxu0 %v10716
    %v11370 = vpop.f32.mrf.mxu0
    %v11371 = vadd.f32 %v11331, %v11370
    %v11372 = vpop.f32.mrf.mxu0
    %v11373 = vpop.f32.mrf.mxu0
    %v11374 = vpop.f32.mrf.mxu0
    %11375 = vdwg.mxu0
    %v11376 = vmax.f32 %v11290, 0.0
    %v11377 = vmax.f32 %v11292, 0.0
    %v11378 = vmax.f32 %v11371, 0.0
    %v11379 = vand.u32 2147483647, %v11290
    %v11380 = vand.u32 2147483647, %v11292
    %v11381 = vand.u32 2147483647, %v11371
    %v11382 = vsub.f32 0.0, %v11379
    %v11383 = vsub.f32 0.0, %v11380
    %v11384 = vsub.f32 0.0, %v11381
    %v11385 = vmul.f32 %v11382, 1.442695
    %v11386 = vpow.pop %v11385
    %v11387 = vmul.f32 %v11383, 1.442695
    %v11388 = vpow.pop %v11387
    %v11389 = vmul.f32 %v11384, 1.442695
    %v11390 = vpow.pop %v11389
    %v11391 = vadd.f32 %v11386, 1.0
    %v11392 = vlog2.pop %v11391
    %v11393 = vmul.f32 %v11392, 0.6931472
    %v11394 = vmul.f32 -0.5, %v11386
    %v11395 = vadd.f32 %v11394, 1.0
    %v11396 = vmul.f32 %v11395, %v11386
    %v11397 = vand.u32 2147483647, %v11386
    %vm11398 = vcmp.lt.f32.partialorder %v11397, 0.0004427343
    %v11399 = vsel %vm11398, %v11396, %v11393
    %v11400 = vadd.f32 %v11388, 1.0
    %v11401 = vlog2.pop %v11400
    %v11402 = vmul.f32 %v11401, 0.6931472
    %v11403 = vmul.f32 -0.5, %v11388
    %v11404 = vadd.f32 %v11403, 1.0
    %v11405 = vmul.f32 %v11404, %v11388
    %v11406 = vand.u32 2147483647, %v11388
    %vm11407 = vcmp.lt.f32.partialorder %v11406, 0.0004427343
    %v11408 = vsel %vm11407, %v11405, %v11402
    %v11409 = vadd.f32 %v11390, 1.0
    %v11410 = vlog2.pop %v11409
    %v11411 = vmul.f32 %v11410, 0.6931472
    %v11412 = vmul.f32 -0.5, %v11390
    %v11413 = vadd.f32 %v11412, 1.0
    %v11414 = vmul.f32 %v11413, %v11390
    %v11415 = vand.u32 2147483647, %v11390
    %vm11416 = vcmp.lt.f32.partialorder %v11415, 0.0004427343
    %v11417 = vsel %vm11416, %v11414, %v11411
    %v11418 = vadd.f32 %v11376, %v11399
    %v11419 = vadd.f32 %v11377, %v11408
    %v11420 = vadd.f32 %v11378, %v11417
    %v11421 = vpack.c.bf16 %v11418, %v11418
    %v11422 = vpack.c.bf16 %v11419, %v11419
    %v11423 = vpack.c.bf16 %v11420, %v11420
    %v11424 = vld [vmem:[#allocation32] sm:$0xff]
    %v11425 = vld [vmem:[#allocation32 + $0x8] sm:$0xf]
    %v11426 = vld [vmem:[#allocation32 + $0xc] sm:$0xff]
    %v11427 = vld [vmem:[#allocation32 + $0x14] sm:$0xf]
    %v11428 = vld [vmem:[#allocation32 + $0x18] sm:$0xff]
    %v11429 = vld [vmem:[#allocation32 + $0x20] sm:$0xf]
    %v11430 = vld [vmem:[#allocation32 + $0x24] sm:$0xff]
    %v11431 = vld [vmem:[#allocation32 + $0x2c] sm:$0xf]
    %v11432 = vld [vmem:[#allocation32 + $0x30] sm:$0xff]
    %v11433 = vld [vmem:[#allocation32 + $0x38] sm:$0xf]
    %v11434 = vld [vmem:[#allocation32 + $0x3c] sm:$0xff]
    %v11435 = vld [vmem:[#allocation32 + $0x44] sm:$0xf]
    %v11436 = vld [vmem:[#allocation32 + $0x48] sm:$0xff]
    %v11437 = vld [vmem:[#allocation32 + $0x50] sm:$0xf]
    %v11438 = vld [vmem:[#allocation32 + $0x54] sm:$0xff]
    %v11439 = vld [vmem:[#allocation32 + $0x5c] sm:$0xf]
    %v11440 = vld [vmem:[#allocation32 + $0x60] sm:$0xff]
    %v11441 = vld [vmem:[#allocation32 + $0x68] sm:$0xf]
    %v11442 = vld [vmem:[#allocation32 + $0x6c] sm:$0xff]
    %v11443 = vld [vmem:[#allocation32 + $0x74] sm:$0xf]
    %v11444 = vld [vmem:[#allocation32 + $0x78] sm:$0xff]
    %v11445 = vld [vmem:[#allocation32 + $0x80] sm:$0xf]
    %v11446 = vld [vmem:[#allocation32 + $0x84] sm:$0xff]
    %v11447 = vld [vmem:[#allocation32 + $0x8c] sm:$0xf]
    %v11448 = vld [vmem:[#allocation32 + $0x90] sm:$0xff]
    %v11449 = vld [vmem:[#allocation32 + $0x98] sm:$0xf]
    %v11450 = vld [vmem:[#allocation32 + $0x9c] sm:$0xff]
    %v11451 = vld [vmem:[#allocation32 + $0xa4] sm:$0xf]
    %v11452 = vld [vmem:[#allocation32 + $0xa8] sm:$0xff]
    %v11453 = vld [vmem:[#allocation32 + $0xb0] sm:$0xf]
    %v11454 = vld [vmem:[#allocation32 + $0xb4] sm:$0xff]
    %v11455 = vld [vmem:[#allocation32 + $0xbc] sm:$0xf]
    %v11456 = vld [vmem:[#allocation32 + $0xc0] sm:$0xff]
    %v11457 = vld [vmem:[#allocation32 + $0xc8] sm:$0xf]
    %v11458 = vld [vmem:[#allocation32 + $0xcc] sm:$0xff]
    %v11459 = vld [vmem:[#allocation32 + $0xd4] sm:$0xf]
    %v11460 = vld [vmem:[#allocation32 + $0xd8] sm:$0xff]
    %v11461 = vld [vmem:[#allocation32 + $0xe0] sm:$0xf]
    %v11462 = vld [vmem:[#allocation32 + $0xe4] sm:$0xff]
    %v11463 = vld [vmem:[#allocation32 + $0xec] sm:$0xf]
    %v11464 = vld [vmem:[#allocation32 + $0xf0] sm:$0xff]
    %v11465 = vld [vmem:[#allocation32 + $0xf8] sm:$0xf]
    %v11466 = vld [vmem:[#allocation32 + $0xfc] sm:$0xff]
    %v11467 = vld [vmem:[#allocation32 + $0x104] sm:$0xf]
    %v11468 = vld [vmem:[#allocation32 + $0x108] sm:$0xff]
    %v11469 = vld [vmem:[#allocation32 + $0x110] sm:$0xf]
    %v11470 = vld [vmem:[#allocation32 + $0x114] sm:$0xff]
    %v11471 = vld [vmem:[#allocation32 + $0x11c] sm:$0xf]
    %v11472 = vld [vmem:[#allocation32 + $0x120] sm:$0xff]
    %v11473 = vld [vmem:[#allocation32 + $0x128] sm:$0xf]
    %v11474 = vld [vmem:[#allocation32 + $0x12c] sm:$0xff]
    %v11475 = vld [vmem:[#allocation32 + $0x134] sm:$0xf]
    %v11476 = vld [vmem:[#allocation32 + $0x138] sm:$0xff]
    %v11477 = vld [vmem:[#allocation32 + $0x140] sm:$0xf]
    %v11478 = vld [vmem:[#allocation32 + $0x144] sm:$0xff]
    %v11479 = vld [vmem:[#allocation32 + $0x14c] sm:$0xf]
    %v11480 = vld [vmem:[#allocation32 + $0x150] sm:$0xff]
    %v11481 = vld [vmem:[#allocation32 + $0x158] sm:$0xf]
    %v11482 = vld [vmem:[#allocation32 + $0x15c] sm:$0xff]
    %v11483 = vld [vmem:[#allocation32 + $0x164] sm:$0xf]
    %v11484 = vld [vmem:[#allocation32 + $0x168] sm:$0xff]
    %v11485 = vld [vmem:[#allocation32 + $0x170] sm:$0xf]
    %v11486 = vld [vmem:[#allocation32 + $0x174] sm:$0xff]
    %v11487 = vld [vmem:[#allocation32 + $0x17c] sm:$0xf]
    %v11488 = vld [vmem:[#allocation32 + $0x180] sm:$0xff]
    %v11489 = vld [vmem:[#allocation32 + $0x188] sm:$0xf]
    %v11490 = vld [vmem:[#allocation32 + $0x18c] sm:$0xff]
    %v11491 = vld [vmem:[#allocation32 + $0x194] sm:$0xf]
    %v11492 = vld [vmem:[#allocation32 + $0x198] sm:$0xff]
    %v11493 = vld [vmem:[#allocation32 + $0x1a0] sm:$0xf]
    %v11494 = vld [vmem:[#allocation32 + $0x1a4] sm:$0xff]
    %v11495 = vld [vmem:[#allocation32 + $0x1ac] sm:$0xf]
    %v11496 = vld [vmem:[#allocation32 + $0x1b0] sm:$0xff]
    %v11497 = vld [vmem:[#allocation32 + $0x1b8] sm:$0xf]
    %v11498 = vld [vmem:[#allocation32 + $0x1bc] sm:$0xff]
    %v11499 = vld [vmem:[#allocation32 + $0x1c4] sm:$0xf]
    %v11500 = vld [vmem:[#allocation32 + $0x1c8] sm:$0xff]
    %v11501 = vld [vmem:[#allocation32 + $0x1d0] sm:$0xf]
    %v11502 = vld [vmem:[#allocation32 + $0x1d4] sm:$0xff]
    %v11503 = vld [vmem:[#allocation32 + $0x1dc] sm:$0xf]
    %v11504 = vld [vmem:[#allocation32 + $0x1e0] sm:$0xff]
    %v11505 = vld [vmem:[#allocation32 + $0x1e8] sm:$0xf]
    %v11506 = vld [vmem:[#allocation32 + $0x1ec] sm:$0xff]
    %v11507 = vld [vmem:[#allocation32 + $0x1f4] sm:$0xf]
    %v11508 = vld [vmem:[#allocation32 + $0x1f8] sm:$0xff]
    %v11509 = vld [vmem:[#allocation32 + $0x200] sm:$0xf]
    %v11510 = vld [vmem:[#allocation32 + $0x204] sm:$0xff]
    %v11511 = vld [vmem:[#allocation32 + $0x20c] sm:$0xf]
    %v11512 = vld [vmem:[#allocation32 + $0x210] sm:$0xff]
    %v11513 = vld [vmem:[#allocation32 + $0x218] sm:$0xf]
    %v11514 = vld [vmem:[#allocation32 + $0x21c] sm:$0xff]
    %v11515 = vld [vmem:[#allocation32 + $0x224] sm:$0xf]
    %v11516 = vld [vmem:[#allocation32 + $0x228] sm:$0xff]
    %v11517 = vld [vmem:[#allocation32 + $0x230] sm:$0xf]
    %v11518 = vld [vmem:[#allocation32 + $0x234] sm:$0xff]
    %v11519 = vld [vmem:[#allocation32 + $0x23c] sm:$0xf]
    %v11520 = vld [vmem:[%s73] sm:$0x7]
    %v11522 = vlaneseq
    %v11523 = vshrl.u32 %v11522, 7
    %v11524 = vsub.s32 0, %v11523
    %v11525 = vrot.slane %v11520, %v11524
    %v11526 = vlaneseq
    %v11527 = vshrl.u32 %v11526, 7
    %v11528 = vsub.s32 1, %v11527
    %v11529 = vrot.slane %v11520, %v11528
    %v11530 = vlaneseq
    %v11531 = vshrl.u32 %v11530, 7
    %v11532 = vsub.s32 2, %v11531
    %v11533 = vrot.slane %v11520, %v11532
    %v11633 = vunpack.c.l.b16 %v11424
    %v11634 = vunpack.c.h.b16 %v11424
    %v11635 = vunpack.c.l.b16 %v11425
    %v11636 = vunpack.c.l.b16 %v11426
    %v11637 = vunpack.c.h.b16 %v11426
    %v11638 = vunpack.c.l.b16 %v11427
    %v11639 = vunpack.c.l.b16 %v11428
    %v11640 = vunpack.c.h.b16 %v11428
    %v11641 = vunpack.c.l.b16 %v11429
    %v11642 = vunpack.c.l.b16 %v11430
    %v11643 = vunpack.c.h.b16 %v11430
    %v11644 = vunpack.c.l.b16 %v11431
    %v11645 = vunpack.c.l.b16 %v11432
    %v11646 = vunpack.c.h.b16 %v11432
    %v11647 = vunpack.c.l.b16 %v11433
    %v11648 = vunpack.c.l.b16 %v11434
    %v11649 = vunpack.c.h.b16 %v11434
    %v11650 = vunpack.c.l.b16 %v11435
    %v11651 = vunpack.c.l.b16 %v11436
    %v11652 = vunpack.c.h.b16 %v11436
    %v11653 = vunpack.c.l.b16 %v11437
    %v11654 = vunpack.c.l.b16 %v11438
    %v11655 = vunpack.c.h.b16 %v11438
    %v11656 = vunpack.c.l.b16 %v11439
    %v11657 = vunpack.c.l.b16 %v11440
    %v11658 = vunpack.c.h.b16 %v11440
    %v11659 = vunpack.c.l.b16 %v11441
    %v11660 = vunpack.c.l.b16 %v11442
    %v11661 = vunpack.c.h.b16 %v11442
    %v11662 = vunpack.c.l.b16 %v11443
    %v11663 = vunpack.c.l.b16 %v11444
    %v11664 = vunpack.c.h.b16 %v11444
    %v11665 = vunpack.c.l.b16 %v11445
    %v11666 = vunpack.c.l.b16 %v11446
    %v11667 = vunpack.c.h.b16 %v11446
    %v11668 = vunpack.c.l.b16 %v11447
    %v11669 = vunpack.c.l.b16 %v11448
    %v11670 = vunpack.c.h.b16 %v11448
    %v11671 = vunpack.c.l.b16 %v11449
    %v11672 = vunpack.c.l.b16 %v11450
    %v11673 = vunpack.c.h.b16 %v11450
    %v11674 = vunpack.c.l.b16 %v11451
    %v11675 = vunpack.c.l.b16 %v11452
    %v11676 = vunpack.c.h.b16 %v11452
    %v11677 = vunpack.c.l.b16 %v11453
    %v11678 = vunpack.c.l.b16 %v11454
    %v11679 = vunpack.c.h.b16 %v11454
    %v11680 = vunpack.c.l.b16 %v11455
    %v11681 = vunpack.c.l.b16 %v11456
    %v11682 = vunpack.c.h.b16 %v11456
    %v11683 = vunpack.c.l.b16 %v11457
    %v11684 = vunpack.c.l.b16 %v11458
    %v11685 = vunpack.c.h.b16 %v11458
    %v11686 = vunpack.c.l.b16 %v11459
    %v11687 = vunpack.c.l.b16 %v11460
    %v11688 = vunpack.c.h.b16 %v11460
    %v11689 = vunpack.c.l.b16 %v11461
    %v11690 = vunpack.c.l.b16 %v11462
    %v11691 = vunpack.c.h.b16 %v11462
    %v11692 = vunpack.c.l.b16 %v11463
    %v11693 = vunpack.c.l.b16 %v11464
    %v11694 = vunpack.c.h.b16 %v11464
    %v11695 = vunpack.c.l.b16 %v11465
    %v11696 = vunpack.c.l.b16 %v11466
    %v11697 = vunpack.c.h.b16 %v11466
    %v11698 = vunpack.c.l.b16 %v11467
    %v11699 = vunpack.c.l.b16 %v11468
    %v11700 = vunpack.c.h.b16 %v11468
    %v11701 = vunpack.c.l.b16 %v11469
    %v11702 = vunpack.c.l.b16 %v11470
    %v11703 = vunpack.c.h.b16 %v11470
    %v11704 = vunpack.c.l.b16 %v11471
    %v11705 = vunpack.c.l.b16 %v11472
    %v11706 = vunpack.c.h.b16 %v11472
    %v11707 = vunpack.c.l.b16 %v11473
    %v11708 = vunpack.c.l.b16 %v11474
    %v11709 = vunpack.c.h.b16 %v11474
    %v11710 = vunpack.c.l.b16 %v11475
    %v11711 = vunpack.c.l.b16 %v11476
    %v11712 = vunpack.c.h.b16 %v11476
    %v11713 = vunpack.c.l.b16 %v11477
    %v11714 = vunpack.c.l.b16 %v11478
    %v11715 = vunpack.c.h.b16 %v11478
    %v11716 = vunpack.c.l.b16 %v11479
    %v11717 = vunpack.c.l.b16 %v11480
    %v11718 = vunpack.c.h.b16 %v11480
    %v11719 = vunpack.c.l.b16 %v11481
    %v11720 = vunpack.c.l.b16 %v11482
    %v11721 = vunpack.c.h.b16 %v11482
    %v11722 = vunpack.c.l.b16 %v11483
    %v11723 = vunpack.c.l.b16 %v11484
    %v11724 = vunpack.c.h.b16 %v11484
    %v11725 = vunpack.c.l.b16 %v11485
    %v11726 = vunpack.c.l.b16 %v11486
    %v11727 = vunpack.c.h.b16 %v11486
    %v11728 = vunpack.c.l.b16 %v11487
    %v11729 = vunpack.c.l.b16 %v11488
    %v11730 = vunpack.c.h.b16 %v11488
    %v11731 = vunpack.c.l.b16 %v11489
    %v11732 = vunpack.c.l.b16 %v11490
    %v11733 = vunpack.c.h.b16 %v11490
    %v11734 = vunpack.c.l.b16 %v11491
    %v11735 = vunpack.c.l.b16 %v11492
    %v11736 = vunpack.c.h.b16 %v11492
    %v11737 = vunpack.c.l.b16 %v11493
    %v11738 = vunpack.c.l.b16 %v11494
    %v11739 = vunpack.c.h.b16 %v11494
    %v11740 = vunpack.c.l.b16 %v11495
    %v11741 = vunpack.c.l.b16 %v11496
    %v11742 = vunpack.c.h.b16 %v11496
    %v11743 = vunpack.c.l.b16 %v11497
    %v11744 = vunpack.c.l.b16 %v11498
    %v11745 = vunpack.c.h.b16 %v11498
    %v11746 = vunpack.c.l.b16 %v11499
    %v11747 = vunpack.c.l.b16 %v11500
    %v11748 = vunpack.c.h.b16 %v11500
    %v11749 = vunpack.c.l.b16 %v11501
    %v11750 = vunpack.c.l.b16 %v11502
    %v11751 = vunpack.c.h.b16 %v11502
    %v11752 = vunpack.c.l.b16 %v11503
    %v11753 = vunpack.c.l.b16 %v11504
    %v11754 = vunpack.c.h.b16 %v11504
    %v11755 = vunpack.c.l.b16 %v11505
    %v11756 = vunpack.c.l.b16 %v11506
    %v11757 = vunpack.c.h.b16 %v11506
    %v11758 = vunpack.c.l.b16 %v11507
    %v11759 = vunpack.c.l.b16 %v11508
    %v11760 = vunpack.c.h.b16 %v11508
    %v11761 = vunpack.c.l.b16 %v11509
    %v11762 = vunpack.c.l.b16 %v11510
    %v11763 = vunpack.c.h.b16 %v11510
    %v11764 = vunpack.c.l.b16 %v11511
    %v11765 = vunpack.c.l.b16 %v11512
    %v11766 = vunpack.c.h.b16 %v11512
    %v11767 = vunpack.c.l.b16 %v11513
    %v11768 = vunpack.c.l.b16 %v11514
    %v11769 = vunpack.c.h.b16 %v11514
    %v11770 = vunpack.c.l.b16 %v11515
    %v11771 = vunpack.c.l.b16 %v11516
    %v11772 = vunpack.c.h.b16 %v11516
    %v11773 = vunpack.c.l.b16 %v11517
    %v11774 = vunpack.c.l.b16 %v11518
    %v11775 = vunpack.c.h.b16 %v11518
    %v11776 = vunpack.c.l.b16 %v11519
    %v11777 = vpack.c.b16 %v11636, %v11633
    %v11778 = vpack.c.b16 %v11637, %v11634
    %v11779 = vpack.c.b16 %v11638, %v11635
    %v11780 = vpack.c.b16 %v11642, %v11639
    %v11781 = vpack.c.b16 %v11643, %v11640
    %v11782 = vpack.c.b16 %v11644, %v11641
    %v11783 = vpack.c.b16 %v11648, %v11645
    %v11784 = vpack.c.b16 %v11649, %v11646
    %v11785 = vpack.c.b16 %v11650, %v11647
    %v11786 = vpack.c.b16 %v11654, %v11651
    %v11787 = vpack.c.b16 %v11655, %v11652
    %v11788 = vpack.c.b16 %v11656, %v11653
    %v11789 = vpack.c.b16 %v11660, %v11657
    %v11790 = vpack.c.b16 %v11661, %v11658
    %v11791 = vpack.c.b16 %v11662, %v11659
    %v11792 = vpack.c.b16 %v11666, %v11663
    %v11793 = vpack.c.b16 %v11667, %v11664
    %v11794 = vpack.c.b16 %v11668, %v11665
    %v11795 = vpack.c.b16 %v11672, %v11669
    %v11796 = vpack.c.b16 %v11673, %v11670
    %v11797 = vpack.c.b16 %v11674, %v11671
    %v11798 = vpack.c.b16 %v11678, %v11675
    %v11799 = vpack.c.b16 %v11679, %v11676
    %v11800 = vpack.c.b16 %v11680, %v11677
    %v11801 = vpack.c.b16 %v11684, %v11681
    %v11802 = vpack.c.b16 %v11685, %v11682
    %v11803 = vpack.c.b16 %v11686, %v11683
    %v11804 = vpack.c.b16 %v11690, %v11687
    %v11805 = vpack.c.b16 %v11691, %v11688
    %v11806 = vpack.c.b16 %v11692, %v11689
    %v11807 = vpack.c.b16 %v11696, %v11693
    %v11808 = vpack.c.b16 %v11697, %v11694
    %v11809 = vpack.c.b16 %v11698, %v11695
    %v11810 = vpack.c.b16 %v11702, %v11699
    %v11811 = vpack.c.b16 %v11703, %v11700
    %v11812 = vpack.c.b16 %v11704, %v11701
    %v11813 = vpack.c.b16 %v11708, %v11705
    %v11814 = vpack.c.b16 %v11709, %v11706
    %v11815 = vpack.c.b16 %v11710, %v11707
    %v11816 = vpack.c.b16 %v11714, %v11711
    %v11817 = vpack.c.b16 %v11715, %v11712
    %v11818 = vpack.c.b16 %v11716, %v11713
    %v11819 = vpack.c.b16 %v11720, %v11717
    %v11820 = vpack.c.b16 %v11721, %v11718
    %v11821 = vpack.c.b16 %v11722, %v11719
    %v11822 = vpack.c.b16 %v11726, %v11723
    %v11823 = vpack.c.b16 %v11727, %v11724
    %v11824 = vpack.c.b16 %v11728, %v11725
    %v11825 = vpack.c.b16 %v11732, %v11729
    %v11826 = vpack.c.b16 %v11733, %v11730
    %v11827 = vpack.c.b16 %v11734, %v11731
    %v11828 = vpack.c.b16 %v11738, %v11735
    %v11829 = vpack.c.b16 %v11739, %v11736
    %v11830 = vpack.c.b16 %v11740, %v11737
    %v11831 = vpack.c.b16 %v11744, %v11741
    %v11832 = vpack.c.b16 %v11745, %v11742
    %v11833 = vpack.c.b16 %v11746, %v11743
    %v11834 = vpack.c.b16 %v11750, %v11747
    %v11835 = vpack.c.b16 %v11751, %v11748
    %v11836 = vpack.c.b16 %v11752, %v11749
    %v11837 = vpack.c.b16 %v11756, %v11753
    %v11838 = vpack.c.b16 %v11757, %v11754
    %v11839 = vpack.c.b16 %v11758, %v11755
    %v11840 = vpack.c.b16 %v11762, %v11759
    %v11841 = vpack.c.b16 %v11763, %v11760
    %v11842 = vpack.c.b16 %v11764, %v11761
    %v11843 = vpack.c.b16 %v11768, %v11765
    %v11844 = vpack.c.b16 %v11769, %v11766
    %v11845 = vpack.c.b16 %v11770, %v11767
    %v11846 = vpack.c.b16 %v11774, %v11771
    %v11847 = vpack.c.b16 %v11775, %v11772
    %v11848 = vpack.c.b16 %v11776, %v11773
    %11921 = vmatprep.subr.bf16.mxu0 %v11799
    %11922 = vmatpush1.bf16.msra.mxu0 %v11798
    %11923 = vmatprep.subr.bf16.mxu0 %v11796
    %11924 = vmatpush1.bf16.msra.mxu0 %v11795
    %11925 = vmatprep.subr.bf16.mxu0 %v11793
    %11926 = vmatpush1.bf16.msra.mxu0 %v11792
    %11927 = vmatprep.subr.bf16.mxu0 %v11790
    %11928 = vmatpush1.bf16.msra.mxu0 %v11789
    %11929 = vmatprep.subr.bf16.mxu0 %v11787
    %11930 = vmatpush1.bf16.msra.mxu0 %v11786
    %11931 = vmatprep.subr.bf16.mxu0 %v11784
    %11932 = vmatpush1.bf16.msra.mxu0 %v11783
    %11933 = vmatprep.subr.bf16.mxu0 %v11781
    %11934 = vmatpush1.bf16.msra.mxu0 %v11780
    %11935 = vmatprep.subr.bf16.mxu0 %v11778
    %11936 = vmatpush1.bf16.msra.mxu0 %v11777
    %11937 = vmatprep.subr.bf16.mxu0 %v11823
    %11938 = vmatpush2.bf16.msra.mxu0 %v11822
    %11939 = vmatprep.subr.bf16.mxu0 %v11820
    %11940 = vmatpush2.bf16.msra.mxu0 %v11819
    %11941 = vmatprep.subr.bf16.mxu0 %v11817
    %11942 = vmatpush2.bf16.msra.mxu0 %v11816
    %11943 = vmatprep.subr.bf16.mxu0 %v11814
    %11944 = vmatpush2.bf16.msra.mxu0 %v11813
    %11945 = vmatprep.subr.bf16.mxu0 %v11811
    %11946 = vmatpush2.bf16.msra.mxu0 %v11810
    %11947 = vmatprep.subr.bf16.mxu0 %v11808
    %11948 = vmatpush2.bf16.msra.mxu0 %v11807
    %11949 = vmatprep.subr.bf16.mxu0 %v11805
    %11950 = vmatpush2.bf16.msra.mxu0 %v11804
    %11951 = vmatprep.subr.bf16.mxu0 %v11802
    %11952 = vmatpush2.bf16.msra.mxu0 %v11801
    %11953 = vmatprep.mubr.bf16.mxu0 %v11422
    %11954 = vmatmul.mubr.bf16.gmra.mxu0 %v11421
    %v11955 = vpop.f32.mrf.mxu0
    %v11956 = vadd.f32 %v11525, %v11955
    %v11957 = vpop.f32.mrf.mxu0
    %v11958 = vadd.f32 %v11529, %v11957
    %v11959 = vpop.f32.mrf.mxu0
    %v11960 = vpop.f32.mrf.mxu0
    %11961 = vdwg.mxu0
    %11962 = vmatprep.subr.bf16.mxu0 %v11847
    %11963 = vmatpush1.bf16.msra.mxu0 %v11846
    %11964 = vmatprep.subr.bf16.mxu0 %v11844
    %11965 = vmatpush1.bf16.msra.mxu0 %v11843
    %11966 = vmatprep.subr.bf16.mxu0 %v11841
    %11967 = vmatpush1.bf16.msra.mxu0 %v11840
    %11968 = vmatprep.subr.bf16.mxu0 %v11838
    %11969 = vmatpush1.bf16.msra.mxu0 %v11837
    %11970 = vmatprep.subr.bf16.mxu0 %v11835
    %11971 = vmatpush1.bf16.msra.mxu0 %v11834
    %11972 = vmatprep.subr.bf16.mxu0 %v11832
    %11973 = vmatpush1.bf16.msra.mxu0 %v11831
    %11974 = vmatprep.subr.bf16.mxu0 %v11829
    %11975 = vmatpush1.bf16.msra.mxu0 %v11828
    %11976 = vmatprep.subr.bf16.mxu0 %v11826
    %11977 = vmatpush1.bf16.msra.mxu0 %v11825
    %11978 = vmatprep.subr.bf16.mxu0 0
    %11979 = vmatpush2.bf16.msra.mxu0 0
    %11980 = vmatprep.subr.bf16.mxu0 0
    %11981 = vmatpush2.bf16.msra.mxu0 0
    %11982 = vmatprep.subr.bf16.mxu0 0
    %11983 = vmatpush2.bf16.msra.mxu0 0
    %11984 = vmatprep.subr.bf16.mxu0 0
    %11985 = vmatpush2.bf16.msra.mxu0 0
    %11986 = vmatprep.subr.bf16.mxu0 0
    %11987 = vmatpush2.bf16.msra.mxu0 0
    %11988 = vmatprep.subr.bf16.mxu0 0
    %11989 = vmatpush2.bf16.msra.mxu0 0
    %11990 = vmatprep.subr.bf16.mxu0 0
    %11991 = vmatpush2.bf16.msra.mxu0 0
    %11992 = vmatprep.subr.bf16.mxu0 0
    %11993 = vmatpush2.bf16.msra.mxu0 0
    %11994 = vmatprep.mubr.bf16.mxu0 0
    %11995 = vmatmul.mubr.bf16.gmra.mxu0 %v11423
    %v11996 = vpop.f32.mrf.mxu0
    %v11997 = vadd.f32 %v11956, %v11996
    %v11998 = vpop.f32.mrf.mxu0
    %v11999 = vadd.f32 %v11958, %v11998
    %v12000 = vpop.f32.mrf.mxu0
    %v12001 = vpop.f32.mrf.mxu0
    %12002 = vdwg.mxu0
    %12003 = vmatprep.subr.bf16.mxu0 0
    %12004 = vmatpush1.bf16.msra.mxu0 %v11800
    %12005 = vmatprep.subr.bf16.mxu0 0
    %12006 = vmatpush1.bf16.msra.mxu0 %v11797
    %12007 = vmatprep.subr.bf16.mxu0 0
    %12008 = vmatpush1.bf16.msra.mxu0 %v11794
    %12009 = vmatprep.subr.bf16.mxu0 0
    %12010 = vmatpush1.bf16.msra.mxu0 %v11791
    %12011 = vmatprep.subr.bf16.mxu0 0
    %12012 = vmatpush1.bf16.msra.mxu0 %v11788
    %12013 = vmatprep.subr.bf16.mxu0 0
    %12014 = vmatpush1.bf16.msra.mxu0 %v11785
    %12015 = vmatprep.subr.bf16.mxu0 0
    %12016 = vmatpush1.bf16.msra.mxu0 %v11782
    %12017 = vmatprep.subr.bf16.mxu0 0
    %12018 = vmatpush1.bf16.msra.mxu0 %v11779
    %12019 = vmatprep.subr.bf16.mxu0 0
    %12020 = vmatpush2.bf16.msra.mxu0 %v11824
    %12021 = vmatprep.subr.bf16.mxu0 0
    %12022 = vmatpush2.bf16.msra.mxu0 %v11821
    %12023 = vmatprep.subr.bf16.mxu0 0
    %12024 = vmatpush2.bf16.msra.mxu0 %v11818
    %12025 = vmatprep.subr.bf16.mxu0 0
    %12026 = vmatpush2.bf16.msra.mxu0 %v11815
    %12027 = vmatprep.subr.bf16.mxu0 0
    %12028 = vmatpush2.bf16.msra.mxu0 %v11812
    %12029 = vmatprep.subr.bf16.mxu0 0
    %12030 = vmatpush2.bf16.msra.mxu0 %v11809
    %12031 = vmatprep.subr.bf16.mxu0 0
    %12032 = vmatpush2.bf16.msra.mxu0 %v11806
    %12033 = vmatprep.subr.bf16.mxu0 0
    %12034 = vmatpush2.bf16.msra.mxu0 %v11803
    %12035 = vmatprep.mubr.bf16.mxu0 %v11422
    %12036 = vmatmul.mubr.bf16.gmra.mxu0 %v11421
    %v12037 = vpop.f32.mrf.mxu0
    %v12038 = vadd.f32 %v11533, %v12037
    %v12039 = vpop.f32.mrf.mxu0
    %v12040 = vpop.f32.mrf.mxu0
    %v12041 = vpop.f32.mrf.mxu0
    %12042 = vdwg.mxu0
    %12043 = vmatprep.subr.bf16.mxu0 0
    %12044 = vmatpush1.bf16.msra.mxu0 %v11848
    %12045 = vmatprep.subr.bf16.mxu0 0
    %12046 = vmatpush1.bf16.msra.mxu0 %v11845
    %12047 = vmatprep.subr.bf16.mxu0 0
    %12048 = vmatpush1.bf16.msra.mxu0 %v11842
    %12049 = vmatprep.subr.bf16.mxu0 0
    %12050 = vmatpush1.bf16.msra.mxu0 %v11839
    %12051 = vmatprep.subr.bf16.mxu0 0
    %12052 = vmatpush1.bf16.msra.mxu0 %v11836
    %12053 = vmatprep.subr.bf16.mxu0 0
    %12054 = vmatpush1.bf16.msra.mxu0 %v11833
    %12055 = vmatprep.subr.bf16.mxu0 0
    %12056 = vmatpush1.bf16.msra.mxu0 %v11830
    %12057 = vmatprep.subr.bf16.mxu0 0
    %12058 = vmatpush1.bf16.msra.mxu0 %v11827
    %12059 = vmatprep.subr.bf16.mxu0 0
    %12060 = vmatpush2.bf16.msra.mxu0 0
    %12061 = vmatprep.subr.bf16.mxu0 0
    %12062 = vmatpush2.bf16.msra.mxu0 0
    %12063 = vmatprep.subr.bf16.mxu0 0
    %12064 = vmatpush2.bf16.msra.mxu0 0
    %12065 = vmatprep.subr.bf16.mxu0 0
    %12066 = vmatpush2.bf16.msra.mxu0 0
    %12067 = vmatprep.subr.bf16.mxu0 0
    %12068 = vmatpush2.bf16.msra.mxu0 0
    %12069 = vmatprep.subr.bf16.mxu0 0
    %12070 = vmatpush2.bf16.msra.mxu0 0
    %12071 = vmatprep.subr.bf16.mxu0 0
    %12072 = vmatpush2.bf16.msra.mxu0 0
    %12073 = vmatprep.subr.bf16.mxu0 0
    %12074 = vmatpush2.bf16.msra.mxu0 0
    %12075 = vmatprep.mubr.bf16.mxu0 0
    %12076 = vmatmul.mubr.bf16.gmra.mxu0 %v11423
    %v12077 = vpop.f32.mrf.mxu0
    %v12078 = vadd.f32 %v12038, %v12077
    %v12079 = vpop.f32.mrf.mxu0
    %v12080 = vpop.f32.mrf.mxu0
    %v12081 = vpop.f32.mrf.mxu0
    %12082 = vdwg.mxu0
    %v12083 = vpack.c.bf16 %v11997, %v11997
    %v12084 = vpack.c.bf16 %v11999, %v11999
    %v12085 = vpack.c.bf16 %v12078, %v12078
    %v12086 = vld [vmem:[#allocation8] sm:$0xf]
    %v12087 = vld [vmem:[#allocation8 + $0x4] sm:$0xf]
    %v12088 = vld [vmem:[#allocation8 + $0x8] sm:$0xf]
    %v12089 = vld [vmem:[#allocation8 + $0xc] sm:$0xf]
    %v12090 = vld [vmem:[#allocation8 + $0x10] sm:$0xf]
    %v12091 = vld [vmem:[#allocation8 + $0x14] sm:$0xf]
    %v12092 = vld [vmem:[#allocation8 + $0x18] sm:$0xf]
    %v12093 = vld [vmem:[#allocation8 + $0x1c] sm:$0xf]
    %v12094 = vld [vmem:[#allocation8 + $0x20] sm:$0xf]
    %v12095 = vld [vmem:[#allocation8 + $0x24] sm:$0xf]
    %v12096 = vld [vmem:[#allocation8 + $0x28] sm:$0xf]
    %v12097 = vld [vmem:[#allocation8 + $0x2c] sm:$0xf]
    %v12098 = vld [vmem:[#allocation8 + $0x30] sm:$0xf]
    %v12099 = vld [vmem:[#allocation8 + $0x34] sm:$0xf]
    %v12100 = vld [vmem:[#allocation8 + $0x38] sm:$0xf]
    %v12101 = vld [vmem:[#allocation8 + $0x3c] sm:$0xf]
    %v12102 = vld [vmem:[#allocation8 + $0x40] sm:$0xf]
    %v12103 = vld [vmem:[#allocation8 + $0x44] sm:$0xf]
    %v12104 = vld [vmem:[#allocation8 + $0x48] sm:$0xf]
    %v12105 = vld [vmem:[#allocation8 + $0x4c] sm:$0xf]
    %v12106 = vld [vmem:[#allocation8 + $0x50] sm:$0xf]
    %v12107 = vld [vmem:[#allocation8 + $0x54] sm:$0xf]
    %v12108 = vld [vmem:[#allocation8 + $0x58] sm:$0xf]
    %v12109 = vld [vmem:[#allocation8 + $0x5c] sm:$0xf]
    %v12110 = vld [vmem:[#allocation8 + $0x60] sm:$0xf]
    %v12111 = vld [vmem:[#allocation8 + $0x64] sm:$0xf]
    %v12112 = vld [vmem:[#allocation8 + $0x68] sm:$0xf]
    %v12113 = vld [vmem:[#allocation8 + $0x6c] sm:$0xf]
    %v12114 = vld [vmem:[#allocation8 + $0x70] sm:$0xf]
    %v12115 = vld [vmem:[#allocation8 + $0x74] sm:$0xf]
    %v12116 = vld [vmem:[#allocation8 + $0x78] sm:$0xf]
    %v12117 = vld [vmem:[#allocation8 + $0x7c] sm:$0xf]
    %v12118 = vld [vmem:[#allocation8 + $0x80] sm:$0xf]
    %v12119 = vld [vmem:[#allocation8 + $0x84] sm:$0xf]
    %v12120 = vld [vmem:[#allocation8 + $0x88] sm:$0xf]
    %v12121 = vld [vmem:[#allocation8 + $0x8c] sm:$0xf]
    %v12122 = vld [vmem:[#allocation8 + $0x90] sm:$0xf]
    %v12123 = vld [vmem:[#allocation8 + $0x94] sm:$0xf]
    %v12124 = vld [vmem:[#allocation8 + $0x98] sm:$0xf]
    %v12125 = vld [vmem:[#allocation8 + $0x9c] sm:$0xf]
    %v12126 = vld [vmem:[#allocation8 + $0xa0] sm:$0xf]
    %v12127 = vld [vmem:[#allocation8 + $0xa4] sm:$0xf]
    %v12128 = vld [vmem:[#allocation8 + $0xa8] sm:$0xf]
    %v12129 = vld [vmem:[#allocation8 + $0xac] sm:$0xf]
    %v12130 = vld [vmem:[#allocation8 + $0xb0] sm:$0xf]
    %v12131 = vld [vmem:[#allocation8 + $0xb4] sm:$0xf]
    %v12132 = vld [vmem:[#allocation8 + $0xb8] sm:$0xf]
    %v12133 = vld [vmem:[#allocation8 + $0xbc] sm:$0xf]
    %v12134 = vld [vmem:[#allocation8 + $0xc0] sm:$0xf]
    %v12135 = vld [vmem:[#allocation8 + $0xc4] sm:$0xf]
    %v12136 = vld [vmem:[#allocation8 + $0xc8] sm:$0xf]
    %v12137 = vld [vmem:[#allocation8 + $0xcc] sm:$0xf]
    %v12138 = vld [vmem:[#allocation8 + $0xd0] sm:$0xf]
    %v12139 = vld [vmem:[#allocation8 + $0xd4] sm:$0xf]
    %v12140 = vld [vmem:[#allocation8 + $0xd8] sm:$0xf]
    %v12141 = vld [vmem:[#allocation8 + $0xdc] sm:$0xf]
    %v12142 = vld [vmem:[#allocation8 + $0xe0] sm:$0xf]
    %v12143 = vld [vmem:[#allocation8 + $0xe4] sm:$0xf]
    %v12144 = vld [vmem:[#allocation8 + $0xe8] sm:$0xf]
    %v12145 = vld [vmem:[#allocation8 + $0xec] sm:$0xf]
    %v12146 = vld [vmem:[#allocation8 + $0xf0] sm:$0xf]
    %v12147 = vld [vmem:[#allocation8 + $0xf4] sm:$0xf]
    %v12148 = vld [vmem:[#allocation8 + $0xf8] sm:$0xf]
    %v12149 = vld [vmem:[#allocation8 + $0xfc] sm:$0xf]
    %v12150 = vld [vmem:[#allocation8 + $0x100] sm:$0xf]
    %v12151 = vld [vmem:[#allocation8 + $0x104] sm:$0xf]
    %v12152 = vld [vmem:[#allocation8 + $0x108] sm:$0xf]
    %v12153 = vld [vmem:[#allocation8 + $0x10c] sm:$0xf]
    %v12154 = vld [vmem:[#allocation8 + $0x110] sm:$0xf]
    %v12155 = vld [vmem:[#allocation8 + $0x114] sm:$0xf]
    %v12156 = vld [vmem:[#allocation8 + $0x118] sm:$0xf]
    %v12157 = vld [vmem:[#allocation8 + $0x11c] sm:$0xf]
    %v12158 = vld [vmem:[#allocation8 + $0x120] sm:$0xf]
    %v12159 = vld [vmem:[#allocation8 + $0x124] sm:$0xf]
    %v12160 = vld [vmem:[#allocation8 + $0x128] sm:$0xf]
    %v12161 = vld [vmem:[#allocation8 + $0x12c] sm:$0xf]
    %v12162 = vld [vmem:[#allocation8 + $0x130] sm:$0xf]
    %v12163 = vld [vmem:[#allocation8 + $0x134] sm:$0xf]
    %v12164 = vld [vmem:[#allocation8 + $0x138] sm:$0xf]
    %v12165 = vld [vmem:[#allocation8 + $0x13c] sm:$0xf]
    %v12166 = vld [vmem:[#allocation8 + $0x140] sm:$0xf]
    %v12167 = vld [vmem:[#allocation8 + $0x144] sm:$0xf]
    %v12168 = vld [vmem:[#allocation8 + $0x148] sm:$0xf]
    %v12169 = vld [vmem:[#allocation8 + $0x14c] sm:$0xf]
    %v12170 = vld [vmem:[#allocation8 + $0x150] sm:$0xf]
    %v12171 = vld [vmem:[#allocation8 + $0x154] sm:$0xf]
    %v12172 = vld [vmem:[#allocation8 + $0x158] sm:$0xf]
    %v12173 = vld [vmem:[#allocation8 + $0x15c] sm:$0xf]
    %v12174 = vld [vmem:[#allocation8 + $0x160] sm:$0xf]
    %v12175 = vld [vmem:[#allocation8 + $0x164] sm:$0xf]
    %v12176 = vld [vmem:[#allocation8 + $0x168] sm:$0xf]
    %v12177 = vld [vmem:[#allocation8 + $0x16c] sm:$0xf]
    %v12178 = vld [vmem:[#allocation8 + $0x170] sm:$0xf]
    %v12179 = vld [vmem:[#allocation8 + $0x174] sm:$0xf]
    %v12180 = vld [vmem:[#allocation8 + $0x178] sm:$0xf]
    %v12181 = vld [vmem:[#allocation8 + $0x17c] sm:$0xf]
    %v12230 = vunpack.c.l.b16 %v12134
    %v12231 = vunpack.c.l.b16 %v12135
    %v12232 = vunpack.c.l.b16 %v12136
    %v12233 = vunpack.c.l.b16 %v12137
    %v12234 = vunpack.c.l.b16 %v12138
    %v12235 = vunpack.c.l.b16 %v12139
    %v12236 = vunpack.c.l.b16 %v12140
    %v12237 = vunpack.c.l.b16 %v12141
    %v12238 = vunpack.c.l.b16 %v12142
    %v12239 = vunpack.c.l.b16 %v12143
    %v12240 = vunpack.c.l.b16 %v12144
    %v12241 = vunpack.c.l.b16 %v12145
    %v12242 = vunpack.c.l.b16 %v12146
    %v12243 = vunpack.c.l.b16 %v12147
    %v12244 = vunpack.c.l.b16 %v12148
    %v12245 = vunpack.c.l.b16 %v12149
    %v12246 = vunpack.c.l.b16 %v12150
    %v12247 = vunpack.c.l.b16 %v12151
    %v12248 = vunpack.c.l.b16 %v12152
    %v12249 = vunpack.c.l.b16 %v12153
    %v12250 = vunpack.c.l.b16 %v12154
    %v12251 = vunpack.c.l.b16 %v12155
    %v12252 = vunpack.c.l.b16 %v12156
    %v12253 = vunpack.c.l.b16 %v12157
    %v12254 = vunpack.c.l.b16 %v12158
    %v12255 = vunpack.c.l.b16 %v12159
    %v12256 = vunpack.c.l.b16 %v12160
    %v12257 = vunpack.c.l.b16 %v12161
    %v12258 = vunpack.c.l.b16 %v12162
    %v12259 = vunpack.c.l.b16 %v12163
    %v12260 = vunpack.c.l.b16 %v12164
    %v12261 = vunpack.c.l.b16 %v12165
    %v12262 = vunpack.c.l.b16 %v12166
    %v12263 = vunpack.c.l.b16 %v12167
    %v12264 = vunpack.c.l.b16 %v12168
    %v12265 = vunpack.c.l.b16 %v12169
    %v12266 = vunpack.c.l.b16 %v12170
    %v12267 = vunpack.c.l.b16 %v12171
    %v12268 = vunpack.c.l.b16 %v12172
    %v12269 = vunpack.c.l.b16 %v12173
    %v12270 = vunpack.c.l.b16 %v12174
    %v12271 = vunpack.c.l.b16 %v12175
    %v12272 = vunpack.c.l.b16 %v12176
    %v12273 = vunpack.c.l.b16 %v12177
    %v12274 = vunpack.c.l.b16 %v12178
    %v12275 = vunpack.c.l.b16 %v12179
    %v12276 = vunpack.c.l.b16 %v12180
    %v12277 = vunpack.c.l.b16 %v12181
    %v12278 = vpack.c.b16 %v12231, %v12230
    %v12279 = vpack.c.b16 %v12233, %v12232
    %v12280 = vpack.c.b16 %v12235, %v12234
    %v12281 = vpack.c.b16 %v12237, %v12236
    %v12282 = vpack.c.b16 %v12239, %v12238
    %v12283 = vpack.c.b16 %v12241, %v12240
    %v12284 = vpack.c.b16 %v12243, %v12242
    %v12285 = vpack.c.b16 %v12245, %v12244
    %v12286 = vpack.c.b16 %v12247, %v12246
    %v12287 = vpack.c.b16 %v12249, %v12248
    %v12288 = vpack.c.b16 %v12251, %v12250
    %v12289 = vpack.c.b16 %v12253, %v12252
    %v12290 = vpack.c.b16 %v12255, %v12254
    %v12291 = vpack.c.b16 %v12257, %v12256
    %v12292 = vpack.c.b16 %v12259, %v12258
    %v12293 = vpack.c.b16 %v12261, %v12260
    %v12294 = vpack.c.b16 %v12263, %v12262
    %v12295 = vpack.c.b16 %v12265, %v12264
    %v12296 = vpack.c.b16 %v12267, %v12266
    %v12297 = vpack.c.b16 %v12269, %v12268
    %v12298 = vpack.c.b16 %v12271, %v12270
    %v12299 = vpack.c.b16 %v12273, %v12272
    %v12300 = vpack.c.b16 %v12275, %v12274
    %v12301 = vpack.c.b16 %v12277, %v12276
    %12326 = vmatprep.subr.bf16.mxu0 0
    %12327 = vmatpush1.bf16.msra.mxu0 %v12285
    %12328 = vmatprep.subr.bf16.mxu0 0
    %12329 = vmatpush1.bf16.msra.mxu0 %v12284
    %12330 = vmatprep.subr.bf16.mxu0 0
    %12331 = vmatpush1.bf16.msra.mxu0 %v12283
    %12332 = vmatprep.subr.bf16.mxu0 0
    %12333 = vmatpush1.bf16.msra.mxu0 %v12282
    %12334 = vmatprep.subr.bf16.mxu0 0
    %12335 = vmatpush1.bf16.msra.mxu0 %v12281
    %12336 = vmatprep.subr.bf16.mxu0 0
    %12337 = vmatpush1.bf16.msra.mxu0 %v12280
    %12338 = vmatprep.subr.bf16.mxu0 0
    %12339 = vmatpush1.bf16.msra.mxu0 %v12279
    %12340 = vmatprep.subr.bf16.mxu0 0
    %12341 = vmatpush1.bf16.msra.mxu0 %v12278
    %12342 = vmatprep.subr.bf16.mxu0 0
    %12343 = vmatpush2.bf16.msra.mxu0 %v12293
    %12344 = vmatprep.subr.bf16.mxu0 0
    %12345 = vmatpush2.bf16.msra.mxu0 %v12292
    %12346 = vmatprep.subr.bf16.mxu0 0
    %12347 = vmatpush2.bf16.msra.mxu0 %v12291
    %12348 = vmatprep.subr.bf16.mxu0 0
    %12349 = vmatpush2.bf16.msra.mxu0 %v12290
    %12350 = vmatprep.subr.bf16.mxu0 0
    %12351 = vmatpush2.bf16.msra.mxu0 %v12289
    %12352 = vmatprep.subr.bf16.mxu0 0
    %12353 = vmatpush2.bf16.msra.mxu0 %v12288
    %12354 = vmatprep.subr.bf16.mxu0 0
    %12355 = vmatpush2.bf16.msra.mxu0 %v12287
    %12356 = vmatprep.subr.bf16.mxu0 0
    %12357 = vmatpush2.bf16.msra.mxu0 %v12286
    %12358 = vmatprep.mubr.bf16.mxu0 %v12084
    %12359 = vmatmul.mubr.bf16.gmra.mxu0 %v12083
    %v12360 = vpop.f32.mrf.mxu0
    %v12361 = vadd.f32 0.0, %v12360
    %v12362 = vpop.f32.mrf.mxu0
    %v12363 = vpop.f32.mrf.mxu0
    %v12364 = vpop.f32.mrf.mxu0
    %12365 = vdwg.mxu0
    %12366 = vmatprep.subr.bf16.mxu0 0
    %12367 = vmatpush1.bf16.msra.mxu0 %v12301
    %12368 = vmatprep.subr.bf16.mxu0 0
    %12369 = vmatpush1.bf16.msra.mxu0 %v12300
    %12370 = vmatprep.subr.bf16.mxu0 0
    %12371 = vmatpush1.bf16.msra.mxu0 %v12299
    %12372 = vmatprep.subr.bf16.mxu0 0
    %12373 = vmatpush1.bf16.msra.mxu0 %v12298
    %12374 = vmatprep.subr.bf16.mxu0 0
    %12375 = vmatpush1.bf16.msra.mxu0 %v12297
    %12376 = vmatprep.subr.bf16.mxu0 0
    %12377 = vmatpush1.bf16.msra.mxu0 %v12296
    %12378 = vmatprep.subr.bf16.mxu0 0
    %12379 = vmatpush1.bf16.msra.mxu0 %v12295
    %12380 = vmatprep.subr.bf16.mxu0 0
    %12381 = vmatpush1.bf16.msra.mxu0 %v12294
    %12382 = vmatprep.subr.bf16.mxu0 0
    %12383 = vmatpush2.bf16.msra.mxu0 0
    %12384 = vmatprep.subr.bf16.mxu0 0
    %12385 = vmatpush2.bf16.msra.mxu0 0
    %12386 = vmatprep.subr.bf16.mxu0 0
    %12387 = vmatpush2.bf16.msra.mxu0 0
    %12388 = vmatprep.subr.bf16.mxu0 0
    %12389 = vmatpush2.bf16.msra.mxu0 0
    %12390 = vmatprep.subr.bf16.mxu0 0
    %12391 = vmatpush2.bf16.msra.mxu0 0
    %12392 = vmatprep.subr.bf16.mxu0 0
    %12393 = vmatpush2.bf16.msra.mxu0 0
    %12394 = vmatprep.subr.bf16.mxu0 0
    %12395 = vmatpush2.bf16.msra.mxu0 0
    %12396 = vmatprep.subr.bf16.mxu0 0
    %12397 = vmatpush2.bf16.msra.mxu0 0
    %12398 = vmatprep.mubr.bf16.mxu0 0
    %12399 = vmatmul.mubr.bf16.gmra.mxu0 %v12085
    %v12400 = vpop.f32.mrf.mxu0
    %v12401 = vadd.f32 %v12361, %v12400
    %v12402 = vpop.f32.mrf.mxu0
    %v12403 = vpop.f32.mrf.mxu0
    %v12404 = vpop.f32.mrf.mxu0
    %12405 = vdwg.mxu0
    %v12454 = vunpack.c.l.b16 %v12086
    %v12455 = vunpack.c.l.b16 %v12087
    %v12456 = vunpack.c.l.b16 %v12088
    %v12457 = vunpack.c.l.b16 %v12089
    %v12458 = vunpack.c.l.b16 %v12090
    %v12459 = vunpack.c.l.b16 %v12091
    %v12460 = vunpack.c.l.b16 %v12092
    %v12461 = vunpack.c.l.b16 %v12093
    %v12462 = vunpack.c.l.b16 %v12094
    %v12463 = vunpack.c.l.b16 %v12095
    %v12464 = vunpack.c.l.b16 %v12096
    %v12465 = vunpack.c.l.b16 %v12097
    %v12466 = vunpack.c.l.b16 %v12098
    %v12467 = vunpack.c.l.b16 %v12099
    %v12468 = vunpack.c.l.b16 %v12100
    %v12469 = vunpack.c.l.b16 %v12101
    %v12470 = vunpack.c.l.b16 %v12102
    %v12471 = vunpack.c.l.b16 %v12103
    %v12472 = vunpack.c.l.b16 %v12104
    %v12473 = vunpack.c.l.b16 %v12105
    %v12474 = vunpack.c.l.b16 %v12106
    %v12475 = vunpack.c.l.b16 %v12107
    %v12476 = vunpack.c.l.b16 %v12108
    %v12477 = vunpack.c.l.b16 %v12109
    %v12478 = vunpack.c.l.b16 %v12110
    %v12479 = vunpack.c.l.b16 %v12111
    %v12480 = vunpack.c.l.b16 %v12112
    %v12481 = vunpack.c.l.b16 %v12113
    %v12482 = vunpack.c.l.b16 %v12114
    %v12483 = vunpack.c.l.b16 %v12115
    %v12484 = vunpack.c.l.b16 %v12116
    %v12485 = vunpack.c.l.b16 %v12117
    %v12486 = vunpack.c.l.b16 %v12118
    %v12487 = vunpack.c.l.b16 %v12119
    %v12488 = vunpack.c.l.b16 %v12120
    %v12489 = vunpack.c.l.b16 %v12121
    %v12490 = vunpack.c.l.b16 %v12122
    %v12491 = vunpack.c.l.b16 %v12123
    %v12492 = vunpack.c.l.b16 %v12124
    %v12493 = vunpack.c.l.b16 %v12125
    %v12494 = vunpack.c.l.b16 %v12126
    %v12495 = vunpack.c.l.b16 %v12127
    %v12496 = vunpack.c.l.b16 %v12128
    %v12497 = vunpack.c.l.b16 %v12129
    %v12498 = vunpack.c.l.b16 %v12130
    %v12499 = vunpack.c.l.b16 %v12131
    %v12500 = vunpack.c.l.b16 %v12132
    %v12501 = vunpack.c.l.b16 %v12133
    %v12502 = vpack.c.b16 %v12455, %v12454
    %v12503 = vpack.c.b16 %v12457, %v12456
    %v12504 = vpack.c.b16 %v12459, %v12458
    %v12505 = vpack.c.b16 %v12461, %v12460
    %v12506 = vpack.c.b16 %v12463, %v12462
    %v12507 = vpack.c.b16 %v12465, %v12464
    %v12508 = vpack.c.b16 %v12467, %v12466
    %v12509 = vpack.c.b16 %v12469, %v12468
    %v12510 = vpack.c.b16 %v12471, %v12470
    %v12511 = vpack.c.b16 %v12473, %v12472
    %v12512 = vpack.c.b16 %v12475, %v12474
    %v12513 = vpack.c.b16 %v12477, %v12476
    %v12514 = vpack.c.b16 %v12479, %v12478
    %v12515 = vpack.c.b16 %v12481, %v12480
    %v12516 = vpack.c.b16 %v12483, %v12482
    %v12517 = vpack.c.b16 %v12485, %v12484
    %v12518 = vpack.c.b16 %v12487, %v12486
    %v12519 = vpack.c.b16 %v12489, %v12488
    %v12520 = vpack.c.b16 %v12491, %v12490
    %v12521 = vpack.c.b16 %v12493, %v12492
    %v12522 = vpack.c.b16 %v12495, %v12494
    %v12523 = vpack.c.b16 %v12497, %v12496
    %v12524 = vpack.c.b16 %v12499, %v12498
    %v12525 = vpack.c.b16 %v12501, %v12500
    %12550 = vmatprep.subr.bf16.mxu0 0
    %12551 = vmatpush1.bf16.msra.mxu0 %v12509
    %12552 = vmatprep.subr.bf16.mxu0 0
    %12553 = vmatpush1.bf16.msra.mxu0 %v12508
    %12554 = vmatprep.subr.bf16.mxu0 0
    %12555 = vmatpush1.bf16.msra.mxu0 %v12507
    %12556 = vmatprep.subr.bf16.mxu0 0
    %12557 = vmatpush1.bf16.msra.mxu0 %v12506
    %12558 = vmatprep.subr.bf16.mxu0 0
    %12559 = vmatpush1.bf16.msra.mxu0 %v12505
    %12560 = vmatprep.subr.bf16.mxu0 0
    %12561 = vmatpush1.bf16.msra.mxu0 %v12504
    %12562 = vmatprep.subr.bf16.mxu0 0
    %12563 = vmatpush1.bf16.msra.mxu0 %v12503
    %12564 = vmatprep.subr.bf16.mxu0 0
    %12565 = vmatpush1.bf16.msra.mxu0 %v12502
    %12566 = vmatprep.subr.bf16.mxu0 0
    %12567 = vmatpush2.bf16.msra.mxu0 %v12517
    %12568 = vmatprep.subr.bf16.mxu0 0
    %12569 = vmatpush2.bf16.msra.mxu0 %v12516
    %12570 = vmatprep.subr.bf16.mxu0 0
    %12571 = vmatpush2.bf16.msra.mxu0 %v12515
    %12572 = vmatprep.subr.bf16.mxu0 0
    %12573 = vmatpush2.bf16.msra.mxu0 %v12514
    %12574 = vmatprep.subr.bf16.mxu0 0
    %12575 = vmatpush2.bf16.msra.mxu0 %v12513
    %12576 = vmatprep.subr.bf16.mxu0 0
    %12577 = vmatpush2.bf16.msra.mxu0 %v12512
    %12578 = vmatprep.subr.bf16.mxu0 0
    %12579 = vmatpush2.bf16.msra.mxu0 %v12511
    %12580 = vmatprep.subr.bf16.mxu0 0
    %12581 = vmatpush2.bf16.msra.mxu0 %v12510
    %12582 = vmatprep.mubr.bf16.mxu0 %v9301
    %12583 = vmatmul.mubr.bf16.gmra.mxu0 %v9300
    %v12584 = vpop.f32.mrf.mxu0
    %v12585 = vadd.f32 %v12401, %v12584
    %v12586 = vpop.f32.mrf.mxu0
    %v12587 = vpop.f32.mrf.mxu0
    %v12588 = vpop.f32.mrf.mxu0
    %12589 = vdwg.mxu0
    %12590 = vmatprep.subr.bf16.mxu0 0
    %12591 = vmatpush1.bf16.msra.mxu0 %v12525
    %12592 = vmatprep.subr.bf16.mxu0 0
    %12593 = vmatpush1.bf16.msra.mxu0 %v12524
    %12594 = vmatprep.subr.bf16.mxu0 0
    %12595 = vmatpush1.bf16.msra.mxu0 %v12523
    %12596 = vmatprep.subr.bf16.mxu0 0
    %12597 = vmatpush1.bf16.msra.mxu0 %v12522
    %12598 = vmatprep.subr.bf16.mxu0 0
    %12599 = vmatpush1.bf16.msra.mxu0 %v12521
    %12600 = vmatprep.subr.bf16.mxu0 0
    %12601 = vmatpush1.bf16.msra.mxu0 %v12520
    %12602 = vmatprep.subr.bf16.mxu0 0
    %12603 = vmatpush1.bf16.msra.mxu0 %v12519
    %12604 = vmatprep.subr.bf16.mxu0 0
    %12605 = vmatpush1.bf16.msra.mxu0 %v12518
    %12606 = vmatprep.subr.bf16.mxu0 0
    %12607 = vmatpush2.bf16.msra.mxu0 0
    %12608 = vmatprep.subr.bf16.mxu0 0
    %12609 = vmatpush2.bf16.msra.mxu0 0
    %12610 = vmatprep.subr.bf16.mxu0 0
    %12611 = vmatpush2.bf16.msra.mxu0 0
    %12612 = vmatprep.subr.bf16.mxu0 0
    %12613 = vmatpush2.bf16.msra.mxu0 0
    %12614 = vmatprep.subr.bf16.mxu0 0
    %12615 = vmatpush2.bf16.msra.mxu0 0
    %12616 = vmatprep.subr.bf16.mxu0 0
    %12617 = vmatpush2.bf16.msra.mxu0 0
    %12618 = vmatprep.subr.bf16.mxu0 0
    %12619 = vmatpush2.bf16.msra.mxu0 0
    %12620 = vmatprep.subr.bf16.mxu0 0
    %12621 = vmatpush2.bf16.msra.mxu0 0
    %12622 = vmatprep.mubr.bf16.mxu0 0
    %12623 = vmatmul.mubr.bf16.gmra.mxu0 %v9302
    %v12624 = vpop.f32.mrf.mxu0
    %v12625 = vadd.f32 %v12585, %v12624
    %v12626 = vpop.f32.mrf.mxu0
    %v12627 = vpop.f32.mrf.mxu0
    %v12628 = vpop.f32.mrf.mxu0
    %12629 = vdwg.mxu0
    %v12630 = vld [vmem:[#allocation8 + $0x180] sm:$0xf]
    %v12631 = vld [vmem:[#allocation8 + $0x184] sm:$0xf]
    %v12632 = vld [vmem:[#allocation8 + $0x188] sm:$0xf]
    %v12633 = vld [vmem:[#allocation8 + $0x18c] sm:$0xf]
    %v12634 = vld [vmem:[#allocation8 + $0x190] sm:$0xf]
    %v12635 = vld [vmem:[#allocation8 + $0x194] sm:$0xf]
    %v12636 = vld [vmem:[#allocation8 + $0x198] sm:$0xf]
    %v12637 = vld [vmem:[#allocation8 + $0x19c] sm:$0xf]
    %v12638 = vld [vmem:[#allocation8 + $0x1a0] sm:$0xf]
    %v12639 = vld [vmem:[#allocation8 + $0x1a4] sm:$0xf]
    %v12640 = vld [vmem:[#allocation8 + $0x1a8] sm:$0xf]
    %v12641 = vld [vmem:[#allocation8 + $0x1ac] sm:$0xf]
    %v12642 = vld [vmem:[#allocation8 + $0x1b0] sm:$0xf]
    %v12643 = vld [vmem:[#allocation8 + $0x1b4] sm:$0xf]
    %v12644 = vld [vmem:[#allocation8 + $0x1b8] sm:$0xf]
    %v12645 = vld [vmem:[#allocation8 + $0x1bc] sm:$0xf]
    %v12646 = vld [vmem:[#allocation8 + $0x1c0] sm:$0xf]
    %v12647 = vld [vmem:[#allocation8 + $0x1c4] sm:$0xf]
    %v12648 = vld [vmem:[#allocation8 + $0x1c8] sm:$0xf]
    %v12649 = vld [vmem:[#allocation8 + $0x1cc] sm:$0xf]
    %v12650 = vld [vmem:[#allocation8 + $0x1d0] sm:$0xf]
    %v12651 = vld [vmem:[#allocation8 + $0x1d4] sm:$0xf]
    %v12652 = vld [vmem:[#allocation8 + $0x1d8] sm:$0xf]
    %v12653 = vld [vmem:[#allocation8 + $0x1dc] sm:$0xf]
    %v12654 = vld [vmem:[#allocation8 + $0x1e0] sm:$0xf]
    %v12655 = vld [vmem:[#allocation8 + $0x1e4] sm:$0xf]
    %v12656 = vld [vmem:[#allocation8 + $0x1e8] sm:$0xf]
    %v12657 = vld [vmem:[#allocation8 + $0x1ec] sm:$0xf]
    %v12658 = vld [vmem:[#allocation8 + $0x1f0] sm:$0xf]
    %v12659 = vld [vmem:[#allocation8 + $0x1f4] sm:$0xf]
    %v12660 = vld [vmem:[#allocation8 + $0x1f8] sm:$0xf]
    %v12661 = vld [vmem:[#allocation8 + $0x1fc] sm:$0xf]
    %v12694 = vunpack.c.l.b16 %v12630
    %v12695 = vunpack.c.l.b16 %v12631
    %v12696 = vunpack.c.l.b16 %v12632
    %v12697 = vunpack.c.l.b16 %v12633
    %v12698 = vunpack.c.l.b16 %v12634
    %v12699 = vunpack.c.l.b16 %v12635
    %v12700 = vunpack.c.l.b16 %v12636
    %v12701 = vunpack.c.l.b16 %v12637
    %v12702 = vunpack.c.l.b16 %v12638
    %v12703 = vunpack.c.l.b16 %v12639
    %v12704 = vunpack.c.l.b16 %v12640
    %v12705 = vunpack.c.l.b16 %v12641
    %v12706 = vunpack.c.l.b16 %v12642
    %v12707 = vunpack.c.l.b16 %v12643
    %v12708 = vunpack.c.l.b16 %v12644
    %v12709 = vunpack.c.l.b16 %v12645
    %v12710 = vunpack.c.l.b16 %v12646
    %v12711 = vunpack.c.l.b16 %v12647
    %v12712 = vunpack.c.l.b16 %v12648
    %v12713 = vunpack.c.l.b16 %v12649
    %v12714 = vunpack.c.l.b16 %v12650
    %v12715 = vunpack.c.l.b16 %v12651
    %v12716 = vunpack.c.l.b16 %v12652
    %v12717 = vunpack.c.l.b16 %v12653
    %v12718 = vunpack.c.l.b16 %v12654
    %v12719 = vunpack.c.l.b16 %v12655
    %v12720 = vunpack.c.l.b16 %v12656
    %v12721 = vunpack.c.l.b16 %v12657
    %v12722 = vunpack.c.l.b16 %v12658
    %v12723 = vunpack.c.l.b16 %v12659
    %v12724 = vunpack.c.l.b16 %v12660
    %v12725 = vunpack.c.l.b16 %v12661
    %v12726 = vpack.c.b16 %v12695, %v12694
    %v12727 = vpack.c.b16 %v12697, %v12696
    %v12728 = vpack.c.b16 %v12699, %v12698
    %v12729 = vpack.c.b16 %v12701, %v12700
    %v12730 = vpack.c.b16 %v12703, %v12702
    %v12731 = vpack.c.b16 %v12705, %v12704
    %v12732 = vpack.c.b16 %v12707, %v12706
    %v12733 = vpack.c.b16 %v12709, %v12708
    %v12734 = vpack.c.b16 %v12711, %v12710
    %v12735 = vpack.c.b16 %v12713, %v12712
    %v12736 = vpack.c.b16 %v12715, %v12714
    %v12737 = vpack.c.b16 %v12717, %v12716
    %v12738 = vpack.c.b16 %v12719, %v12718
    %v12739 = vpack.c.b16 %v12721, %v12720
    %v12740 = vpack.c.b16 %v12723, %v12722
    %v12741 = vpack.c.b16 %v12725, %v12724
    %12758 = vmatprep.subr.bf16.mxu0 0
    %12759 = vmatpush1.bf16.msra.mxu0 %v12733
    %12760 = vmatprep.subr.bf16.mxu0 0
    %12761 = vmatpush1.bf16.msra.mxu0 %v12732
    %12762 = vmatprep.subr.bf16.mxu0 0
    %12763 = vmatpush1.bf16.msra.mxu0 %v12731
    %12764 = vmatprep.subr.bf16.mxu0 0
    %12765 = vmatpush1.bf16.msra.mxu0 %v12730
    %12766 = vmatprep.subr.bf16.mxu0 0
    %12767 = vmatpush1.bf16.msra.mxu0 %v12729
    %12768 = vmatprep.subr.bf16.mxu0 0
    %12769 = vmatpush1.bf16.msra.mxu0 %v12728
    %12770 = vmatprep.subr.bf16.mxu0 0
    %12771 = vmatpush1.bf16.msra.mxu0 %v12727
    %12772 = vmatprep.subr.bf16.mxu0 0
    %12773 = vmatpush1.bf16.msra.mxu0 %v12726
    %12774 = vmatprep.subr.bf16.mxu0 0
    %12775 = vmatpush2.bf16.msra.mxu0 %v12741
    %12776 = vmatprep.subr.bf16.mxu0 0
    %12777 = vmatpush2.bf16.msra.mxu0 %v12740
    %12778 = vmatprep.subr.bf16.mxu0 0
    %12779 = vmatpush2.bf16.msra.mxu0 %v12739
    %12780 = vmatprep.subr.bf16.mxu0 0
    %12781 = vmatpush2.bf16.msra.mxu0 %v12738
    %12782 = vmatprep.subr.bf16.mxu0 0
    %12783 = vmatpush2.bf16.msra.mxu0 %v12737
    %12784 = vmatprep.subr.bf16.mxu0 0
    %12785 = vmatpush2.bf16.msra.mxu0 %v12736
    %12786 = vmatprep.subr.bf16.mxu0 0
    %12787 = vmatpush2.bf16.msra.mxu0 %v12735
    %12788 = vmatprep.subr.bf16.mxu0 0
    %12789 = vmatpush2.bf16.msra.mxu0 %v12734
    %12790 = vmatprep.mubr.bf16.mxu0 %v724
    %12791 = vmatmul.mubr.bf16.gmra.mxu0 %v723
    %v12792 = vpop.f32.mrf.mxu0
    %v12793 = vadd.f32 0.0, %v12792
    %v12794 = vpop.f32.mrf.mxu0
    %v12795 = vpop.f32.mrf.mxu0
    %v12796 = vpop.f32.mrf.mxu0
    %12797 = vdwg.mxu0
    %v12798 = vadd.f32 %v12625, %v12793
    %v12799 = vld [vmem:[#allocation10] sm:$0x1]
    %v12801 = vlaneseq
    %v12802 = vshrl.u32 %v12801, 7
    %v12803 = vsub.s32 0, %v12802
    %v12804 = vrot.slane %v12799, %v12803
    %v12806 = vadd.f32 %v12798, %v12804
    %12807 = vst [vmem:[#allocation34] sm:$0xff] %v12806
    // Predicated region
    $region230: #{tpu_custom_call.1} parent=1 // pred_check
      _
    $region231: #{tpu_custom_call.1} parent=1 // pred_check_branch
      %12809 = sbr.rel (0) target = $region233
    $region232: #{tpu_custom_call.1} parent=1 // pred_region
      %s12811 = ssub.s32 128, 128
      %12812 = vsyncadd [#allocation4], %s12811
      %s12814 = sshll.u32 [#allocation34], 4
      %s12815 = int_to_ptr.vmem [resolvable:$true] %s12814
      %12817 = dma.vmem_to_hbm [thread:$0]  %s12815, 128, %s75, [#allocation4]
    $region233: #{tpu_custom_call.1} parent=1 // pred_fallthru
      _
    // Predicated region
    $region234: #{tpu_custom_call.1} parent=1 // pred_check
      _
    $region235: #{tpu_custom_call.1} parent=1 // pred_check_branch
      %12819 = sbr.rel (0) target = $region237
    $region236: #{tpu_custom_call.1} parent=1 // pred_region
      %12820 = dma.done [#allocation4], 128
    $region237: #{tpu_custom_call.1} parent=1 // pred_fallthru
      _
    %12821 = vsyncpa [#allocation3], 1
    %12822 = vsyncpa [#allocation6], 1
    %12823 = vsyncpa [#allocation9], 1
    %12824 = vsyncpa [#allocation12], 1
    %12825 = vsyncpa [#allocation15], 1
    %12826 = vsyncpa [#allocation18], 1
    %12827 = vsyncpa [#allocation21], 1
    %12828 = vsyncpa [#allocation24], 1
    %12829 = vsyncpa [#allocation27], 1
    %12830 = vsyncpa [#allocation30], 1
    %12831 = vsyncpa [#allocation33], 1
    %12832 = vsyncpa [#allocation4], 1

</llo_original>
